<compile_context>
chip_gen: v7x
topology: tpu7x:2x2x1
jax: 0.10.0
libtpu: 0.0.40
codegen_flags: <defaults>
</compile_context>

<pallas_src>
import functools

import jax
import jax.numpy as jnp
from jax import lax
from jax.experimental import pallas as pl
from jax.experimental.pallas import tpu as pltpu

_BN_EPS = 1e-5
_NT_DIMS = (((1,), (1,)), ((), ()))   # contract the minor dim of both operands
_VMEM_LIMIT = 64 * 1024 * 1024


# ----------------------------------------------------------------------------
# Tile choosers (only emit (8,128)-legal block shapes; full-dim fallback)
# ----------------------------------------------------------------------------
def _choose_flat_tile(hw, cap_elems):
    cands = [t for t in range(128, hw + 1, 128) if hw % t == 0]
    if not cands:
        return hw                                   # full block (always legal)
    fitting = [t for t in cands if t <= cap_elems] or [min(cands)]
    multi = [t for t in fitting if hw // t >= 2]    # keep >= 2 spatial steps
    return max(multi) if multi else max(fitting)


def _choose_row_tile(h, w, cap_elems):
    cands = [t for t in range(8, h + 1, 8)
             if h % t == 0 and (t * w) % 128 == 0]
    if not cands:
        return h                                    # full-height block fallback
    fitting = [t for t in cands if t * w <= cap_elems] or [min(cands)]
    multi = [t for t in fitting if h // t >= 2]
    return max(multi) if multi else max(fitting)


# ----------------------------------------------------------------------------
# Kernel 1: input 1x1 conv + BN + ReLU, fused global-average-pool partial sums
# ----------------------------------------------------------------------------
def _input_conv_kernel(x_ref, w_ref, s_ref, b_ref, h_ref, gap_ref):
    @pl.when(pl.program_id(1) == 0)
    def _():
        gap_ref[...] = jnp.zeros_like(gap_ref)

    xb = x_ref[...].astype(jnp.bfloat16)                       # [C0, TM]
    acc = jnp.dot(w_ref[...], xb, preferred_element_type=jnp.float32)  # [ch, TM]
    h = jnp.maximum(acc * s_ref[...] + b_ref[...], 0.0)        # folded BN + ReLU
    gap_ref[...] += jnp.sum(h, axis=1, keepdims=True)          # GAP partial sum
    h_ref[...] = h.astype(jnp.bfloat16)


def input_conv_gap(x_flat, w_in, s_in, b_in, tile_cap):
    B, C0, HW = x_flat.shape
    ch = w_in.shape[0]
    TM = _choose_flat_tile(HW, tile_cap)
    grid = (B, HW // TM)
    return pl.pallas_call(
        _input_conv_kernel,
        out_shape=(jax.ShapeDtypeStruct((B, ch, HW), jnp.bfloat16),
                   jax.ShapeDtypeStruct((B, ch, 1), jnp.float32)),
        grid=grid,
        in_specs=[
            pl.BlockSpec((None, C0, TM), lambda b, i: (b, 0, i)),
            pl.BlockSpec((ch, C0), lambda b, i: (0, 0)),
            pl.BlockSpec((ch, 1), lambda b, i: (0, 0)),
            pl.BlockSpec((ch, 1), lambda b, i: (0, 0)),
        ],
        out_specs=(
            pl.BlockSpec((None, ch, TM), lambda b, i: (b, 0, i)),
            pl.BlockSpec((None, ch, 1), lambda b, i: (b, 0, 0)),
        ),
        compiler_params=pltpu.CompilerParams(
            dimension_semantics=("parallel", "arbitrary"),
            vmem_limit_bytes=_VMEM_LIMIT),
    )(x_flat, w_in, s_in, b_in)


# ----------------------------------------------------------------------------
# Kernel 2: fused ASPP branches + projection + residual + output conv + residual
# ----------------------------------------------------------------------------
def _aspp_output_kernel(hp_ref, xres_ref, gap_ref, w1_ref, wd_ref, wp_ref,
                        wout_ref, sc_ref, sh_ref, so_ref, bo_ref, out_ref,
                        *, th, w, d_max, dils, ch):
    f32 = jnp.float32
    bf16 = jnp.bfloat16
    tm = th * w
    r0 = pl.program_id(1) * th
    if th % 8 == 0:
        r0 = pl.multiple_of(r0, 8)

    def slab(dy, dx):
        # shifted [th, w, ch] window of the zero-padded h, flattened for the MXU
        s = hp_ref[pl.ds(r0 + d_max + dy, th), pl.ds(d_max + dx, w), :]
        return s.reshape(tm, ch)

    h2 = slab(0, 0)                                            # center tile of h

    # aspp1: 1x1 conv branch
    x1 = jnp.maximum(
        jnp.dot(h2, w1_ref[...], preferred_element_type=f32) * sc_ref[0]
        + sh_ref[0], 0.0)
    proj = jnp.dot(x1.astype(bf16), wp_ref[0], preferred_element_type=f32)

    # aspp2/3/4: dilated 3x3 branches built from in-VMEM halo taps
    for bi, dil in enumerate(dils):
        acc = jnp.zeros((tm, ch), f32)
        for t in range(9):
            ky, kx = t // 3, t % 3
            acc += jnp.dot(slab((ky - 1) * dil, (kx - 1) * dil),
                           wd_ref[bi * 9 + t], preferred_element_type=f32)
        xb = jnp.maximum(acc * sc_ref[bi + 1] + sh_ref[bi + 1], 0.0)
        proj += jnp.dot(xb.astype(bf16), wp_ref[bi + 1],
                        preferred_element_type=f32)

    proj += gap_ref[...]                                       # GAP-branch term
    y = jnp.maximum(proj * sc_ref[4] + sh_ref[4], 0.0)         # conv1 + bn1 + relu
    z = h2.astype(f32) + y                                     # ASPP residual

    # fused output 1x1 conv (+BN+ReLU) and outer residual, stored channels-first
    o = lax.dot_general(wout_ref[...], z.astype(bf16), _NT_DIMS,
                        preferred_element_type=f32)            # [C0, TM]
    out_ref[...] = xres_ref[...] + jnp.maximum(o * so_ref[...] + bo_ref[...], 0.0)


def aspp_output_fused(h_pad, x_flat, gap_term, w1, wd, wp, wout, sc, sh, so, bo,
                      H, W, dilations, tile_cap):
    B, C0, HW = x_flat.shape
    Hp, Wp, ch = h_pad.shape[1:]
    d_max = max(dilations[1:])
    TH = _choose_row_tile(H, W, tile_cap)
    TM = TH * W
    grid = (B, H // TH)
    kern = functools.partial(_aspp_output_kernel, th=TH, w=W, d_max=d_max,
                             dils=tuple(dilations[1:]), ch=ch)
    return pl.pallas_call(
        kern,
        out_shape=jax.ShapeDtypeStruct((B, C0, HW), jnp.float32),
        grid=grid,
        in_specs=[
            pl.BlockSpec((None, Hp, Wp, ch), lambda b, i: (b, 0, 0, 0)),  # padded h
            pl.BlockSpec((None, C0, TM), lambda b, i: (b, 0, i)),         # residual x
            pl.BlockSpec((None, 1, ch), lambda b, i: (b, 0, 0)),          # GAP term
            pl.BlockSpec((ch, ch), lambda b, i: (0, 0)),                  # aspp1 w
            pl.BlockSpec((27, ch, ch), lambda b, i: (0, 0, 0)),           # tap ws
            pl.BlockSpec((4, ch, ch), lambda b, i: (0, 0, 0)),            # conv1 blocks
            pl.BlockSpec((C0, ch), lambda b, i: (0, 0)),                  # output conv w
            pl.BlockSpec((5, 1, ch), lambda b, i: (0, 0, 0)),             # BN scales
            pl.BlockSpec((5, 1, ch), lambda b, i: (0, 0, 0)),             # BN shifts
            pl.BlockSpec((C0, 1), lambda b, i: (0, 0)),                   # out BN scale
            pl.BlockSpec((C0, 1), lambda b, i: (0, 0)),                   # out BN shift
        ],
        out_specs=pl.BlockSpec((None, C0, TM), lambda b, i: (b, 0, i)),
        compiler_params=pltpu.CompilerParams(
            dimension_semantics=("parallel", "parallel"),
            vmem_limit_bytes=_VMEM_LIMIT),
    )(h_pad, x_flat, gap_term, w1, wd, wp, wout, sc, sh, so, bo)


# ----------------------------------------------------------------------------
# Parameters (matching the PyTorch module's _init_weight)
# ----------------------------------------------------------------------------
def _kaiming_normal(key, shape):
    fan_in = shape[1] * shape[2] * shape[3]
    std = (2.0 / fan_in) ** 0.5
    return std * jax.random.normal(key, shape, dtype=jnp.float32)


def _bn_params(c):
    return dict(gamma=jnp.ones((c,), jnp.float32), beta=jnp.zeros((c,), jnp.float32),
                mean=jnp.zeros((c,), jnp.float32), var=jnp.ones((c,), jnp.float32))


def make_params(inplanes, reduction=4, seed=0):
    ch = inplanes // reduction
    keys = jax.random.split(jax.random.PRNGKey(seed), 8)
    return {
        "in_w": _kaiming_normal(keys[0], (ch, inplanes, 1, 1)),
        "aspp1_w": _kaiming_normal(keys[1], (ch, ch, 1, 1)),
        "aspp2_w": _kaiming_normal(keys[2], (ch, ch, 3, 3)),
        "aspp3_w": _kaiming_normal(keys[3], (ch, ch, 3, 3)),
        "aspp4_w": _kaiming_normal(keys[4], (ch, ch, 3, 3)),
        "gap_w": _kaiming_normal(keys[5], (ch, ch, 1, 1)),
        "conv1_w": _kaiming_normal(keys[6], (ch, 5 * ch, 1, 1)),
        "out_w": _kaiming_normal(keys[7], (inplanes, ch, 1, 1)),
        "in_bn": _bn_params(ch), "aspp1_bn": _bn_params(ch),
        "aspp2_bn": _bn_params(ch), "aspp3_bn": _bn_params(ch),
        "aspp4_bn": _bn_params(ch), "gap_bn": _bn_params(ch),
        "conv1_bn": _bn_params(ch), "out_bn": _bn_params(inplanes),
    }


# ----------------------------------------------------------------------------
# Forward pass
# ----------------------------------------------------------------------------
def bottleneck_aspp_forward(x, params, dilations=(1, 6, 12, 18)):
    B, C0, H, W = x.shape
    ch = params["in_w"].shape[0]
    HW = H * W
    D = max(dilations[1:])
    bf = jnp.bfloat16
    x = x.astype(jnp.float32)
    x_flat = x.reshape(B, C0, HW)
    tile_cap = max(128, (4 * 1024 * 1024) // (4 * C0))   # keep per-step blocks modest

    def fold(bn):   # eval-mode BN folded into per-channel scale / shift
        s = bn["gamma"] / jnp.sqrt(bn["var"] + _BN_EPS)
        return s, bn["beta"] - bn["mean"] * s

    # --- input_conv (+ fused GAP partial sums), NCHW read, bf16 channels-first h ---
    s_in, b_in = fold(params["in_bn"])
    w_in = params["in_w"][:, :, 0, 0].astype(bf)                      # [ch, C0]
    h_cf, gap_sum = input_conv_gap(x_flat, w_in, s_in.reshape(ch, 1),
                                   b_in.reshape(ch, 1), tile_cap)

    # --- global-average-pool branch (tiny per-batch math in plain JAX) ---
    pooled = gap_sum[:, :, 0] / HW                                    # [B, ch]
    s_g, b_g = fold(params["gap_bn"])
    wg = params["gap_w"][:, :, 0, 0]                                  # [out, in]
    x5 = jnp.maximum(pooled @ wg.T * s_g + b_g, 0.0)                  # [B, ch]
    wproj = jnp.transpose(params["conv1_w"][:, :, 0, 0], (1, 0))      # [5ch, ch]
    gap_term = (x5 @ wproj[4 * ch:]).reshape(B, 1, ch)                # pre-BN term

    # --- zero-padded channels-last h (halo source for the dilated taps, bf16) ---
    h_nhwc = jnp.transpose(h_cf.reshape(B, ch, H, W), (0, 2, 3, 1))
    h_pad = jnp.pad(h_nhwc, ((0, 0), (D, D), (D, D), (0, 0)))

    # --- stacked weights / folded BN for the fused ASPP + output kernel ---
    w1 = jnp.transpose(params["aspp1_w"][:, :, 0, 0], (1, 0)).astype(bf)
    wd = jnp.stack(
        [jnp.transpose(params[f"aspp{b_}_w"][:, :, ky, kx], (1, 0))
         for b_ in (2, 3, 4) for ky in range(3) for kx in range(3)],
        axis=0).astype(bf)                                            # [27, ch, ch]
    wp = jnp.stack([wproj[i * ch:(i + 1) * ch] for i in range(4)],
                   axis=0).astype(bf)                                 # [4, ch, ch]
    wout = params["out_w"][:, :, 0, 0].astype(bf)                     # [C0, ch]

    folds = [fold(params["aspp1_bn"]), fold(params["aspp2_bn"]),
             fold(params["aspp3_bn"]), fold(params["aspp4_bn"]),
             fold(params["conv1_bn"])]
    sc = jnp.stack([f[0].reshape(1, ch) for f in folds], axis=0)      # [5, 1, ch]
    sh = jnp.stack([f[1].reshape(1, ch) for f in folds], axis=0)
    s_o, b_o = fold(params["out_bn"])

    out_flat = aspp_output_fused(h_pad, x_flat, gap_term, w1, wd, wp, wout,
                                 sc, sh, s_o.reshape(C0, 1), b_o.reshape(C0, 1),
                                 H, W, dilations, tile_cap)
    return out_flat.reshape(B, C0, H, W)


# ----------------------------------------------------------------------------
# Pure-JAX reference (eval-mode BN, dropout == identity)
# ----------------------------------------------------------------------------
def _reference_forward(x, params, dilations=(1, 6, 12, 18)):
    def bn(h, p):
        s = p["gamma"] / jnp.sqrt(p["var"] + _BN_EPS)
        b = p["beta"] - p["mean"] * s
        return h * s[None, :, None, None] + b[None, :, None, None]

    def conv(h, w, dil=1, pad=0):
        return lax.conv_general_dilated(
            h, w, window_strides=(1, 1), padding=[(pad, pad), (pad, pad)],
            rhs_dilation=(dil, dil),
            dimension_numbers=("NCHW", "OIHW", "NCHW"))

    relu = lambda t: jnp.maximum(t, 0.0)
    identity = x
    h = relu(bn(conv(x, params["in_w"]), params["in_bn"]))
    x1 = relu(bn(conv(h, params["aspp1_w"]), params["aspp1_bn"]))
    x2 = relu(bn(conv(h, params["aspp2_w"], dilations[1], dilations[1]),
                 params["aspp2_bn"]))
    x3 = relu(bn(conv(h, params["aspp3_w"], dilations[2], dilations[2]),
                 params["aspp3_bn"]))
    x4 = relu(bn(conv(h, params["aspp4_w"], dilations[3], dilations[3]),
                 params["aspp4_bn"]))
    pooled = jnp.mean(h, axis=(2, 3), keepdims=True)
    x5 = relu(bn(conv(pooled, params["gap_w"]), params["gap_bn"]))
    x5 = jnp.broadcast_to(x5, x4.shape)   # bilinear upsample of a 1x1 map == broadcast
    cat = jnp.concatenate([x1, x2, x3, x4, x5], axis=1)
    y = relu(bn(conv(cat, params["conv1_w"]), params["conv1_bn"]))
    z = h + y
    out = relu(bn(conv(z, params["out_w"]), params["out_bn"]))
    return identity + out


if __name__ == "__main__":
    B, C0, H, W = 2, 32, 16, 16          # channels = 32 // 4 = 8
    key = jax.random.PRNGKey(0)
    x = jax.random.normal(key, (B, C0, H, W), dtype=jnp.float32)
    params = make_params(C0, reduction=4, seed=0)

    fwd = jax.jit(bottleneck_aspp_forward)
    out = jax.block_until_ready(fwd(x, params))
    assert out.shape == (B, C0, H, W)
    assert bool(jnp.isfinite(out).all())

    ref = _reference_forward(x, params)
    rel = float(jnp.linalg.norm(out - ref) / jnp.linalg.norm(ref))
    assert rel < 3e-2, f"relative error too large: {rel}"
    print("KERNEL_OK")
</pallas_src>

<mosaic_0001>
module attributes {stable_mosaic.version = 11 : i64} {
  func.func @_input_conv_kernel(%arg0: i32, %arg1: i32, %arg2: memref<1x32x128xf32, #tpu.memory_space<vmem>>, %arg3: memref<8x32xbf16, #tpu.memory_space<vmem>>, %arg4: memref<8x1xf32, #tpu.memory_space<vmem>>, %arg5: memref<8x1xf32, #tpu.memory_space<vmem>>, %arg6: memref<1x8x128xbf16, #tpu.memory_space<vmem>>, %arg7: memref<1x8x1xf32, #tpu.memory_space<vmem>>) attributes {dimension_semantics = [#tpu.dimension_semantics<parallel>, #tpu.dimension_semantics<arbitrary>], iteration_bounds = array<i64: 2, 2>, scalar_prefetch = 0 : i64, scratch_operands = 0 : i64, tpu.core_type = #tpu.core_type<tc>, window_params = [{transform_indices = @transform_0, window_bounds = array<i64: 1, 32, 128>}, {pipeline_mode = #tpu.pipeline_mode<synchronous>, transform_indices = @transform_1, window_bounds = array<i64: 8, 32>}, {pipeline_mode = #tpu.pipeline_mode<synchronous>, transform_indices = @transform_2, window_bounds = array<i64: 8, 1>}, {pipeline_mode = #tpu.pipeline_mode<synchronous>, transform_indices = @transform_3, window_bounds = array<i64: 8, 1>}, {transform_indices = @transform_4, window_bounds = array<i64: 1, 8, 128>}, {transform_indices = @transform_5, window_bounds = array<i64: 1, 8, 1>}]} {
    %c0_i32 = arith.constant 0 : i32
    %0 = arith.cmpi eq, %arg1, %c0_i32 : i32
    %1 = arith.extui %0 : i1 to i32
    %c0_i32_0 = arith.constant 0 : i32
    %2 = arith.cmpi ne, %1, %c0_i32_0 : i32
    scf.if %2 {
      %cst_20 = arith.constant 0.000000e+00 : f32
      %28 = vector.broadcast %cst_20 : f32 to vector<8x1xf32>
      %c0_21 = arith.constant 0 : index
      %c0_22 = arith.constant 0 : index
      %c0_23 = arith.constant 0 : index
      %29 = vector.load %arg7[%c0_21, %c0_22, %c0_23] : memref<1x8x1xf32, #tpu.memory_space<vmem>>, vector<1x8x1xf32>
      %30 = vector.shape_cast %29 : vector<1x8x1xf32> to vector<8x1xf32>
      %31 = vector.shape_cast %28 : vector<8x1xf32> to vector<1x8x1xf32>
      tpu.vector_store %arg7[%c0_21, %c0_22, %c0_23], %31 {strides = array<i32>} : memref<1x8x1xf32, #tpu.memory_space<vmem>>, vector<1x8x1xf32>,
    } else {
    }
    %c0 = arith.constant 0 : index
    %c0_1 = arith.constant 0 : index
    %c0_2 = arith.constant 0 : index
    %3 = vector.load %arg2[%c0, %c0_1, %c0_2] : memref<1x32x128xf32, #tpu.memory_space<vmem>>, vector<1x32x128xf32>
    %4 = vector.shape_cast %3 : vector<1x32x128xf32> to vector<32x128xf32>
    %5 = arith.truncf %4 : vector<32x128xf32> to vector<32x128xbf16>
    %c0_3 = arith.constant 0 : index
    %c0_4 = arith.constant 0 : index
    %6 = vector.load %arg3[%c0_3, %c0_4] : memref<8x32xbf16, #tpu.memory_space<vmem>>, vector<8x32xbf16>
    %cst = arith.constant dense<0.000000e+00> : vector<8x128xf32>
    %7 = tpu.matmul %6, %5, %cst {dimension_numbers = #tpu.dot_dimension_numbers<[1], [0], [0], [1], [0, 0, 1, 1], [], []>} : vector<8x32xbf16>, vector<32x128xbf16>, vector<8x128xf32> -> vector<8x128xf32>
    %c0_5 = arith.constant 0 : index
    %c0_6 = arith.constant 0 : index
    %8 = vector.load %arg4[%c0_5, %c0_6] : memref<8x1xf32, #tpu.memory_space<vmem>>, vector<8x1xf32>
    %9 = vector.broadcast %8 : vector<8x1xf32> to vector<8x128xf32>
    %10 = arith.mulf %7, %9 : vector<8x128xf32>
    %c0_7 = arith.constant 0 : index
    %c0_8 = arith.constant 0 : index
    %11 = vector.load %arg5[%c0_7, %c0_8] : memref<8x1xf32, #tpu.memory_space<vmem>>, vector<8x1xf32>
    %12 = vector.broadcast %11 : vector<8x1xf32> to vector<8x128xf32>
    %13 = arith.addf %10, %12 : vector<8x128xf32>
    %cst_9 = arith.constant 0.000000e+00 : f32
    %14 = vector.broadcast %cst_9 : f32 to vector<8x128xf32>
    %15 = arith.maximumf %13, %14 : vector<8x128xf32>
    %c0_10 = arith.constant 0 : index
    %c0_11 = arith.constant 0 : index
    %c0_12 = arith.constant 0 : index
    %16 = vector.load %arg7[%c0_10, %c0_11, %c0_12] : memref<1x8x1xf32, #tpu.memory_space<vmem>>, vector<1x8x1xf32>
    %17 = vector.shape_cast %16 : vector<1x8x1xf32> to vector<8x1xf32>
    %cst_13 = arith.constant dense<0.000000e+00> : vector<8xf32>
    %18 = vector.multi_reduction <add>, %15, %cst_13 [1] : vector<8x128xf32> to vector<8xf32>
    %19 = vector.shape_cast %18 : vector<8xf32> to vector<8x1xf32>
    %20 = arith.addf %17, %19 : vector<8x1xf32>
    %c0_14 = arith.constant 0 : index
    %c0_15 = arith.constant 0 : index
    %c0_16 = arith.constant 0 : index
    %21 = vector.load %arg7[%c0_14, %c0_15, %c0_16] : memref<1x8x1xf32, #tpu.memory_space<vmem>>, vector<1x8x1xf32>
    %22 = vector.shape_cast %21 : vector<1x8x1xf32> to vector<8x1xf32>
    %23 = vector.shape_cast %20 : vector<8x1xf32> to vector<1x8x1xf32>
    tpu.vector_store %arg7[%c0_14, %c0_15, %c0_16], %23 {strides = array<i32>} : memref<1x8x1xf32, #tpu.memory_space<vmem>>, vector<1x8x1xf32>,
    %24 = arith.truncf %15 : vector<8x128xf32> to vector<8x128xbf16>
    %c0_17 = arith.constant 0 : index
    %c0_18 = arith.constant 0 : index
    %c0_19 = arith.constant 0 : index
    %25 = vector.load %arg6[%c0_17, %c0_18, %c0_19] : memref<1x8x128xbf16, #tpu.memory_space<vmem>>, vector<1x8x128xbf16>
    %26 = vector.shape_cast %25 : vector<1x8x128xbf16> to vector<8x128xbf16>
    %27 = vector.shape_cast %24 : vector<8x128xbf16> to vector<1x8x128xbf16>
    tpu.vector_store %arg6[%c0_17, %c0_18, %c0_19], %27 {strides = array<i32>} : memref<1x8x128xbf16, #tpu.memory_space<vmem>>, vector<1x8x128xbf16>,
    return
  }
  func.func @transform_0(%arg0: i32, %arg1: i32) -> (i32, i32, i32) {
    %c0_i32 = arith.constant 0 : i32
    %c0_i32_0 = arith.constant 0 : i32
    return %arg0, %c0_i32, %arg1 : i32, i32, i32
  }
  func.func @transform_1(%arg0: i32, %arg1: i32) -> (i32, i32) {
    %c0_i32 = arith.constant 0 : i32
    %c0_i32_0 = arith.constant 0 : i32
    %c0_i32_1 = arith.constant 0 : i32
    return %c0_i32, %c0_i32_0 : i32, i32
  }
  func.func @transform_2(%arg0: i32, %arg1: i32) -> (i32, i32) {
    %c0_i32 = arith.constant 0 : i32
    %c0_i32_0 = arith.constant 0 : i32
    %c0_i32_1 = arith.constant 0 : i32
    return %c0_i32, %c0_i32_0 : i32, i32
  }
  func.func @transform_3(%arg0: i32, %arg1: i32) -> (i32, i32) {
    %c0_i32 = arith.constant 0 : i32
    %c0_i32_0 = arith.constant 0 : i32
    %c0_i32_1 = arith.constant 0 : i32
    return %c0_i32, %c0_i32_0 : i32, i32
  }
  func.func @transform_4(%arg0: i32, %arg1: i32) -> (i32, i32, i32) {
    %c0_i32 = arith.constant 0 : i32
    %c0_i32_0 = arith.constant 0 : i32
    return %arg0, %c0_i32, %arg1 : i32, i32, i32
  }
  func.func @transform_5(%arg0: i32, %arg1: i32) -> (i32, i32, i32) {
    %c0_i32 = arith.constant 0 : i32
    %c0_i32_0 = arith.constant 0 : i32
    %c0_i32_1 = arith.constant 0 : i32
    return %arg0, %c0_i32, %c0_i32_0 : i32, i32, i32
  }
}

module attributes {stable_mosaic.version = 11 : i64} {
  func.func @_aspp_output_kernel(%arg0: i32, %arg1: i32, %arg2: memref<1x52x52x8xbf16, #tpu.memory_space<vmem>>, %arg3: memref<1x32x128xf32, #tpu.memory_space<vmem>>, %arg4: memref<1x1x8xf32, #tpu.memory_space<vmem>>, %arg5: memref<8x8xbf16, #tpu.memory_space<vmem>>, %arg6: memref<27x8x8xbf16, #tpu.memory_space<vmem>>, %arg7: memref<4x8x8xbf16, #tpu.memory_space<vmem>>, %arg8: memref<32x8xbf16, #tpu.memory_space<vmem>>, %arg9: memref<5x1x8xf32, #tpu.memory_space<vmem>>, %arg10: memref<5x1x8xf32, #tpu.memory_space<vmem>>, %arg11: memref<32x1xf32, #tpu.memory_space<vmem>>, %arg12: memref<32x1xf32, #tpu.memory_space<vmem>>, %arg13: memref<1x32x128xf32, #tpu.memory_space<vmem>>) attributes {dimension_semantics = [#tpu.dimension_semantics<parallel>, #tpu.dimension_semantics<parallel>], iteration_bounds = array<i64: 2, 2>, scalar_prefetch = 0 : i64, scratch_operands = 0 : i64, tpu.core_type = #tpu.core_type<tc>, window_params = [{transform_indices = @transform_0, window_bounds = array<i64: 1, 52, 52, 8>}, {transform_indices = @transform_1, window_bounds = array<i64: 1, 32, 128>}, {transform_indices = @transform_2, window_bounds = array<i64: 1, 1, 8>}, {pipeline_mode = #tpu.pipeline_mode<synchronous>, transform_indices = @transform_3, window_bounds = array<i64: 8, 8>}, {pipeline_mode = #tpu.pipeline_mode<synchronous>, transform_indices = @transform_4, window_bounds = array<i64: 27, 8, 8>}, {pipeline_mode = #tpu.pipeline_mode<synchronous>, transform_indices = @transform_5, window_bounds = array<i64: 4, 8, 8>}, {pipeline_mode = #tpu.pipeline_mode<synchronous>, transform_indices = @transform_6, window_bounds = array<i64: 32, 8>}, {pipeline_mode = #tpu.pipeline_mode<synchronous>, transform_indices = @transform_7, window_bounds = array<i64: 5, 1, 8>}, {pipeline_mode = #tpu.pipeline_mode<synchronous>, transform_indices = @transform_8, window_bounds = array<i64: 5, 1, 8>}, {pipeline_mode = #tpu.pipeline_mode<synchronous>, transform_indices = @transform_9, window_bounds = array<i64: 32, 1>}, {pipeline_mode = #tpu.pipeline_mode<synchronous>, transform_indices = @transform_10, window_bounds = array<i64: 32, 1>}, {transform_indices = @transform_11, window_bounds = array<i64: 1, 32, 128>}]} {
    %c8_i32 = arith.constant 8 : i32
    %0 = arith.muli %arg1, %c8_i32 : i32
    %1 = tpu.assume_multiple %0, 8 : i32
    %c18_i32 = arith.constant 18 : i32
    %2 = arith.addi %1, %c18_i32 : i32
    %c0_i32 = arith.constant 0 : i32
    %3 = arith.addi %2, %c0_i32 : i32
    %c0 = arith.constant 0 : index
    %4 = arith.index_cast %3 : i32 to index
    %c18 = arith.constant 18 : index
    %c0_0 = arith.constant 0 : index
    %5 = vector.load %arg2[%c0, %4, %c18, %c0_0] : memref<1x52x52x8xbf16, #tpu.memory_space<vmem>>, vector<1x8x16x8xbf16>
    %6 = vector.shape_cast %5 : vector<1x8x16x8xbf16> to vector<8x16x8xbf16>
    %7 = vector.shape_cast %6 : vector<8x16x8xbf16> to vector<128x8xbf16>
    %c0_1 = arith.constant 0 : index
    %c0_2 = arith.constant 0 : index
    %8 = vector.load %arg5[%c0_1, %c0_2] : memref<8x8xbf16, #tpu.memory_space<vmem>>, vector<8x8xbf16>
    %cst = arith.constant dense<0.000000e+00> : vector<128x8xf32>
    %9 = tpu.matmul %7, %8, %cst {dimension_numbers = #tpu.dot_dimension_numbers<[1], [0], [0], [1], [0, 0, 1, 1], [], []>} : vector<128x8xbf16>, vector<8x8xbf16>, vector<128x8xf32> -> vector<128x8xf32>
    %c0_3 = arith.constant 0 : index
    %c0_4 = arith.constant 0 : index
    %c0_5 = arith.constant 0 : index
    %10 = vector.load %arg9[%c0_3, %c0_4, %c0_5] : memref<5x1x8xf32, #tpu.memory_space<vmem>>, vector<1x1x8xf32>
    %11 = vector.shape_cast %10 : vector<1x1x8xf32> to vector<1x8xf32>
    %12 = vector.broadcast %11 : vector<1x8xf32> to vector<128x8xf32>
    %13 = arith.mulf %9, %12 : vector<128x8xf32>
    %c0_6 = arith.constant 0 : index
    %c0_7 = arith.constant 0 : index
    %c0_8 = arith.constant 0 : index
    %14 = vector.load %arg10[%c0_6, %c0_7, %c0_8] : memref<5x1x8xf32, #tpu.memory_space<vmem>>, vector<1x1x8xf32>
    %15 = vector.shape_cast %14 : vector<1x1x8xf32> to vector<1x8xf32>
    %16 = vector.broadcast %15 : vector<1x8xf32> to vector<128x8xf32>
    %17 = arith.addf %13, %16 : vector<128x8xf32>
    %cst_9 = arith.constant 0.000000e+00 : f32
    %18 = vector.broadcast %cst_9 : f32 to vector<128x8xf32>
    %19 = arith.maximumf %17, %18 : vector<128x8xf32>
    %20 = arith.truncf %19 : vector<128x8xf32> to vector<128x8xbf16>
    %c0_10 = arith.constant 0 : index
    %c0_11 = arith.constant 0 : index
    %c0_12 = arith.constant 0 : index
    %21 = vector.load %arg7[%c0_10, %c0_11, %c0_12] : memref<4x8x8xbf16, #tpu.memory_space<vmem>>, vector<1x8x8xbf16>
    %22 = vector.shape_cast %21 : vector<1x8x8xbf16> to vector<8x8xbf16>
    %cst_13 = arith.constant dense<0.000000e+00> : vector<128x8xf32>
    %23 = tpu.matmul %20, %22, %cst_13 {dimension_numbers = #tpu.dot_dimension_numbers<[1], [0], [0], [1], [0, 0, 1, 1], [], []>} : vector<128x8xbf16>, vector<8x8xbf16>, vector<128x8xf32> -> vector<128x8xf32>
    %cst_14 = arith.constant 0.000000e+00 : f32
    %24 = vector.broadcast %cst_14 : f32 to vector<128x8xf32>
    %c18_i32_15 = arith.constant 18 : i32
    %25 = arith.addi %1, %c18_i32_15 : i32
    %c-6_i32 = arith.constant -6 : i32
    %26 = arith.addi %25, %c-6_i32 : i32
    %c0_16 = arith.constant 0 : index
    %27 = arith.index_cast %26 : i32 to index
    %c12 = arith.constant 12 : index
    %c0_17 = arith.constant 0 : index
    %28 = vector.load %arg2[%c0_16, %27, %c12, %c0_17] : memref<1x52x52x8xbf16, #tpu.memory_space<vmem>>, vector<1x8x16x8xbf16>
    %29 = vector.shape_cast %28 : vector<1x8x16x8xbf16> to vector<8x16x8xbf16>
    %30 = vector.shape_cast %29 : vector<8x16x8xbf16> to vector<128x8xbf16>
    %c0_18 = arith.constant 0 : index
    %c0_19 = arith.constant 0 : index
    %c0_20 = arith.constant 0 : index
    %31 = vector.load %arg6[%c0_18, %c0_19, %c0_20] : memref<27x8x8xbf16, #tpu.memory_space<vmem>>, vector<1x8x8xbf16>
    %32 = vector.shape_cast %31 : vector<1x8x8xbf16> to vector<8x8xbf16>
    %cst_21 = arith.constant dense<0.000000e+00> : vector<128x8xf32>
    %33 = tpu.matmul %30, %32, %cst_21 {dimension_numbers = #tpu.dot_dimension_numbers<[1], [0], [0], [1], [0, 0, 1, 1], [], []>} : vector<128x8xbf16>, vector<8x8xbf16>, vector<128x8xf32> -> vector<128x8xf32>
    %34 = arith.addf %24, %33 : vector<128x8xf32>
    %c18_i32_22 = arith.constant 18 : i32
    %35 = arith.addi %1, %c18_i32_22 : i32
    %c-6_i32_23 = arith.constant -6 : i32
    %36 = arith.addi %35, %c-6_i32_23 : i32
    %c0_24 = arith.constant 0 : index
    %37 = arith.index_cast %36 : i32 to index
    %c18_25 = arith.constant 18 : index
    %c0_26 = arith.constant 0 : index
    %38 = vector.load %arg2[%c0_24, %37, %c18_25, %c0_26] : memref<1x52x52x8xbf16, #tpu.memory_space<vmem>>, vector<1x8x16x8xbf16>
    %39 = vector.shape_cast %38 : vector<1x8x16x8xbf16> to vector<8x16x8xbf16>
    %40 = vector.shape_cast %39 : vector<8x16x8xbf16> to vector<128x8xbf16>
    %c1 = arith.constant 1 : index
    %c0_27 = arith.constant 0 : index
    %c0_28 = arith.constant 0 : index
    %41 = vector.load %arg6[%c1, %c0_27, %c0_28] : memref<27x8x8xbf16, #tpu.memory_space<vmem>>, vector<1x8x8xbf16>
    %42 = vector.shape_cast %41 : vector<1x8x8xbf16> to vector<8x8xbf16>
    %cst_29 = arith.constant dense<0.000000e+00> : vector<128x8xf32>
    %43 = tpu.matmul %40, %42, %cst_29 {dimension_numbers = #tpu.dot_dimension_numbers<[1], [0], [0], [1], [0, 0, 1, 1], [], []>} : vector<128x8xbf16>, vector<8x8xbf16>, vector<128x8xf32> -> vector<128x8xf32>
    %44 = arith.addf %34, %43 : vector<128x8xf32>
    %c18_i32_30 = arith.constant 18 : i32
    %45 = arith.addi %1, %c18_i32_30 : i32
    %c-6_i32_31 = arith.constant -6 : i32
    %46 = arith.addi %45, %c-6_i32_31 : i32
    %c0_32 = arith.constant 0 : index
    %47 = arith.index_cast %46 : i32 to index
    %c24 = arith.constant 24 : index
    %c0_33 = arith.constant 0 : index
    %48 = vector.load %arg2[%c0_32, %47, %c24, %c0_33] : memref<1x52x52x8xbf16, #tpu.memory_space<vmem>>, vector<1x8x16x8xbf16>
    %49 = vector.shape_cast %48 : vector<1x8x16x8xbf16> to vector<8x16x8xbf16>
    %50 = vector.shape_cast %49 : vector<8x16x8xbf16> to vector<128x8xbf16>
    %c2 = arith.constant 2 : index
    %c0_34 = arith.constant 0 : index
    %c0_35 = arith.constant 0 : index
    %51 = vector.load %arg6[%c2, %c0_34, %c0_35] : memref<27x8x8xbf16, #tpu.memory_space<vmem>>, vector<1x8x8xbf16>
    %52 = vector.shape_cast %51 : vector<1x8x8xbf16> to vector<8x8xbf16>
    %cst_36 = arith.constant dense<0.000000e+00> : vector<128x8xf32>
    %53 = tpu.matmul %50, %52, %cst_36 {dimension_numbers = #tpu.dot_dimension_numbers<[1], [0], [0], [1], [0, 0, 1, 1], [], []>} : vector<128x8xbf16>, vector<8x8xbf16>, vector<128x8xf32> -> vector<128x8xf32>
    %54 = arith.addf %44, %53 : vector<128x8xf32>
    %c18_i32_37 = arith.constant 18 : i32
    %55 = arith.addi %1, %c18_i32_37 : i32
    %c0_i32_38 = arith.constant 0 : i32
    %56 = arith.addi %55, %c0_i32_38 : i32
    %c0_39 = arith.constant 0 : index
    %57 = arith.index_cast %56 : i32 to index
    %c12_40 = arith.constant 12 : index
    %c0_41 = arith.constant 0 : index
    %58 = vector.load %arg2[%c0_39, %57, %c12_40, %c0_41] : memref<1x52x52x8xbf16, #tpu.memory_space<vmem>>, vector<1x8x16x8xbf16>
    %59 = vector.shape_cast %58 : vector<1x8x16x8xbf16> to vector<8x16x8xbf16>
    %60 = vector.shape_cast %59 : vector<8x16x8xbf16> to vector<128x8xbf16>
    %c3 = arith.constant 3 : index
    %c0_42 = arith.constant 0 : index
    %c0_43 = arith.constant 0 : index
    %61 = vector.load %arg6[%c3, %c0_42, %c0_43] : memref<27x8x8xbf16, #tpu.memory_space<vmem>>, vector<1x8x8xbf16>
    %62 = vector.shape_cast %61 : vector<1x8x8xbf16> to vector<8x8xbf16>
    %cst_44 = arith.constant dense<0.000000e+00> : vector<128x8xf32>
    %63 = tpu.matmul %60, %62, %cst_44 {dimension_numbers = #tpu.dot_dimension_numbers<[1], [0], [0], [1], [0, 0, 1, 1], [], []>} : vector<128x8xbf16>, vector<8x8xbf16>, vector<128x8xf32> -> vector<128x8xf32>
    %64 = arith.addf %54, %63 : vector<128x8xf32>
    %c18_i32_45 = arith.constant 18 : i32
    %65 = arith.addi %1, %c18_i32_45 : i32
    %c0_i32_46 = arith.constant 0 : i32
    %66 = arith.addi %65, %c0_i32_46 : i32
    %c0_47 = arith.constant 0 : index
    %67 = arith.index_cast %66 : i32 to index
    %c18_48 = arith.constant 18 : index
    %c0_49 = arith.constant 0 : index
    %68 = vector.load %arg2[%c0_47, %67, %c18_48, %c0_49] : memref<1x52x52x8xbf16, #tpu.memory_space<vmem>>, vector<1x8x16x8xbf16>
    %69 = vector.shape_cast %68 : vector<1x8x16x8xbf16> to vector<8x16x8xbf16>
    %70 = vector.shape_cast %69 : vector<8x16x8xbf16> to vector<128x8xbf16>
    %c4 = arith.constant 4 : index
    %c0_50 = arith.constant 0 : index
    %c0_51 = arith.constant 0 : index
    %71 = vector.load %arg6[%c4, %c0_50, %c0_51] : memref<27x8x8xbf16, #tpu.memory_space<vmem>>, vector<1x8x8xbf16>
    %72 = vector.shape_cast %71 : vector<1x8x8xbf16> to vector<8x8xbf16>
    %cst_52 = arith.constant dense<0.000000e+00> : vector<128x8xf32>
    %73 = tpu.matmul %70, %72, %cst_52 {dimension_numbers = #tpu.dot_dimension_numbers<[1], [0], [0], [1], [0, 0, 1, 1], [], []>} : vector<128x8xbf16>, vector<8x8xbf16>, vector<128x8xf32> -> vector<128x8xf32>
    %74 = arith.addf %64, %73 : vector<128x8xf32>
    %c18_i32_53 = arith.constant 18 : i32
    %75 = arith.addi %1, %c18_i32_53 : i32
    %c0_i32_54 = arith.constant 0 : i32
    %76 = arith.addi %75, %c0_i32_54 : i32
    %c0_55 = arith.constant 0 : index
    %77 = arith.index_cast %76 : i32 to index
    %c24_56 = arith.constant 24 : index
    %c0_57 = arith.constant 0 : index
    %78 = vector.load %arg2[%c0_55, %77, %c24_56, %c0_57] : memref<1x52x52x8xbf16, #tpu.memory_space<vmem>>, vector<1x8x16x8xbf16>
    %79 = vector.shape_cast %78 : vector<1x8x16x8xbf16> to vector<8x16x8xbf16>
    %80 = vector.shape_cast %79 : vector<8x16x8xbf16> to vector<128x8xbf16>
    %c5 = arith.constant 5 : index
    %c0_58 = arith.constant 0 : index
    %c0_59 = arith.constant 0 : index
    %81 = vector.load %arg6[%c5, %c0_58, %c0_59] : memref<27x8x8xbf16, #tpu.memory_space<vmem>>, vector<1x8x8xbf16>
    %82 = vector.shape_cast %81 : vector<1x8x8xbf16> to vector<8x8xbf16>
    %cst_60 = arith.constant dense<0.000000e+00> : vector<128x8xf32>
    %83 = tpu.matmul %80, %82, %cst_60 {dimension_numbers = #tpu.dot_dimension_numbers<[1], [0], [0], [1], [0, 0, 1, 1], [], []>} : vector<128x8xbf16>, vector<8x8xbf16>, vector<128x8xf32> -> vector<128x8xf32>
    %84 = arith.addf %74, %83 : vector<128x8xf32>
    %c18_i32_61 = arith.constant 18 : i32
    %85 = arith.addi %1, %c18_i32_61 : i32
    %c6_i32 = arith.constant 6 : i32
    %86 = arith.addi %85, %c6_i32 : i32
    %c0_62 = arith.constant 0 : index
    %87 = arith.index_cast %86 : i32 to index
    %c12_63 = arith.constant 12 : index
    %c0_64 = arith.constant 0 : index
    %88 = vector.load %arg2[%c0_62, %87, %c12_63, %c0_64] : memref<1x52x52x8xbf16, #tpu.memory_space<vmem>>, vector<1x8x16x8xbf16>
    %89 = vector.shape_cast %88 : vector<1x8x16x8xbf16> to vector<8x16x8xbf16>
    %90 = vector.shape_cast %89 : vector<8x16x8xbf16> to vector<128x8xbf16>
    %c6 = arith.constant 6 : index
    %c0_65 = arith.constant 0 : index
    %c0_66 = arith.constant 0 : index
    %91 = vector.load %arg6[%c6, %c0_65, %c0_66] : memref<27x8x8xbf16, #tpu.memory_space<vmem>>, vector<1x8x8xbf16>
    %92 = vector.shape_cast %91 : vector<1x8x8xbf16> to vector<8x8xbf16>
    %cst_67 = arith.constant dense<0.000000e+00> : vector<128x8xf32>
    %93 = tpu.matmul %90, %92, %cst_67 {dimension_numbers = #tpu.dot_dimension_numbers<[1], [0], [0], [1], [0, 0, 1, 1], [], []>} : vector<128x8xbf16>, vector<8x8xbf16>, vector<128x8xf32> -> vector<128x8xf32>
    %94 = arith.addf %84, %93 : vector<128x8xf32>
    %c18_i32_68 = arith.constant 18 : i32
    %95 = arith.addi %1, %c18_i32_68 : i32
    %c6_i32_69 = arith.constant 6 : i32
    %96 = arith.addi %95, %c6_i32_69 : i32
    %c0_70 = arith.constant 0 : index
    %97 = arith.index_cast %96 : i32 to index
    %c18_71 = arith.constant 18 : index
    %c0_72 = arith.constant 0 : index
    %98 = vector.load %arg2[%c0_70, %97, %c18_71, %c0_72] : memref<1x52x52x8xbf16, #tpu.memory_space<vmem>>, vector<1x8x16x8xbf16>
    %99 = vector.shape_cast %98 : vector<1x8x16x8xbf16> to vector<8x16x8xbf16>
    %100 = vector.shape_cast %99 : vector<8x16x8xbf16> to vector<128x8xbf16>
    %c7 = arith.constant 7 : index
    %c0_73 = arith.constant 0 : index
    %c0_74 = arith.constant 0 : index
    %101 = vector.load %arg6[%c7, %c0_73, %c0_74] : memref<27x8x8xbf16, #tpu.memory_space<vmem>>, vector<1x8x8xbf16>
    %102 = vector.shape_cast %101 : vector<1x8x8xbf16> to vector<8x8xbf16>
    %cst_75 = arith.constant dense<0.000000e+00> : vector<128x8xf32>
    %103 = tpu.matmul %100, %102, %cst_75 {dimension_numbers = #tpu.dot_dimension_numbers<[1], [0], [0], [1], [0, 0, 1, 1], [], []>} : vector<128x8xbf16>, vector<8x8xbf16>, vector<128x8xf32> -> vector<128x8xf32>
    %104 = arith.addf %94, %103 : vector<128x8xf32>
    %c18_i32_76 = arith.constant 18 : i32
    %105 = arith.addi %1, %c18_i32_76 : i32
    %c6_i32_77 = arith.constant 6 : i32
    %106 = arith.addi %105, %c6_i32_77 : i32
    %c0_78 = arith.constant 0 : index
    %107 = arith.index_cast %106 : i32 to index
    %c24_79 = arith.constant 24 : index
    %c0_80 = arith.constant 0 : index
    %108 = vector.load %arg2[%c0_78, %107, %c24_79, %c0_80] : memref<1x52x52x8xbf16, #tpu.memory_space<vmem>>, vector<1x8x16x8xbf16>
    %109 = vector.shape_cast %108 : vector<1x8x16x8xbf16> to vector<8x16x8xbf16>
    %110 = vector.shape_cast %109 : vector<8x16x8xbf16> to vector<128x8xbf16>
    %c8 = arith.constant 8 : index
    %c0_81 = arith.constant 0 : index
    %c0_82 = arith.constant 0 : index
    %111 = vector.load %arg6[%c8, %c0_81, %c0_82] : memref<27x8x8xbf16, #tpu.memory_space<vmem>>, vector<1x8x8xbf16>
    %112 = vector.shape_cast %111 : vector<1x8x8xbf16> to vector<8x8xbf16>
    %cst_83 = arith.constant dense<0.000000e+00> : vector<128x8xf32>
    %113 = tpu.matmul %110, %112, %cst_83 {dimension_numbers = #tpu.dot_dimension_numbers<[1], [0], [0], [1], [0, 0, 1, 1], [], []>} : vector<128x8xbf16>, vector<8x8xbf16>, vector<128x8xf32> -> vector<128x8xf32>
    %114 = arith.addf %104, %113 : vector<128x8xf32>
    %c1_84 = arith.constant 1 : index
    %c0_85 = arith.constant 0 : index
    %c0_86 = arith.constant 0 : index
    %115 = vector.load %arg9[%c1_84, %c0_85, %c0_86] : memref<5x1x8xf32, #tpu.memory_space<vmem>>, vector<1x1x8xf32>
    %116 = vector.shape_cast %115 : vector<1x1x8xf32> to vector<1x8xf32>
    %117 = vector.broadcast %116 : vector<1x8xf32> to vector<128x8xf32>
    %118 = arith.mulf %114, %117 : vector<128x8xf32>
    %c1_87 = arith.constant 1 : index
    %c0_88 = arith.constant 0 : index
    %c0_89 = arith.constant 0 : index
    %119 = vector.load %arg10[%c1_87, %c0_88, %c0_89] : memref<5x1x8xf32, #tpu.memory_space<vmem>>, vector<1x1x8xf32>
    %120 = vector.shape_cast %119 : vector<1x1x8xf32> to vector<1x8xf32>
    %121 = vector.broadcast %120 : vector<1x8xf32> to vector<128x8xf32>
    %122 = arith.addf %118, %121 : vector<128x8xf32>
    %cst_90 = arith.constant 0.000000e+00 : f32
    %123 = vector.broadcast %cst_90 : f32 to vector<128x8xf32>
    %124 = arith.maximumf %122, %123 : vector<128x8xf32>
    %125 = arith.truncf %124 : vector<128x8xf32> to vector<128x8xbf16>
    %c1_91 = arith.constant 1 : index
    %c0_92 = arith.constant 0 : index
    %c0_93 = arith.constant 0 : index
    %126 = vector.load %arg7[%c1_91, %c0_92, %c0_93] : memref<4x8x8xbf16, #tpu.memory_space<vmem>>, vector<1x8x8xbf16>
    %127 = vector.shape_cast %126 : vector<1x8x8xbf16> to vector<8x8xbf16>
    %cst_94 = arith.constant dense<0.000000e+00> : vector<128x8xf32>
    %128 = tpu.matmul %125, %127, %cst_94 {dimension_numbers = #tpu.dot_dimension_numbers<[1], [0], [0], [1], [0, 0, 1, 1], [], []>} : vector<128x8xbf16>, vector<8x8xbf16>, vector<128x8xf32> -> vector<128x8xf32>
    %129 = arith.addf %23, %128 : vector<128x8xf32>
    %cst_95 = arith.constant 0.000000e+00 : f32
    %130 = vector.broadcast %cst_95 : f32 to vector<128x8xf32>
    %c18_i32_96 = arith.constant 18 : i32
    %131 = arith.addi %1, %c18_i32_96 : i32
    %c-12_i32 = arith.constant -12 : i32
    %132 = arith.addi %131, %c-12_i32 : i32
    %c0_97 = arith.constant 0 : index
    %133 = arith.index_cast %132 : i32 to index
    %c6_98 = arith.constant 6 : index
    %c0_99 = arith.constant 0 : index
    %134 = vector.load %arg2[%c0_97, %133, %c6_98, %c0_99] : memref<1x52x52x8xbf16, #tpu.memory_space<vmem>>, vector<1x8x16x8xbf16>
    %135 = vector.shape_cast %134 : vector<1x8x16x8xbf16> to vector<8x16x8xbf16>
    %136 = vector.shape_cast %135 : vector<8x16x8xbf16> to vector<128x8xbf16>
    %c9 = arith.constant 9 : index
    %c0_100 = arith.constant 0 : index
    %c0_101 = arith.constant 0 : index
    %137 = vector.load %arg6[%c9, %c0_100, %c0_101] : memref<27x8x8xbf16, #tpu.memory_space<vmem>>, vector<1x8x8xbf16>
    %138 = vector.shape_cast %137 : vector<1x8x8xbf16> to vector<8x8xbf16>
    %cst_102 = arith.constant dense<0.000000e+00> : vector<128x8xf32>
    %139 = tpu.matmul %136, %138, %cst_102 {dimension_numbers = #tpu.dot_dimension_numbers<[1], [0], [0], [1], [0, 0, 1, 1], [], []>} : vector<128x8xbf16>, vector<8x8xbf16>, vector<128x8xf32> -> vector<128x8xf32>
    %140 = arith.addf %130, %139 : vector<128x8xf32>
    %c18_i32_103 = arith.constant 18 : i32
    %141 = arith.addi %1, %c18_i32_103 : i32
    %c-12_i32_104 = arith.constant -12 : i32
    %142 = arith.addi %141, %c-12_i32_104 : i32
    %c0_105 = arith.constant 0 : index
    %143 = arith.index_cast %142 : i32 to index
    %c18_106 = arith.constant 18 : index
    %c0_107 = arith.constant 0 : index
    %144 = vector.load %arg2[%c0_105, %143, %c18_106, %c0_107] : memref<1x52x52x8xbf16, #tpu.memory_space<vmem>>, vector<1x8x16x8xbf16>
    %145 = vector.shape_cast %144 : vector<1x8x16x8xbf16> to vector<8x16x8xbf16>
    %146 = vector.shape_cast %145 : vector<8x16x8xbf16> to vector<128x8xbf16>
    %c10 = arith.constant 10 : index
    %c0_108 = arith.constant 0 : index
    %c0_109 = arith.constant 0 : index
    %147 = vector.load %arg6[%c10, %c0_108, %c0_109] : memref<27x8x8xbf16, #tpu.memory_space<vmem>>, vector<1x8x8xbf16>
    %148 = vector.shape_cast %147 : vector<1x8x8xbf16> to vector<8x8xbf16>
    %cst_110 = arith.constant dense<0.000000e+00> : vector<128x8xf32>
    %149 = tpu.matmul %146, %148, %cst_110 {dimension_numbers = #tpu.dot_dimension_numbers<[1], [0], [0], [1], [0, 0, 1, 1], [], []>} : vector<128x8xbf16>, vector<8x8xbf16>, vector<128x8xf32> -> vector<128x8xf32>
    %150 = arith.addf %140, %149 : vector<128x8xf32>
    %c18_i32_111 = arith.constant 18 : i32
    %151 = arith.addi %1, %c18_i32_111 : i32
    %c-12_i32_112 = arith.constant -12 : i32
    %152 = arith.addi %151, %c-12_i32_112 : i32
    %c0_113 = arith.constant 0 : index
    %153 = arith.index_cast %152 : i32 to index
    %c30 = arith.constant 30 : index
    %c0_114 = arith.constant 0 : index
    %154 = vector.load %arg2[%c0_113, %153, %c30, %c0_114] : memref<1x52x52x8xbf16, #tpu.memory_space<vmem>>, vector<1x8x16x8xbf16>
    %155 = vector.shape_cast %154 : vector<1x8x16x8xbf16> to vector<8x16x8xbf16>
    %156 = vector.shape_cast %155 : vector<8x16x8xbf16> to vector<128x8xbf16>
    %c11 = arith.constant 11 : index
    %c0_115 = arith.constant 0 : index
    %c0_116 = arith.constant 0 : index
    %157 = vector.load %arg6[%c11, %c0_115, %c0_116] : memref<27x8x8xbf16, #tpu.memory_space<vmem>>, vector<1x8x8xbf16>
    %158 = vector.shape_cast %157 : vector<1x8x8xbf16> to vector<8x8xbf16>
    %cst_117 = arith.constant dense<0.000000e+00> : vector<128x8xf32>
    %159 = tpu.matmul %156, %158, %cst_117 {dimension_numbers = #tpu.dot_dimension_numbers<[1], [0], [0], [1], [0, 0, 1, 1], [], []>} : vector<128x8xbf16>, vector<8x8xbf16>, vector<128x8xf32> -> vector<128x8xf32>
    %160 = arith.addf %150, %159 : vector<128x8xf32>
    %c18_i32_118 = arith.constant 18 : i32
    %161 = arith.addi %1, %c18_i32_118 : i32
    %c0_i32_119 = arith.constant 0 : i32
    %162 = arith.addi %161, %c0_i32_119 : i32
    %c0_120 = arith.constant 0 : index
    %163 = arith.index_cast %162 : i32 to index
    %c6_121 = arith.constant 6 : index
    %c0_122 = arith.constant 0 : index
    %164 = vector.load %arg2[%c0_120, %163, %c6_121, %c0_122] : memref<1x52x52x8xbf16, #tpu.memory_space<vmem>>, vector<1x8x16x8xbf16>
    %165 = vector.shape_cast %164 : vector<1x8x16x8xbf16> to vector<8x16x8xbf16>
    %166 = vector.shape_cast %165 : vector<8x16x8xbf16> to vector<128x8xbf16>
    %c12_123 = arith.constant 12 : index
    %c0_124 = arith.constant 0 : index
    %c0_125 = arith.constant 0 : index
    %167 = vector.load %arg6[%c12_123, %c0_124, %c0_125] : memref<27x8x8xbf16, #tpu.memory_space<vmem>>, vector<1x8x8xbf16>
    %168 = vector.shape_cast %167 : vector<1x8x8xbf16> to vector<8x8xbf16>
    %cst_126 = arith.constant dense<0.000000e+00> : vector<128x8xf32>
    %169 = tpu.matmul %166, %168, %cst_126 {dimension_numbers = #tpu.dot_dimension_numbers<[1], [0], [0], [1], [0, 0, 1, 1], [], []>} : vector<128x8xbf16>, vector<8x8xbf16>, vector<128x8xf32> -> vector<128x8xf32>
    %170 = arith.addf %160, %169 : vector<128x8xf32>
    %c18_i32_127 = arith.constant 18 : i32
    %171 = arith.addi %1, %c18_i32_127 : i32
    %c0_i32_128 = arith.constant 0 : i32
    %172 = arith.addi %171, %c0_i32_128 : i32
    %c0_129 = arith.constant 0 : index
    %173 = arith.index_cast %172 : i32 to index
    %c18_130 = arith.constant 18 : index
    %c0_131 = arith.constant 0 : index
    %174 = vector.load %arg2[%c0_129, %173, %c18_130, %c0_131] : memref<1x52x52x8xbf16, #tpu.memory_space<vmem>>, vector<1x8x16x8xbf16>
    %175 = vector.shape_cast %174 : vector<1x8x16x8xbf16> to vector<8x16x8xbf16>
    %176 = vector.shape_cast %175 : vector<8x16x8xbf16> to vector<128x8xbf16>
    %c13 = arith.constant 13 : index
    %c0_132 = arith.constant 0 : index
    %c0_133 = arith.constant 0 : index
    %177 = vector.load %arg6[%c13, %c0_132, %c0_133] : memref<27x8x8xbf16, #tpu.memory_space<vmem>>, vector<1x8x8xbf16>
    %178 = vector.shape_cast %177 : vector<1x8x8xbf16> to vector<8x8xbf16>
    %cst_134 = arith.constant dense<0.000000e+00> : vector<128x8xf32>
    %179 = tpu.matmul %176, %178, %cst_134 {dimension_numbers = #tpu.dot_dimension_numbers<[1], [0], [0], [1], [0, 0, 1, 1], [], []>} : vector<128x8xbf16>, vector<8x8xbf16>, vector<128x8xf32> -> vector<128x8xf32>
    %180 = arith.addf %170, %179 : vector<128x8xf32>
    %c18_i32_135 = arith.constant 18 : i32
    %181 = arith.addi %1, %c18_i32_135 : i32
    %c0_i32_136 = arith.constant 0 : i32
    %182 = arith.addi %181, %c0_i32_136 : i32
    %c0_137 = arith.constant 0 : index
    %183 = arith.index_cast %182 : i32 to index
    %c30_138 = arith.constant 30 : index
    %c0_139 = arith.constant 0 : index
    %184 = vector.load %arg2[%c0_137, %183, %c30_138, %c0_139] : memref<1x52x52x8xbf16, #tpu.memory_space<vmem>>, vector<1x8x16x8xbf16>
    %185 = vector.shape_cast %184 : vector<1x8x16x8xbf16> to vector<8x16x8xbf16>
    %186 = vector.shape_cast %185 : vector<8x16x8xbf16> to vector<128x8xbf16>
    %c14 = arith.constant 14 : index
    %c0_140 = arith.constant 0 : index
    %c0_141 = arith.constant 0 : index
    %187 = vector.load %arg6[%c14, %c0_140, %c0_141] : memref<27x8x8xbf16, #tpu.memory_space<vmem>>, vector<1x8x8xbf16>
    %188 = vector.shape_cast %187 : vector<1x8x8xbf16> to vector<8x8xbf16>
    %cst_142 = arith.constant dense<0.000000e+00> : vector<128x8xf32>
    %189 = tpu.matmul %186, %188, %cst_142 {dimension_numbers = #tpu.dot_dimension_numbers<[1], [0], [0], [1], [0, 0, 1, 1], [], []>} : vector<128x8xbf16>, vector<8x8xbf16>, vector<128x8xf32> -> vector<128x8xf32>
    %190 = arith.addf %180, %189 : vector<128x8xf32>
    %c18_i32_143 = arith.constant 18 : i32
    %191 = arith.addi %1, %c18_i32_143 : i32
    %c12_i32 = arith.constant 12 : i32
    %192 = arith.addi %191, %c12_i32 : i32
    %c0_144 = arith.constant 0 : index
    %193 = arith.index_cast %192 : i32 to index
    %c6_145 = arith.constant 6 : index
    %c0_146 = arith.constant 0 : index
    %194 = vector.load %arg2[%c0_144, %193, %c6_145, %c0_146] : memref<1x52x52x8xbf16, #tpu.memory_space<vmem>>, vector<1x8x16x8xbf16>
    %195 = vector.shape_cast %194 : vector<1x8x16x8xbf16> to vector<8x16x8xbf16>
    %196 = vector.shape_cast %195 : vector<8x16x8xbf16> to vector<128x8xbf16>
    %c15 = arith.constant 15 : index
    %c0_147 = arith.constant 0 : index
    %c0_148 = arith.constant 0 : index
    %197 = vector.load %arg6[%c15, %c0_147, %c0_148] : memref<27x8x8xbf16, #tpu.memory_space<vmem>>, vector<1x8x8xbf16>
    %198 = vector.shape_cast %197 : vector<1x8x8xbf16> to vector<8x8xbf16>
    %cst_149 = arith.constant dense<0.000000e+00> : vector<128x8xf32>
    %199 = tpu.matmul %196, %198, %cst_149 {dimension_numbers = #tpu.dot_dimension_numbers<[1], [0], [0], [1], [0, 0, 1, 1], [], []>} : vector<128x8xbf16>, vector<8x8xbf16>, vector<128x8xf32> -> vector<128x8xf32>
    %200 = arith.addf %190, %199 : vector<128x8xf32>
    %c18_i32_150 = arith.constant 18 : i32
    %201 = arith.addi %1, %c18_i32_150 : i32
    %c12_i32_151 = arith.constant 12 : i32
    %202 = arith.addi %201, %c12_i32_151 : i32
    %c0_152 = arith.constant 0 : index
    %203 = arith.index_cast %202 : i32 to index
    %c18_153 = arith.constant 18 : index
    %c0_154 = arith.constant 0 : index
    %204 = vector.load %arg2[%c0_152, %203, %c18_153, %c0_154] : memref<1x52x52x8xbf16, #tpu.memory_space<vmem>>, vector<1x8x16x8xbf16>
    %205 = vector.shape_cast %204 : vector<1x8x16x8xbf16> to vector<8x16x8xbf16>
    %206 = vector.shape_cast %205 : vector<8x16x8xbf16> to vector<128x8xbf16>
    %c16 = arith.constant 16 : index
    %c0_155 = arith.constant 0 : index
    %c0_156 = arith.constant 0 : index
    %207 = vector.load %arg6[%c16, %c0_155, %c0_156] : memref<27x8x8xbf16, #tpu.memory_space<vmem>>, vector<1x8x8xbf16>
    %208 = vector.shape_cast %207 : vector<1x8x8xbf16> to vector<8x8xbf16>
    %cst_157 = arith.constant dense<0.000000e+00> : vector<128x8xf32>
    %209 = tpu.matmul %206, %208, %cst_157 {dimension_numbers = #tpu.dot_dimension_numbers<[1], [0], [0], [1], [0, 0, 1, 1], [], []>} : vector<128x8xbf16>, vector<8x8xbf16>, vector<128x8xf32> -> vector<128x8xf32>
    %210 = arith.addf %200, %209 : vector<128x8xf32>
    %c18_i32_158 = arith.constant 18 : i32
    %211 = arith.addi %1, %c18_i32_158 : i32
    %c12_i32_159 = arith.constant 12 : i32
    %212 = arith.addi %211, %c12_i32_159 : i32
    %c0_160 = arith.constant 0 : index
    %213 = arith.index_cast %212 : i32 to index
    %c30_161 = arith.constant 30 : index
    %c0_162 = arith.constant 0 : index
    %214 = vector.load %arg2[%c0_160, %213, %c30_161, %c0_162] : memref<1x52x52x8xbf16, #tpu.memory_space<vmem>>, vector<1x8x16x8xbf16>
    %215 = vector.shape_cast %214 : vector<1x8x16x8xbf16> to vector<8x16x8xbf16>
    %216 = vector.shape_cast %215 : vector<8x16x8xbf16> to vector<128x8xbf16>
    %c17 = arith.constant 17 : index
    %c0_163 = arith.constant 0 : index
    %c0_164 = arith.constant 0 : index
    %217 = vector.load %arg6[%c17, %c0_163, %c0_164] : memref<27x8x8xbf16, #tpu.memory_space<vmem>>, vector<1x8x8xbf16>
    %218 = vector.shape_cast %217 : vector<1x8x8xbf16> to vector<8x8xbf16>
    %cst_165 = arith.constant dense<0.000000e+00> : vector<128x8xf32>
    %219 = tpu.matmul %216, %218, %cst_165 {dimension_numbers = #tpu.dot_dimension_numbers<[1], [0], [0], [1], [0, 0, 1, 1], [], []>} : vector<128x8xbf16>, vector<8x8xbf16>, vector<128x8xf32> -> vector<128x8xf32>
    %220 = arith.addf %210, %219 : vector<128x8xf32>
    %c2_166 = arith.constant 2 : index
    %c0_167 = arith.constant 0 : index
    %c0_168 = arith.constant 0 : index
    %221 = vector.load %arg9[%c2_166, %c0_167, %c0_168] : memref<5x1x8xf32, #tpu.memory_space<vmem>>, vector<1x1x8xf32>
    %222 = vector.shape_cast %221 : vector<1x1x8xf32> to vector<1x8xf32>
    %223 = vector.broadcast %222 : vector<1x8xf32> to vector<128x8xf32>
    %224 = arith.mulf %220, %223 : vector<128x8xf32>
    %c2_169 = arith.constant 2 : index
    %c0_170 = arith.constant 0 : index
    %c0_171 = arith.constant 0 : index
    %225 = vector.load %arg10[%c2_169, %c0_170, %c0_171] : memref<5x1x8xf32, #tpu.memory_space<vmem>>, vector<1x1x8xf32>
    %226 = vector.shape_cast %225 : vector<1x1x8xf32> to vector<1x8xf32>
    %227 = vector.broadcast %226 : vector<1x8xf32> to vector<128x8xf32>
    %228 = arith.addf %224, %227 : vector<128x8xf32>
    %cst_172 = arith.constant 0.000000e+00 : f32
    %229 = vector.broadcast %cst_172 : f32 to vector<128x8xf32>
    %230 = arith.maximumf %228, %229 : vector<128x8xf32>
    %231 = arith.truncf %230 : vector<128x8xf32> to vector<128x8xbf16>
    %c2_173 = arith.constant 2 : index
    %c0_174 = arith.constant 0 : index
    %c0_175 = arith.constant 0 : index
    %232 = vector.load %arg7[%c2_173, %c0_174, %c0_175] : memref<4x8x8xbf16, #tpu.memory_space<vmem>>, vector<1x8x8xbf16>
    %233 = vector.shape_cast %232 : vector<1x8x8xbf16> to vector<8x8xbf16>
    %cst_176 = arith.constant dense<0.000000e+00> : vector<128x8xf32>
    %234 = tpu.matmul %231, %233, %cst_176 {dimension_numbers = #tpu.dot_dimension_numbers<[1], [0], [0], [1], [0, 0, 1, 1], [], []>} : vector<128x8xbf16>, vector<8x8xbf16>, vector<128x8xf32> -> vector<128x8xf32>
    %235 = arith.addf %129, %234 : vector<128x8xf32>
    %cst_177 = arith.constant 0.000000e+00 : f32
    %236 = vector.broadcast %cst_177 : f32 to vector<128x8xf32>
    %c18_i32_178 = arith.constant 18 : i32
    %237 = arith.addi %1, %c18_i32_178 : i32
    %c-18_i32 = arith.constant -18 : i32
    %238 = arith.addi %237, %c-18_i32 : i32
    %c0_179 = arith.constant 0 : index
    %239 = arith.index_cast %238 : i32 to index
    %c0_180 = arith.constant 0 : index
    %c0_181 = arith.constant 0 : index
    %240 = vector.load %arg2[%c0_179, %239, %c0_180, %c0_181] : memref<1x52x52x8xbf16, #tpu.memory_space<vmem>>, vector<1x8x16x8xbf16>
    %241 = vector.shape_cast %240 : vector<1x8x16x8xbf16> to vector<8x16x8xbf16>
    %242 = vector.shape_cast %241 : vector<8x16x8xbf16> to vector<128x8xbf16>
    %c18_182 = arith.constant 18 : index
    %c0_183 = arith.constant 0 : index
    %c0_184 = arith.constant 0 : index
    %243 = vector.load %arg6[%c18_182, %c0_183, %c0_184] : memref<27x8x8xbf16, #tpu.memory_space<vmem>>, vector<1x8x8xbf16>
    %244 = vector.shape_cast %243 : vector<1x8x8xbf16> to vector<8x8xbf16>
    %cst_185 = arith.constant dense<0.000000e+00> : vector<128x8xf32>
    %245 = tpu.matmul %242, %244, %cst_185 {dimension_numbers = #tpu.dot_dimension_numbers<[1], [0], [0], [1], [0, 0, 1, 1], [], []>} : vector<128x8xbf16>, vector<8x8xbf16>, vector<128x8xf32> -> vector<128x8xf32>
    %246 = arith.addf %236, %245 : vector<128x8xf32>
    %c18_i32_186 = arith.constant 18 : i32
    %247 = arith.addi %1, %c18_i32_186 : i32
    %c-18_i32_187 = arith.constant -18 : i32
    %248 = arith.addi %247, %c-18_i32_187 : i32
    %c0_188 = arith.constant 0 : index
    %249 = arith.index_cast %248 : i32 to index
    %c18_189 = arith.constant 18 : index
    %c0_190 = arith.constant 0 : index
    %250 = vector.load %arg2[%c0_188, %249, %c18_189, %c0_190] : memref<1x52x52x8xbf16, #tpu.memory_space<vmem>>, vector<1x8x16x8xbf16>
    %251 = vector.shape_cast %250 : vector<1x8x16x8xbf16> to vector<8x16x8xbf16>
    %252 = vector.shape_cast %251 : vector<8x16x8xbf16> to vector<128x8xbf16>
    %c19 = arith.constant 19 : index
    %c0_191 = arith.constant 0 : index
    %c0_192 = arith.constant 0 : index
    %253 = vector.load %arg6[%c19, %c0_191, %c0_192] : memref<27x8x8xbf16, #tpu.memory_space<vmem>>, vector<1x8x8xbf16>
    %254 = vector.shape_cast %253 : vector<1x8x8xbf16> to vector<8x8xbf16>
    %cst_193 = arith.constant dense<0.000000e+00> : vector<128x8xf32>
    %255 = tpu.matmul %252, %254, %cst_193 {dimension_numbers = #tpu.dot_dimension_numbers<[1], [0], [0], [1], [0, 0, 1, 1], [], []>} : vector<128x8xbf16>, vector<8x8xbf16>, vector<128x8xf32> -> vector<128x8xf32>
    %256 = arith.addf %246, %255 : vector<128x8xf32>
    %c18_i32_194 = arith.constant 18 : i32
    %257 = arith.addi %1, %c18_i32_194 : i32
    %c-18_i32_195 = arith.constant -18 : i32
    %258 = arith.addi %257, %c-18_i32_195 : i32
    %c0_196 = arith.constant 0 : index
    %259 = arith.index_cast %258 : i32 to index
    %c36 = arith.constant 36 : index
    %c0_197 = arith.constant 0 : index
    %260 = vector.load %arg2[%c0_196, %259, %c36, %c0_197] : memref<1x52x52x8xbf16, #tpu.memory_space<vmem>>, vector<1x8x16x8xbf16>
    %261 = vector.shape_cast %260 : vector<1x8x16x8xbf16> to vector<8x16x8xbf16>
    %262 = vector.shape_cast %261 : vector<8x16x8xbf16> to vector<128x8xbf16>
    %c20 = arith.constant 20 : index
    %c0_198 = arith.constant 0 : index
    %c0_199 = arith.constant 0 : index
    %263 = vector.load %arg6[%c20, %c0_198, %c0_199] : memref<27x8x8xbf16, #tpu.memory_space<vmem>>, vector<1x8x8xbf16>
    %264 = vector.shape_cast %263 : vector<1x8x8xbf16> to vector<8x8xbf16>
    %cst_200 = arith.constant dense<0.000000e+00> : vector<128x8xf32>
    %265 = tpu.matmul %262, %264, %cst_200 {dimension_numbers = #tpu.dot_dimension_numbers<[1], [0], [0], [1], [0, 0, 1, 1], [], []>} : vector<128x8xbf16>, vector<8x8xbf16>, vector<128x8xf32> -> vector<128x8xf32>
    %266 = arith.addf %256, %265 : vector<128x8xf32>
    %c18_i32_201 = arith.constant 18 : i32
    %267 = arith.addi %1, %c18_i32_201 : i32
    %c0_i32_202 = arith.constant 0 : i32
    %268 = arith.addi %267, %c0_i32_202 : i32
    %c0_203 = arith.constant 0 : index
    %269 = arith.index_cast %268 : i32 to index
    %c0_204 = arith.constant 0 : index
    %c0_205 = arith.constant 0 : index
    %270 = vector.load %arg2[%c0_203, %269, %c0_204, %c0_205] : memref<1x52x52x8xbf16, #tpu.memory_space<vmem>>, vector<1x8x16x8xbf16>
    %271 = vector.shape_cast %270 : vector<1x8x16x8xbf16> to vector<8x16x8xbf16>
    %272 = vector.shape_cast %271 : vector<8x16x8xbf16> to vector<128x8xbf16>
    %c21 = arith.constant 21 : index
    %c0_206 = arith.constant 0 : index
    %c0_207 = arith.constant 0 : index
    %273 = vector.load %arg6[%c21, %c0_206, %c0_207] : memref<27x8x8xbf16, #tpu.memory_space<vmem>>, vector<1x8x8xbf16>
    %274 = vector.shape_cast %273 : vector<1x8x8xbf16> to vector<8x8xbf16>
    %cst_208 = arith.constant dense<0.000000e+00> : vector<128x8xf32>
    %275 = tpu.matmul %272, %274, %cst_208 {dimension_numbers = #tpu.dot_dimension_numbers<[1], [0], [0], [1], [0, 0, 1, 1], [], []>} : vector<128x8xbf16>, vector<8x8xbf16>, vector<128x8xf32> -> vector<128x8xf32>
    %276 = arith.addf %266, %275 : vector<128x8xf32>
    %c18_i32_209 = arith.constant 18 : i32
    %277 = arith.addi %1, %c18_i32_209 : i32
    %c0_i32_210 = arith.constant 0 : i32
    %278 = arith.addi %277, %c0_i32_210 : i32
    %c0_211 = arith.constant 0 : index
    %279 = arith.index_cast %278 : i32 to index
    %c18_212 = arith.constant 18 : index
    %c0_213 = arith.constant 0 : index
    %280 = vector.load %arg2[%c0_211, %279, %c18_212, %c0_213] : memref<1x52x52x8xbf16, #tpu.memory_space<vmem>>, vector<1x8x16x8xbf16>
    %281 = vector.shape_cast %280 : vector<1x8x16x8xbf16> to vector<8x16x8xbf16>
    %282 = vector.shape_cast %281 : vector<8x16x8xbf16> to vector<128x8xbf16>
    %c22 = arith.constant 22 : index
    %c0_214 = arith.constant 0 : index
    %c0_215 = arith.constant 0 : index
    %283 = vector.load %arg6[%c22, %c0_214, %c0_215] : memref<27x8x8xbf16, #tpu.memory_space<vmem>>, vector<1x8x8xbf16>
    %284 = vector.shape_cast %283 : vector<1x8x8xbf16> to vector<8x8xbf16>
    %cst_216 = arith.constant dense<0.000000e+00> : vector<128x8xf32>
    %285 = tpu.matmul %282, %284, %cst_216 {dimension_numbers = #tpu.dot_dimension_numbers<[1], [0], [0], [1], [0, 0, 1, 1], [], []>} : vector<128x8xbf16>, vector<8x8xbf16>, vector<128x8xf32> -> vector<128x8xf32>
    %286 = arith.addf %276, %285 : vector<128x8xf32>
    %c18_i32_217 = arith.constant 18 : i32
    %287 = arith.addi %1, %c18_i32_217 : i32
    %c0_i32_218 = arith.constant 0 : i32
    %288 = arith.addi %287, %c0_i32_218 : i32
    %c0_219 = arith.constant 0 : index
    %289 = arith.index_cast %288 : i32 to index
    %c36_220 = arith.constant 36 : index
    %c0_221 = arith.constant 0 : index
    %290 = vector.load %arg2[%c0_219, %289, %c36_220, %c0_221] : memref<1x52x52x8xbf16, #tpu.memory_space<vmem>>, vector<1x8x16x8xbf16>
    %291 = vector.shape_cast %290 : vector<1x8x16x8xbf16> to vector<8x16x8xbf16>
    %292 = vector.shape_cast %291 : vector<8x16x8xbf16> to vector<128x8xbf16>
    %c23 = arith.constant 23 : index
    %c0_222 = arith.constant 0 : index
    %c0_223 = arith.constant 0 : index
    %293 = vector.load %arg6[%c23, %c0_222, %c0_223] : memref<27x8x8xbf16, #tpu.memory_space<vmem>>, vector<1x8x8xbf16>
    %294 = vector.shape_cast %293 : vector<1x8x8xbf16> to vector<8x8xbf16>
    %cst_224 = arith.constant dense<0.000000e+00> : vector<128x8xf32>
    %295 = tpu.matmul %292, %294, %cst_224 {dimension_numbers = #tpu.dot_dimension_numbers<[1], [0], [0], [1], [0, 0, 1, 1], [], []>} : vector<128x8xbf16>, vector<8x8xbf16>, vector<128x8xf32> -> vector<128x8xf32>
    %296 = arith.addf %286, %295 : vector<128x8xf32>
    %c18_i32_225 = arith.constant 18 : i32
    %297 = arith.addi %1, %c18_i32_225 : i32
    %c18_i32_226 = arith.constant 18 : i32
    %298 = arith.addi %297, %c18_i32_226 : i32
    %c0_227 = arith.constant 0 : index
    %299 = arith.index_cast %298 : i32 to index
    %c0_228 = arith.constant 0 : index
    %c0_229 = arith.constant 0 : index
    %300 = vector.load %arg2[%c0_227, %299, %c0_228, %c0_229] : memref<1x52x52x8xbf16, #tpu.memory_space<vmem>>, vector<1x8x16x8xbf16>
    %301 = vector.shape_cast %300 : vector<1x8x16x8xbf16> to vector<8x16x8xbf16>
    %302 = vector.shape_cast %301 : vector<8x16x8xbf16> to vector<128x8xbf16>
    %c24_230 = arith.constant 24 : index
    %c0_231 = arith.constant 0 : index
    %c0_232 = arith.constant 0 : index
    %303 = vector.load %arg6[%c24_230, %c0_231, %c0_232] : memref<27x8x8xbf16, #tpu.memory_space<vmem>>, vector<1x8x8xbf16>
    %304 = vector.shape_cast %303 : vector<1x8x8xbf16> to vector<8x8xbf16>
    %cst_233 = arith.constant dense<0.000000e+00> : vector<128x8xf32>
    %305 = tpu.matmul %302, %304, %cst_233 {dimension_numbers = #tpu.dot_dimension_numbers<[1], [0], [0], [1], [0, 0, 1, 1], [], []>} : vector<128x8xbf16>, vector<8x8xbf16>, vector<128x8xf32> -> vector<128x8xf32>
    %306 = arith.addf %296, %305 : vector<128x8xf32>
    %c18_i32_234 = arith.constant 18 : i32
    %307 = arith.addi %1, %c18_i32_234 : i32
    %c18_i32_235 = arith.constant 18 : i32
    %308 = arith.addi %307, %c18_i32_235 : i32
    %c0_236 = arith.constant 0 : index
    %309 = arith.index_cast %308 : i32 to index
    %c18_237 = arith.constant 18 : index
    %c0_238 = arith.constant 0 : index
    %310 = vector.load %arg2[%c0_236, %309, %c18_237, %c0_238] : memref<1x52x52x8xbf16, #tpu.memory_space<vmem>>, vector<1x8x16x8xbf16>
    %311 = vector.shape_cast %310 : vector<1x8x16x8xbf16> to vector<8x16x8xbf16>
    %312 = vector.shape_cast %311 : vector<8x16x8xbf16> to vector<128x8xbf16>
    %c25 = arith.constant 25 : index
    %c0_239 = arith.constant 0 : index
    %c0_240 = arith.constant 0 : index
    %313 = vector.load %arg6[%c25, %c0_239, %c0_240] : memref<27x8x8xbf16, #tpu.memory_space<vmem>>, vector<1x8x8xbf16>
    %314 = vector.shape_cast %313 : vector<1x8x8xbf16> to vector<8x8xbf16>
    %cst_241 = arith.constant dense<0.000000e+00> : vector<128x8xf32>
    %315 = tpu.matmul %312, %314, %cst_241 {dimension_numbers = #tpu.dot_dimension_numbers<[1], [0], [0], [1], [0, 0, 1, 1], [], []>} : vector<128x8xbf16>, vector<8x8xbf16>, vector<128x8xf32> -> vector<128x8xf32>
    %316 = arith.addf %306, %315 : vector<128x8xf32>
    %c18_i32_242 = arith.constant 18 : i32
    %317 = arith.addi %1, %c18_i32_242 : i32
    %c18_i32_243 = arith.constant 18 : i32
    %318 = arith.addi %317, %c18_i32_243 : i32
    %c0_244 = arith.constant 0 : index
    %319 = arith.index_cast %318 : i32 to index
    %c36_245 = arith.constant 36 : index
    %c0_246 = arith.constant 0 : index
    %320 = vector.load %arg2[%c0_244, %319, %c36_245, %c0_246] : memref<1x52x52x8xbf16, #tpu.memory_space<vmem>>, vector<1x8x16x8xbf16>
    %321 = vector.shape_cast %320 : vector<1x8x16x8xbf16> to vector<8x16x8xbf16>
    %322 = vector.shape_cast %321 : vector<8x16x8xbf16> to vector<128x8xbf16>
    %c26 = arith.constant 26 : index
    %c0_247 = arith.constant 0 : index
    %c0_248 = arith.constant 0 : index
    %323 = vector.load %arg6[%c26, %c0_247, %c0_248] : memref<27x8x8xbf16, #tpu.memory_space<vmem>>, vector<1x8x8xbf16>
    %324 = vector.shape_cast %323 : vector<1x8x8xbf16> to vector<8x8xbf16>
    %cst_249 = arith.constant dense<0.000000e+00> : vector<128x8xf32>
    %325 = tpu.matmul %322, %324, %cst_249 {dimension_numbers = #tpu.dot_dimension_numbers<[1], [0], [0], [1], [0, 0, 1, 1], [], []>} : vector<128x8xbf16>, vector<8x8xbf16>, vector<128x8xf32> -> vector<128x8xf32>
    %326 = arith.addf %316, %325 : vector<128x8xf32>
    %c3_250 = arith.constant 3 : index
    %c0_251 = arith.constant 0 : index
    %c0_252 = arith.constant 0 : index
    %327 = vector.load %arg9[%c3_250, %c0_251, %c0_252] : memref<5x1x8xf32, #tpu.memory_space<vmem>>, vector<1x1x8xf32>
    %328 = vector.shape_cast %327 : vector<1x1x8xf32> to vector<1x8xf32>
    %329 = vector.broadcast %328 : vector<1x8xf32> to vector<128x8xf32>
    %330 = arith.mulf %326, %329 : vector<128x8xf32>
    %c3_253 = arith.constant 3 : index
    %c0_254 = arith.constant 0 : index
    %c0_255 = arith.constant 0 : index
    %331 = vector.load %arg10[%c3_253, %c0_254, %c0_255] : memref<5x1x8xf32, #tpu.memory_space<vmem>>, vector<1x1x8xf32>
    %332 = vector.shape_cast %331 : vector<1x1x8xf32> to vector<1x8xf32>
    %333 = vector.broadcast %332 : vector<1x8xf32> to vector<128x8xf32>
    %334 = arith.addf %330, %333 : vector<128x8xf32>
    %cst_256 = arith.constant 0.000000e+00 : f32
    %335 = vector.broadcast %cst_256 : f32 to vector<128x8xf32>
    %336 = arith.maximumf %334, %335 : vector<128x8xf32>
    %337 = arith.truncf %336 : vector<128x8xf32> to vector<128x8xbf16>
    %c3_257 = arith.constant 3 : index
    %c0_258 = arith.constant 0 : index
    %c0_259 = arith.constant 0 : index
    %338 = vector.load %arg7[%c3_257, %c0_258, %c0_259] : memref<4x8x8xbf16, #tpu.memory_space<vmem>>, vector<1x8x8xbf16>
    %339 = vector.shape_cast %338 : vector<1x8x8xbf16> to vector<8x8xbf16>
    %cst_260 = arith.constant dense<0.000000e+00> : vector<128x8xf32>
    %340 = tpu.matmul %337, %339, %cst_260 {dimension_numbers = #tpu.dot_dimension_numbers<[1], [0], [0], [1], [0, 0, 1, 1], [], []>} : vector<128x8xbf16>, vector<8x8xbf16>, vector<128x8xf32> -> vector<128x8xf32>
    %341 = arith.addf %235, %340 : vector<128x8xf32>
    %c0_261 = arith.constant 0 : index
    %c0_262 = arith.constant 0 : index
    %c0_263 = arith.constant 0 : index
    %342 = vector.load %arg4[%c0_261, %c0_262, %c0_263] : memref<1x1x8xf32, #tpu.memory_space<vmem>>, vector<1x1x8xf32>
    %343 = vector.shape_cast %342 : vector<1x1x8xf32> to vector<1x8xf32>
    %344 = vector.broadcast %343 : vector<1x8xf32> to vector<128x8xf32>
    %345 = arith.addf %341, %344 : vector<128x8xf32>
    %c4_264 = arith.constant 4 : index
    %c0_265 = arith.constant 0 : index
    %c0_266 = arith.constant 0 : index
    %346 = vector.load %arg9[%c4_264, %c0_265, %c0_266] : memref<5x1x8xf32, #tpu.memory_space<vmem>>, vector<1x1x8xf32>
    %347 = vector.shape_cast %346 : vector<1x1x8xf32> to vector<1x8xf32>
    %348 = vector.broadcast %347 : vector<1x8xf32> to vector<128x8xf32>
    %349 = arith.mulf %345, %348 : vector<128x8xf32>
    %c4_267 = arith.constant 4 : index
    %c0_268 = arith.constant 0 : index
    %c0_269 = arith.constant 0 : index
    %350 = vector.load %arg10[%c4_267, %c0_268, %c0_269] : memref<5x1x8xf32, #tpu.memory_space<vmem>>, vector<1x1x8xf32>
    %351 = vector.shape_cast %350 : vector<1x1x8xf32> to vector<1x8xf32>
    %352 = vector.broadcast %351 : vector<1x8xf32> to vector<128x8xf32>
    %353 = arith.addf %349, %352 : vector<128x8xf32>
    %cst_270 = arith.constant 0.000000e+00 : f32
    %354 = vector.broadcast %cst_270 : f32 to vector<128x8xf32>
    %355 = arith.maximumf %353, %354 : vector<128x8xf32>
    %356 = arith.extf %7 : vector<128x8xbf16> to vector<128x8xf32>
    %357 = arith.addf %356, %355 : vector<128x8xf32>
    %c0_271 = arith.constant 0 : index
    %c0_272 = arith.constant 0 : index
    %358 = vector.load %arg8[%c0_271, %c0_272] : memref<32x8xbf16, #tpu.memory_space<vmem>>, vector<32x8xbf16>
    %359 = arith.truncf %357 : vector<128x8xf32> to vector<128x8xbf16>
    %cst_273 = arith.constant dense<0.000000e+00> : vector<32x128xf32>
    %360 = tpu.matmul %358, %359, %cst_273 {dimension_numbers = #tpu.dot_dimension_numbers<[1], [1], [0], [0], [0, 0, 1, 0], [], []>} : vector<32x8xbf16>, vector<128x8xbf16>, vector<32x128xf32> -> vector<32x128xf32>
    %c0_274 = arith.constant 0 : index
    %c0_275 = arith.constant 0 : index
    %c0_276 = arith.constant 0 : index
    %361 = vector.load %arg3[%c0_274, %c0_275, %c0_276] : memref<1x32x128xf32, #tpu.memory_space<vmem>>, vector<1x32x128xf32>
    %362 = vector.shape_cast %361 : vector<1x32x128xf32> to vector<32x128xf32>
    %c0_277 = arith.constant 0 : index
    %c0_278 = arith.constant 0 : index
    %363 = vector.load %arg11[%c0_277, %c0_278] : memref<32x1xf32, #tpu.memory_space<vmem>>, vector<32x1xf32>
    %364 = vector.broadcast %363 : vector<32x1xf32> to vector<32x128xf32>
    %365 = arith.mulf %360, %364 : vector<32x128xf32>
    %c0_279 = arith.constant 0 : index
    %c0_280 = arith.constant 0 : index
    %366 = vector.load %arg12[%c0_279, %c0_280] : memref<32x1xf32, #tpu.memory_space<vmem>>, vector<32x1xf32>
    %367 = vector.broadcast %366 : vector<32x1xf32> to vector<32x128xf32>
    %368 = arith.addf %365, %367 : vector<32x128xf32>
    %cst_281 = arith.constant 0.000000e+00 : f32
    %369 = vector.broadcast %cst_281 : f32 to vector<32x128xf32>
    %370 = arith.maximumf %368, %369 : vector<32x128xf32>
    %371 = arith.addf %362, %370 : vector<32x128xf32>
    %c0_282 = arith.constant 0 : index
    %c0_283 = arith.constant 0 : index
    %c0_284 = arith.constant 0 : index
    %372 = vector.load %arg13[%c0_282, %c0_283, %c0_284] : memref<1x32x128xf32, #tpu.memory_space<vmem>>, vector<1x32x128xf32>
    %373 = vector.shape_cast %372 : vector<1x32x128xf32> to vector<32x128xf32>
    %374 = vector.shape_cast %371 : vector<32x128xf32> to vector<1x32x128xf32>
    tpu.vector_store %arg13[%c0_282, %c0_283, %c0_284], %374 {strides = array<i32>} : memref<1x32x128xf32, #tpu.memory_space<vmem>>, vector<1x32x128xf32>,
    return
  }
  func.func @transform_0(%arg0: i32, %arg1: i32) -> (i32, i32, i32, i32) {
    %c0_i32 = arith.constant 0 : i32
    %c0_i32_0 = arith.constant 0 : i32
    %c0_i32_1 = arith.constant 0 : i32
    %c0_i32_2 = arith.constant 0 : i32
    return %arg0, %c0_i32, %c0_i32_0, %c0_i32_1 : i32, i32, i32, i32
  }
  func.func @transform_1(%arg0: i32, %arg1: i32) -> (i32, i32, i32) {
    %c0_i32 = arith.constant 0 : i32
    %c0_i32_0 = arith.constant 0 : i32
    return %arg0, %c0_i32, %arg1 : i32, i32, i32
  }
  func.func @transform_2(%arg0: i32, %arg1: i32) -> (i32, i32, i32) {
    %c0_i32 = arith.constant 0 : i32
    %c0_i32_0 = arith.constant 0 : i32
    %c0_i32_1 = arith.constant 0 : i32
    return %arg0, %c0_i32, %c0_i32_0 : i32, i32, i32
  }
  func.func @transform_3(%arg0: i32, %arg1: i32) -> (i32, i32) {
    %c0_i32 = arith.constant 0 : i32
    %c0_i32_0 = arith.constant 0 : i32
    %c0_i32_1 = arith.constant 0 : i32
    return %c0_i32, %c0_i32_0 : i32, i32
  }
  func.func @transform_4(%arg0: i32, %arg1: i32) -> (i32, i32, i32) {
    %c0_i32 = arith.constant 0 : i32
    %c0_i32_0 = arith.constant 0 : i32
    %c0_i32_1 = arith.constant 0 : i32
    %c0_i32_2 = arith.constant 0 : i32
    return %c0_i32, %c0_i32_0, %c0_i32_1 : i32, i32, i32
  }
  func.func @transform_5(%arg0: i32, %arg1: i32) -> (i32, i32, i32) {
    %c0_i32 = arith.constant 0 : i32
    %c0_i32_0 = arith.constant 0 : i32
    %c0_i32_1 = arith.constant 0 : i32
    %c0_i32_2 = arith.constant 0 : i32
    return %c0_i32, %c0_i32_0, %c0_i32_1 : i32, i32, i32
  }
  func.func @transform_6(%arg0: i32, %arg1: i32) -> (i32, i32) {
    %c0_i32 = arith.constant 0 : i32
    %c0_i32_0 = arith.constant 0 : i32
    %c0_i32_1 = arith.constant 0 : i32
    return %c0_i32, %c0_i32_0 : i32, i32
  }
  func.func @transform_7(%arg0: i32, %arg1: i32) -> (i32, i32, i32) {
    %c0_i32 = arith.constant 0 : i32
    %c0_i32_0 = arith.constant 0 : i32
    %c0_i32_1 = arith.constant 0 : i32
    %c0_i32_2 = arith.constant 0 : i32
    return %c0_i32, %c0_i32_0, %c0_i32_1 : i32, i32, i32
  }
  func.func @transform_8(%arg0: i32, %arg1: i32) -> (i32, i32, i32) {
    %c0_i32 = arith.constant 0 : i32
    %c0_i32_0 = arith.constant 0 : i32
    %c0_i32_1 = arith.constant 0 : i32
    %c0_i32_2 = arith.constant 0 : i32
    return %c0_i32, %c0_i32_0, %c0_i32_1 : i32, i32, i32
  }
  func.func @transform_9(%arg0: i32, %arg1: i32) -> (i32, i32) {
    %c0_i32 = arith.constant 0 : i32
    %c0_i32_0 = arith.constant 0 : i32
    %c0_i32_1 = arith.constant 0 : i32
    return %c0_i32, %c0_i32_0 : i32, i32
  }
  func.func @transform_10(%arg0: i32, %arg1: i32) -> (i32, i32) {
    %c0_i32 = arith.constant 0 : i32
    %c0_i32_0 = arith.constant 0 : i32
    %c0_i32_1 = arith.constant 0 : i32
    return %c0_i32, %c0_i32_0 : i32, i32
  }
  func.func @transform_11(%arg0: i32, %arg1: i32) -> (i32, i32, i32) {
    %c0_i32 = arith.constant 0 : i32
    %c0_i32_0 = arith.constant 0 : i32
    return %arg0, %c0_i32, %arg1 : i32, i32, i32
  }
}

</mosaic_0001>

<llo_original>
// kernel: bottleneck_aspp_forward.2
$region0: #{bottleneck_aspp_forward.2}
  #allocation0 [shape = 'u32[]', space=smem, size = 0x4, offset = 0x4, fixed_abs, tag = 'smem constant byte address 0x4 - core index']
  #allocation1 [shape = 'u32[144,128]{1,0:T(1,128)}', space=vmem, size = 0x12000, scoped, tag = 'internal scratch']
  %s0 = inlined_call_operand.hbm [shape: f32[2,32,256], index: 0, kind: input, shape index: {}]
  %s1 = inlined_call_operand.hbm [shape: bf16[8,32], index: 1, kind: input, shape index: {}]
  %s2 = inlined_call_operand.hbm [shape: f32[8,1], index: 2, kind: input, shape index: {}]
  %s3 = inlined_call_operand.hbm [shape: f32[8,1], index: 3, kind: input, shape index: {}]
  %s4 = inlined_call_operand.hbm [shape: bf16[2,8,256], index: 4, kind: output, shape index: {0}]
  %s5 = inlined_call_operand.hbm [shape: f32[2,8,1], index: 5, kind: output, shape index: {1}]
  %6 = xla_tuple %s4, %s5
  %s7 = sld [smem:[#allocation0]]
  $region77: #{bottleneck_aspp_forward.2} parent=0
    _
  %s9 = ssub.s32 1, %s7
  %s10 = scalar_select 0, %s9, %s7
  $region1: #{bottleneck_aspp_forward.2} parent=0
    #allocation2 [shape = 'u8[32768]{0}', space=vmem, size = 0x8000, scoped, tag = 'input window, operand 0']
    #allocation3 [shape = 's32[2]{0}', space=sflag, size = 0x8, scoped, tag = 'scoped memory for bottleneck_aspp_forward.2']
    #allocation4 [shape = 's32[2]{0}', space=sflag, size = 0x8, scoped, tag = 'scoped memory for bottleneck_aspp_forward.2']
    #allocation5 [shape = 'u8[2048]{0}', space=vmem, size = 0x800, scoped, tag = 'input window, operand 1, single buffered']
    #allocation6 [shape = 's32[1]{0}', space=sflag, size = 0x4, scoped, tag = 'scoped memory for bottleneck_aspp_forward.2']
    #allocation7 [shape = 'u8[4096]{0}', space=vmem, size = 0x1000, scoped, tag = 'input window, operand 2, single buffered']
    #allocation8 [shape = 'u8[4096]{0}', space=vmem, size = 0x1000, scoped, tag = 'input window, operand 3, single buffered']
    #allocation9 [shape = 's32[1]{0}', space=sflag, size = 0x4, scoped, tag = 'scoped memory for bottleneck_aspp_forward.2']
    #allocation10 [shape = 'u8[4096]{0}', space=vmem, size = 0x1000, scoped, tag = 'output window, operand 0']
    #allocation11 [shape = 'u8[8192]{0}', space=vmem, size = 0x2000, scoped, tag = 'output window, operand 1']
    #allocation12 [shape = 's32[2]{0}', space=sflag, size = 0x8, scoped, tag = 'scoped memory for bottleneck_aspp_forward.2']
    %11 = vsyncpa [#allocation3], 0
    %s12 = scalar_lea.sflag [#allocation3], 1
    %13 = vsyncpa %s12, 0
    %14 = vsyncpa [#allocation6], 0
    %15 = vsyncpa [#allocation9], 0
    %16 = vsyncpa [#allocation4], 0
    %s17 = scalar_lea.sflag [#allocation4], 1
    %18 = vsyncpa %s17, 0
    %19 = vsyncpa [#allocation12], 0
    %s20 = scalar_lea.sflag [#allocation12], 1
    %21 = vsyncpa %s20, 0
    loop: start=0, step=1, limit=6
    $region2: #{bottleneck_aspp_forward.2} parent=1 // loop_pre_header
      _
    $region3: #{bottleneck_aspp_forward.2} parent=1 // loop_header
      %s23 = sphi 0, %s27
      %p24 = scmp.ge.s32.totalorder %s23, 6
      %s30 = sphi 0, %s42
      %s31 = sphi 0, %s38
      %s32 = sphi 0, %s30
      %s33 = sphi 0, %s31
      %s34 = sphi 0, %s32
      %s35 = sphi 0, %s33
      %s47 = sphi 0, %s49
      %s50 = sphi 0, %s47
      %s51 = sphi 0, %s50
      %s67 = sphi 0, %s51
      %s71 = sphi 0, %s71
      %s73 = sphi 0, %s71
      %s74 = sphi 0, %s73
      %s88 = sphi 0, %s74
      %s92 = sphi 0, %s92
      %s94 = sphi 0, %s92
      %s95 = sphi 0, %s94
      %s109 = sphi 0, %s95
      %s113 = sphi 0, %s113
      %s115 = sphi 0, %s113
      %s116 = sphi 0, %s115
      %s130 = sphi 0, %s116
      %s138 = sphi 0, %s140
      %s141 = sphi 0, %s138
      %s142 = sphi 0, %s141
      %s158 = sphi 0, %s142
      %s164 = sphi 0, %s166
      %s167 = sphi 0, %s164
      %s168 = sphi 0, %s167
      %s184 = sphi 0, %s168
    $region4: #{bottleneck_aspp_forward.2} parent=1 // loop_header_branch
      %26 = sbr.rel (%p24) target = $region8
    $region5: #{bottleneck_aspp_forward.2} parent=1 // loop_body
      %s28 = ssub.s32 %s23, 1
      %s29 = ssub.s32 %s23, 2
      %s36 = sadd.s32 1, %s31
      %p37 = scmp.ge.s32.totalorder %s36, 2
      %s38 = scalar_select %p37, 0, %s36
      %s39 = sadd.s32 1, %s30
      %s40 = scalar_select %p37, %s39, %s30
      %p41 = scmp.ge.s32.totalorder %s40, 2
      %s42 = scalar_select %p41, 0, %s40
      %s43 = ssub.s32 %s30, %s42
      %s44 = ssub.s32 %s31, %s38
      %s45 = sor.u32 %s43, %s44
      %p46 = scmp.eq.s32.totalorder %s45, 0
      %s48 = sadd.s32 %s47, 1
      %s49 = scalar_select %p46, %s47, %s48
      %p52 = pneg %p46
      %p53 = scmp.eq.s32.totalorder %s23, 3
      %p54 = por %p52, %p53
      %p55 = scmp.ne.s32.totalorder %s47, %s50
      %p56 = scmp.eq.s32.totalorder %s23, 0
      %p57 = por %p55, %p56
      %p58 = scmp.ne.s32.totalorder %s47, %s50
      %p59 = scmp.eq.s32.totalorder %s28, 3
      %p60 = por %p58, %p59
      %p61 = scmp.ne.s32.totalorder %s50, %s51
      %p62 = scmp.eq.s32.totalorder %s28, 0
      %p63 = por %p61, %p62
      %p64 = scmp.ne.s32.totalorder %s50, %s51
      %p65 = scmp.eq.s32.totalorder %s29, 3
      %p66 = por %p64, %p65
      %p68 = scmp.ne.s32.totalorder %s51, %s67
      %p69 = scmp.eq.s32.totalorder %s29, 0
      %p70 = por %p68, %p69
      %s72 = sadd.s32 %s71, 1
      %p75 = scmp.eq.s32.totalorder %s23, 3
      %p76 = scmp.ne.s32.totalorder %s71, %s73
      %p77 = scmp.eq.s32.totalorder %s23, 0
      %p78 = por %p76, %p77
      %p79 = scmp.ne.s32.totalorder %s71, %s73
      %p80 = scmp.eq.s32.totalorder %s28, 3
      %p81 = por %p79, %p80
      %p82 = scmp.ne.s32.totalorder %s73, %s74
      %p83 = scmp.eq.s32.totalorder %s28, 0
      %p84 = por %p82, %p83
      %p85 = scmp.ne.s32.totalorder %s73, %s74
      %p86 = scmp.eq.s32.totalorder %s29, 3
      %p87 = por %p85, %p86
      %p89 = scmp.ne.s32.totalorder %s74, %s88
      %p90 = scmp.eq.s32.totalorder %s29, 0
      %p91 = por %p89, %p90
      %s93 = sadd.s32 %s92, 1
      %p96 = scmp.eq.s32.totalorder %s23, 3
      %p97 = scmp.ne.s32.totalorder %s92, %s94
      %p98 = scmp.eq.s32.totalorder %s23, 0
      %p99 = por %p97, %p98
      %p100 = scmp.ne.s32.totalorder %s92, %s94
      %p101 = scmp.eq.s32.totalorder %s28, 3
      %p102 = por %p100, %p101
      %p103 = scmp.ne.s32.totalorder %s94, %s95
      %p104 = scmp.eq.s32.totalorder %s28, 0
      %p105 = por %p103, %p104
      %p106 = scmp.ne.s32.totalorder %s94, %s95
      %p107 = scmp.eq.s32.totalorder %s29, 3
      %p108 = por %p106, %p107
      %p110 = scmp.ne.s32.totalorder %s95, %s109
      %p111 = scmp.eq.s32.totalorder %s29, 0
      %p112 = por %p110, %p111
      %s114 = sadd.s32 %s113, 1
      %p117 = scmp.eq.s32.totalorder %s23, 3
      %p118 = scmp.ne.s32.totalorder %s113, %s115
      %p119 = scmp.eq.s32.totalorder %s23, 0
      %p120 = por %p118, %p119
      %p121 = scmp.ne.s32.totalorder %s113, %s115
      %p122 = scmp.eq.s32.totalorder %s28, 3
      %p123 = por %p121, %p122
      %p124 = scmp.ne.s32.totalorder %s115, %s116
      %p125 = scmp.eq.s32.totalorder %s28, 0
      %p126 = por %p124, %p125
      %p127 = scmp.ne.s32.totalorder %s115, %s116
      %p128 = scmp.eq.s32.totalorder %s29, 3
      %p129 = por %p127, %p128
      %p131 = scmp.ne.s32.totalorder %s116, %s130
      %p132 = scmp.eq.s32.totalorder %s29, 0
      %p133 = por %p131, %p132
      %s134 = ssub.s32 %s30, %s42
      %s135 = ssub.s32 %s31, %s38
      %s136 = sor.u32 %s134, %s135
      %p137 = scmp.eq.s32.totalorder %s136, 0
      %s139 = sadd.s32 %s138, 1
      %s140 = scalar_select %p137, %s138, %s139
      %p143 = pneg %p137
      %p144 = scmp.eq.s32.totalorder %s23, 3
      %p145 = por %p143, %p144
      %p146 = scmp.ne.s32.totalorder %s138, %s141
      %p147 = scmp.eq.s32.totalorder %s23, 0
      %p148 = por %p146, %p147
      %p149 = scmp.ne.s32.totalorder %s138, %s141
      %p150 = scmp.eq.s32.totalorder %s28, 3
      %p151 = por %p149, %p150
      %p152 = scmp.ne.s32.totalorder %s141, %s142
      %p153 = scmp.eq.s32.totalorder %s28, 0
      %p154 = por %p152, %p153
      %p155 = scmp.ne.s32.totalorder %s141, %s142
      %p156 = scmp.eq.s32.totalorder %s29, 3
      %p157 = por %p155, %p156
      %p159 = scmp.ne.s32.totalorder %s142, %s158
      %p160 = scmp.eq.s32.totalorder %s29, 0
      %p161 = por %p159, %p160
      %s162 = ssub.s32 %s30, %s42
      %p163 = scmp.eq.s32.totalorder %s162, 0
      %s165 = sadd.s32 %s164, 1
      %s166 = scalar_select %p163, %s164, %s165
      %p169 = pneg %p163
      %p170 = scmp.eq.s32.totalorder %s23, 3
      %p171 = por %p169, %p170
      %p172 = scmp.ne.s32.totalorder %s164, %s167
      %p173 = scmp.eq.s32.totalorder %s23, 0
      %p174 = por %p172, %p173
      %p175 = scmp.ne.s32.totalorder %s164, %s167
      %p176 = scmp.eq.s32.totalorder %s28, 3
      %p177 = por %p175, %p176
      %p178 = scmp.ne.s32.totalorder %s167, %s168
      %p179 = scmp.eq.s32.totalorder %s28, 0
      %p180 = por %p178, %p179
      %p181 = scmp.ne.s32.totalorder %s167, %s168
      %p182 = scmp.eq.s32.totalorder %s29, 3
      %p183 = por %p181, %p182
      %p185 = scmp.ne.s32.totalorder %s168, %s184
      %p186 = scmp.eq.s32.totalorder %s29, 0
      %p187 = por %p185, %p186
      %p188 = scmp.le.s32.totalorder 1, %s23
      %p189 = scmp.lt.s32.totalorder %s23, 5
      %p190 = pnand %p188, %p189
      %p191 = pneg %p190
      // Predicated region
      $region9: #{bottleneck_aspp_forward.2} parent=5 // pred_check
        _
      $region10: #{bottleneck_aspp_forward.2} parent=5 // pred_check_branch
        %193 = sbr.rel (%p190) target = $region12
      $region11: #{bottleneck_aspp_forward.2} parent=5 // pred_region
        %s194 = ssub.s32 %s23, 1
        // Predicated region
        $region13: #{bottleneck_aspp_forward.2} parent=11 // pred_check
          %p195 = pneg %p84
        $region14: #{bottleneck_aspp_forward.2} parent=11 // pred_check_branch
          %197 = sbr.rel (%p195) target = $region16
        $region15: #{bottleneck_aspp_forward.2} parent=11 // pred_region
          %s199 = ssub.s32 64, 64
          %200 = vsyncadd [#allocation6], %s199
          %s202 = sshll.u32 [#allocation5], 4
          %s203 = int_to_ptr.vmem [resolvable:$true] %s202
          %205 = dma.hbm_to_vmem [thread:$0]  %s1, 64, %s203, [#allocation6]
        $region16: #{bottleneck_aspp_forward.2} parent=11 // pred_fallthru
          _
        // Predicated region
        $region17: #{bottleneck_aspp_forward.2} parent=11 // pred_check
          %p206 = pneg %p105
        $region18: #{bottleneck_aspp_forward.2} parent=11 // pred_check_branch
          %208 = sbr.rel (%p206) target = $region20
        $region19: #{bottleneck_aspp_forward.2} parent=11 // pred_region
          %s210 = ssub.s32 128, 128
          %211 = vsyncadd [#allocation6], %s210
          %s213 = sshll.u32 [#allocation7], 4
          %s214 = int_to_ptr.vmem [resolvable:$true] %s213
          %216 = dma.hbm_to_vmem [thread:$0]  %s2, 128, %s214, [#allocation6]
        $region20: #{bottleneck_aspp_forward.2} parent=11 // pred_fallthru
          _
        // Predicated region
        $region21: #{bottleneck_aspp_forward.2} parent=11 // pred_check
          %p217 = pneg %p126
        $region22: #{bottleneck_aspp_forward.2} parent=11 // pred_check_branch
          %219 = sbr.rel (%p217) target = $region24
        $region23: #{bottleneck_aspp_forward.2} parent=11 // pred_region
          %s221 = ssub.s32 128, 128
          %222 = vsyncadd [#allocation9], %s221
          %s224 = sshll.u32 [#allocation8], 4
          %s225 = int_to_ptr.vmem [resolvable:$true] %s224
          %227 = dma.hbm_to_vmem [thread:$0]  %s3, 128, %s225, [#allocation9]
        $region24: #{bottleneck_aspp_forward.2} parent=11 // pred_fallthru
          _
      $region12: #{bottleneck_aspp_forward.2} parent=5 // pred_fallthru
        _
      %p228 = scmp.lt.s32.totalorder %s23, 4
      // Predicated region
      $region25: #{bottleneck_aspp_forward.2} parent=5 // pred_check
        %p229 = pneg %p228
      $region26: #{bottleneck_aspp_forward.2} parent=5 // pred_check_branch
        %231 = sbr.rel (%p229) target = $region28
      $region27: #{bottleneck_aspp_forward.2} parent=5 // pred_region
        // Predicated region
        $region29: #{bottleneck_aspp_forward.2} parent=27 // pred_check
          %p232 = pneg %p57
        $region30: #{bottleneck_aspp_forward.2} parent=27 // pred_check_branch
          %234 = sbr.rel (%p232) target = $region32
        $region31: #{bottleneck_aspp_forward.2} parent=27 // pred_region
          %s235 = sand.u32 %s47, 1
          %s236 = scalar_lea.sflag [#allocation3], %s235
          %s237 = sand.u32 %s47, 1
          %s238 = smul.addr %s237, 32
          %s239 = scalar_lea.vmem [#allocation2], %s238
          %s241 = ssub.s32 512, 512
          %242 = vsyncadd %s236, %s241
          %s243 = smul.addr %s30, 8
          %s244 = sadd.s32 %s31, %s243
          %s245 = smul.addr %s244, 128
          %s246 = scalar_lea.hbm %s0, %s245
          %s247 = sshll.u32 %s239, 4
          %s248 = int_to_ptr.vmem [resolvable:$true] %s247
          %253 = dma.hbm_to_vmem [thread:$0]  %s246, 512, %s248, %s236, 256, 128, 8
        $region32: #{bottleneck_aspp_forward.2} parent=27 // pred_fallthru
          _
      $region28: #{bottleneck_aspp_forward.2} parent=5 // pred_fallthru
        _
      %p254 = scmp.le.s32.totalorder 1, %s23
      %p255 = scmp.lt.s32.totalorder %s23, 5
      %p256 = pnand %p254, %p255
      %p257 = pneg %p256
      // Predicated region
      $region33: #{bottleneck_aspp_forward.2} parent=5 // pred_check
        _
      $region34: #{bottleneck_aspp_forward.2} parent=5 // pred_check_branch
        %259 = sbr.rel (%p256) target = $region36
      $region35: #{bottleneck_aspp_forward.2} parent=5 // pred_region
        %s260 = ssub.s32 %s23, 1
        %s261 = sand.u32 %s50, 1
        %s262 = scalar_lea.sflag [#allocation3], %s261
        %s263 = sand.u32 %s50, 1
        %s264 = smul.addr %s263, 32
        %s265 = scalar_lea.vmem [#allocation2], %s264
        // Predicated region
        $region37: #{bottleneck_aspp_forward.2} parent=35 // pred_check
          %p266 = pneg %p63
        $region38: #{bottleneck_aspp_forward.2} parent=35 // pred_check_branch
          %268 = sbr.rel (%p266) target = $region40
        $region39: #{bottleneck_aspp_forward.2} parent=35 // pred_region
          %269 = dma.done %s262, 512
        $region40: #{bottleneck_aspp_forward.2} parent=35 // pred_fallthru
          _
        // Predicated region
        $region41: #{bottleneck_aspp_forward.2} parent=35 // pred_check
          %p270 = pneg %p84
        $region42: #{bottleneck_aspp_forward.2} parent=35 // pred_check_branch
          %272 = sbr.rel (%p270) target = $region44
        $region43: #{bottleneck_aspp_forward.2} parent=35 // pred_region
          %273 = dma.done [#allocation6], 64
        $region44: #{bottleneck_aspp_forward.2} parent=35 // pred_fallthru
          _
        // Predicated region
        $region45: #{bottleneck_aspp_forward.2} parent=35 // pred_check
          %p274 = pneg %p105
        $region46: #{bottleneck_aspp_forward.2} parent=35 // pred_check_branch
          %276 = sbr.rel (%p274) target = $region48
        $region47: #{bottleneck_aspp_forward.2} parent=35 // pred_region
          %277 = dma.done [#allocation6], 128
        $region48: #{bottleneck_aspp_forward.2} parent=35 // pred_fallthru
          _
        // Predicated region
        $region49: #{bottleneck_aspp_forward.2} parent=35 // pred_check
          %p278 = pneg %p126
        $region50: #{bottleneck_aspp_forward.2} parent=35 // pred_check_branch
          %280 = sbr.rel (%p278) target = $region52
        $region51: #{bottleneck_aspp_forward.2} parent=35 // pred_region
          %281 = dma.done [#allocation9], 128
        $region52: #{bottleneck_aspp_forward.2} parent=35 // pred_fallthru
          _
        %s282 = sand.u32 %s50, 1
        %s283 = scalar_lea.sflag [#allocation3], %s282
        %s284 = sand.u32 %s50, 1
        %s285 = smul.addr %s284, 32
        %s286 = scalar_lea.vmem [#allocation2], %s285
        %p287 = pneg %p63
        %p288 = pneg %p60
        %p289 = pneg %p84
        %p290 = pneg %p81
        %p291 = pneg %p105
        %p292 = pneg %p102
        %p293 = pneg %p126
        %p294 = pneg %p123
        %p295 = pneg %p154
        %p296 = pneg %p151
        %s297 = sand.u32 %s141, 1
        %s298 = scalar_lea.sflag [#allocation4], %s297
        %s299 = sand.u32 %s141, 1
        %s300 = smul.addr %s299, 4
        %s301 = scalar_lea.vmem [#allocation10], %s300
        %p302 = pneg %p180
        %p303 = pneg %p177
        %s304 = sand.u32 %s167, 1
        %s305 = scalar_lea.sflag [#allocation12], %s304
        %s306 = sand.u32 %s167, 1
        %s307 = smul.addr %s306, 8
        %s308 = scalar_lea.vmem [#allocation11], %s307
        %p310 = scmp.eq.s32.totalorder %s33, 0
        // Predicated region
        $region53: #{bottleneck_aspp_forward.2} parent=35 // pred_check
          %p311 = pneg %p310
        $region54: #{bottleneck_aspp_forward.2} parent=35 // pred_check_branch
          %313 = sbr.rel (%p311) target = $region56
        $region55: #{bottleneck_aspp_forward.2} parent=35 // pred_region
          %vm314 = vcmask 7168
          %315 = vst.msk [vmem:[%s308] sm:$0xff] %vm314, 0.0
        $region56: #{bottleneck_aspp_forward.2} parent=35 // pred_fallthru
          _
        %v316 = vld [vmem:[%s265] sm:$0xff]
        %v317 = vld [vmem:[%s265 + $0x8] sm:$0xff]
        %v318 = vld [vmem:[%s265 + $0x10] sm:$0xff]
        %v319 = vld [vmem:[%s265 + $0x18] sm:$0xff]
        %v320 = vpack.c.bf16 %v317, %v316
        %v321 = vpack.c.bf16 %v319, %v318
        %v322 = vld [vmem:[#allocation5] sm:$0xf]
        %vm323 = vcmask 261120
        %v325 = vsel %vm323, %v322, 0
        %327 = vmatprep.subr.bf16.mxu0 0
        %328 = vmatpush1.bf16.msra.mxu0 %v320
        %329 = vmatprep.subr.bf16.mxu0 0
        %330 = vmatpush1.bf16.msra.mxu0 %v321
        %331 = vmatprep.subr.bf16.mxu0 0
        %332 = vmatpush1.bf16.msra.mxu0 0
        %333 = vmatprep.subr.bf16.mxu0 0
        %334 = vmatpush1.bf16.msra.mxu0 0
        %335 = vmatprep.subr.bf16.mxu0 0
        %336 = vmatpush1.bf16.msra.mxu0 0
        %337 = vmatprep.subr.bf16.mxu0 0
        %338 = vmatpush1.bf16.msra.mxu0 0
        %339 = vmatprep.subr.bf16.mxu0 0
        %340 = vmatpush1.bf16.msra.mxu0 0
        %341 = vmatprep.subr.bf16.mxu0 0
        %342 = vmatpush1.bf16.msra.mxu0 0
        %343 = vmatprep.subr.bf16.mxu0 0
        %344 = vmatpush1.bf16.msra.mxu0 0
        %345 = vmatprep.subr.bf16.mxu0 0
        %346 = vmatpush1.bf16.msra.mxu0 0
        %347 = vmatprep.subr.bf16.mxu0 0
        %348 = vmatpush1.bf16.msra.mxu0 0
        %349 = vmatprep.subr.bf16.mxu0 0
        %350 = vmatpush1.bf16.msra.mxu0 0
        %351 = vmatprep.subr.bf16.mxu0 0
        %352 = vmatpush1.bf16.msra.mxu0 0
        %353 = vmatprep.subr.bf16.mxu0 0
        %354 = vmatpush1.bf16.msra.mxu0 0
        %355 = vmatprep.subr.bf16.mxu0 0
        %356 = vmatpush1.bf16.msra.mxu0 0
        %357 = vmatprep.subr.bf16.mxu0 0
        %358 = vmatpush1.bf16.msra.mxu0 0
        %359 = vmatprep.mubr.bf16.mxu0 0
        %360 = vmatmul.mubr.bf16.gmra.mrb[0].mxu0 %v325
        %v361 = vpop.f32.mrb[0].mxu0
        %v362 = vadd.f32 0.0, %v361
        %v363 = vpop.f32.mrb[0].mxu0
        %v364 = vpop.f32.mrb[0].mxu0
        %v365 = vpop.f32.mrb[0].mxu0
        %366 = vdwg.mxu0
        %v367 = vld [vmem:[#allocation7] sm:$0xff]
        %369 = vset.pattern.permute.xlu0 0
        %370 = vperm.xlu0 %369, %v367
        %v371 = vpop.permute.xlu0 %370
        %v373 = vmul.f32 %v362, %v371
        %v374 = vld [vmem:[#allocation8] sm:$0xff]
        %376 = vset.pattern.permute.xlu0 0
        %377 = vperm.xlu0 %376, %v374
        %v378 = vpop.permute.xlu0 %377
        %v380 = vadd.f32 %v373, %v378
        %v381 = vmax.f32 %v380, 0.0
        %v382 = vld [vmem:[%s308] sm:$0xff]
        %383 = vadd.xlane.f32.xlu0 %v381
        %v384 = vpop.xlane.xlu0 %383
        %v385 = vadd.f32 %v382, %v384
        %vm386 = vcmask 7168
        %387 = vst.msk [vmem:[%s308] sm:$0xff] %vm386, %v385
        %v388 = vpack.c.bf16 %v381, %v381
        %389 = vst [vmem:[%s301] sm:$0xf] %v388
        %s390 = sand.u32 %s141, 1
        %s391 = scalar_lea.sflag [#allocation4], %s390
        %s392 = sand.u32 %s141, 1
        %s393 = smul.addr %s392, 4
        %s394 = scalar_lea.vmem [#allocation10], %s393
        %s395 = sand.u32 %s167, 1
        %s396 = scalar_lea.sflag [#allocation12], %s395
        %s397 = sand.u32 %s167, 1
        %s398 = smul.addr %s397, 8
        %s399 = scalar_lea.vmem [#allocation11], %s398
        // Predicated region
        $region57: #{bottleneck_aspp_forward.2} parent=35 // pred_check
          %p400 = pneg %p151
        $region58: #{bottleneck_aspp_forward.2} parent=35 // pred_check_branch
          %402 = sbr.rel (%p400) target = $region60
        $region59: #{bottleneck_aspp_forward.2} parent=35 // pred_region
          %s404 = ssub.s32 64, 64
          %405 = vsyncadd %s391, %s404
          %s406 = smul.addr %s32, 2
          %s407 = sadd.s32 %s33, %s406
          %s408 = smul.addr %s407, 64
          %s409 = scalar_lea.hbm %s4, %s408
          %s411 = sshll.u32 %s394, 4
          %s412 = int_to_ptr.vmem [resolvable:$true] %s411
          %414 = dma.vmem_to_hbm [thread:$0]  %s412, 64, %s409, %s391
        $region60: #{bottleneck_aspp_forward.2} parent=35 // pred_fallthru
          _
        // Predicated region
        $region61: #{bottleneck_aspp_forward.2} parent=35 // pred_check
          %p415 = pneg %p177
        $region62: #{bottleneck_aspp_forward.2} parent=35 // pred_check_branch
          %417 = sbr.rel (%p415) target = $region64
        $region63: #{bottleneck_aspp_forward.2} parent=35 // pred_region
          %s419 = ssub.s32 128, 128
          %420 = vsyncadd %s396, %s419
          %s421 = smul.addr %s32, 128
          %s422 = scalar_lea.hbm %s5, %s421
          %s424 = sshll.u32 %s399, 4
          %s425 = int_to_ptr.vmem [resolvable:$true] %s424
          %427 = dma.vmem_to_hbm [thread:$0]  %s425, 128, %s422, %s396
        $region64: #{bottleneck_aspp_forward.2} parent=35 // pred_fallthru
          _
      $region36: #{bottleneck_aspp_forward.2} parent=5 // pred_fallthru
        _
      %p428 = scmp.le.s32.totalorder 2, %s23
      // Predicated region
      $region65: #{bottleneck_aspp_forward.2} parent=5 // pred_check
        %p429 = pneg %p428
      $region66: #{bottleneck_aspp_forward.2} parent=5 // pred_check_branch
        %431 = sbr.rel (%p429) target = $region68
      $region67: #{bottleneck_aspp_forward.2} parent=5 // pred_region
        %s432 = ssub.s32 %s23, 2
        // Predicated region
        $region69: #{bottleneck_aspp_forward.2} parent=67 // pred_check
          %p433 = pneg %p157
        $region70: #{bottleneck_aspp_forward.2} parent=67 // pred_check_branch
          %435 = sbr.rel (%p433) target = $region72
        $region71: #{bottleneck_aspp_forward.2} parent=67 // pred_region
          %s436 = sand.u32 %s142, 1
          %s437 = scalar_lea.sflag [#allocation4], %s436
          %s438 = sand.u32 %s142, 1
          %s439 = smul.addr %s438, 4
          %s440 = scalar_lea.vmem [#allocation10], %s439
          %441 = dma.done %s437, 64
        $region72: #{bottleneck_aspp_forward.2} parent=67 // pred_fallthru
          _
        // Predicated region
        $region73: #{bottleneck_aspp_forward.2} parent=67 // pred_check
          %p442 = pneg %p183
        $region74: #{bottleneck_aspp_forward.2} parent=67 // pred_check_branch
          %444 = sbr.rel (%p442) target = $region76
        $region75: #{bottleneck_aspp_forward.2} parent=67 // pred_region
          %s445 = sand.u32 %s168, 1
          %s446 = scalar_lea.sflag [#allocation12], %s445
          %s447 = sand.u32 %s168, 1
          %s448 = smul.addr %s447, 8
          %s449 = scalar_lea.vmem [#allocation11], %s448
          %450 = dma.done %s446, 128
        $region76: #{bottleneck_aspp_forward.2} parent=67 // pred_fallthru
          _
      $region68: #{bottleneck_aspp_forward.2} parent=5 // pred_fallthru
        _
    $region6: #{bottleneck_aspp_forward.2} parent=1 // loop_footer
      %s27 = sadd.s32 1, %s23
    $region7: #{bottleneck_aspp_forward.2} parent=1 // loop_footer_branch
      %22 = sbr.rel target = $region3
    $region8: #{bottleneck_aspp_forward.2} parent=1 // loop_exit
      _
    %451 = vsyncpa [#allocation3], 1
    %s452 = scalar_lea.sflag [#allocation3], 1
    %453 = vsyncpa %s452, 1
    %454 = vsyncpa [#allocation6], 1
    %455 = vsyncpa [#allocation9], 1
    %456 = vsyncpa [#allocation4], 1
    %s457 = scalar_lea.sflag [#allocation4], 1
    %458 = vsyncpa %s457, 1
    %459 = vsyncpa [#allocation12], 1
    %s460 = scalar_lea.sflag [#allocation12], 1
    %461 = vsyncpa %s460, 1

// kernel: bottleneck_aspp_forward.3
$region0: #{bottleneck_aspp_forward.3}
  #allocation0 [shape = 'u32[]', space=smem, size = 0x4, offset = 0x4, fixed_abs, tag = 'smem constant byte address 0x4 - core index']
  #allocation1 [shape = 'u32[144,128]{1,0:T(1,128)}', space=vmem, size = 0x12000, scoped, tag = 'internal scratch']
  %s0 = inlined_call_operand.hbm [shape: bf16[2,52,52,8], index: 0, kind: input, shape index: {}]
  %s1 = inlined_call_operand.hbm [shape: f32[2,32,256], index: 1, kind: input, shape index: {}]
  %s2 = inlined_call_operand.hbm [shape: f32[2,1,8], index: 2, kind: input, shape index: {}]
  %s3 = inlined_call_operand.hbm [shape: bf16[8,8], index: 3, kind: input, shape index: {}]
  %s4 = inlined_call_operand.hbm [shape: bf16[27,8,8], index: 4, kind: input, shape index: {}]
  %s5 = inlined_call_operand.hbm [shape: bf16[4,8,8], index: 5, kind: input, shape index: {}]
  %s6 = inlined_call_operand.hbm [shape: bf16[32,8], index: 6, kind: input, shape index: {}]
  %s7 = inlined_call_operand.hbm [shape: f32[5,1,8], index: 7, kind: input, shape index: {}]
  %s8 = inlined_call_operand.hbm [shape: f32[5,1,8], index: 8, kind: input, shape index: {}]
  %s9 = inlined_call_operand.hbm [shape: f32[32,1], index: 9, kind: input, shape index: {}]
  %s10 = inlined_call_operand.hbm [shape: f32[32,1], index: 10, kind: input, shape index: {}]
  %s11 = inlined_call_operand.hbm [shape: f32[2,32,256], index: 11, kind: output, shape index: {}]
  %s12 = sld [smem:[#allocation0]]
  $region121: #{bottleneck_aspp_forward.3} parent=0
    _
  %s14 = ssub.s32 1, %s12
  %s15 = scalar_select 0, %s14, %s12
  $region1: #{bottleneck_aspp_forward.3} parent=0
    #allocation2 [shape = 'u8[1490944]{0}', space=vmem, size = 0x16c000, scoped, tag = 'input window, operand 0']
    #allocation3 [shape = 's32[2]{0}', space=sflag, size = 0x8, scoped, tag = 'scoped memory for bottleneck_aspp_forward.3']
    #allocation4 [shape = 's32[2]{0}', space=sflag, size = 0x8, scoped, tag = 'scoped memory for bottleneck_aspp_forward.3']
    #allocation5 [shape = 'u8[32768]{0}', space=vmem, size = 0x8000, scoped, tag = 'input window, operand 1']
    #allocation6 [shape = 's32[2]{0}', space=sflag, size = 0x8, scoped, tag = 'scoped memory for bottleneck_aspp_forward.3']
    #allocation7 [shape = 'u8[1024]{0}', space=vmem, size = 0x400, scoped, tag = 'input window, operand 2']
    #allocation8 [shape = 'u8[2048]{0}', space=vmem, size = 0x800, scoped, tag = 'input window, operand 3, single buffered']
    #allocation9 [shape = 's32[1]{0}', space=sflag, size = 0x4, scoped, tag = 'scoped memory for bottleneck_aspp_forward.3']
    #allocation10 [shape = 'u8[55296]{0}', space=vmem, size = 0xd800, scoped, tag = 'input window, operand 4, single buffered']
    #allocation11 [shape = 'u8[8192]{0}', space=vmem, size = 0x2000, scoped, tag = 'input window, operand 5, single buffered']
    #allocation12 [shape = 's32[1]{0}', space=sflag, size = 0x4, scoped, tag = 'scoped memory for bottleneck_aspp_forward.3']
    #allocation13 [shape = 'u8[8192]{0}', space=vmem, size = 0x2000, scoped, tag = 'input window, operand 6, single buffered']
    #allocation14 [shape = 'u8[2560]{0}', space=vmem, size = 0xc00, scoped, tag = 'input window, operand 7, single buffered']
    #allocation15 [shape = 's32[1]{0}', space=sflag, size = 0x4, scoped, tag = 'scoped memory for bottleneck_aspp_forward.3']
    #allocation16 [shape = 'u8[2560]{0}', space=vmem, size = 0xc00, scoped, tag = 'input window, operand 8, single buffered']
    #allocation17 [shape = 'u8[16384]{0}', space=vmem, size = 0x4000, scoped, tag = 'input window, operand 9, single buffered']
    #allocation18 [shape = 's32[1]{0}', space=sflag, size = 0x4, scoped, tag = 'scoped memory for bottleneck_aspp_forward.3']
    #allocation19 [shape = 'u8[16384]{0}', space=vmem, size = 0x4000, scoped, tag = 'input window, operand 10, single buffered']
    #allocation20 [shape = 'u8[32768]{0}', space=vmem, size = 0x8000, scoped, tag = 'output window, operand 0']
    %16 = vsyncpa [#allocation3], 0
    %s17 = scalar_lea.sflag [#allocation3], 1
    %18 = vsyncpa %s17, 0
    %19 = vsyncpa [#allocation6], 0
    %s20 = scalar_lea.sflag [#allocation6], 1
    %21 = vsyncpa %s20, 0
    %22 = vsyncpa [#allocation9], 0
    %23 = vsyncpa [#allocation12], 0
    %24 = vsyncpa [#allocation15], 0
    %25 = vsyncpa [#allocation18], 0
    %26 = vsyncpa [#allocation4], 0
    %s27 = scalar_lea.sflag [#allocation4], 1
    %28 = vsyncpa %s27, 0
    loop: start=0, step=1, limit=6
    $region2: #{bottleneck_aspp_forward.3} parent=1 // loop_pre_header
      _
    $region3: #{bottleneck_aspp_forward.3} parent=1 // loop_header
      %s30 = sphi 0, %s34
      %p31 = scmp.ge.s32.totalorder %s30, 6
      %s37 = sphi 0, %s49
      %s38 = sphi 0, %s45
      %s39 = sphi 0, %s37
      %s40 = sphi 0, %s38
      %s41 = sphi 0, %s39
      %s42 = sphi 0, %s40
      %s52 = sphi 0, %s54
      %s55 = sphi 0, %s52
      %s56 = sphi 0, %s55
      %s72 = sphi 0, %s56
      %s80 = sphi 0, %s82
      %s83 = sphi 0, %s80
      %s84 = sphi 0, %s83
      %s100 = sphi 0, %s84
      %s106 = sphi 0, %s108
      %s109 = sphi 0, %s106
      %s110 = sphi 0, %s109
      %s126 = sphi 0, %s110
      %s130 = sphi 0, %s130
      %s132 = sphi 0, %s130
      %s133 = sphi 0, %s132
      %s147 = sphi 0, %s133
      %s151 = sphi 0, %s151
      %s153 = sphi 0, %s151
      %s154 = sphi 0, %s153
      %s168 = sphi 0, %s154
      %s172 = sphi 0, %s172
      %s174 = sphi 0, %s172
      %s175 = sphi 0, %s174
      %s189 = sphi 0, %s175
      %s193 = sphi 0, %s193
      %s195 = sphi 0, %s193
      %s196 = sphi 0, %s195
      %s210 = sphi 0, %s196
      %s214 = sphi 0, %s214
      %s216 = sphi 0, %s214
      %s217 = sphi 0, %s216
      %s231 = sphi 0, %s217
      %s235 = sphi 0, %s235
      %s237 = sphi 0, %s235
      %s238 = sphi 0, %s237
      %s252 = sphi 0, %s238
      %s256 = sphi 0, %s256
      %s258 = sphi 0, %s256
      %s259 = sphi 0, %s258
      %s273 = sphi 0, %s259
      %s277 = sphi 0, %s277
      %s279 = sphi 0, %s277
      %s280 = sphi 0, %s279
      %s294 = sphi 0, %s280
      %s302 = sphi 0, %s304
      %s305 = sphi 0, %s302
      %s306 = sphi 0, %s305
      %s322 = sphi 0, %s306
    $region4: #{bottleneck_aspp_forward.3} parent=1 // loop_header_branch
      %33 = sbr.rel (%p31) target = $region8
    $region5: #{bottleneck_aspp_forward.3} parent=1 // loop_body
      %s35 = ssub.s32 %s30, 1
      %s36 = ssub.s32 %s30, 2
      %s43 = sadd.s32 1, %s38
      %p44 = scmp.ge.s32.totalorder %s43, 2
      %s45 = scalar_select %p44, 0, %s43
      %s46 = sadd.s32 1, %s37
      %s47 = scalar_select %p44, %s46, %s37
      %p48 = scmp.ge.s32.totalorder %s47, 2
      %s49 = scalar_select %p48, 0, %s47
      %s50 = ssub.s32 %s37, %s49
      %p51 = scmp.eq.s32.totalorder %s50, 0
      %s53 = sadd.s32 %s52, 1
      %s54 = scalar_select %p51, %s52, %s53
      %p57 = pneg %p51
      %p58 = scmp.eq.s32.totalorder %s30, 3
      %p59 = por %p57, %p58
      %p60 = scmp.ne.s32.totalorder %s52, %s55
      %p61 = scmp.eq.s32.totalorder %s30, 0
      %p62 = por %p60, %p61
      %p63 = scmp.ne.s32.totalorder %s52, %s55
      %p64 = scmp.eq.s32.totalorder %s35, 3
      %p65 = por %p63, %p64
      %p66 = scmp.ne.s32.totalorder %s55, %s56
      %p67 = scmp.eq.s32.totalorder %s35, 0
      %p68 = por %p66, %p67
      %p69 = scmp.ne.s32.totalorder %s55, %s56
      %p70 = scmp.eq.s32.totalorder %s36, 3
      %p71 = por %p69, %p70
      %p73 = scmp.ne.s32.totalorder %s56, %s72
      %p74 = scmp.eq.s32.totalorder %s36, 0
      %p75 = por %p73, %p74
      %s76 = ssub.s32 %s37, %s49
      %s77 = ssub.s32 %s38, %s45
      %s78 = sor.u32 %s76, %s77
      %p79 = scmp.eq.s32.totalorder %s78, 0
      %s81 = sadd.s32 %s80, 1
      %s82 = scalar_select %p79, %s80, %s81
      %p85 = pneg %p79
      %p86 = scmp.eq.s32.totalorder %s30, 3
      %p87 = por %p85, %p86
      %p88 = scmp.ne.s32.totalorder %s80, %s83
      %p89 = scmp.eq.s32.totalorder %s30, 0
      %p90 = por %p88, %p89
      %p91 = scmp.ne.s32.totalorder %s80, %s83
      %p92 = scmp.eq.s32.totalorder %s35, 3
      %p93 = por %p91, %p92
      %p94 = scmp.ne.s32.totalorder %s83, %s84
      %p95 = scmp.eq.s32.totalorder %s35, 0
      %p96 = por %p94, %p95
      %p97 = scmp.ne.s32.totalorder %s83, %s84
      %p98 = scmp.eq.s32.totalorder %s36, 3
      %p99 = por %p97, %p98
      %p101 = scmp.ne.s32.totalorder %s84, %s100
      %p102 = scmp.eq.s32.totalorder %s36, 0
      %p103 = por %p101, %p102
      %s104 = ssub.s32 %s37, %s49
      %p105 = scmp.eq.s32.totalorder %s104, 0
      %s107 = sadd.s32 %s106, 1
      %s108 = scalar_select %p105, %s106, %s107
      %p111 = pneg %p105
      %p112 = scmp.eq.s32.totalorder %s30, 3
      %p113 = por %p111, %p112
      %p114 = scmp.ne.s32.totalorder %s106, %s109
      %p115 = scmp.eq.s32.totalorder %s30, 0
      %p116 = por %p114, %p115
      %p117 = scmp.ne.s32.totalorder %s106, %s109
      %p118 = scmp.eq.s32.totalorder %s35, 3
      %p119 = por %p117, %p118
      %p120 = scmp.ne.s32.totalorder %s109, %s110
      %p121 = scmp.eq.s32.totalorder %s35, 0
      %p122 = por %p120, %p121
      %p123 = scmp.ne.s32.totalorder %s109, %s110
      %p124 = scmp.eq.s32.totalorder %s36, 3
      %p125 = por %p123, %p124
      %p127 = scmp.ne.s32.totalorder %s110, %s126
      %p128 = scmp.eq.s32.totalorder %s36, 0
      %p129 = por %p127, %p128
      %s131 = sadd.s32 %s130, 1
      %p134 = scmp.eq.s32.totalorder %s30, 3
      %p135 = scmp.ne.s32.totalorder %s130, %s132
      %p136 = scmp.eq.s32.totalorder %s30, 0
      %p137 = por %p135, %p136
      %p138 = scmp.ne.s32.totalorder %s130, %s132
      %p139 = scmp.eq.s32.totalorder %s35, 3
      %p140 = por %p138, %p139
      %p141 = scmp.ne.s32.totalorder %s132, %s133
      %p142 = scmp.eq.s32.totalorder %s35, 0
      %p143 = por %p141, %p142
      %p144 = scmp.ne.s32.totalorder %s132, %s133
      %p145 = scmp.eq.s32.totalorder %s36, 3
      %p146 = por %p144, %p145
      %p148 = scmp.ne.s32.totalorder %s133, %s147
      %p149 = scmp.eq.s32.totalorder %s36, 0
      %p150 = por %p148, %p149
      %s152 = sadd.s32 %s151, 1
      %p155 = scmp.eq.s32.totalorder %s30, 3
      %p156 = scmp.ne.s32.totalorder %s151, %s153
      %p157 = scmp.eq.s32.totalorder %s30, 0
      %p158 = por %p156, %p157
      %p159 = scmp.ne.s32.totalorder %s151, %s153
      %p160 = scmp.eq.s32.totalorder %s35, 3
      %p161 = por %p159, %p160
      %p162 = scmp.ne.s32.totalorder %s153, %s154
      %p163 = scmp.eq.s32.totalorder %s35, 0
      %p164 = por %p162, %p163
      %p165 = scmp.ne.s32.totalorder %s153, %s154
      %p166 = scmp.eq.s32.totalorder %s36, 3
      %p167 = por %p165, %p166
      %p169 = scmp.ne.s32.totalorder %s154, %s168
      %p170 = scmp.eq.s32.totalorder %s36, 0
      %p171 = por %p169, %p170
      %s173 = sadd.s32 %s172, 1
      %p176 = scmp.eq.s32.totalorder %s30, 3
      %p177 = scmp.ne.s32.totalorder %s172, %s174
      %p178 = scmp.eq.s32.totalorder %s30, 0
      %p179 = por %p177, %p178
      %p180 = scmp.ne.s32.totalorder %s172, %s174
      %p181 = scmp.eq.s32.totalorder %s35, 3
      %p182 = por %p180, %p181
      %p183 = scmp.ne.s32.totalorder %s174, %s175
      %p184 = scmp.eq.s32.totalorder %s35, 0
      %p185 = por %p183, %p184
      %p186 = scmp.ne.s32.totalorder %s174, %s175
      %p187 = scmp.eq.s32.totalorder %s36, 3
      %p188 = por %p186, %p187
      %p190 = scmp.ne.s32.totalorder %s175, %s189
      %p191 = scmp.eq.s32.totalorder %s36, 0
      %p192 = por %p190, %p191
      %s194 = sadd.s32 %s193, 1
      %p197 = scmp.eq.s32.totalorder %s30, 3
      %p198 = scmp.ne.s32.totalorder %s193, %s195
      %p199 = scmp.eq.s32.totalorder %s30, 0
      %p200 = por %p198, %p199
      %p201 = scmp.ne.s32.totalorder %s193, %s195
      %p202 = scmp.eq.s32.totalorder %s35, 3
      %p203 = por %p201, %p202
      %p204 = scmp.ne.s32.totalorder %s195, %s196
      %p205 = scmp.eq.s32.totalorder %s35, 0
      %p206 = por %p204, %p205
      %p207 = scmp.ne.s32.totalorder %s195, %s196
      %p208 = scmp.eq.s32.totalorder %s36, 3
      %p209 = por %p207, %p208
      %p211 = scmp.ne.s32.totalorder %s196, %s210
      %p212 = scmp.eq.s32.totalorder %s36, 0
      %p213 = por %p211, %p212
      %s215 = sadd.s32 %s214, 1
      %p218 = scmp.eq.s32.totalorder %s30, 3
      %p219 = scmp.ne.s32.totalorder %s214, %s216
      %p220 = scmp.eq.s32.totalorder %s30, 0
      %p221 = por %p219, %p220
      %p222 = scmp.ne.s32.totalorder %s214, %s216
      %p223 = scmp.eq.s32.totalorder %s35, 3
      %p224 = por %p222, %p223
      %p225 = scmp.ne.s32.totalorder %s216, %s217
      %p226 = scmp.eq.s32.totalorder %s35, 0
      %p227 = por %p225, %p226
      %p228 = scmp.ne.s32.totalorder %s216, %s217
      %p229 = scmp.eq.s32.totalorder %s36, 3
      %p230 = por %p228, %p229
      %p232 = scmp.ne.s32.totalorder %s217, %s231
      %p233 = scmp.eq.s32.totalorder %s36, 0
      %p234 = por %p232, %p233
      %s236 = sadd.s32 %s235, 1
      %p239 = scmp.eq.s32.totalorder %s30, 3
      %p240 = scmp.ne.s32.totalorder %s235, %s237
      %p241 = scmp.eq.s32.totalorder %s30, 0
      %p242 = por %p240, %p241
      %p243 = scmp.ne.s32.totalorder %s235, %s237
      %p244 = scmp.eq.s32.totalorder %s35, 3
      %p245 = por %p243, %p244
      %p246 = scmp.ne.s32.totalorder %s237, %s238
      %p247 = scmp.eq.s32.totalorder %s35, 0
      %p248 = por %p246, %p247
      %p249 = scmp.ne.s32.totalorder %s237, %s238
      %p250 = scmp.eq.s32.totalorder %s36, 3
      %p251 = por %p249, %p250
      %p253 = scmp.ne.s32.totalorder %s238, %s252
      %p254 = scmp.eq.s32.totalorder %s36, 0
      %p255 = por %p253, %p254
      %s257 = sadd.s32 %s256, 1
      %p260 = scmp.eq.s32.totalorder %s30, 3
      %p261 = scmp.ne.s32.totalorder %s256, %s258
      %p262 = scmp.eq.s32.totalorder %s30, 0
      %p263 = por %p261, %p262
      %p264 = scmp.ne.s32.totalorder %s256, %s258
      %p265 = scmp.eq.s32.totalorder %s35, 3
      %p266 = por %p264, %p265
      %p267 = scmp.ne.s32.totalorder %s258, %s259
      %p268 = scmp.eq.s32.totalorder %s35, 0
      %p269 = por %p267, %p268
      %p270 = scmp.ne.s32.totalorder %s258, %s259
      %p271 = scmp.eq.s32.totalorder %s36, 3
      %p272 = por %p270, %p271
      %p274 = scmp.ne.s32.totalorder %s259, %s273
      %p275 = scmp.eq.s32.totalorder %s36, 0
      %p276 = por %p274, %p275
      %s278 = sadd.s32 %s277, 1
      %p281 = scmp.eq.s32.totalorder %s30, 3
      %p282 = scmp.ne.s32.totalorder %s277, %s279
      %p283 = scmp.eq.s32.totalorder %s30, 0
      %p284 = por %p282, %p283
      %p285 = scmp.ne.s32.totalorder %s277, %s279
      %p286 = scmp.eq.s32.totalorder %s35, 3
      %p287 = por %p285, %p286
      %p288 = scmp.ne.s32.totalorder %s279, %s280
      %p289 = scmp.eq.s32.totalorder %s35, 0
      %p290 = por %p288, %p289
      %p291 = scmp.ne.s32.totalorder %s279, %s280
      %p292 = scmp.eq.s32.totalorder %s36, 3
      %p293 = por %p291, %p292
      %p295 = scmp.ne.s32.totalorder %s280, %s294
      %p296 = scmp.eq.s32.totalorder %s36, 0
      %p297 = por %p295, %p296
      %s298 = ssub.s32 %s37, %s49
      %s299 = ssub.s32 %s38, %s45
      %s300 = sor.u32 %s298, %s299
      %p301 = scmp.eq.s32.totalorder %s300, 0
      %s303 = sadd.s32 %s302, 1
      %s304 = scalar_select %p301, %s302, %s303
      %p307 = pneg %p301
      %p308 = scmp.eq.s32.totalorder %s30, 3
      %p309 = por %p307, %p308
      %p310 = scmp.ne.s32.totalorder %s302, %s305
      %p311 = scmp.eq.s32.totalorder %s30, 0
      %p312 = por %p310, %p311
      %p313 = scmp.ne.s32.totalorder %s302, %s305
      %p314 = scmp.eq.s32.totalorder %s35, 3
      %p315 = por %p313, %p314
      %p316 = scmp.ne.s32.totalorder %s305, %s306
      %p317 = scmp.eq.s32.totalorder %s35, 0
      %p318 = por %p316, %p317
      %p319 = scmp.ne.s32.totalorder %s305, %s306
      %p320 = scmp.eq.s32.totalorder %s36, 3
      %p321 = por %p319, %p320
      %p323 = scmp.ne.s32.totalorder %s306, %s322
      %p324 = scmp.eq.s32.totalorder %s36, 0
      %p325 = por %p323, %p324
      %p326 = scmp.le.s32.totalorder 1, %s30
      %p327 = scmp.lt.s32.totalorder %s30, 5
      %p328 = pnand %p326, %p327
      %p329 = pneg %p328
      // Predicated region
      $region9: #{bottleneck_aspp_forward.3} parent=5 // pred_check
        _
      $region10: #{bottleneck_aspp_forward.3} parent=5 // pred_check_branch
        %331 = sbr.rel (%p328) target = $region12
      $region11: #{bottleneck_aspp_forward.3} parent=5 // pred_region
        %s332 = ssub.s32 %s30, 1
        // Predicated region
        $region13: #{bottleneck_aspp_forward.3} parent=11 // pred_check
          %p333 = pneg %p143
        $region14: #{bottleneck_aspp_forward.3} parent=11 // pred_check_branch
          %335 = sbr.rel (%p333) target = $region16
        $region15: #{bottleneck_aspp_forward.3} parent=11 // pred_region
          %s337 = ssub.s32 64, 64
          %338 = vsyncadd [#allocation9], %s337
          %s340 = sshll.u32 [#allocation8], 4
          %s341 = int_to_ptr.vmem [resolvable:$true] %s340
          %343 = dma.hbm_to_vmem [thread:$0]  %s3, 64, %s341, [#allocation9]
        $region16: #{bottleneck_aspp_forward.3} parent=11 // pred_fallthru
          _
        // Predicated region
        $region17: #{bottleneck_aspp_forward.3} parent=11 // pred_check
          %p344 = pneg %p164
        $region18: #{bottleneck_aspp_forward.3} parent=11 // pred_check_branch
          %346 = sbr.rel (%p344) target = $region20
        $region19: #{bottleneck_aspp_forward.3} parent=11 // pred_region
          %s348 = ssub.s32 1728, 1728
          %349 = vsyncadd [#allocation9], %s348
          %s350 = sshll.u32 [#allocation10], 4
          %s351 = int_to_ptr.vmem [resolvable:$true] %s350
          %356 = dma.hbm_to_vmem [thread:$0]  %s4, 1728, %s351, [#allocation9], 64, 64, 4
        $region20: #{bottleneck_aspp_forward.3} parent=11 // pred_fallthru
          _
        // Predicated region
        $region21: #{bottleneck_aspp_forward.3} parent=11 // pred_check
          %p357 = pneg %p185
        $region22: #{bottleneck_aspp_forward.3} parent=11 // pred_check_branch
          %359 = sbr.rel (%p357) target = $region24
        $region23: #{bottleneck_aspp_forward.3} parent=11 // pred_region
          %s361 = ssub.s32 256, 256
          %362 = vsyncadd [#allocation12], %s361
          %s363 = sshll.u32 [#allocation11], 4
          %s364 = int_to_ptr.vmem [resolvable:$true] %s363
          %369 = dma.hbm_to_vmem [thread:$0]  %s5, 256, %s364, [#allocation12], 64, 64, 4
        $region24: #{bottleneck_aspp_forward.3} parent=11 // pred_fallthru
          _
        // Predicated region
        $region25: #{bottleneck_aspp_forward.3} parent=11 // pred_check
          %p370 = pneg %p206
        $region26: #{bottleneck_aspp_forward.3} parent=11 // pred_check_branch
          %372 = sbr.rel (%p370) target = $region28
        $region27: #{bottleneck_aspp_forward.3} parent=11 // pred_region
          %s374 = ssub.s32 256, 256
          %375 = vsyncadd [#allocation12], %s374
          %s376 = sshll.u32 [#allocation13], 4
          %s377 = int_to_ptr.vmem [resolvable:$true] %s376
          %382 = dma.hbm_to_vmem [thread:$0]  %s6, 256, %s377, [#allocation12], 64, 64, 4
        $region28: #{bottleneck_aspp_forward.3} parent=11 // pred_fallthru
          _
        // Predicated region
        $region29: #{bottleneck_aspp_forward.3} parent=11 // pred_check
          %p383 = pneg %p227
        $region30: #{bottleneck_aspp_forward.3} parent=11 // pred_check_branch
          %385 = sbr.rel (%p383) target = $region32
        $region31: #{bottleneck_aspp_forward.3} parent=11 // pred_region
          %s387 = ssub.s32 80, 80
          %388 = vsyncadd [#allocation15], %s387
          %s389 = sshll.u32 [#allocation14], 4
          %s390 = int_to_ptr.vmem [resolvable:$true] %s389
          %395 = dma.hbm_to_vmem [thread:$0]  %s7, 80, %s390, [#allocation15], 16, 16, 1
        $region32: #{bottleneck_aspp_forward.3} parent=11 // pred_fallthru
          _
        // Predicated region
        $region33: #{bottleneck_aspp_forward.3} parent=11 // pred_check
          %p396 = pneg %p248
        $region34: #{bottleneck_aspp_forward.3} parent=11 // pred_check_branch
          %398 = sbr.rel (%p396) target = $region36
        $region35: #{bottleneck_aspp_forward.3} parent=11 // pred_region
          %s400 = ssub.s32 80, 80
          %401 = vsyncadd [#allocation15], %s400
          %s402 = sshll.u32 [#allocation16], 4
          %s403 = int_to_ptr.vmem [resolvable:$true] %s402
          %408 = dma.hbm_to_vmem [thread:$0]  %s8, 80, %s403, [#allocation15], 16, 16, 1
        $region36: #{bottleneck_aspp_forward.3} parent=11 // pred_fallthru
          _
        // Predicated region
        $region37: #{bottleneck_aspp_forward.3} parent=11 // pred_check
          %p409 = pneg %p269
        $region38: #{bottleneck_aspp_forward.3} parent=11 // pred_check_branch
          %411 = sbr.rel (%p409) target = $region40
        $region39: #{bottleneck_aspp_forward.3} parent=11 // pred_region
          %s413 = ssub.s32 512, 512
          %414 = vsyncadd [#allocation18], %s413
          %s415 = sshll.u32 [#allocation17], 4
          %s416 = int_to_ptr.vmem [resolvable:$true] %s415
          %421 = dma.hbm_to_vmem [thread:$0]  %s9, 512, %s416, [#allocation18], 128, 128, 8
        $region40: #{bottleneck_aspp_forward.3} parent=11 // pred_fallthru
          _
        // Predicated region
        $region41: #{bottleneck_aspp_forward.3} parent=11 // pred_check
          %p422 = pneg %p290
        $region42: #{bottleneck_aspp_forward.3} parent=11 // pred_check_branch
          %424 = sbr.rel (%p422) target = $region44
        $region43: #{bottleneck_aspp_forward.3} parent=11 // pred_region
          %s426 = ssub.s32 512, 512
          %427 = vsyncadd [#allocation18], %s426
          %s428 = sshll.u32 [#allocation19], 4
          %s429 = int_to_ptr.vmem [resolvable:$true] %s428
          %434 = dma.hbm_to_vmem [thread:$0]  %s10, 512, %s429, [#allocation18], 128, 128, 8
        $region44: #{bottleneck_aspp_forward.3} parent=11 // pred_fallthru
          _
      $region12: #{bottleneck_aspp_forward.3} parent=5 // pred_fallthru
        _
      %p435 = scmp.lt.s32.totalorder %s30, 4
      // Predicated region
      $region45: #{bottleneck_aspp_forward.3} parent=5 // pred_check
        %p436 = pneg %p435
      $region46: #{bottleneck_aspp_forward.3} parent=5 // pred_check_branch
        %438 = sbr.rel (%p436) target = $region48
      $region47: #{bottleneck_aspp_forward.3} parent=5 // pred_region
        // Predicated region
        $region49: #{bottleneck_aspp_forward.3} parent=47 // pred_check
          %p439 = pneg %p62
        $region50: #{bottleneck_aspp_forward.3} parent=47 // pred_check_branch
          %441 = sbr.rel (%p439) target = $region52
        $region51: #{bottleneck_aspp_forward.3} parent=47 // pred_region
          %s442 = sand.u32 %s52, 1
          %s443 = scalar_lea.sflag [#allocation3], %s442
          %s444 = sand.u32 %s52, 1
          %s445 = smul.addr %s444, 1456
          %s446 = scalar_lea.vmem [#allocation2], %s445
          %s448 = ssub.s32 23296, 23296
          %449 = vsyncadd %s443, %s448
          %s450 = smul.addr %s37, 364
          %s451 = smul.addr %s450, 64
          %s452 = scalar_lea.hbm %s0, %s451
          %s453 = sshll.u32 %s446, 4
          %s454 = int_to_ptr.vmem [resolvable:$true] %s453
          %459 = dma.hbm_to_vmem [thread:$0]  %s452, 23296, %s454, %s443, 64, 64, 4
        $region52: #{bottleneck_aspp_forward.3} parent=47 // pred_fallthru
          _
        // Predicated region
        $region53: #{bottleneck_aspp_forward.3} parent=47 // pred_check
          %p460 = pneg %p90
        $region54: #{bottleneck_aspp_forward.3} parent=47 // pred_check_branch
          %462 = sbr.rel (%p460) target = $region56
        $region55: #{bottleneck_aspp_forward.3} parent=47 // pred_region
          %s463 = sand.u32 %s30, 1
          %s464 = scalar_lea.sflag [#allocation6], %s463
          %s465 = sand.u32 %s80, 1
          %s466 = smul.addr %s465, 32
          %s467 = scalar_lea.vmem [#allocation5], %s466
          %s469 = ssub.s32 512, 512
          %470 = vsyncadd %s464, %s469
          %s471 = smul.addr %s37, 8
          %s472 = sadd.s32 %s38, %s471
          %s473 = smul.addr %s472, 128
          %s474 = scalar_lea.hbm %s1, %s473
          %s475 = sshll.u32 %s467, 4
          %s476 = int_to_ptr.vmem [resolvable:$true] %s475
          %481 = dma.hbm_to_vmem [thread:$0]  %s474, 512, %s476, %s464, 256, 128, 8
        $region56: #{bottleneck_aspp_forward.3} parent=47 // pred_fallthru
          _
        // Predicated region
        $region57: #{bottleneck_aspp_forward.3} parent=47 // pred_check
          %p482 = pneg %p116
        $region58: #{bottleneck_aspp_forward.3} parent=47 // pred_check_branch
          %484 = sbr.rel (%p482) target = $region60
        $region59: #{bottleneck_aspp_forward.3} parent=47 // pred_region
          %s485 = sand.u32 %s30, 1
          %s486 = scalar_lea.sflag [#allocation6], %s485
          %s487 = sand.u32 %s106, 1
          %s488 = scalar_lea.vmem [#allocation7], %s487
          %s490 = ssub.s32 16, 16
          %491 = vsyncadd %s486, %s490
          %s492 = smul.addr %s37, 16
          %s493 = scalar_lea.hbm %s2, %s492
          %s495 = sshll.u32 %s488, 4
          %s496 = int_to_ptr.vmem [resolvable:$true] %s495
          %498 = dma.hbm_to_vmem [thread:$0]  %s493, 16, %s496, %s486
        $region60: #{bottleneck_aspp_forward.3} parent=47 // pred_fallthru
          _
      $region48: #{bottleneck_aspp_forward.3} parent=5 // pred_fallthru
        _
      %p499 = scmp.le.s32.totalorder 1, %s30
      %p500 = scmp.lt.s32.totalorder %s30, 5
      %p501 = pnand %p499, %p500
      %p502 = pneg %p501
      // Predicated region
      $region61: #{bottleneck_aspp_forward.3} parent=5 // pred_check
        _
      $region62: #{bottleneck_aspp_forward.3} parent=5 // pred_check_branch
        %504 = sbr.rel (%p501) target = $region64
      $region63: #{bottleneck_aspp_forward.3} parent=5 // pred_region
        %s505 = ssub.s32 %s30, 1
        %s506 = sand.u32 %s55, 1
        %s507 = scalar_lea.sflag [#allocation3], %s506
        %s508 = sand.u32 %s55, 1
        %s509 = smul.addr %s508, 1456
        %s510 = scalar_lea.vmem [#allocation2], %s509
        // Predicated region
        $region65: #{bottleneck_aspp_forward.3} parent=63 // pred_check
          %p511 = pneg %p68
        $region66: #{bottleneck_aspp_forward.3} parent=63 // pred_check_branch
          %513 = sbr.rel (%p511) target = $region68
        $region67: #{bottleneck_aspp_forward.3} parent=63 // pred_region
          %514 = dma.done %s507, 23296
        $region68: #{bottleneck_aspp_forward.3} parent=63 // pred_fallthru
          _
        %s515 = sand.u32 %s35, 1
        %s516 = scalar_lea.sflag [#allocation6], %s515
        %s517 = sand.u32 %s83, 1
        %s518 = smul.addr %s517, 32
        %s519 = scalar_lea.vmem [#allocation5], %s518
        // Predicated region
        $region69: #{bottleneck_aspp_forward.3} parent=63 // pred_check
          %p520 = pneg %p96
        $region70: #{bottleneck_aspp_forward.3} parent=63 // pred_check_branch
          %522 = sbr.rel (%p520) target = $region72
        $region71: #{bottleneck_aspp_forward.3} parent=63 // pred_region
          %523 = dma.done %s516, 512
        $region72: #{bottleneck_aspp_forward.3} parent=63 // pred_fallthru
          _
        %s524 = sand.u32 %s35, 1
        %s525 = scalar_lea.sflag [#allocation6], %s524
        %s526 = sand.u32 %s109, 1
        %s527 = scalar_lea.vmem [#allocation7], %s526
        // Predicated region
        $region73: #{bottleneck_aspp_forward.3} parent=63 // pred_check
          %p528 = pneg %p122
        $region74: #{bottleneck_aspp_forward.3} parent=63 // pred_check_branch
          %530 = sbr.rel (%p528) target = $region76
        $region75: #{bottleneck_aspp_forward.3} parent=63 // pred_region
          %531 = dma.done %s525, 16
        $region76: #{bottleneck_aspp_forward.3} parent=63 // pred_fallthru
          _
        // Predicated region
        $region77: #{bottleneck_aspp_forward.3} parent=63 // pred_check
          %p532 = pneg %p143
        $region78: #{bottleneck_aspp_forward.3} parent=63 // pred_check_branch
          %534 = sbr.rel (%p532) target = $region80
        $region79: #{bottleneck_aspp_forward.3} parent=63 // pred_region
          %535 = dma.done [#allocation9], 64
        $region80: #{bottleneck_aspp_forward.3} parent=63 // pred_fallthru
          _
        // Predicated region
        $region81: #{bottleneck_aspp_forward.3} parent=63 // pred_check
          %p536 = pneg %p164
        $region82: #{bottleneck_aspp_forward.3} parent=63 // pred_check_branch
          %538 = sbr.rel (%p536) target = $region84
        $region83: #{bottleneck_aspp_forward.3} parent=63 // pred_region
          %539 = dma.done [#allocation9], 1728
        $region84: #{bottleneck_aspp_forward.3} parent=63 // pred_fallthru
          _
        // Predicated region
        $region85: #{bottleneck_aspp_forward.3} parent=63 // pred_check
          %p540 = pneg %p185
        $region86: #{bottleneck_aspp_forward.3} parent=63 // pred_check_branch
          %542 = sbr.rel (%p540) target = $region88
        $region87: #{bottleneck_aspp_forward.3} parent=63 // pred_region
          %543 = dma.done [#allocation12], 256
        $region88: #{bottleneck_aspp_forward.3} parent=63 // pred_fallthru
          _
        // Predicated region
        $region89: #{bottleneck_aspp_forward.3} parent=63 // pred_check
          %p544 = pneg %p206
        $region90: #{bottleneck_aspp_forward.3} parent=63 // pred_check_branch
          %546 = sbr.rel (%p544) target = $region92
        $region91: #{bottleneck_aspp_forward.3} parent=63 // pred_region
          %547 = dma.done [#allocation12], 256
        $region92: #{bottleneck_aspp_forward.3} parent=63 // pred_fallthru
          _
        // Predicated region
        $region93: #{bottleneck_aspp_forward.3} parent=63 // pred_check
          %p548 = pneg %p227
        $region94: #{bottleneck_aspp_forward.3} parent=63 // pred_check_branch
          %550 = sbr.rel (%p548) target = $region96
        $region95: #{bottleneck_aspp_forward.3} parent=63 // pred_region
          %551 = dma.done [#allocation15], 80
        $region96: #{bottleneck_aspp_forward.3} parent=63 // pred_fallthru
          _
        // Predicated region
        $region97: #{bottleneck_aspp_forward.3} parent=63 // pred_check
          %p552 = pneg %p248
        $region98: #{bottleneck_aspp_forward.3} parent=63 // pred_check_branch
          %554 = sbr.rel (%p552) target = $region100
        $region99: #{bottleneck_aspp_forward.3} parent=63 // pred_region
          %555 = dma.done [#allocation15], 80
        $region100: #{bottleneck_aspp_forward.3} parent=63 // pred_fallthru
          _
        // Predicated region
        $region101: #{bottleneck_aspp_forward.3} parent=63 // pred_check
          %p556 = pneg %p269
        $region102: #{bottleneck_aspp_forward.3} parent=63 // pred_check_branch
          %558 = sbr.rel (%p556) target = $region104
        $region103: #{bottleneck_aspp_forward.3} parent=63 // pred_region
          %559 = dma.done [#allocation18], 512
        $region104: #{bottleneck_aspp_forward.3} parent=63 // pred_fallthru
          _
        // Predicated region
        $region105: #{bottleneck_aspp_forward.3} parent=63 // pred_check
          %p560 = pneg %p290
        $region106: #{bottleneck_aspp_forward.3} parent=63 // pred_check_branch
          %562 = sbr.rel (%p560) target = $region108
        $region107: #{bottleneck_aspp_forward.3} parent=63 // pred_region
          %563 = dma.done [#allocation18], 512
        $region108: #{bottleneck_aspp_forward.3} parent=63 // pred_fallthru
          _
        %s564 = sand.u32 %s55, 1
        %s565 = scalar_lea.sflag [#allocation3], %s564
        %s566 = sand.u32 %s55, 1
        %s567 = smul.addr %s566, 1456
        %s568 = scalar_lea.vmem [#allocation2], %s567
        %p569 = pneg %p68
        %p570 = pneg %p65
        %s571 = sand.u32 %s35, 1
        %s572 = scalar_lea.sflag [#allocation6], %s571
        %s573 = sand.u32 %s83, 1
        %s574 = smul.addr %s573, 32
        %s575 = scalar_lea.vmem [#allocation5], %s574
        %p576 = pneg %p96
        %p577 = pneg %p93
        %s578 = sand.u32 %s35, 1
        %s579 = scalar_lea.sflag [#allocation6], %s578
        %s580 = sand.u32 %s109, 1
        %s581 = scalar_lea.vmem [#allocation7], %s580
        %p582 = pneg %p122
        %p583 = pneg %p119
        %p584 = pneg %p143
        %p585 = pneg %p140
        %p586 = pneg %p164
        %p587 = pneg %p161
        %p588 = pneg %p185
        %p589 = pneg %p182
        %p590 = pneg %p206
        %p591 = pneg %p203
        %p592 = pneg %p227
        %p593 = pneg %p224
        %p594 = pneg %p248
        %p595 = pneg %p245
        %p596 = pneg %p269
        %p597 = pneg %p266
        %p598 = pneg %p290
        %p599 = pneg %p287
        %p600 = pneg %p318
        %p601 = pneg %p315
        %s602 = sand.u32 %s305, 1
        %s603 = scalar_lea.sflag [#allocation4], %s602
        %s604 = sand.u32 %s305, 1
        %s605 = smul.addr %s604, 32
        %s606 = scalar_lea.vmem [#allocation20], %s605
        %s608 = smul.u32 %s40, 8
        %s609 = sadd.s32 %s608, 18
        %s610 = smul.u32 %s609, 7
        %s611 = smul.addr %s610, 4
        %s612 = scalar_lea.vmem %s510, %s611 [#allocation2]
        %v613 = vld [vmem:[%s612 + $0x8] sm:$0xe]
        %v614 = vld [vmem:[%s612 + $0xc] sm:$0xf]
        %v615 = vld [vmem:[%s612 + $0x10] sm:$0x1]
        %v616 = vld [vmem:[%s612 + $0x24] sm:$0xe]
        %v617 = vld [vmem:[%s612 + $0x28] sm:$0xf]
        %v618 = vld [vmem:[%s612 + $0x2c] sm:$0x1]
        %v619 = vld [vmem:[%s612 + $0x40] sm:$0xe]
        %v620 = vld [vmem:[%s612 + $0x44] sm:$0xf]
        %v621 = vld [vmem:[%s612 + $0x48] sm:$0x1]
        %v622 = vld [vmem:[%s612 + $0x5c] sm:$0xe]
        %v623 = vld [vmem:[%s612 + $0x60] sm:$0xf]
        %v624 = vld [vmem:[%s612 + $0x64] sm:$0x1]
        %v625 = vld [vmem:[%s612 + $0x78] sm:$0xe]
        %v626 = vld [vmem:[%s612 + $0x7c] sm:$0xf]
        %v627 = vld [vmem:[%s612 + $0x80] sm:$0x1]
        %v628 = vld [vmem:[%s612 + $0x94] sm:$0xe]
        %v629 = vld [vmem:[%s612 + $0x98] sm:$0xf]
        %v630 = vld [vmem:[%s612 + $0x9c] sm:$0x1]
        %v631 = vld [vmem:[%s612 + $0xb0] sm:$0xe]
        %v632 = vld [vmem:[%s612 + $0xb4] sm:$0xf]
        %v633 = vld [vmem:[%s612 + $0xb8] sm:$0x1]
        %v634 = vld [vmem:[%s612 + $0xcc] sm:$0xe]
        %v635 = vld [vmem:[%s612 + $0xd0] sm:$0xf]
        %v636 = vld [vmem:[%s612 + $0xd4] sm:$0x1]
        %vm661 = vcmask 1042432
        %vm662 = vcmask 1046532
        %vm663 = vmor %vm661, %vm662
        %v664 = vrot.slane %v613, 5
        %v665 = vrot.slane %v664, 4
        %v666 = vrot.slane %v614, 5
        %v667 = vsel %vm663, %v665, %v666
        %v668 = vrot.slane %v666, 4
        %v669 = vrot.slane %v615, 5
        %v670 = vsel %vm663, %v668, %v669
        %v671 = vrot.slane %v616, 5
        %v672 = vrot.slane %v671, 4
        %v673 = vrot.slane %v617, 5
        %v674 = vsel %vm663, %v672, %v673
        %v675 = vrot.slane %v673, 4
        %v676 = vrot.slane %v618, 5
        %v677 = vsel %vm663, %v675, %v676
        %v678 = vrot.slane %v619, 5
        %v679 = vrot.slane %v678, 4
        %v680 = vrot.slane %v620, 5
        %v681 = vsel %vm663, %v679, %v680
        %v682 = vrot.slane %v680, 4
        %v683 = vrot.slane %v621, 5
        %v684 = vsel %vm663, %v682, %v683
        %v685 = vrot.slane %v622, 5
        %v686 = vrot.slane %v685, 4
        %v687 = vrot.slane %v623, 5
        %v688 = vsel %vm663, %v686, %v687
        %v689 = vrot.slane %v687, 4
        %v690 = vrot.slane %v624, 5
        %v691 = vsel %vm663, %v689, %v690
        %v692 = vrot.slane %v625, 5
        %v693 = vrot.slane %v692, 4
        %v694 = vrot.slane %v626, 5
        %v695 = vsel %vm663, %v693, %v694
        %v696 = vrot.slane %v694, 4
        %v697 = vrot.slane %v627, 5
        %v698 = vsel %vm663, %v696, %v697
        %v699 = vrot.slane %v628, 5
        %v700 = vrot.slane %v699, 4
        %v701 = vrot.slane %v629, 5
        %v702 = vsel %vm663, %v700, %v701
        %v703 = vrot.slane %v701, 4
        %v704 = vrot.slane %v630, 5
        %v705 = vsel %vm663, %v703, %v704
        %v706 = vrot.slane %v631, 5
        %v707 = vrot.slane %v706, 4
        %v708 = vrot.slane %v632, 5
        %v709 = vsel %vm663, %v707, %v708
        %v710 = vrot.slane %v708, 4
        %v711 = vrot.slane %v633, 5
        %v712 = vsel %vm663, %v710, %v711
        %v713 = vrot.slane %v634, 5
        %v714 = vrot.slane %v713, 4
        %v715 = vrot.slane %v635, 5
        %v716 = vsel %vm663, %v714, %v715
        %v717 = vrot.slane %v715, 4
        %v718 = vrot.slane %v636, 5
        %v719 = vsel %vm663, %v717, %v718
        %v736 = vld [vmem:[#allocation8] sm:$0xf]
        %v737 = vunpack.c.l.b16 %v667
        %v738 = vunpack.c.l.b16 %v670
        %v739 = vunpack.c.l.b16 %v674
        %v740 = vunpack.c.l.b16 %v677
        %v741 = vunpack.c.l.b16 %v681
        %v742 = vunpack.c.l.b16 %v684
        %v743 = vunpack.c.l.b16 %v688
        %v744 = vunpack.c.l.b16 %v691
        %v745 = vunpack.c.l.b16 %v695
        %v746 = vunpack.c.l.b16 %v698
        %v747 = vunpack.c.l.b16 %v702
        %v748 = vunpack.c.l.b16 %v705
        %v749 = vunpack.c.l.b16 %v709
        %v750 = vunpack.c.l.b16 %v712
        %v751 = vunpack.c.l.b16 %v716
        %v752 = vunpack.c.l.b16 %v719
        %v753 = vpack.c.b16 %v738, %v737
        %v754 = vpack.c.b16 %v740, %v739
        %v755 = vpack.c.b16 %v742, %v741
        %v756 = vpack.c.b16 %v744, %v743
        %v757 = vpack.c.b16 %v746, %v745
        %v758 = vpack.c.b16 %v748, %v747
        %v759 = vpack.c.b16 %v750, %v749
        %v760 = vpack.c.b16 %v752, %v751
        %vm761 = vcmask 64512
        %v763 = vsel %vm761, %v753, 0
        %v766 = vsel %vm761, %v754, 0
        %v769 = vsel %vm761, %v755, 0
        %v772 = vsel %vm761, %v756, 0
        %v775 = vsel %vm761, %v757, 0
        %v778 = vsel %vm761, %v758, 0
        %v781 = vsel %vm761, %v759, 0
        %v784 = vsel %vm761, %v760, 0
        %vm786 = vcmask 1043456
        %v788 = vsel %vm786, %v736, 0
        %790 = vmatprep.subr.bf16.mxu0 0
        %791 = vmatpush1.bf16.msra.mxu0 %v788
        %792 = vmatprep.subr.bf16.mxu0 0
        %793 = vmatpush1.bf16.msra.mxu0 0
        %794 = vmatprep.subr.bf16.mxu0 0
        %795 = vmatpush1.bf16.msra.mxu0 0
        %796 = vmatprep.subr.bf16.mxu0 0
        %797 = vmatpush1.bf16.msra.mxu0 0
        %798 = vmatprep.subr.bf16.mxu0 0
        %799 = vmatpush1.bf16.msra.mxu0 0
        %800 = vmatprep.subr.bf16.mxu0 0
        %801 = vmatpush1.bf16.msra.mxu0 0
        %802 = vmatprep.subr.bf16.mxu0 0
        %803 = vmatpush1.bf16.msra.mxu0 0
        %804 = vmatprep.subr.bf16.mxu0 0
        %805 = vmatpush1.bf16.msra.mxu0 0
        %806 = vmatprep.subr.bf16.mxu0 0
        %807 = vmatpush1.bf16.msra.mxu0 0
        %808 = vmatprep.subr.bf16.mxu0 0
        %809 = vmatpush1.bf16.msra.mxu0 0
        %810 = vmatprep.subr.bf16.mxu0 0
        %811 = vmatpush1.bf16.msra.mxu0 0
        %812 = vmatprep.subr.bf16.mxu0 0
        %813 = vmatpush1.bf16.msra.mxu0 0
        %814 = vmatprep.subr.bf16.mxu0 0
        %815 = vmatpush1.bf16.msra.mxu0 0
        %816 = vmatprep.subr.bf16.mxu0 0
        %817 = vmatpush1.bf16.msra.mxu0 0
        %818 = vmatprep.subr.bf16.mxu0 0
        %819 = vmatpush1.bf16.msra.mxu0 0
        %820 = vmatprep.subr.bf16.mxu0 0
        %821 = vmatpush1.bf16.msra.mxu0 0
        %822 = vmatprep.mubr.bf16.mxu0 0
        %823 = vmatmul.mubr.bf16.gmra.mrb[0].mxu0 %v763
        %v824 = vpop.f32.mrb[0].mxu0
        %v825 = vadd.f32 0.0, %v824
        %v826 = vpop.f32.mrb[0].mxu0
        %v827 = vpop.f32.mrb[0].mxu0
        %v828 = vadd.f32 0.0, %v827
        %v829 = vpop.f32.mrb[0].mxu0
        %830 = vmatprep.mubr.bf16.mxu0 0
        %831 = vmatmul.mubr.bf16.gmra.mrb[0].mxu0 %v766
        %v832 = vpop.f32.mrb[0].mxu0
        %v833 = vadd.f32 0.0, %v832
        %v834 = vpop.f32.mrb[0].mxu0
        %v835 = vpop.f32.mrb[0].mxu0
        %v836 = vadd.f32 0.0, %v835
        %v837 = vpop.f32.mrb[0].mxu0
        %838 = vmatprep.mubr.bf16.mxu0 0
        %839 = vmatmul.mubr.bf16.gmra.mrb[0].mxu0 %v769
        %v840 = vpop.f32.mrb[0].mxu0
        %v841 = vadd.f32 0.0, %v840
        %v842 = vpop.f32.mrb[0].mxu0
        %v843 = vpop.f32.mrb[0].mxu0
        %v844 = vadd.f32 0.0, %v843
        %v845 = vpop.f32.mrb[0].mxu0
        %846 = vmatprep.mubr.bf16.mxu0 0
        %847 = vmatmul.mubr.bf16.gmra.mrb[0].mxu0 %v772
        %v848 = vpop.f32.mrb[0].mxu0
        %v849 = vadd.f32 0.0, %v848
        %v850 = vpop.f32.mrb[0].mxu0
        %v851 = vpop.f32.mrb[0].mxu0
        %v852 = vadd.f32 0.0, %v851
        %v853 = vpop.f32.mrb[0].mxu0
        %854 = vmatprep.mubr.bf16.mxu0 0
        %855 = vmatmul.mubr.bf16.gmra.mrb[0].mxu0 %v775
        %v856 = vpop.f32.mrb[0].mxu0
        %v857 = vadd.f32 0.0, %v856
        %v858 = vpop.f32.mrb[0].mxu0
        %v859 = vpop.f32.mrb[0].mxu0
        %v860 = vadd.f32 0.0, %v859
        %v861 = vpop.f32.mrb[0].mxu0
        %862 = vmatprep.mubr.bf16.mxu0 0
        %863 = vmatmul.mubr.bf16.gmra.mrb[0].mxu0 %v778
        %v864 = vpop.f32.mrb[0].mxu0
        %v865 = vadd.f32 0.0, %v864
        %v866 = vpop.f32.mrb[0].mxu0
        %v867 = vpop.f32.mrb[0].mxu0
        %v868 = vadd.f32 0.0, %v867
        %v869 = vpop.f32.mrb[0].mxu0
        %870 = vmatprep.mubr.bf16.mxu0 0
        %871 = vmatmul.mubr.bf16.gmra.mrb[0].mxu0 %v781
        %v872 = vpop.f32.mrb[0].mxu0
        %v873 = vadd.f32 0.0, %v872
        %v874 = vpop.f32.mrb[0].mxu0
        %v875 = vpop.f32.mrb[0].mxu0
        %v876 = vadd.f32 0.0, %v875
        %v877 = vpop.f32.mrb[0].mxu0
        %878 = vmatprep.mubr.bf16.mxu0 0
        %879 = vmatmul.mubr.bf16.gmra.mrb[0].mxu0 %v784
        %v880 = vpop.f32.mrb[0].mxu0
        %v881 = vadd.f32 0.0, %v880
        %v882 = vpop.f32.mrb[0].mxu0
        %v883 = vpop.f32.mrb[0].mxu0
        %v884 = vadd.f32 0.0, %v883
        %v885 = vpop.f32.mrb[0].mxu0
        %886 = vdwg.mxu0
        %v887 = vld [vmem:[#allocation14] sm:$0x1]
        %v889 = vlaneseq
        %v890 = vshrl.u32 %v889, 7
        %v891 = vsub.s32 0, %v890
        %v892 = vrot.slane %v887, %v891
        %v894 = vmul.f32 %v825, %v892
        %v895 = vmul.f32 %v828, %v892
        %v896 = vmul.f32 %v833, %v892
        %v897 = vmul.f32 %v836, %v892
        %v898 = vmul.f32 %v841, %v892
        %v899 = vmul.f32 %v844, %v892
        %v900 = vmul.f32 %v849, %v892
        %v901 = vmul.f32 %v852, %v892
        %v902 = vmul.f32 %v857, %v892
        %v903 = vmul.f32 %v860, %v892
        %v904 = vmul.f32 %v865, %v892
        %v905 = vmul.f32 %v868, %v892
        %v906 = vmul.f32 %v873, %v892
        %v907 = vmul.f32 %v876, %v892
        %v908 = vmul.f32 %v881, %v892
        %v909 = vmul.f32 %v884, %v892
        %v910 = vld [vmem:[#allocation16] sm:$0x1]
        %v912 = vlaneseq
        %v913 = vshrl.u32 %v912, 7
        %v914 = vsub.s32 0, %v913
        %v915 = vrot.slane %v910, %v914
        %v917 = vadd.f32 %v894, %v915
        %v918 = vadd.f32 %v895, %v915
        %v919 = vadd.f32 %v896, %v915
        %v920 = vadd.f32 %v897, %v915
        %v921 = vadd.f32 %v898, %v915
        %v922 = vadd.f32 %v899, %v915
        %v923 = vadd.f32 %v900, %v915
        %v924 = vadd.f32 %v901, %v915
        %v925 = vadd.f32 %v902, %v915
        %v926 = vadd.f32 %v903, %v915
        %v927 = vadd.f32 %v904, %v915
        %v928 = vadd.f32 %v905, %v915
        %v929 = vadd.f32 %v906, %v915
        %v930 = vadd.f32 %v907, %v915
        %v931 = vadd.f32 %v908, %v915
        %v932 = vadd.f32 %v909, %v915
        %v933 = vmax.f32 %v917, 0.0
        %v934 = vmax.f32 %v918, 0.0
        %v935 = vmax.f32 %v919, 0.0
        %v936 = vmax.f32 %v920, 0.0
        %v937 = vmax.f32 %v921, 0.0
        %v938 = vmax.f32 %v922, 0.0
        %v939 = vmax.f32 %v923, 0.0
        %v940 = vmax.f32 %v924, 0.0
        %v941 = vmax.f32 %v925, 0.0
        %v942 = vmax.f32 %v926, 0.0
        %v943 = vmax.f32 %v927, 0.0
        %v944 = vmax.f32 %v928, 0.0
        %v945 = vmax.f32 %v929, 0.0
        %v946 = vmax.f32 %v930, 0.0
        %v947 = vmax.f32 %v931, 0.0
        %v948 = vmax.f32 %v932, 0.0
        %v949 = vpack.c.bf16 %v934, %v933
        %v950 = vpack.c.bf16 %v936, %v935
        %v951 = vpack.c.bf16 %v938, %v937
        %v952 = vpack.c.bf16 %v940, %v939
        %v953 = vpack.c.bf16 %v942, %v941
        %v954 = vpack.c.bf16 %v944, %v943
        %v955 = vpack.c.bf16 %v946, %v945
        %v956 = vpack.c.bf16 %v948, %v947
        %v957 = vld [vmem:[#allocation11] sm:$0xf]
        %s958 = sadd.s32 %s608, 12
        %s959 = smul.u32 %s958, 7
        %s960 = smul.addr %s959, 4
        %s961 = scalar_lea.vmem %s510, %s960 [#allocation2]
        %v962 = vld [vmem:[%s961 + $0x4] sm:$0xc]
        %v963 = vld [vmem:[%s961 + $0x8] sm:$0xf]
        %v964 = vld [vmem:[%s961 + $0xc] sm:$0x3]
        %v965 = vld [vmem:[%s961 + $0x20] sm:$0xc]
        %v966 = vld [vmem:[%s961 + $0x24] sm:$0xf]
        %v967 = vld [vmem:[%s961 + $0x28] sm:$0x3]
        %v968 = vld [vmem:[%s961 + $0x3c] sm:$0xc]
        %v969 = vld [vmem:[%s961 + $0x40] sm:$0xf]
        %v970 = vld [vmem:[%s961 + $0x44] sm:$0x3]
        %v971 = vld [vmem:[%s961 + $0x58] sm:$0xc]
        %v972 = vld [vmem:[%s961 + $0x5c] sm:$0xf]
        %v973 = vld [vmem:[%s961 + $0x60] sm:$0x3]
        %v974 = vld [vmem:[%s961 + $0x74] sm:$0xc]
        %v975 = vld [vmem:[%s961 + $0x78] sm:$0xf]
        %v976 = vld [vmem:[%s961 + $0x7c] sm:$0x3]
        %v977 = vld [vmem:[%s961 + $0x90] sm:$0xc]
        %v978 = vld [vmem:[%s961 + $0x94] sm:$0xf]
        %v979 = vld [vmem:[%s961 + $0x98] sm:$0x3]
        %v980 = vld [vmem:[%s961 + $0xac] sm:$0xc]
        %v981 = vld [vmem:[%s961 + $0xb0] sm:$0xf]
        %v982 = vld [vmem:[%s961 + $0xb4] sm:$0x3]
        %v983 = vld [vmem:[%s961 + $0xc8] sm:$0xc]
        %v984 = vld [vmem:[%s961 + $0xcc] sm:$0xf]
        %v985 = vld [vmem:[%s961 + $0xd0] sm:$0x3]
        %vm1010 = vcmask 1041408
        %vm1011 = vcmask 1045508
        %vm1012 = vmor %vm1010, %vm1011
        %v1013 = vrot.slane %v962, 6
        %v1014 = vrot.slane %v1013, 4
        %v1015 = vrot.slane %v963, 6
        %v1016 = vsel %vm1012, %v1014, %v1015
        %v1017 = vrot.slane %v1015, 4
        %v1018 = vrot.slane %v964, 6
        %v1019 = vsel %vm1012, %v1017, %v1018
        %v1020 = vrot.slane %v965, 6
        %v1021 = vrot.slane %v1020, 4
        %v1022 = vrot.slane %v966, 6
        %v1023 = vsel %vm1012, %v1021, %v1022
        %v1024 = vrot.slane %v1022, 4
        %v1025 = vrot.slane %v967, 6
        %v1026 = vsel %vm1012, %v1024, %v1025
        %v1027 = vrot.slane %v968, 6
        %v1028 = vrot.slane %v1027, 4
        %v1029 = vrot.slane %v969, 6
        %v1030 = vsel %vm1012, %v1028, %v1029
        %v1031 = vrot.slane %v1029, 4
        %v1032 = vrot.slane %v970, 6
        %v1033 = vsel %vm1012, %v1031, %v1032
        %v1034 = vrot.slane %v971, 6
        %v1035 = vrot.slane %v1034, 4
        %v1036 = vrot.slane %v972, 6
        %v1037 = vsel %vm1012, %v1035, %v1036
        %v1038 = vrot.slane %v1036, 4
        %v1039 = vrot.slane %v973, 6
        %v1040 = vsel %vm1012, %v1038, %v1039
        %v1041 = vrot.slane %v974, 6
        %v1042 = vrot.slane %v1041, 4
        %v1043 = vrot.slane %v975, 6
        %v1044 = vsel %vm1012, %v1042, %v1043
        %v1045 = vrot.slane %v1043, 4
        %v1046 = vrot.slane %v976, 6
        %v1047 = vsel %vm1012, %v1045, %v1046
        %v1048 = vrot.slane %v977, 6
        %v1049 = vrot.slane %v1048, 4
        %v1050 = vrot.slane %v978, 6
        %v1051 = vsel %vm1012, %v1049, %v1050
        %v1052 = vrot.slane %v1050, 4
        %v1053 = vrot.slane %v979, 6
        %v1054 = vsel %vm1012, %v1052, %v1053
        %v1055 = vrot.slane %v980, 6
        %v1056 = vrot.slane %v1055, 4
        %v1057 = vrot.slane %v981, 6
        %v1058 = vsel %vm1012, %v1056, %v1057
        %v1059 = vrot.slane %v1057, 4
        %v1060 = vrot.slane %v982, 6
        %v1061 = vsel %vm1012, %v1059, %v1060
        %v1062 = vrot.slane %v983, 6
        %v1063 = vrot.slane %v1062, 4
        %v1064 = vrot.slane %v984, 6
        %v1065 = vsel %vm1012, %v1063, %v1064
        %v1066 = vrot.slane %v1064, 4
        %v1067 = vrot.slane %v985, 6
        %v1068 = vsel %vm1012, %v1066, %v1067
        %v1069 = vld [vmem:[#allocation10] sm:$0xf]
        %v1070 = vld [vmem:[%s961 + $0x8] sm:$0xe]
        %v1071 = vld [vmem:[%s961 + $0xc] sm:$0xf]
        %v1072 = vld [vmem:[%s961 + $0x10] sm:$0x1]
        %v1073 = vld [vmem:[%s961 + $0x24] sm:$0xe]
        %v1074 = vld [vmem:[%s961 + $0x28] sm:$0xf]
        %v1075 = vld [vmem:[%s961 + $0x2c] sm:$0x1]
        %v1076 = vld [vmem:[%s961 + $0x40] sm:$0xe]
        %v1077 = vld [vmem:[%s961 + $0x44] sm:$0xf]
        %v1078 = vld [vmem:[%s961 + $0x48] sm:$0x1]
        %v1079 = vld [vmem:[%s961 + $0x5c] sm:$0xe]
        %v1080 = vld [vmem:[%s961 + $0x60] sm:$0xf]
        %v1081 = vld [vmem:[%s961 + $0x64] sm:$0x1]
        %v1082 = vld [vmem:[%s961 + $0x78] sm:$0xe]
        %v1083 = vld [vmem:[%s961 + $0x7c] sm:$0xf]
        %v1084 = vld [vmem:[%s961 + $0x80] sm:$0x1]
        %v1085 = vld [vmem:[%s961 + $0x94] sm:$0xe]
        %v1086 = vld [vmem:[%s961 + $0x98] sm:$0xf]
        %v1087 = vld [vmem:[%s961 + $0x9c] sm:$0x1]
        %v1088 = vld [vmem:[%s961 + $0xb0] sm:$0xe]
        %v1089 = vld [vmem:[%s961 + $0xb4] sm:$0xf]
        %v1090 = vld [vmem:[%s961 + $0xb8] sm:$0x1]
        %v1091 = vld [vmem:[%s961 + $0xcc] sm:$0xe]
        %v1092 = vld [vmem:[%s961 + $0xd0] sm:$0xf]
        %v1093 = vld [vmem:[%s961 + $0xd4] sm:$0x1]
        %v1118 = vrot.slane %v1070, 5
        %v1119 = vrot.slane %v1118, 4
        %v1120 = vrot.slane %v1071, 5
        %v1121 = vsel %vm663, %v1119, %v1120
        %v1122 = vrot.slane %v1120, 4
        %v1123 = vrot.slane %v1072, 5
        %v1124 = vsel %vm663, %v1122, %v1123
        %v1125 = vrot.slane %v1073, 5
        %v1126 = vrot.slane %v1125, 4
        %v1127 = vrot.slane %v1074, 5
        %v1128 = vsel %vm663, %v1126, %v1127
        %v1129 = vrot.slane %v1127, 4
        %v1130 = vrot.slane %v1075, 5
        %v1131 = vsel %vm663, %v1129, %v1130
        %v1132 = vrot.slane %v1076, 5
        %v1133 = vrot.slane %v1132, 4
        %v1134 = vrot.slane %v1077, 5
        %v1135 = vsel %vm663, %v1133, %v1134
        %v1136 = vrot.slane %v1134, 4
        %v1137 = vrot.slane %v1078, 5
        %v1138 = vsel %vm663, %v1136, %v1137
        %v1139 = vrot.slane %v1079, 5
        %v1140 = vrot.slane %v1139, 4
        %v1141 = vrot.slane %v1080, 5
        %v1142 = vsel %vm663, %v1140, %v1141
        %v1143 = vrot.slane %v1141, 4
        %v1144 = vrot.slane %v1081, 5
        %v1145 = vsel %vm663, %v1143, %v1144
        %v1146 = vrot.slane %v1082, 5
        %v1147 = vrot.slane %v1146, 4
        %v1148 = vrot.slane %v1083, 5
        %v1149 = vsel %vm663, %v1147, %v1148
        %v1150 = vrot.slane %v1148, 4
        %v1151 = vrot.slane %v1084, 5
        %v1152 = vsel %vm663, %v1150, %v1151
        %v1153 = vrot.slane %v1085, 5
        %v1154 = vrot.slane %v1153, 4
        %v1155 = vrot.slane %v1086, 5
        %v1156 = vsel %vm663, %v1154, %v1155
        %v1157 = vrot.slane %v1155, 4
        %v1158 = vrot.slane %v1087, 5
        %v1159 = vsel %vm663, %v1157, %v1158
        %v1160 = vrot.slane %v1088, 5
        %v1161 = vrot.slane %v1160, 4
        %v1162 = vrot.slane %v1089, 5
        %v1163 = vsel %vm663, %v1161, %v1162
        %v1164 = vrot.slane %v1162, 4
        %v1165 = vrot.slane %v1090, 5
        %v1166 = vsel %vm663, %v1164, %v1165
        %v1167 = vrot.slane %v1091, 5
        %v1168 = vrot.slane %v1167, 4
        %v1169 = vrot.slane %v1092, 5
        %v1170 = vsel %vm663, %v1168, %v1169
        %v1171 = vrot.slane %v1169, 4
        %v1172 = vrot.slane %v1093, 5
        %v1173 = vsel %vm663, %v1171, %v1172
        %s1174 = scalar_lea.vmem [#allocation10], 4
        %v1175 = vld [vmem:[%s1174] sm:$0xf]
        %v1176 = vunpack.c.l.b16 %v1121
        %v1177 = vunpack.c.l.b16 %v1124
        %v1178 = vunpack.c.l.b16 %v1128
        %v1179 = vunpack.c.l.b16 %v1131
        %v1180 = vunpack.c.l.b16 %v1135
        %v1181 = vunpack.c.l.b16 %v1138
        %v1182 = vunpack.c.l.b16 %v1142
        %v1183 = vunpack.c.l.b16 %v1145
        %v1184 = vunpack.c.l.b16 %v1149
        %v1185 = vunpack.c.l.b16 %v1152
        %v1186 = vunpack.c.l.b16 %v1156
        %v1187 = vunpack.c.l.b16 %v1159
        %v1188 = vunpack.c.l.b16 %v1163
        %v1189 = vunpack.c.l.b16 %v1166
        %v1190 = vunpack.c.l.b16 %v1170
        %v1191 = vunpack.c.l.b16 %v1173
        %v1192 = vpack.c.b16 %v1177, %v1176
        %v1193 = vpack.c.b16 %v1179, %v1178
        %v1194 = vpack.c.b16 %v1181, %v1180
        %v1195 = vpack.c.b16 %v1183, %v1182
        %v1196 = vpack.c.b16 %v1185, %v1184
        %v1197 = vpack.c.b16 %v1187, %v1186
        %v1198 = vpack.c.b16 %v1189, %v1188
        %v1199 = vpack.c.b16 %v1191, %v1190
        %v1201 = vsel %vm761, %v1192, 0
        %v1204 = vsel %vm761, %v1193, 0
        %v1207 = vsel %vm761, %v1194, 0
        %v1210 = vsel %vm761, %v1195, 0
        %v1213 = vsel %vm761, %v1196, 0
        %v1216 = vsel %vm761, %v1197, 0
        %v1219 = vsel %vm761, %v1198, 0
        %v1222 = vsel %vm761, %v1199, 0
        %v1225 = vsel %vm786, %v1175, 0
        %1227 = vmatprep.subr.bf16.mxu0 0
        %1228 = vmatpush1.bf16.msra.mxu0 %v1225
        %1229 = vmatprep.subr.bf16.mxu0 0
        %1230 = vmatpush1.bf16.msra.mxu0 0
        %1231 = vmatprep.subr.bf16.mxu0 0
        %1232 = vmatpush1.bf16.msra.mxu0 0
        %1233 = vmatprep.subr.bf16.mxu0 0
        %1234 = vmatpush1.bf16.msra.mxu0 0
        %1235 = vmatprep.subr.bf16.mxu0 0
        %1236 = vmatpush1.bf16.msra.mxu0 0
        %1237 = vmatprep.subr.bf16.mxu0 0
        %1238 = vmatpush1.bf16.msra.mxu0 0
        %1239 = vmatprep.subr.bf16.mxu0 0
        %1240 = vmatpush1.bf16.msra.mxu0 0
        %1241 = vmatprep.subr.bf16.mxu0 0
        %1242 = vmatpush1.bf16.msra.mxu0 0
        %1243 = vmatprep.subr.bf16.mxu0 0
        %1244 = vmatpush1.bf16.msra.mxu0 0
        %1245 = vmatprep.subr.bf16.mxu0 0
        %1246 = vmatpush1.bf16.msra.mxu0 0
        %1247 = vmatprep.subr.bf16.mxu0 0
        %1248 = vmatpush1.bf16.msra.mxu0 0
        %1249 = vmatprep.subr.bf16.mxu0 0
        %1250 = vmatpush1.bf16.msra.mxu0 0
        %1251 = vmatprep.subr.bf16.mxu0 0
        %1252 = vmatpush1.bf16.msra.mxu0 0
        %1253 = vmatprep.subr.bf16.mxu0 0
        %1254 = vmatpush1.bf16.msra.mxu0 0
        %1255 = vmatprep.subr.bf16.mxu0 0
        %1256 = vmatpush1.bf16.msra.mxu0 0
        %1257 = vmatprep.subr.bf16.mxu0 0
        %1258 = vmatpush1.bf16.msra.mxu0 0
        %1259 = vmatprep.mubr.bf16.mxu0 0
        %1260 = vmatmul.mubr.bf16.gmra.mrb[0].mxu0 %v1201
        %v1261 = vpop.f32.mrb[0].mxu0
        %v1262 = vadd.f32 0.0, %v1261
        %v1263 = vpop.f32.mrb[0].mxu0
        %v1264 = vpop.f32.mrb[0].mxu0
        %v1265 = vadd.f32 0.0, %v1264
        %v1266 = vpop.f32.mrb[0].mxu0
        %1267 = vmatprep.mubr.bf16.mxu0 0
        %1268 = vmatmul.mubr.bf16.gmra.mrb[0].mxu0 %v1204
        %v1269 = vpop.f32.mrb[0].mxu0
        %v1270 = vadd.f32 0.0, %v1269
        %v1271 = vpop.f32.mrb[0].mxu0
        %v1272 = vpop.f32.mrb[0].mxu0
        %v1273 = vadd.f32 0.0, %v1272
        %v1274 = vpop.f32.mrb[0].mxu0
        %1275 = vmatprep.mubr.bf16.mxu0 0
        %1276 = vmatmul.mubr.bf16.gmra.mrb[0].mxu0 %v1207
        %v1277 = vpop.f32.mrb[0].mxu0
        %v1278 = vadd.f32 0.0, %v1277
        %v1279 = vpop.f32.mrb[0].mxu0
        %v1280 = vpop.f32.mrb[0].mxu0
        %v1281 = vadd.f32 0.0, %v1280
        %v1282 = vpop.f32.mrb[0].mxu0
        %1283 = vmatprep.mubr.bf16.mxu0 0
        %1284 = vmatmul.mubr.bf16.gmra.mrb[0].mxu0 %v1210
        %v1285 = vpop.f32.mrb[0].mxu0
        %v1286 = vadd.f32 0.0, %v1285
        %v1287 = vpop.f32.mrb[0].mxu0
        %v1288 = vpop.f32.mrb[0].mxu0
        %v1289 = vadd.f32 0.0, %v1288
        %v1290 = vpop.f32.mrb[0].mxu0
        %1291 = vmatprep.mubr.bf16.mxu0 0
        %1292 = vmatmul.mubr.bf16.gmra.mrb[0].mxu0 %v1213
        %v1293 = vpop.f32.mrb[0].mxu0
        %v1294 = vadd.f32 0.0, %v1293
        %v1295 = vpop.f32.mrb[0].mxu0
        %v1296 = vpop.f32.mrb[0].mxu0
        %v1297 = vadd.f32 0.0, %v1296
        %v1298 = vpop.f32.mrb[0].mxu0
        %1299 = vmatprep.mubr.bf16.mxu0 0
        %1300 = vmatmul.mubr.bf16.gmra.mrb[0].mxu0 %v1216
        %v1301 = vpop.f32.mrb[0].mxu0
        %v1302 = vadd.f32 0.0, %v1301
        %v1303 = vpop.f32.mrb[0].mxu0
        %v1304 = vpop.f32.mrb[0].mxu0
        %v1305 = vadd.f32 0.0, %v1304
        %v1306 = vpop.f32.mrb[0].mxu0
        %1307 = vmatprep.mubr.bf16.mxu0 0
        %1308 = vmatmul.mubr.bf16.gmra.mrb[0].mxu0 %v1219
        %v1309 = vpop.f32.mrb[0].mxu0
        %v1310 = vadd.f32 0.0, %v1309
        %v1311 = vpop.f32.mrb[0].mxu0
        %v1312 = vpop.f32.mrb[0].mxu0
        %v1313 = vadd.f32 0.0, %v1312
        %v1314 = vpop.f32.mrb[0].mxu0
        %1315 = vmatprep.mubr.bf16.mxu0 0
        %1316 = vmatmul.mubr.bf16.gmra.mrb[0].mxu0 %v1222
        %v1317 = vpop.f32.mrb[0].mxu0
        %v1318 = vadd.f32 0.0, %v1317
        %v1319 = vpop.f32.mrb[0].mxu0
        %v1320 = vpop.f32.mrb[0].mxu0
        %v1321 = vadd.f32 0.0, %v1320
        %v1322 = vpop.f32.mrb[0].mxu0
        %1323 = vdwg.mxu0
        %v1324 = vunpack.c.l.b16 %v1016
        %v1325 = vunpack.c.l.b16 %v1019
        %v1326 = vunpack.c.l.b16 %v1023
        %v1327 = vunpack.c.l.b16 %v1026
        %v1328 = vunpack.c.l.b16 %v1030
        %v1329 = vunpack.c.l.b16 %v1033
        %v1330 = vunpack.c.l.b16 %v1037
        %v1331 = vunpack.c.l.b16 %v1040
        %v1332 = vunpack.c.l.b16 %v1044
        %v1333 = vunpack.c.l.b16 %v1047
        %v1334 = vunpack.c.l.b16 %v1051
        %v1335 = vunpack.c.l.b16 %v1054
        %v1336 = vunpack.c.l.b16 %v1058
        %v1337 = vunpack.c.l.b16 %v1061
        %v1338 = vunpack.c.l.b16 %v1065
        %v1339 = vunpack.c.l.b16 %v1068
        %v1340 = vpack.c.b16 %v1325, %v1324
        %v1341 = vpack.c.b16 %v1327, %v1326
        %v1342 = vpack.c.b16 %v1329, %v1328
        %v1343 = vpack.c.b16 %v1331, %v1330
        %v1344 = vpack.c.b16 %v1333, %v1332
        %v1345 = vpack.c.b16 %v1335, %v1334
        %v1346 = vpack.c.b16 %v1337, %v1336
        %v1347 = vpack.c.b16 %v1339, %v1338
        %v1349 = vsel %vm761, %v1340, 0
        %v1352 = vsel %vm761, %v1341, 0
        %v1355 = vsel %vm761, %v1342, 0
        %v1358 = vsel %vm761, %v1343, 0
        %v1361 = vsel %vm761, %v1344, 0
        %v1364 = vsel %vm761, %v1345, 0
        %v1367 = vsel %vm761, %v1346, 0
        %v1370 = vsel %vm761, %v1347, 0
        %v1373 = vsel %vm786, %v1069, 0
        %1375 = vmatprep.subr.bf16.mxu0 0
        %1376 = vmatpush1.bf16.msra.mxu0 %v1373
        %1377 = vmatprep.subr.bf16.mxu0 0
        %1378 = vmatpush1.bf16.msra.mxu0 0
        %1379 = vmatprep.subr.bf16.mxu0 0
        %1380 = vmatpush1.bf16.msra.mxu0 0
        %1381 = vmatprep.subr.bf16.mxu0 0
        %1382 = vmatpush1.bf16.msra.mxu0 0
        %1383 = vmatprep.subr.bf16.mxu0 0
        %1384 = vmatpush1.bf16.msra.mxu0 0
        %1385 = vmatprep.subr.bf16.mxu0 0
        %1386 = vmatpush1.bf16.msra.mxu0 0
        %1387 = vmatprep.subr.bf16.mxu0 0
        %1388 = vmatpush1.bf16.msra.mxu0 0
        %1389 = vmatprep.subr.bf16.mxu0 0
        %1390 = vmatpush1.bf16.msra.mxu0 0
        %1391 = vmatprep.subr.bf16.mxu0 0
        %1392 = vmatpush1.bf16.msra.mxu0 0
        %1393 = vmatprep.subr.bf16.mxu0 0
        %1394 = vmatpush1.bf16.msra.mxu0 0
        %1395 = vmatprep.subr.bf16.mxu0 0
        %1396 = vmatpush1.bf16.msra.mxu0 0
        %1397 = vmatprep.subr.bf16.mxu0 0
        %1398 = vmatpush1.bf16.msra.mxu0 0
        %1399 = vmatprep.subr.bf16.mxu0 0
        %1400 = vmatpush1.bf16.msra.mxu0 0
        %1401 = vmatprep.subr.bf16.mxu0 0
        %1402 = vmatpush1.bf16.msra.mxu0 0
        %1403 = vmatprep.subr.bf16.mxu0 0
        %1404 = vmatpush1.bf16.msra.mxu0 0
        %1405 = vmatprep.subr.bf16.mxu0 0
        %1406 = vmatpush1.bf16.msra.mxu0 0
        %1407 = vmatprep.mubr.bf16.mxu0 0
        %1408 = vmatmul.mubr.bf16.gmra.mrb[0].mxu0 %v1349
        %v1409 = vpop.f32.mrb[0].mxu0
        %v1410 = vadd.f32 %v1262, %v1409
        %v1411 = vpop.f32.mrb[0].mxu0
        %v1412 = vpop.f32.mrb[0].mxu0
        %v1413 = vadd.f32 %v1265, %v1412
        %v1414 = vpop.f32.mrb[0].mxu0
        %1415 = vmatprep.mubr.bf16.mxu0 0
        %1416 = vmatmul.mubr.bf16.gmra.mrb[0].mxu0 %v1352
        %v1417 = vpop.f32.mrb[0].mxu0
        %v1418 = vadd.f32 %v1270, %v1417
        %v1419 = vpop.f32.mrb[0].mxu0
        %v1420 = vpop.f32.mrb[0].mxu0
        %v1421 = vadd.f32 %v1273, %v1420
        %v1422 = vpop.f32.mrb[0].mxu0
        %1423 = vmatprep.mubr.bf16.mxu0 0
        %1424 = vmatmul.mubr.bf16.gmra.mrb[0].mxu0 %v1355
        %v1425 = vpop.f32.mrb[0].mxu0
        %v1426 = vadd.f32 %v1278, %v1425
        %v1427 = vpop.f32.mrb[0].mxu0
        %v1428 = vpop.f32.mrb[0].mxu0
        %v1429 = vadd.f32 %v1281, %v1428
        %v1430 = vpop.f32.mrb[0].mxu0
        %1431 = vmatprep.mubr.bf16.mxu0 0
        %1432 = vmatmul.mubr.bf16.gmra.mrb[0].mxu0 %v1358
        %v1433 = vpop.f32.mrb[0].mxu0
        %v1434 = vadd.f32 %v1286, %v1433
        %v1435 = vpop.f32.mrb[0].mxu0
        %v1436 = vpop.f32.mrb[0].mxu0
        %v1437 = vadd.f32 %v1289, %v1436
        %v1438 = vpop.f32.mrb[0].mxu0
        %1439 = vmatprep.mubr.bf16.mxu0 0
        %1440 = vmatmul.mubr.bf16.gmra.mrb[0].mxu0 %v1361
        %v1441 = vpop.f32.mrb[0].mxu0
        %v1442 = vadd.f32 %v1294, %v1441
        %v1443 = vpop.f32.mrb[0].mxu0
        %v1444 = vpop.f32.mrb[0].mxu0
        %v1445 = vadd.f32 %v1297, %v1444
        %v1446 = vpop.f32.mrb[0].mxu0
        %1447 = vmatprep.mubr.bf16.mxu0 0
        %1448 = vmatmul.mubr.bf16.gmra.mrb[0].mxu0 %v1364
        %v1449 = vpop.f32.mrb[0].mxu0
        %v1450 = vadd.f32 %v1302, %v1449
        %v1451 = vpop.f32.mrb[0].mxu0
        %v1452 = vpop.f32.mrb[0].mxu0
        %v1453 = vadd.f32 %v1305, %v1452
        %v1454 = vpop.f32.mrb[0].mxu0
        %1455 = vmatprep.mubr.bf16.mxu0 0
        %1456 = vmatmul.mubr.bf16.gmra.mrb[0].mxu0 %v1367
        %v1457 = vpop.f32.mrb[0].mxu0
        %v1458 = vadd.f32 %v1310, %v1457
        %v1459 = vpop.f32.mrb[0].mxu0
        %v1460 = vpop.f32.mrb[0].mxu0
        %v1461 = vadd.f32 %v1313, %v1460
        %v1462 = vpop.f32.mrb[0].mxu0
        %1463 = vmatprep.mubr.bf16.mxu0 0
        %1464 = vmatmul.mubr.bf16.gmra.mrb[0].mxu0 %v1370
        %v1465 = vpop.f32.mrb[0].mxu0
        %v1466 = vadd.f32 %v1318, %v1465
        %v1467 = vpop.f32.mrb[0].mxu0
        %v1468 = vpop.f32.mrb[0].mxu0
        %v1469 = vadd.f32 %v1321, %v1468
        %v1470 = vpop.f32.mrb[0].mxu0
        %1471 = vdwg.mxu0
        %v1472 = vld [vmem:[%s961 + $0x10] sm:$0xf]
        %v1473 = vld [vmem:[%s961 + $0x2c] sm:$0xf]
        %v1474 = vld [vmem:[%s961 + $0x48] sm:$0xf]
        %v1475 = vld [vmem:[%s961 + $0x64] sm:$0xf]
        %v1476 = vld [vmem:[%s961 + $0x80] sm:$0xf]
        %v1477 = vld [vmem:[%s961 + $0x9c] sm:$0xf]
        %v1478 = vld [vmem:[%s961 + $0xb8] sm:$0xf]
        %v1479 = vld [vmem:[%s961 + $0xd4] sm:$0xf]
        %s1480 = scalar_lea.vmem [#allocation10], 8
        %v1481 = vld [vmem:[%s1480] sm:$0xf]
        %v1490 = vunpack.c.l.b16 %v1071
        %v1491 = vunpack.c.l.b16 %v1472
        %v1492 = vunpack.c.l.b16 %v1074
        %v1493 = vunpack.c.l.b16 %v1473
        %v1494 = vunpack.c.l.b16 %v1077
        %v1495 = vunpack.c.l.b16 %v1474
        %v1496 = vunpack.c.l.b16 %v1080
        %v1497 = vunpack.c.l.b16 %v1475
        %v1498 = vunpack.c.l.b16 %v1083
        %v1499 = vunpack.c.l.b16 %v1476
        %v1500 = vunpack.c.l.b16 %v1086
        %v1501 = vunpack.c.l.b16 %v1477
        %v1502 = vunpack.c.l.b16 %v1089
        %v1503 = vunpack.c.l.b16 %v1478
        %v1504 = vunpack.c.l.b16 %v1092
        %v1505 = vunpack.c.l.b16 %v1479
        %v1506 = vpack.c.b16 %v1491, %v1490
        %v1507 = vpack.c.b16 %v1493, %v1492
        %v1508 = vpack.c.b16 %v1495, %v1494
        %v1509 = vpack.c.b16 %v1497, %v1496
        %v1510 = vpack.c.b16 %v1499, %v1498
        %v1511 = vpack.c.b16 %v1501, %v1500
        %v1512 = vpack.c.b16 %v1503, %v1502
        %v1513 = vpack.c.b16 %v1505, %v1504
        %v1515 = vsel %vm761, %v1506, 0
        %v1518 = vsel %vm761, %v1507, 0
        %v1521 = vsel %vm761, %v1508, 0
        %v1524 = vsel %vm761, %v1509, 0
        %v1527 = vsel %vm761, %v1510, 0
        %v1530 = vsel %vm761, %v1511, 0
        %v1533 = vsel %vm761, %v1512, 0
        %v1536 = vsel %vm761, %v1513, 0
        %v1539 = vsel %vm786, %v1481, 0
        %1541 = vmatprep.subr.bf16.mxu0 0
        %1542 = vmatpush1.bf16.msra.mxu0 %v1539
        %1543 = vmatprep.subr.bf16.mxu0 0
        %1544 = vmatpush1.bf16.msra.mxu0 0
        %1545 = vmatprep.subr.bf16.mxu0 0
        %1546 = vmatpush1.bf16.msra.mxu0 0
        %1547 = vmatprep.subr.bf16.mxu0 0
        %1548 = vmatpush1.bf16.msra.mxu0 0
        %1549 = vmatprep.subr.bf16.mxu0 0
        %1550 = vmatpush1.bf16.msra.mxu0 0
        %1551 = vmatprep.subr.bf16.mxu0 0
        %1552 = vmatpush1.bf16.msra.mxu0 0
        %1553 = vmatprep.subr.bf16.mxu0 0
        %1554 = vmatpush1.bf16.msra.mxu0 0
        %1555 = vmatprep.subr.bf16.mxu0 0
        %1556 = vmatpush1.bf16.msra.mxu0 0
        %1557 = vmatprep.subr.bf16.mxu0 0
        %1558 = vmatpush1.bf16.msra.mxu0 0
        %1559 = vmatprep.subr.bf16.mxu0 0
        %1560 = vmatpush1.bf16.msra.mxu0 0
        %1561 = vmatprep.subr.bf16.mxu0 0
        %1562 = vmatpush1.bf16.msra.mxu0 0
        %1563 = vmatprep.subr.bf16.mxu0 0
        %1564 = vmatpush1.bf16.msra.mxu0 0
        %1565 = vmatprep.subr.bf16.mxu0 0
        %1566 = vmatpush1.bf16.msra.mxu0 0
        %1567 = vmatprep.subr.bf16.mxu0 0
        %1568 = vmatpush1.bf16.msra.mxu0 0
        %1569 = vmatprep.subr.bf16.mxu0 0
        %1570 = vmatpush1.bf16.msra.mxu0 0
        %1571 = vmatprep.subr.bf16.mxu0 0
        %1572 = vmatpush1.bf16.msra.mxu0 0
        %1573 = vmatprep.mubr.bf16.mxu0 0
        %1574 = vmatmul.mubr.bf16.gmra.mrb[0].mxu0 %v1515
        %v1575 = vpop.f32.mrb[0].mxu0
        %v1576 = vadd.f32 0.0, %v1575
        %v1577 = vpop.f32.mrb[0].mxu0
        %v1578 = vpop.f32.mrb[0].mxu0
        %v1579 = vadd.f32 0.0, %v1578
        %v1580 = vpop.f32.mrb[0].mxu0
        %1581 = vmatprep.mubr.bf16.mxu0 0
        %1582 = vmatmul.mubr.bf16.gmra.mrb[0].mxu0 %v1518
        %v1583 = vpop.f32.mrb[0].mxu0
        %v1584 = vadd.f32 0.0, %v1583
        %v1585 = vpop.f32.mrb[0].mxu0
        %v1586 = vpop.f32.mrb[0].mxu0
        %v1587 = vadd.f32 0.0, %v1586
        %v1588 = vpop.f32.mrb[0].mxu0
        %1589 = vmatprep.mubr.bf16.mxu0 0
        %1590 = vmatmul.mubr.bf16.gmra.mrb[0].mxu0 %v1521
        %v1591 = vpop.f32.mrb[0].mxu0
        %v1592 = vadd.f32 0.0, %v1591
        %v1593 = vpop.f32.mrb[0].mxu0
        %v1594 = vpop.f32.mrb[0].mxu0
        %v1595 = vadd.f32 0.0, %v1594
        %v1596 = vpop.f32.mrb[0].mxu0
        %1597 = vmatprep.mubr.bf16.mxu0 0
        %1598 = vmatmul.mubr.bf16.gmra.mrb[0].mxu0 %v1524
        %v1599 = vpop.f32.mrb[0].mxu0
        %v1600 = vadd.f32 0.0, %v1599
        %v1601 = vpop.f32.mrb[0].mxu0
        %v1602 = vpop.f32.mrb[0].mxu0
        %v1603 = vadd.f32 0.0, %v1602
        %v1604 = vpop.f32.mrb[0].mxu0
        %1605 = vmatprep.mubr.bf16.mxu0 0
        %1606 = vmatmul.mubr.bf16.gmra.mrb[0].mxu0 %v1527
        %v1607 = vpop.f32.mrb[0].mxu0
        %v1608 = vadd.f32 0.0, %v1607
        %v1609 = vpop.f32.mrb[0].mxu0
        %v1610 = vpop.f32.mrb[0].mxu0
        %v1611 = vadd.f32 0.0, %v1610
        %v1612 = vpop.f32.mrb[0].mxu0
        %1613 = vmatprep.mubr.bf16.mxu0 0
        %1614 = vmatmul.mubr.bf16.gmra.mrb[0].mxu0 %v1530
        %v1615 = vpop.f32.mrb[0].mxu0
        %v1616 = vadd.f32 0.0, %v1615
        %v1617 = vpop.f32.mrb[0].mxu0
        %v1618 = vpop.f32.mrb[0].mxu0
        %v1619 = vadd.f32 0.0, %v1618
        %v1620 = vpop.f32.mrb[0].mxu0
        %1621 = vmatprep.mubr.bf16.mxu0 0
        %1622 = vmatmul.mubr.bf16.gmra.mrb[0].mxu0 %v1533
        %v1623 = vpop.f32.mrb[0].mxu0
        %v1624 = vadd.f32 0.0, %v1623
        %v1625 = vpop.f32.mrb[0].mxu0
        %v1626 = vpop.f32.mrb[0].mxu0
        %v1627 = vadd.f32 0.0, %v1626
        %v1628 = vpop.f32.mrb[0].mxu0
        %1629 = vmatprep.mubr.bf16.mxu0 0
        %1630 = vmatmul.mubr.bf16.gmra.mrb[0].mxu0 %v1536
        %v1631 = vpop.f32.mrb[0].mxu0
        %v1632 = vadd.f32 0.0, %v1631
        %v1633 = vpop.f32.mrb[0].mxu0
        %v1634 = vpop.f32.mrb[0].mxu0
        %v1635 = vadd.f32 0.0, %v1634
        %v1636 = vpop.f32.mrb[0].mxu0
        %1637 = vdwg.mxu0
        %v1638 = vadd.f32 %v1410, %v1576
        %v1639 = vadd.f32 %v1413, %v1579
        %v1640 = vadd.f32 %v1418, %v1584
        %v1641 = vadd.f32 %v1421, %v1587
        %v1642 = vadd.f32 %v1426, %v1592
        %v1643 = vadd.f32 %v1429, %v1595
        %v1644 = vadd.f32 %v1434, %v1600
        %v1645 = vadd.f32 %v1437, %v1603
        %v1646 = vadd.f32 %v1442, %v1608
        %v1647 = vadd.f32 %v1445, %v1611
        %v1648 = vadd.f32 %v1450, %v1616
        %v1649 = vadd.f32 %v1453, %v1619
        %v1650 = vadd.f32 %v1458, %v1624
        %v1651 = vadd.f32 %v1461, %v1627
        %v1652 = vadd.f32 %v1466, %v1632
        %v1653 = vadd.f32 %v1469, %v1635
        %v1654 = vld [vmem:[%s612 + $0x4] sm:$0xc]
        %v1655 = vld [vmem:[%s612 + $0x8] sm:$0xf]
        %v1656 = vld [vmem:[%s612 + $0xc] sm:$0x3]
        %v1657 = vld [vmem:[%s612 + $0x20] sm:$0xc]
        %v1658 = vld [vmem:[%s612 + $0x24] sm:$0xf]
        %v1659 = vld [vmem:[%s612 + $0x28] sm:$0x3]
        %v1660 = vld [vmem:[%s612 + $0x3c] sm:$0xc]
        %v1661 = vld [vmem:[%s612 + $0x40] sm:$0xf]
        %v1662 = vld [vmem:[%s612 + $0x44] sm:$0x3]
        %v1663 = vld [vmem:[%s612 + $0x58] sm:$0xc]
        %v1664 = vld [vmem:[%s612 + $0x5c] sm:$0xf]
        %v1665 = vld [vmem:[%s612 + $0x60] sm:$0x3]
        %v1666 = vld [vmem:[%s612 + $0x74] sm:$0xc]
        %v1667 = vld [vmem:[%s612 + $0x78] sm:$0xf]
        %v1668 = vld [vmem:[%s612 + $0x7c] sm:$0x3]
        %v1669 = vld [vmem:[%s612 + $0x90] sm:$0xc]
        %v1670 = vld [vmem:[%s612 + $0x94] sm:$0xf]
        %v1671 = vld [vmem:[%s612 + $0x98] sm:$0x3]
        %v1672 = vld [vmem:[%s612 + $0xac] sm:$0xc]
        %v1673 = vld [vmem:[%s612 + $0xb0] sm:$0xf]
        %v1674 = vld [vmem:[%s612 + $0xb4] sm:$0x3]
        %v1675 = vld [vmem:[%s612 + $0xc8] sm:$0xc]
        %v1676 = vld [vmem:[%s612 + $0xcc] sm:$0xf]
        %v1677 = vld [vmem:[%s612 + $0xd0] sm:$0x3]
        %v1702 = vrot.slane %v1654, 6
        %v1703 = vrot.slane %v1702, 4
        %v1704 = vrot.slane %v1655, 6
        %v1705 = vsel %vm1012, %v1703, %v1704
        %v1706 = vrot.slane %v1704, 4
        %v1707 = vrot.slane %v1656, 6
        %v1708 = vsel %vm1012, %v1706, %v1707
        %v1709 = vrot.slane %v1657, 6
        %v1710 = vrot.slane %v1709, 4
        %v1711 = vrot.slane %v1658, 6
        %v1712 = vsel %vm1012, %v1710, %v1711
        %v1713 = vrot.slane %v1711, 4
        %v1714 = vrot.slane %v1659, 6
        %v1715 = vsel %vm1012, %v1713, %v1714
        %v1716 = vrot.slane %v1660, 6
        %v1717 = vrot.slane %v1716, 4
        %v1718 = vrot.slane %v1661, 6
        %v1719 = vsel %vm1012, %v1717, %v1718
        %v1720 = vrot.slane %v1718, 4
        %v1721 = vrot.slane %v1662, 6
        %v1722 = vsel %vm1012, %v1720, %v1721
        %v1723 = vrot.slane %v1663, 6
        %v1724 = vrot.slane %v1723, 4
        %v1725 = vrot.slane %v1664, 6
        %v1726 = vsel %vm1012, %v1724, %v1725
        %v1727 = vrot.slane %v1725, 4
        %v1728 = vrot.slane %v1665, 6
        %v1729 = vsel %vm1012, %v1727, %v1728
        %v1730 = vrot.slane %v1666, 6
        %v1731 = vrot.slane %v1730, 4
        %v1732 = vrot.slane %v1667, 6
        %v1733 = vsel %vm1012, %v1731, %v1732
        %v1734 = vrot.slane %v1732, 4
        %v1735 = vrot.slane %v1668, 6
        %v1736 = vsel %vm1012, %v1734, %v1735
        %v1737 = vrot.slane %v1669, 6
        %v1738 = vrot.slane %v1737, 4
        %v1739 = vrot.slane %v1670, 6
        %v1740 = vsel %vm1012, %v1738, %v1739
        %v1741 = vrot.slane %v1739, 4
        %v1742 = vrot.slane %v1671, 6
        %v1743 = vsel %vm1012, %v1741, %v1742
        %v1744 = vrot.slane %v1672, 6
        %v1745 = vrot.slane %v1744, 4
        %v1746 = vrot.slane %v1673, 6
        %v1747 = vsel %vm1012, %v1745, %v1746
        %v1748 = vrot.slane %v1746, 4
        %v1749 = vrot.slane %v1674, 6
        %v1750 = vsel %vm1012, %v1748, %v1749
        %v1751 = vrot.slane %v1675, 6
        %v1752 = vrot.slane %v1751, 4
        %v1753 = vrot.slane %v1676, 6
        %v1754 = vsel %vm1012, %v1752, %v1753
        %v1755 = vrot.slane %v1753, 4
        %v1756 = vrot.slane %v1677, 6
        %v1757 = vsel %vm1012, %v1755, %v1756
        %s1758 = scalar_lea.vmem [#allocation10], 12
        %v1759 = vld [vmem:[%s1758] sm:$0xf]
        %v1760 = vunpack.c.l.b16 %v1705
        %v1761 = vunpack.c.l.b16 %v1708
        %v1762 = vunpack.c.l.b16 %v1712
        %v1763 = vunpack.c.l.b16 %v1715
        %v1764 = vunpack.c.l.b16 %v1719
        %v1765 = vunpack.c.l.b16 %v1722
        %v1766 = vunpack.c.l.b16 %v1726
        %v1767 = vunpack.c.l.b16 %v1729
        %v1768 = vunpack.c.l.b16 %v1733
        %v1769 = vunpack.c.l.b16 %v1736
        %v1770 = vunpack.c.l.b16 %v1740
        %v1771 = vunpack.c.l.b16 %v1743
        %v1772 = vunpack.c.l.b16 %v1747
        %v1773 = vunpack.c.l.b16 %v1750
        %v1774 = vunpack.c.l.b16 %v1754
        %v1775 = vunpack.c.l.b16 %v1757
        %v1776 = vpack.c.b16 %v1761, %v1760
        %v1777 = vpack.c.b16 %v1763, %v1762
        %v1778 = vpack.c.b16 %v1765, %v1764
        %v1779 = vpack.c.b16 %v1767, %v1766
        %v1780 = vpack.c.b16 %v1769, %v1768
        %v1781 = vpack.c.b16 %v1771, %v1770
        %v1782 = vpack.c.b16 %v1773, %v1772
        %v1783 = vpack.c.b16 %v1775, %v1774
        %v1785 = vsel %vm761, %v1776, 0
        %v1788 = vsel %vm761, %v1777, 0
        %v1791 = vsel %vm761, %v1778, 0
        %v1794 = vsel %vm761, %v1779, 0
        %v1797 = vsel %vm761, %v1780, 0
        %v1800 = vsel %vm761, %v1781, 0
        %v1803 = vsel %vm761, %v1782, 0
        %v1806 = vsel %vm761, %v1783, 0
        %v1809 = vsel %vm786, %v1759, 0
        %1811 = vmatprep.subr.bf16.mxu0 0
        %1812 = vmatpush1.bf16.msra.mxu0 %v1809
        %1813 = vmatprep.subr.bf16.mxu0 0
        %1814 = vmatpush1.bf16.msra.mxu0 0
        %1815 = vmatprep.subr.bf16.mxu0 0
        %1816 = vmatpush1.bf16.msra.mxu0 0
        %1817 = vmatprep.subr.bf16.mxu0 0
        %1818 = vmatpush1.bf16.msra.mxu0 0
        %1819 = vmatprep.subr.bf16.mxu0 0
        %1820 = vmatpush1.bf16.msra.mxu0 0
        %1821 = vmatprep.subr.bf16.mxu0 0
        %1822 = vmatpush1.bf16.msra.mxu0 0
        %1823 = vmatprep.subr.bf16.mxu0 0
        %1824 = vmatpush1.bf16.msra.mxu0 0
        %1825 = vmatprep.subr.bf16.mxu0 0
        %1826 = vmatpush1.bf16.msra.mxu0 0
        %1827 = vmatprep.subr.bf16.mxu0 0
        %1828 = vmatpush1.bf16.msra.mxu0 0
        %1829 = vmatprep.subr.bf16.mxu0 0
        %1830 = vmatpush1.bf16.msra.mxu0 0
        %1831 = vmatprep.subr.bf16.mxu0 0
        %1832 = vmatpush1.bf16.msra.mxu0 0
        %1833 = vmatprep.subr.bf16.mxu0 0
        %1834 = vmatpush1.bf16.msra.mxu0 0
        %1835 = vmatprep.subr.bf16.mxu0 0
        %1836 = vmatpush1.bf16.msra.mxu0 0
        %1837 = vmatprep.subr.bf16.mxu0 0
        %1838 = vmatpush1.bf16.msra.mxu0 0
        %1839 = vmatprep.subr.bf16.mxu0 0
        %1840 = vmatpush1.bf16.msra.mxu0 0
        %1841 = vmatprep.subr.bf16.mxu0 0
        %1842 = vmatpush1.bf16.msra.mxu0 0
        %1843 = vmatprep.mubr.bf16.mxu0 0
        %1844 = vmatmul.mubr.bf16.gmra.mrb[0].mxu0 %v1785
        %v1845 = vpop.f32.mrb[0].mxu0
        %v1846 = vadd.f32 0.0, %v1845
        %v1847 = vpop.f32.mrb[0].mxu0
        %v1848 = vpop.f32.mrb[0].mxu0
        %v1849 = vadd.f32 0.0, %v1848
        %v1850 = vpop.f32.mrb[0].mxu0
        %1851 = vmatprep.mubr.bf16.mxu0 0
        %1852 = vmatmul.mubr.bf16.gmra.mrb[0].mxu0 %v1788
        %v1853 = vpop.f32.mrb[0].mxu0
        %v1854 = vadd.f32 0.0, %v1853
        %v1855 = vpop.f32.mrb[0].mxu0
        %v1856 = vpop.f32.mrb[0].mxu0
        %v1857 = vadd.f32 0.0, %v1856
        %v1858 = vpop.f32.mrb[0].mxu0
        %1859 = vmatprep.mubr.bf16.mxu0 0
        %1860 = vmatmul.mubr.bf16.gmra.mrb[0].mxu0 %v1791
        %v1861 = vpop.f32.mrb[0].mxu0
        %v1862 = vadd.f32 0.0, %v1861
        %v1863 = vpop.f32.mrb[0].mxu0
        %v1864 = vpop.f32.mrb[0].mxu0
        %v1865 = vadd.f32 0.0, %v1864
        %v1866 = vpop.f32.mrb[0].mxu0
        %1867 = vmatprep.mubr.bf16.mxu0 0
        %1868 = vmatmul.mubr.bf16.gmra.mrb[0].mxu0 %v1794
        %v1869 = vpop.f32.mrb[0].mxu0
        %v1870 = vadd.f32 0.0, %v1869
        %v1871 = vpop.f32.mrb[0].mxu0
        %v1872 = vpop.f32.mrb[0].mxu0
        %v1873 = vadd.f32 0.0, %v1872
        %v1874 = vpop.f32.mrb[0].mxu0
        %1875 = vmatprep.mubr.bf16.mxu0 0
        %1876 = vmatmul.mubr.bf16.gmra.mrb[0].mxu0 %v1797
        %v1877 = vpop.f32.mrb[0].mxu0
        %v1878 = vadd.f32 0.0, %v1877
        %v1879 = vpop.f32.mrb[0].mxu0
        %v1880 = vpop.f32.mrb[0].mxu0
        %v1881 = vadd.f32 0.0, %v1880
        %v1882 = vpop.f32.mrb[0].mxu0
        %1883 = vmatprep.mubr.bf16.mxu0 0
        %1884 = vmatmul.mubr.bf16.gmra.mrb[0].mxu0 %v1800
        %v1885 = vpop.f32.mrb[0].mxu0
        %v1886 = vadd.f32 0.0, %v1885
        %v1887 = vpop.f32.mrb[0].mxu0
        %v1888 = vpop.f32.mrb[0].mxu0
        %v1889 = vadd.f32 0.0, %v1888
        %v1890 = vpop.f32.mrb[0].mxu0
        %1891 = vmatprep.mubr.bf16.mxu0 0
        %1892 = vmatmul.mubr.bf16.gmra.mrb[0].mxu0 %v1803
        %v1893 = vpop.f32.mrb[0].mxu0
        %v1894 = vadd.f32 0.0, %v1893
        %v1895 = vpop.f32.mrb[0].mxu0
        %v1896 = vpop.f32.mrb[0].mxu0
        %v1897 = vadd.f32 0.0, %v1896
        %v1898 = vpop.f32.mrb[0].mxu0
        %1899 = vmatprep.mubr.bf16.mxu0 0
        %1900 = vmatmul.mubr.bf16.gmra.mrb[0].mxu0 %v1806
        %v1901 = vpop.f32.mrb[0].mxu0
        %v1902 = vadd.f32 0.0, %v1901
        %v1903 = vpop.f32.mrb[0].mxu0
        %v1904 = vpop.f32.mrb[0].mxu0
        %v1905 = vadd.f32 0.0, %v1904
        %v1906 = vpop.f32.mrb[0].mxu0
        %1907 = vdwg.mxu0
        %v1908 = vadd.f32 %v1638, %v1846
        %v1909 = vadd.f32 %v1639, %v1849
        %v1910 = vadd.f32 %v1640, %v1854
        %v1911 = vadd.f32 %v1641, %v1857
        %v1912 = vadd.f32 %v1642, %v1862
        %v1913 = vadd.f32 %v1643, %v1865
        %v1914 = vadd.f32 %v1644, %v1870
        %v1915 = vadd.f32 %v1645, %v1873
        %v1916 = vadd.f32 %v1646, %v1878
        %v1917 = vadd.f32 %v1647, %v1881
        %v1918 = vadd.f32 %v1648, %v1886
        %v1919 = vadd.f32 %v1649, %v1889
        %v1920 = vadd.f32 %v1650, %v1894
        %v1921 = vadd.f32 %v1651, %v1897
        %v1922 = vadd.f32 %v1652, %v1902
        %v1923 = vadd.f32 %v1653, %v1905
        %s1924 = scalar_lea.vmem [#allocation10], 16
        %v1925 = vld [vmem:[%s1924] sm:$0xf]
        %v1927 = vsel %vm786, %v1925, 0
        %1929 = vmatprep.subr.bf16.mxu0 0
        %1930 = vmatpush1.bf16.msra.mxu0 %v1927
        %1931 = vmatprep.subr.bf16.mxu0 0
        %1932 = vmatpush1.bf16.msra.mxu0 0
        %1933 = vmatprep.subr.bf16.mxu0 0
        %1934 = vmatpush1.bf16.msra.mxu0 0
        %1935 = vmatprep.subr.bf16.mxu0 0
        %1936 = vmatpush1.bf16.msra.mxu0 0
        %1937 = vmatprep.subr.bf16.mxu0 0
        %1938 = vmatpush1.bf16.msra.mxu0 0
        %1939 = vmatprep.subr.bf16.mxu0 0
        %1940 = vmatpush1.bf16.msra.mxu0 0
        %1941 = vmatprep.subr.bf16.mxu0 0
        %1942 = vmatpush1.bf16.msra.mxu0 0
        %1943 = vmatprep.subr.bf16.mxu0 0
        %1944 = vmatpush1.bf16.msra.mxu0 0
        %1945 = vmatprep.subr.bf16.mxu0 0
        %1946 = vmatpush1.bf16.msra.mxu0 0
        %1947 = vmatprep.subr.bf16.mxu0 0
        %1948 = vmatpush1.bf16.msra.mxu0 0
        %1949 = vmatprep.subr.bf16.mxu0 0
        %1950 = vmatpush1.bf16.msra.mxu0 0
        %1951 = vmatprep.subr.bf16.mxu0 0
        %1952 = vmatpush1.bf16.msra.mxu0 0
        %1953 = vmatprep.subr.bf16.mxu0 0
        %1954 = vmatpush1.bf16.msra.mxu0 0
        %1955 = vmatprep.subr.bf16.mxu0 0
        %1956 = vmatpush1.bf16.msra.mxu0 0
        %1957 = vmatprep.subr.bf16.mxu0 0
        %1958 = vmatpush1.bf16.msra.mxu0 0
        %1959 = vmatprep.subr.bf16.mxu0 0
        %1960 = vmatpush1.bf16.msra.mxu0 0
        %1961 = vmatprep.mubr.bf16.mxu0 0
        %1962 = vmatmul.mubr.bf16.gmra.mrb[0].mxu0 %v763
        %v1963 = vpop.f32.mrb[0].mxu0
        %v1964 = vadd.f32 0.0, %v1963
        %v1965 = vpop.f32.mrb[0].mxu0
        %v1966 = vpop.f32.mrb[0].mxu0
        %v1967 = vadd.f32 0.0, %v1966
        %v1968 = vpop.f32.mrb[0].mxu0
        %1969 = vmatprep.mubr.bf16.mxu0 0
        %1970 = vmatmul.mubr.bf16.gmra.mrb[0].mxu0 %v766
        %v1971 = vpop.f32.mrb[0].mxu0
        %v1972 = vadd.f32 0.0, %v1971
        %v1973 = vpop.f32.mrb[0].mxu0
        %v1974 = vpop.f32.mrb[0].mxu0
        %v1975 = vadd.f32 0.0, %v1974
        %v1976 = vpop.f32.mrb[0].mxu0
        %1977 = vmatprep.mubr.bf16.mxu0 0
        %1978 = vmatmul.mubr.bf16.gmra.mrb[0].mxu0 %v769
        %v1979 = vpop.f32.mrb[0].mxu0
        %v1980 = vadd.f32 0.0, %v1979
        %v1981 = vpop.f32.mrb[0].mxu0
        %v1982 = vpop.f32.mrb[0].mxu0
        %v1983 = vadd.f32 0.0, %v1982
        %v1984 = vpop.f32.mrb[0].mxu0
        %1985 = vmatprep.mubr.bf16.mxu0 0
        %1986 = vmatmul.mubr.bf16.gmra.mrb[0].mxu0 %v772
        %v1987 = vpop.f32.mrb[0].mxu0
        %v1988 = vadd.f32 0.0, %v1987
        %v1989 = vpop.f32.mrb[0].mxu0
        %v1990 = vpop.f32.mrb[0].mxu0
        %v1991 = vadd.f32 0.0, %v1990
        %v1992 = vpop.f32.mrb[0].mxu0
        %1993 = vmatprep.mubr.bf16.mxu0 0
        %1994 = vmatmul.mubr.bf16.gmra.mrb[0].mxu0 %v775
        %v1995 = vpop.f32.mrb[0].mxu0
        %v1996 = vadd.f32 0.0, %v1995
        %v1997 = vpop.f32.mrb[0].mxu0
        %v1998 = vpop.f32.mrb[0].mxu0
        %v1999 = vadd.f32 0.0, %v1998
        %v2000 = vpop.f32.mrb[0].mxu0
        %2001 = vmatprep.mubr.bf16.mxu0 0
        %2002 = vmatmul.mubr.bf16.gmra.mrb[0].mxu0 %v778
        %v2003 = vpop.f32.mrb[0].mxu0
        %v2004 = vadd.f32 0.0, %v2003
        %v2005 = vpop.f32.mrb[0].mxu0
        %v2006 = vpop.f32.mrb[0].mxu0
        %v2007 = vadd.f32 0.0, %v2006
        %v2008 = vpop.f32.mrb[0].mxu0
        %2009 = vmatprep.mubr.bf16.mxu0 0
        %2010 = vmatmul.mubr.bf16.gmra.mrb[0].mxu0 %v781
        %v2011 = vpop.f32.mrb[0].mxu0
        %v2012 = vadd.f32 0.0, %v2011
        %v2013 = vpop.f32.mrb[0].mxu0
        %v2014 = vpop.f32.mrb[0].mxu0
        %v2015 = vadd.f32 0.0, %v2014
        %v2016 = vpop.f32.mrb[0].mxu0
        %2017 = vmatprep.mubr.bf16.mxu0 0
        %2018 = vmatmul.mubr.bf16.gmra.mrb[0].mxu0 %v784
        %v2019 = vpop.f32.mrb[0].mxu0
        %v2020 = vadd.f32 0.0, %v2019
        %v2021 = vpop.f32.mrb[0].mxu0
        %v2022 = vpop.f32.mrb[0].mxu0
        %v2023 = vadd.f32 0.0, %v2022
        %v2024 = vpop.f32.mrb[0].mxu0
        %2025 = vdwg.mxu0
        %v2026 = vadd.f32 %v1908, %v1964
        %v2027 = vadd.f32 %v1909, %v1967
        %v2028 = vadd.f32 %v1910, %v1972
        %v2029 = vadd.f32 %v1911, %v1975
        %v2030 = vadd.f32 %v1912, %v1980
        %v2031 = vadd.f32 %v1913, %v1983
        %v2032 = vadd.f32 %v1914, %v1988
        %v2033 = vadd.f32 %v1915, %v1991
        %v2034 = vadd.f32 %v1916, %v1996
        %v2035 = vadd.f32 %v1917, %v1999
        %v2036 = vadd.f32 %v1918, %v2004
        %v2037 = vadd.f32 %v1919, %v2007
        %v2038 = vadd.f32 %v1920, %v2012
        %v2039 = vadd.f32 %v1921, %v2015
        %v2040 = vadd.f32 %v1922, %v2020
        %v2041 = vadd.f32 %v1923, %v2023
        %v2042 = vld [vmem:[%s612 + $0x10] sm:$0xf]
        %v2043 = vld [vmem:[%s612 + $0x2c] sm:$0xf]
        %v2044 = vld [vmem:[%s612 + $0x48] sm:$0xf]
        %v2045 = vld [vmem:[%s612 + $0x64] sm:$0xf]
        %v2046 = vld [vmem:[%s612 + $0x80] sm:$0xf]
        %v2047 = vld [vmem:[%s612 + $0x9c] sm:$0xf]
        %v2048 = vld [vmem:[%s612 + $0xb8] sm:$0xf]
        %v2049 = vld [vmem:[%s612 + $0xd4] sm:$0xf]
        %s2050 = scalar_lea.vmem [#allocation10], 20
        %v2051 = vld [vmem:[%s2050] sm:$0xf]
        %v2060 = vunpack.c.l.b16 %v614
        %v2061 = vunpack.c.l.b16 %v2042
        %v2062 = vunpack.c.l.b16 %v617
        %v2063 = vunpack.c.l.b16 %v2043
        %v2064 = vunpack.c.l.b16 %v620
        %v2065 = vunpack.c.l.b16 %v2044
        %v2066 = vunpack.c.l.b16 %v623
        %v2067 = vunpack.c.l.b16 %v2045
        %v2068 = vunpack.c.l.b16 %v626
        %v2069 = vunpack.c.l.b16 %v2046
        %v2070 = vunpack.c.l.b16 %v629
        %v2071 = vunpack.c.l.b16 %v2047
        %v2072 = vunpack.c.l.b16 %v632
        %v2073 = vunpack.c.l.b16 %v2048
        %v2074 = vunpack.c.l.b16 %v635
        %v2075 = vunpack.c.l.b16 %v2049
        %v2076 = vpack.c.b16 %v2061, %v2060
        %v2077 = vpack.c.b16 %v2063, %v2062
        %v2078 = vpack.c.b16 %v2065, %v2064
        %v2079 = vpack.c.b16 %v2067, %v2066
        %v2080 = vpack.c.b16 %v2069, %v2068
        %v2081 = vpack.c.b16 %v2071, %v2070
        %v2082 = vpack.c.b16 %v2073, %v2072
        %v2083 = vpack.c.b16 %v2075, %v2074
        %v2085 = vsel %vm761, %v2076, 0
        %v2088 = vsel %vm761, %v2077, 0
        %v2091 = vsel %vm761, %v2078, 0
        %v2094 = vsel %vm761, %v2079, 0
        %v2097 = vsel %vm761, %v2080, 0
        %v2100 = vsel %vm761, %v2081, 0
        %v2103 = vsel %vm761, %v2082, 0
        %v2106 = vsel %vm761, %v2083, 0
        %v2109 = vsel %vm786, %v2051, 0
        %2111 = vmatprep.subr.bf16.mxu0 0
        %2112 = vmatpush1.bf16.msra.mxu0 %v2109
        %2113 = vmatprep.subr.bf16.mxu0 0
        %2114 = vmatpush1.bf16.msra.mxu0 0
        %2115 = vmatprep.subr.bf16.mxu0 0
        %2116 = vmatpush1.bf16.msra.mxu0 0
        %2117 = vmatprep.subr.bf16.mxu0 0
        %2118 = vmatpush1.bf16.msra.mxu0 0
        %2119 = vmatprep.subr.bf16.mxu0 0
        %2120 = vmatpush1.bf16.msra.mxu0 0
        %2121 = vmatprep.subr.bf16.mxu0 0
        %2122 = vmatpush1.bf16.msra.mxu0 0
        %2123 = vmatprep.subr.bf16.mxu0 0
        %2124 = vmatpush1.bf16.msra.mxu0 0
        %2125 = vmatprep.subr.bf16.mxu0 0
        %2126 = vmatpush1.bf16.msra.mxu0 0
        %2127 = vmatprep.subr.bf16.mxu0 0
        %2128 = vmatpush1.bf16.msra.mxu0 0
        %2129 = vmatprep.subr.bf16.mxu0 0
        %2130 = vmatpush1.bf16.msra.mxu0 0
        %2131 = vmatprep.subr.bf16.mxu0 0
        %2132 = vmatpush1.bf16.msra.mxu0 0
        %2133 = vmatprep.subr.bf16.mxu0 0
        %2134 = vmatpush1.bf16.msra.mxu0 0
        %2135 = vmatprep.subr.bf16.mxu0 0
        %2136 = vmatpush1.bf16.msra.mxu0 0
        %2137 = vmatprep.subr.bf16.mxu0 0
        %2138 = vmatpush1.bf16.msra.mxu0 0
        %2139 = vmatprep.subr.bf16.mxu0 0
        %2140 = vmatpush1.bf16.msra.mxu0 0
        %2141 = vmatprep.subr.bf16.mxu0 0
        %2142 = vmatpush1.bf16.msra.mxu0 0
        %2143 = vmatprep.mubr.bf16.mxu0 0
        %2144 = vmatmul.mubr.bf16.gmra.mrb[0].mxu0 %v2085
        %v2145 = vpop.f32.mrb[0].mxu0
        %v2146 = vadd.f32 0.0, %v2145
        %v2147 = vpop.f32.mrb[0].mxu0
        %v2148 = vpop.f32.mrb[0].mxu0
        %v2149 = vadd.f32 0.0, %v2148
        %v2150 = vpop.f32.mrb[0].mxu0
        %2151 = vmatprep.mubr.bf16.mxu0 0
        %2152 = vmatmul.mubr.bf16.gmra.mrb[0].mxu0 %v2088
        %v2153 = vpop.f32.mrb[0].mxu0
        %v2154 = vadd.f32 0.0, %v2153
        %v2155 = vpop.f32.mrb[0].mxu0
        %v2156 = vpop.f32.mrb[0].mxu0
        %v2157 = vadd.f32 0.0, %v2156
        %v2158 = vpop.f32.mrb[0].mxu0
        %2159 = vmatprep.mubr.bf16.mxu0 0
        %2160 = vmatmul.mubr.bf16.gmra.mrb[0].mxu0 %v2091
        %v2161 = vpop.f32.mrb[0].mxu0
        %v2162 = vadd.f32 0.0, %v2161
        %v2163 = vpop.f32.mrb[0].mxu0
        %v2164 = vpop.f32.mrb[0].mxu0
        %v2165 = vadd.f32 0.0, %v2164
        %v2166 = vpop.f32.mrb[0].mxu0
        %2167 = vmatprep.mubr.bf16.mxu0 0
        %2168 = vmatmul.mubr.bf16.gmra.mrb[0].mxu0 %v2094
        %v2169 = vpop.f32.mrb[0].mxu0
        %v2170 = vadd.f32 0.0, %v2169
        %v2171 = vpop.f32.mrb[0].mxu0
        %v2172 = vpop.f32.mrb[0].mxu0
        %v2173 = vadd.f32 0.0, %v2172
        %v2174 = vpop.f32.mrb[0].mxu0
        %2175 = vmatprep.mubr.bf16.mxu0 0
        %2176 = vmatmul.mubr.bf16.gmra.mrb[0].mxu0 %v2097
        %v2177 = vpop.f32.mrb[0].mxu0
        %v2178 = vadd.f32 0.0, %v2177
        %v2179 = vpop.f32.mrb[0].mxu0
        %v2180 = vpop.f32.mrb[0].mxu0
        %v2181 = vadd.f32 0.0, %v2180
        %v2182 = vpop.f32.mrb[0].mxu0
        %2183 = vmatprep.mubr.bf16.mxu0 0
        %2184 = vmatmul.mubr.bf16.gmra.mrb[0].mxu0 %v2100
        %v2185 = vpop.f32.mrb[0].mxu0
        %v2186 = vadd.f32 0.0, %v2185
        %v2187 = vpop.f32.mrb[0].mxu0
        %v2188 = vpop.f32.mrb[0].mxu0
        %v2189 = vadd.f32 0.0, %v2188
        %v2190 = vpop.f32.mrb[0].mxu0
        %2191 = vmatprep.mubr.bf16.mxu0 0
        %2192 = vmatmul.mubr.bf16.gmra.mrb[0].mxu0 %v2103
        %v2193 = vpop.f32.mrb[0].mxu0
        %v2194 = vadd.f32 0.0, %v2193
        %v2195 = vpop.f32.mrb[0].mxu0
        %v2196 = vpop.f32.mrb[0].mxu0
        %v2197 = vadd.f32 0.0, %v2196
        %v2198 = vpop.f32.mrb[0].mxu0
        %2199 = vmatprep.mubr.bf16.mxu0 0
        %2200 = vmatmul.mubr.bf16.gmra.mrb[0].mxu0 %v2106
        %v2201 = vpop.f32.mrb[0].mxu0
        %v2202 = vadd.f32 0.0, %v2201
        %v2203 = vpop.f32.mrb[0].mxu0
        %v2204 = vpop.f32.mrb[0].mxu0
        %v2205 = vadd.f32 0.0, %v2204
        %v2206 = vpop.f32.mrb[0].mxu0
        %2207 = vdwg.mxu0
        %v2208 = vadd.f32 %v2026, %v2146
        %v2209 = vadd.f32 %v2027, %v2149
        %v2210 = vadd.f32 %v2028, %v2154
        %v2211 = vadd.f32 %v2029, %v2157
        %v2212 = vadd.f32 %v2030, %v2162
        %v2213 = vadd.f32 %v2031, %v2165
        %v2214 = vadd.f32 %v2032, %v2170
        %v2215 = vadd.f32 %v2033, %v2173
        %v2216 = vadd.f32 %v2034, %v2178
        %v2217 = vadd.f32 %v2035, %v2181
        %v2218 = vadd.f32 %v2036, %v2186
        %v2219 = vadd.f32 %v2037, %v2189
        %v2220 = vadd.f32 %v2038, %v2194
        %v2221 = vadd.f32 %v2039, %v2197
        %v2222 = vadd.f32 %v2040, %v2202
        %v2223 = vadd.f32 %v2041, %v2205
        %s2224 = sadd.s32 %s608, 24
        %s2225 = smul.u32 %s2224, 7
        %s2226 = smul.addr %s2225, 4
        %s2227 = scalar_lea.vmem %s510, %s2226 [#allocation2]
        %v2228 = vld [vmem:[%s2227 + $0x4] sm:$0xc]
        %v2229 = vld [vmem:[%s2227 + $0x8] sm:$0xf]
        %v2230 = vld [vmem:[%s2227 + $0xc] sm:$0x3]
        %v2231 = vld [vmem:[%s2227 + $0x20] sm:$0xc]
        %v2232 = vld [vmem:[%s2227 + $0x24] sm:$0xf]
        %v2233 = vld [vmem:[%s2227 + $0x28] sm:$0x3]
        %v2234 = vld [vmem:[%s2227 + $0x3c] sm:$0xc]
        %v2235 = vld [vmem:[%s2227 + $0x40] sm:$0xf]
        %v2236 = vld [vmem:[%s2227 + $0x44] sm:$0x3]
        %v2237 = vld [vmem:[%s2227 + $0x58] sm:$0xc]
        %v2238 = vld [vmem:[%s2227 + $0x5c] sm:$0xf]
        %v2239 = vld [vmem:[%s2227 + $0x60] sm:$0x3]
        %v2240 = vld [vmem:[%s2227 + $0x74] sm:$0xc]
        %v2241 = vld [vmem:[%s2227 + $0x78] sm:$0xf]
        %v2242 = vld [vmem:[%s2227 + $0x7c] sm:$0x3]
        %v2243 = vld [vmem:[%s2227 + $0x90] sm:$0xc]
        %v2244 = vld [vmem:[%s2227 + $0x94] sm:$0xf]
        %v2245 = vld [vmem:[%s2227 + $0x98] sm:$0x3]
        %v2246 = vld [vmem:[%s2227 + $0xac] sm:$0xc]
        %v2247 = vld [vmem:[%s2227 + $0xb0] sm:$0xf]
        %v2248 = vld [vmem:[%s2227 + $0xb4] sm:$0x3]
        %v2249 = vld [vmem:[%s2227 + $0xc8] sm:$0xc]
        %v2250 = vld [vmem:[%s2227 + $0xcc] sm:$0xf]
        %v2251 = vld [vmem:[%s2227 + $0xd0] sm:$0x3]
        %v2276 = vrot.slane %v2228, 6
        %v2277 = vrot.slane %v2276, 4
        %v2278 = vrot.slane %v2229, 6
        %v2279 = vsel %vm1012, %v2277, %v2278
        %v2280 = vrot.slane %v2278, 4
        %v2281 = vrot.slane %v2230, 6
        %v2282 = vsel %vm1012, %v2280, %v2281
        %v2283 = vrot.slane %v2231, 6
        %v2284 = vrot.slane %v2283, 4
        %v2285 = vrot.slane %v2232, 6
        %v2286 = vsel %vm1012, %v2284, %v2285
        %v2287 = vrot.slane %v2285, 4
        %v2288 = vrot.slane %v2233, 6
        %v2289 = vsel %vm1012, %v2287, %v2288
        %v2290 = vrot.slane %v2234, 6
        %v2291 = vrot.slane %v2290, 4
        %v2292 = vrot.slane %v2235, 6
        %v2293 = vsel %vm1012, %v2291, %v2292
        %v2294 = vrot.slane %v2292, 4
        %v2295 = vrot.slane %v2236, 6
        %v2296 = vsel %vm1012, %v2294, %v2295
        %v2297 = vrot.slane %v2237, 6
        %v2298 = vrot.slane %v2297, 4
        %v2299 = vrot.slane %v2238, 6
        %v2300 = vsel %vm1012, %v2298, %v2299
        %v2301 = vrot.slane %v2299, 4
        %v2302 = vrot.slane %v2239, 6
        %v2303 = vsel %vm1012, %v2301, %v2302
        %v2304 = vrot.slane %v2240, 6
        %v2305 = vrot.slane %v2304, 4
        %v2306 = vrot.slane %v2241, 6
        %v2307 = vsel %vm1012, %v2305, %v2306
        %v2308 = vrot.slane %v2306, 4
        %v2309 = vrot.slane %v2242, 6
        %v2310 = vsel %vm1012, %v2308, %v2309
        %v2311 = vrot.slane %v2243, 6
        %v2312 = vrot.slane %v2311, 4
        %v2313 = vrot.slane %v2244, 6
        %v2314 = vsel %vm1012, %v2312, %v2313
        %v2315 = vrot.slane %v2313, 4
        %v2316 = vrot.slane %v2245, 6
        %v2317 = vsel %vm1012, %v2315, %v2316
        %v2318 = vrot.slane %v2246, 6
        %v2319 = vrot.slane %v2318, 4
        %v2320 = vrot.slane %v2247, 6
        %v2321 = vsel %vm1012, %v2319, %v2320
        %v2322 = vrot.slane %v2320, 4
        %v2323 = vrot.slane %v2248, 6
        %v2324 = vsel %vm1012, %v2322, %v2323
        %v2325 = vrot.slane %v2249, 6
        %v2326 = vrot.slane %v2325, 4
        %v2327 = vrot.slane %v2250, 6
        %v2328 = vsel %vm1012, %v2326, %v2327
        %v2329 = vrot.slane %v2327, 4
        %v2330 = vrot.slane %v2251, 6
        %v2331 = vsel %vm1012, %v2329, %v2330
        %s2332 = scalar_lea.vmem [#allocation10], 24
        %v2333 = vld [vmem:[%s2332] sm:$0xf]
        %v2334 = vunpack.c.l.b16 %v2279
        %v2335 = vunpack.c.l.b16 %v2282
        %v2336 = vunpack.c.l.b16 %v2286
        %v2337 = vunpack.c.l.b16 %v2289
        %v2338 = vunpack.c.l.b16 %v2293
        %v2339 = vunpack.c.l.b16 %v2296
        %v2340 = vunpack.c.l.b16 %v2300
        %v2341 = vunpack.c.l.b16 %v2303
        %v2342 = vunpack.c.l.b16 %v2307
        %v2343 = vunpack.c.l.b16 %v2310
        %v2344 = vunpack.c.l.b16 %v2314
        %v2345 = vunpack.c.l.b16 %v2317
        %v2346 = vunpack.c.l.b16 %v2321
        %v2347 = vunpack.c.l.b16 %v2324
        %v2348 = vunpack.c.l.b16 %v2328
        %v2349 = vunpack.c.l.b16 %v2331
        %v2350 = vpack.c.b16 %v2335, %v2334
        %v2351 = vpack.c.b16 %v2337, %v2336
        %v2352 = vpack.c.b16 %v2339, %v2338
        %v2353 = vpack.c.b16 %v2341, %v2340
        %v2354 = vpack.c.b16 %v2343, %v2342
        %v2355 = vpack.c.b16 %v2345, %v2344
        %v2356 = vpack.c.b16 %v2347, %v2346
        %v2357 = vpack.c.b16 %v2349, %v2348
        %v2359 = vsel %vm761, %v2350, 0
        %v2362 = vsel %vm761, %v2351, 0
        %v2365 = vsel %vm761, %v2352, 0
        %v2368 = vsel %vm761, %v2353, 0
        %v2371 = vsel %vm761, %v2354, 0
        %v2374 = vsel %vm761, %v2355, 0
        %v2377 = vsel %vm761, %v2356, 0
        %v2380 = vsel %vm761, %v2357, 0
        %v2383 = vsel %vm786, %v2333, 0
        %2385 = vmatprep.subr.bf16.mxu0 0
        %2386 = vmatpush1.bf16.msra.mxu0 %v2383
        %2387 = vmatprep.subr.bf16.mxu0 0
        %2388 = vmatpush1.bf16.msra.mxu0 0
        %2389 = vmatprep.subr.bf16.mxu0 0
        %2390 = vmatpush1.bf16.msra.mxu0 0
        %2391 = vmatprep.subr.bf16.mxu0 0
        %2392 = vmatpush1.bf16.msra.mxu0 0
        %2393 = vmatprep.subr.bf16.mxu0 0
        %2394 = vmatpush1.bf16.msra.mxu0 0
        %2395 = vmatprep.subr.bf16.mxu0 0
        %2396 = vmatpush1.bf16.msra.mxu0 0
        %2397 = vmatprep.subr.bf16.mxu0 0
        %2398 = vmatpush1.bf16.msra.mxu0 0
        %2399 = vmatprep.subr.bf16.mxu0 0
        %2400 = vmatpush1.bf16.msra.mxu0 0
        %2401 = vmatprep.subr.bf16.mxu0 0
        %2402 = vmatpush1.bf16.msra.mxu0 0
        %2403 = vmatprep.subr.bf16.mxu0 0
        %2404 = vmatpush1.bf16.msra.mxu0 0
        %2405 = vmatprep.subr.bf16.mxu0 0
        %2406 = vmatpush1.bf16.msra.mxu0 0
        %2407 = vmatprep.subr.bf16.mxu0 0
        %2408 = vmatpush1.bf16.msra.mxu0 0
        %2409 = vmatprep.subr.bf16.mxu0 0
        %2410 = vmatpush1.bf16.msra.mxu0 0
        %2411 = vmatprep.subr.bf16.mxu0 0
        %2412 = vmatpush1.bf16.msra.mxu0 0
        %2413 = vmatprep.subr.bf16.mxu0 0
        %2414 = vmatpush1.bf16.msra.mxu0 0
        %2415 = vmatprep.subr.bf16.mxu0 0
        %2416 = vmatpush1.bf16.msra.mxu0 0
        %2417 = vmatprep.mubr.bf16.mxu0 0
        %2418 = vmatmul.mubr.bf16.gmra.mrb[0].mxu0 %v2359
        %v2419 = vpop.f32.mrb[0].mxu0
        %v2420 = vadd.f32 0.0, %v2419
        %v2421 = vpop.f32.mrb[0].mxu0
        %v2422 = vpop.f32.mrb[0].mxu0
        %v2423 = vadd.f32 0.0, %v2422
        %v2424 = vpop.f32.mrb[0].mxu0
        %2425 = vmatprep.mubr.bf16.mxu0 0
        %2426 = vmatmul.mubr.bf16.gmra.mrb[0].mxu0 %v2362
        %v2427 = vpop.f32.mrb[0].mxu0
        %v2428 = vadd.f32 0.0, %v2427
        %v2429 = vpop.f32.mrb[0].mxu0
        %v2430 = vpop.f32.mrb[0].mxu0
        %v2431 = vadd.f32 0.0, %v2430
        %v2432 = vpop.f32.mrb[0].mxu0
        %2433 = vmatprep.mubr.bf16.mxu0 0
        %2434 = vmatmul.mubr.bf16.gmra.mrb[0].mxu0 %v2365
        %v2435 = vpop.f32.mrb[0].mxu0
        %v2436 = vadd.f32 0.0, %v2435
        %v2437 = vpop.f32.mrb[0].mxu0
        %v2438 = vpop.f32.mrb[0].mxu0
        %v2439 = vadd.f32 0.0, %v2438
        %v2440 = vpop.f32.mrb[0].mxu0
        %2441 = vmatprep.mubr.bf16.mxu0 0
        %2442 = vmatmul.mubr.bf16.gmra.mrb[0].mxu0 %v2368
        %v2443 = vpop.f32.mrb[0].mxu0
        %v2444 = vadd.f32 0.0, %v2443
        %v2445 = vpop.f32.mrb[0].mxu0
        %v2446 = vpop.f32.mrb[0].mxu0
        %v2447 = vadd.f32 0.0, %v2446
        %v2448 = vpop.f32.mrb[0].mxu0
        %2449 = vmatprep.mubr.bf16.mxu0 0
        %2450 = vmatmul.mubr.bf16.gmra.mrb[0].mxu0 %v2371
        %v2451 = vpop.f32.mrb[0].mxu0
        %v2452 = vadd.f32 0.0, %v2451
        %v2453 = vpop.f32.mrb[0].mxu0
        %v2454 = vpop.f32.mrb[0].mxu0
        %v2455 = vadd.f32 0.0, %v2454
        %v2456 = vpop.f32.mrb[0].mxu0
        %2457 = vmatprep.mubr.bf16.mxu0 0
        %2458 = vmatmul.mubr.bf16.gmra.mrb[0].mxu0 %v2374
        %v2459 = vpop.f32.mrb[0].mxu0
        %v2460 = vadd.f32 0.0, %v2459
        %v2461 = vpop.f32.mrb[0].mxu0
        %v2462 = vpop.f32.mrb[0].mxu0
        %v2463 = vadd.f32 0.0, %v2462
        %v2464 = vpop.f32.mrb[0].mxu0
        %2465 = vmatprep.mubr.bf16.mxu0 0
        %2466 = vmatmul.mubr.bf16.gmra.mrb[0].mxu0 %v2377
        %v2467 = vpop.f32.mrb[0].mxu0
        %v2468 = vadd.f32 0.0, %v2467
        %v2469 = vpop.f32.mrb[0].mxu0
        %v2470 = vpop.f32.mrb[0].mxu0
        %v2471 = vadd.f32 0.0, %v2470
        %v2472 = vpop.f32.mrb[0].mxu0
        %2473 = vmatprep.mubr.bf16.mxu0 0
        %2474 = vmatmul.mubr.bf16.gmra.mrb[0].mxu0 %v2380
        %v2475 = vpop.f32.mrb[0].mxu0
        %v2476 = vadd.f32 0.0, %v2475
        %v2477 = vpop.f32.mrb[0].mxu0
        %v2478 = vpop.f32.mrb[0].mxu0
        %v2479 = vadd.f32 0.0, %v2478
        %v2480 = vpop.f32.mrb[0].mxu0
        %2481 = vdwg.mxu0
        %v2482 = vadd.f32 %v2208, %v2420
        %v2483 = vadd.f32 %v2209, %v2423
        %v2484 = vadd.f32 %v2210, %v2428
        %v2485 = vadd.f32 %v2211, %v2431
        %v2486 = vadd.f32 %v2212, %v2436
        %v2487 = vadd.f32 %v2213, %v2439
        %v2488 = vadd.f32 %v2214, %v2444
        %v2489 = vadd.f32 %v2215, %v2447
        %v2490 = vadd.f32 %v2216, %v2452
        %v2491 = vadd.f32 %v2217, %v2455
        %v2492 = vadd.f32 %v2218, %v2460
        %v2493 = vadd.f32 %v2219, %v2463
        %v2494 = vadd.f32 %v2220, %v2468
        %v2495 = vadd.f32 %v2221, %v2471
        %v2496 = vadd.f32 %v2222, %v2476
        %v2497 = vadd.f32 %v2223, %v2479
        %v2498 = vld [vmem:[%s2227 + $0x8] sm:$0xe]
        %v2499 = vld [vmem:[%s2227 + $0xc] sm:$0xf]
        %v2500 = vld [vmem:[%s2227 + $0x10] sm:$0x1]
        %v2501 = vld [vmem:[%s2227 + $0x24] sm:$0xe]
        %v2502 = vld [vmem:[%s2227 + $0x28] sm:$0xf]
        %v2503 = vld [vmem:[%s2227 + $0x2c] sm:$0x1]
        %v2504 = vld [vmem:[%s2227 + $0x40] sm:$0xe]
        %v2505 = vld [vmem:[%s2227 + $0x44] sm:$0xf]
        %v2506 = vld [vmem:[%s2227 + $0x48] sm:$0x1]
        %v2507 = vld [vmem:[%s2227 + $0x5c] sm:$0xe]
        %v2508 = vld [vmem:[%s2227 + $0x60] sm:$0xf]
        %v2509 = vld [vmem:[%s2227 + $0x64] sm:$0x1]
        %v2510 = vld [vmem:[%s2227 + $0x78] sm:$0xe]
        %v2511 = vld [vmem:[%s2227 + $0x7c] sm:$0xf]
        %v2512 = vld [vmem:[%s2227 + $0x80] sm:$0x1]
        %v2513 = vld [vmem:[%s2227 + $0x94] sm:$0xe]
        %v2514 = vld [vmem:[%s2227 + $0x98] sm:$0xf]
        %v2515 = vld [vmem:[%s2227 + $0x9c] sm:$0x1]
        %v2516 = vld [vmem:[%s2227 + $0xb0] sm:$0xe]
        %v2517 = vld [vmem:[%s2227 + $0xb4] sm:$0xf]
        %v2518 = vld [vmem:[%s2227 + $0xb8] sm:$0x1]
        %v2519 = vld [vmem:[%s2227 + $0xcc] sm:$0xe]
        %v2520 = vld [vmem:[%s2227 + $0xd0] sm:$0xf]
        %v2521 = vld [vmem:[%s2227 + $0xd4] sm:$0x1]
        %v2546 = vrot.slane %v2498, 5
        %v2547 = vrot.slane %v2546, 4
        %v2548 = vrot.slane %v2499, 5
        %v2549 = vsel %vm663, %v2547, %v2548
        %v2550 = vrot.slane %v2548, 4
        %v2551 = vrot.slane %v2500, 5
        %v2552 = vsel %vm663, %v2550, %v2551
        %v2553 = vrot.slane %v2501, 5
        %v2554 = vrot.slane %v2553, 4
        %v2555 = vrot.slane %v2502, 5
        %v2556 = vsel %vm663, %v2554, %v2555
        %v2557 = vrot.slane %v2555, 4
        %v2558 = vrot.slane %v2503, 5
        %v2559 = vsel %vm663, %v2557, %v2558
        %v2560 = vrot.slane %v2504, 5
        %v2561 = vrot.slane %v2560, 4
        %v2562 = vrot.slane %v2505, 5
        %v2563 = vsel %vm663, %v2561, %v2562
        %v2564 = vrot.slane %v2562, 4
        %v2565 = vrot.slane %v2506, 5
        %v2566 = vsel %vm663, %v2564, %v2565
        %v2567 = vrot.slane %v2507, 5
        %v2568 = vrot.slane %v2567, 4
        %v2569 = vrot.slane %v2508, 5
        %v2570 = vsel %vm663, %v2568, %v2569
        %v2571 = vrot.slane %v2569, 4
        %v2572 = vrot.slane %v2509, 5
        %v2573 = vsel %vm663, %v2571, %v2572
        %v2574 = vrot.slane %v2510, 5
        %v2575 = vrot.slane %v2574, 4
        %v2576 = vrot.slane %v2511, 5
        %v2577 = vsel %vm663, %v2575, %v2576
        %v2578 = vrot.slane %v2576, 4
        %v2579 = vrot.slane %v2512, 5
        %v2580 = vsel %vm663, %v2578, %v2579
        %v2581 = vrot.slane %v2513, 5
        %v2582 = vrot.slane %v2581, 4
        %v2583 = vrot.slane %v2514, 5
        %v2584 = vsel %vm663, %v2582, %v2583
        %v2585 = vrot.slane %v2583, 4
        %v2586 = vrot.slane %v2515, 5
        %v2587 = vsel %vm663, %v2585, %v2586
        %v2588 = vrot.slane %v2516, 5
        %v2589 = vrot.slane %v2588, 4
        %v2590 = vrot.slane %v2517, 5
        %v2591 = vsel %vm663, %v2589, %v2590
        %v2592 = vrot.slane %v2590, 4
        %v2593 = vrot.slane %v2518, 5
        %v2594 = vsel %vm663, %v2592, %v2593
        %v2595 = vrot.slane %v2519, 5
        %v2596 = vrot.slane %v2595, 4
        %v2597 = vrot.slane %v2520, 5
        %v2598 = vsel %vm663, %v2596, %v2597
        %v2599 = vrot.slane %v2597, 4
        %v2600 = vrot.slane %v2521, 5
        %v2601 = vsel %vm663, %v2599, %v2600
        %s2602 = scalar_lea.vmem [#allocation10], 28
        %v2603 = vld [vmem:[%s2602] sm:$0xf]
        %v2604 = vunpack.c.l.b16 %v2549
        %v2605 = vunpack.c.l.b16 %v2552
        %v2606 = vunpack.c.l.b16 %v2556
        %v2607 = vunpack.c.l.b16 %v2559
        %v2608 = vunpack.c.l.b16 %v2563
        %v2609 = vunpack.c.l.b16 %v2566
        %v2610 = vunpack.c.l.b16 %v2570
        %v2611 = vunpack.c.l.b16 %v2573
        %v2612 = vunpack.c.l.b16 %v2577
        %v2613 = vunpack.c.l.b16 %v2580
        %v2614 = vunpack.c.l.b16 %v2584
        %v2615 = vunpack.c.l.b16 %v2587
        %v2616 = vunpack.c.l.b16 %v2591
        %v2617 = vunpack.c.l.b16 %v2594
        %v2618 = vunpack.c.l.b16 %v2598
        %v2619 = vunpack.c.l.b16 %v2601
        %v2620 = vpack.c.b16 %v2605, %v2604
        %v2621 = vpack.c.b16 %v2607, %v2606
        %v2622 = vpack.c.b16 %v2609, %v2608
        %v2623 = vpack.c.b16 %v2611, %v2610
        %v2624 = vpack.c.b16 %v2613, %v2612
        %v2625 = vpack.c.b16 %v2615, %v2614
        %v2626 = vpack.c.b16 %v2617, %v2616
        %v2627 = vpack.c.b16 %v2619, %v2618
        %v2629 = vsel %vm761, %v2620, 0
        %v2632 = vsel %vm761, %v2621, 0
        %v2635 = vsel %vm761, %v2622, 0
        %v2638 = vsel %vm761, %v2623, 0
        %v2641 = vsel %vm761, %v2624, 0
        %v2644 = vsel %vm761, %v2625, 0
        %v2647 = vsel %vm761, %v2626, 0
        %v2650 = vsel %vm761, %v2627, 0
        %v2653 = vsel %vm786, %v2603, 0
        %2655 = vmatprep.subr.bf16.mxu0 0
        %2656 = vmatpush1.bf16.msra.mxu0 %v2653
        %2657 = vmatprep.subr.bf16.mxu0 0
        %2658 = vmatpush1.bf16.msra.mxu0 0
        %2659 = vmatprep.subr.bf16.mxu0 0
        %2660 = vmatpush1.bf16.msra.mxu0 0
        %2661 = vmatprep.subr.bf16.mxu0 0
        %2662 = vmatpush1.bf16.msra.mxu0 0
        %2663 = vmatprep.subr.bf16.mxu0 0
        %2664 = vmatpush1.bf16.msra.mxu0 0
        %2665 = vmatprep.subr.bf16.mxu0 0
        %2666 = vmatpush1.bf16.msra.mxu0 0
        %2667 = vmatprep.subr.bf16.mxu0 0
        %2668 = vmatpush1.bf16.msra.mxu0 0
        %2669 = vmatprep.subr.bf16.mxu0 0
        %2670 = vmatpush1.bf16.msra.mxu0 0
        %2671 = vmatprep.subr.bf16.mxu0 0
        %2672 = vmatpush1.bf16.msra.mxu0 0
        %2673 = vmatprep.subr.bf16.mxu0 0
        %2674 = vmatpush1.bf16.msra.mxu0 0
        %2675 = vmatprep.subr.bf16.mxu0 0
        %2676 = vmatpush1.bf16.msra.mxu0 0
        %2677 = vmatprep.subr.bf16.mxu0 0
        %2678 = vmatpush1.bf16.msra.mxu0 0
        %2679 = vmatprep.subr.bf16.mxu0 0
        %2680 = vmatpush1.bf16.msra.mxu0 0
        %2681 = vmatprep.subr.bf16.mxu0 0
        %2682 = vmatpush1.bf16.msra.mxu0 0
        %2683 = vmatprep.subr.bf16.mxu0 0
        %2684 = vmatpush1.bf16.msra.mxu0 0
        %2685 = vmatprep.subr.bf16.mxu0 0
        %2686 = vmatpush1.bf16.msra.mxu0 0
        %2687 = vmatprep.mubr.bf16.mxu0 0
        %2688 = vmatmul.mubr.bf16.gmra.mrb[0].mxu0 %v2629
        %v2689 = vpop.f32.mrb[0].mxu0
        %v2690 = vadd.f32 0.0, %v2689
        %v2691 = vpop.f32.mrb[0].mxu0
        %v2692 = vpop.f32.mrb[0].mxu0
        %v2693 = vadd.f32 0.0, %v2692
        %v2694 = vpop.f32.mrb[0].mxu0
        %2695 = vmatprep.mubr.bf16.mxu0 0
        %2696 = vmatmul.mubr.bf16.gmra.mrb[0].mxu0 %v2632
        %v2697 = vpop.f32.mrb[0].mxu0
        %v2698 = vadd.f32 0.0, %v2697
        %v2699 = vpop.f32.mrb[0].mxu0
        %v2700 = vpop.f32.mrb[0].mxu0
        %v2701 = vadd.f32 0.0, %v2700
        %v2702 = vpop.f32.mrb[0].mxu0
        %2703 = vmatprep.mubr.bf16.mxu0 0
        %2704 = vmatmul.mubr.bf16.gmra.mrb[0].mxu0 %v2635
        %v2705 = vpop.f32.mrb[0].mxu0
        %v2706 = vadd.f32 0.0, %v2705
        %v2707 = vpop.f32.mrb[0].mxu0
        %v2708 = vpop.f32.mrb[0].mxu0
        %v2709 = vadd.f32 0.0, %v2708
        %v2710 = vpop.f32.mrb[0].mxu0
        %2711 = vmatprep.mubr.bf16.mxu0 0
        %2712 = vmatmul.mubr.bf16.gmra.mrb[0].mxu0 %v2638
        %v2713 = vpop.f32.mrb[0].mxu0
        %v2714 = vadd.f32 0.0, %v2713
        %v2715 = vpop.f32.mrb[0].mxu0
        %v2716 = vpop.f32.mrb[0].mxu0
        %v2717 = vadd.f32 0.0, %v2716
        %v2718 = vpop.f32.mrb[0].mxu0
        %2719 = vmatprep.mubr.bf16.mxu0 0
        %2720 = vmatmul.mubr.bf16.gmra.mrb[0].mxu0 %v2641
        %v2721 = vpop.f32.mrb[0].mxu0
        %v2722 = vadd.f32 0.0, %v2721
        %v2723 = vpop.f32.mrb[0].mxu0
        %v2724 = vpop.f32.mrb[0].mxu0
        %v2725 = vadd.f32 0.0, %v2724
        %v2726 = vpop.f32.mrb[0].mxu0
        %2727 = vmatprep.mubr.bf16.mxu0 0
        %2728 = vmatmul.mubr.bf16.gmra.mrb[0].mxu0 %v2644
        %v2729 = vpop.f32.mrb[0].mxu0
        %v2730 = vadd.f32 0.0, %v2729
        %v2731 = vpop.f32.mrb[0].mxu0
        %v2732 = vpop.f32.mrb[0].mxu0
        %v2733 = vadd.f32 0.0, %v2732
        %v2734 = vpop.f32.mrb[0].mxu0
        %2735 = vmatprep.mubr.bf16.mxu0 0
        %2736 = vmatmul.mubr.bf16.gmra.mrb[0].mxu0 %v2647
        %v2737 = vpop.f32.mrb[0].mxu0
        %v2738 = vadd.f32 0.0, %v2737
        %v2739 = vpop.f32.mrb[0].mxu0
        %v2740 = vpop.f32.mrb[0].mxu0
        %v2741 = vadd.f32 0.0, %v2740
        %v2742 = vpop.f32.mrb[0].mxu0
        %2743 = vmatprep.mubr.bf16.mxu0 0
        %2744 = vmatmul.mubr.bf16.gmra.mrb[0].mxu0 %v2650
        %v2745 = vpop.f32.mrb[0].mxu0
        %v2746 = vadd.f32 0.0, %v2745
        %v2747 = vpop.f32.mrb[0].mxu0
        %v2748 = vpop.f32.mrb[0].mxu0
        %v2749 = vadd.f32 0.0, %v2748
        %v2750 = vpop.f32.mrb[0].mxu0
        %2751 = vdwg.mxu0
        %v2752 = vadd.f32 %v2482, %v2690
        %v2753 = vadd.f32 %v2483, %v2693
        %v2754 = vadd.f32 %v2484, %v2698
        %v2755 = vadd.f32 %v2485, %v2701
        %v2756 = vadd.f32 %v2486, %v2706
        %v2757 = vadd.f32 %v2487, %v2709
        %v2758 = vadd.f32 %v2488, %v2714
        %v2759 = vadd.f32 %v2489, %v2717
        %v2760 = vadd.f32 %v2490, %v2722
        %v2761 = vadd.f32 %v2491, %v2725
        %v2762 = vadd.f32 %v2492, %v2730
        %v2763 = vadd.f32 %v2493, %v2733
        %v2764 = vadd.f32 %v2494, %v2738
        %v2765 = vadd.f32 %v2495, %v2741
        %v2766 = vadd.f32 %v2496, %v2746
        %v2767 = vadd.f32 %v2497, %v2749
        %v2768 = vld [vmem:[%s2227 + $0x10] sm:$0xf]
        %v2769 = vld [vmem:[%s2227 + $0x2c] sm:$0xf]
        %v2770 = vld [vmem:[%s2227 + $0x48] sm:$0xf]
        %v2771 = vld [vmem:[%s2227 + $0x64] sm:$0xf]
        %v2772 = vld [vmem:[%s2227 + $0x80] sm:$0xf]
        %v2773 = vld [vmem:[%s2227 + $0x9c] sm:$0xf]
        %v2774 = vld [vmem:[%s2227 + $0xb8] sm:$0xf]
        %v2775 = vld [vmem:[%s2227 + $0xd4] sm:$0xf]
        %s2776 = scalar_lea.vmem [#allocation10], 32
        %v2777 = vld [vmem:[%s2776] sm:$0xf]
        %v2786 = vunpack.c.l.b16 %v2499
        %v2787 = vunpack.c.l.b16 %v2768
        %v2788 = vunpack.c.l.b16 %v2502
        %v2789 = vunpack.c.l.b16 %v2769
        %v2790 = vunpack.c.l.b16 %v2505
        %v2791 = vunpack.c.l.b16 %v2770
        %v2792 = vunpack.c.l.b16 %v2508
        %v2793 = vunpack.c.l.b16 %v2771
        %v2794 = vunpack.c.l.b16 %v2511
        %v2795 = vunpack.c.l.b16 %v2772
        %v2796 = vunpack.c.l.b16 %v2514
        %v2797 = vunpack.c.l.b16 %v2773
        %v2798 = vunpack.c.l.b16 %v2517
        %v2799 = vunpack.c.l.b16 %v2774
        %v2800 = vunpack.c.l.b16 %v2520
        %v2801 = vunpack.c.l.b16 %v2775
        %v2802 = vpack.c.b16 %v2787, %v2786
        %v2803 = vpack.c.b16 %v2789, %v2788
        %v2804 = vpack.c.b16 %v2791, %v2790
        %v2805 = vpack.c.b16 %v2793, %v2792
        %v2806 = vpack.c.b16 %v2795, %v2794
        %v2807 = vpack.c.b16 %v2797, %v2796
        %v2808 = vpack.c.b16 %v2799, %v2798
        %v2809 = vpack.c.b16 %v2801, %v2800
        %v2811 = vsel %vm761, %v2802, 0
        %v2814 = vsel %vm761, %v2803, 0
        %v2817 = vsel %vm761, %v2804, 0
        %v2820 = vsel %vm761, %v2805, 0
        %v2823 = vsel %vm761, %v2806, 0
        %v2826 = vsel %vm761, %v2807, 0
        %v2829 = vsel %vm761, %v2808, 0
        %v2832 = vsel %vm761, %v2809, 0
        %v2835 = vsel %vm786, %v2777, 0
        %2837 = vmatprep.subr.bf16.mxu0 0
        %2838 = vmatpush1.bf16.msra.mxu0 %v2835
        %2839 = vmatprep.subr.bf16.mxu0 0
        %2840 = vmatpush1.bf16.msra.mxu0 0
        %2841 = vmatprep.subr.bf16.mxu0 0
        %2842 = vmatpush1.bf16.msra.mxu0 0
        %2843 = vmatprep.subr.bf16.mxu0 0
        %2844 = vmatpush1.bf16.msra.mxu0 0
        %2845 = vmatprep.subr.bf16.mxu0 0
        %2846 = vmatpush1.bf16.msra.mxu0 0
        %2847 = vmatprep.subr.bf16.mxu0 0
        %2848 = vmatpush1.bf16.msra.mxu0 0
        %2849 = vmatprep.subr.bf16.mxu0 0
        %2850 = vmatpush1.bf16.msra.mxu0 0
        %2851 = vmatprep.subr.bf16.mxu0 0
        %2852 = vmatpush1.bf16.msra.mxu0 0
        %2853 = vmatprep.subr.bf16.mxu0 0
        %2854 = vmatpush1.bf16.msra.mxu0 0
        %2855 = vmatprep.subr.bf16.mxu0 0
        %2856 = vmatpush1.bf16.msra.mxu0 0
        %2857 = vmatprep.subr.bf16.mxu0 0
        %2858 = vmatpush1.bf16.msra.mxu0 0
        %2859 = vmatprep.subr.bf16.mxu0 0
        %2860 = vmatpush1.bf16.msra.mxu0 0
        %2861 = vmatprep.subr.bf16.mxu0 0
        %2862 = vmatpush1.bf16.msra.mxu0 0
        %2863 = vmatprep.subr.bf16.mxu0 0
        %2864 = vmatpush1.bf16.msra.mxu0 0
        %2865 = vmatprep.subr.bf16.mxu0 0
        %2866 = vmatpush1.bf16.msra.mxu0 0
        %2867 = vmatprep.subr.bf16.mxu0 0
        %2868 = vmatpush1.bf16.msra.mxu0 0
        %2869 = vmatprep.mubr.bf16.mxu0 0
        %2870 = vmatmul.mubr.bf16.gmra.mrb[0].mxu0 %v2811
        %v2871 = vpop.f32.mrb[0].mxu0
        %v2872 = vadd.f32 0.0, %v2871
        %v2873 = vpop.f32.mrb[0].mxu0
        %v2874 = vpop.f32.mrb[0].mxu0
        %v2875 = vadd.f32 0.0, %v2874
        %v2876 = vpop.f32.mrb[0].mxu0
        %2877 = vmatprep.mubr.bf16.mxu0 0
        %2878 = vmatmul.mubr.bf16.gmra.mrb[0].mxu0 %v2814
        %v2879 = vpop.f32.mrb[0].mxu0
        %v2880 = vadd.f32 0.0, %v2879
        %v2881 = vpop.f32.mrb[0].mxu0
        %v2882 = vpop.f32.mrb[0].mxu0
        %v2883 = vadd.f32 0.0, %v2882
        %v2884 = vpop.f32.mrb[0].mxu0
        %2885 = vmatprep.mubr.bf16.mxu0 0
        %2886 = vmatmul.mubr.bf16.gmra.mrb[0].mxu0 %v2817
        %v2887 = vpop.f32.mrb[0].mxu0
        %v2888 = vadd.f32 0.0, %v2887
        %v2889 = vpop.f32.mrb[0].mxu0
        %v2890 = vpop.f32.mrb[0].mxu0
        %v2891 = vadd.f32 0.0, %v2890
        %v2892 = vpop.f32.mrb[0].mxu0
        %2893 = vmatprep.mubr.bf16.mxu0 0
        %2894 = vmatmul.mubr.bf16.gmra.mrb[0].mxu0 %v2820
        %v2895 = vpop.f32.mrb[0].mxu0
        %v2896 = vadd.f32 0.0, %v2895
        %v2897 = vpop.f32.mrb[0].mxu0
        %v2898 = vpop.f32.mrb[0].mxu0
        %v2899 = vadd.f32 0.0, %v2898
        %v2900 = vpop.f32.mrb[0].mxu0
        %2901 = vmatprep.mubr.bf16.mxu0 0
        %2902 = vmatmul.mubr.bf16.gmra.mrb[0].mxu0 %v2823
        %v2903 = vpop.f32.mrb[0].mxu0
        %v2904 = vadd.f32 0.0, %v2903
        %v2905 = vpop.f32.mrb[0].mxu0
        %v2906 = vpop.f32.mrb[0].mxu0
        %v2907 = vadd.f32 0.0, %v2906
        %v2908 = vpop.f32.mrb[0].mxu0
        %2909 = vmatprep.mubr.bf16.mxu0 0
        %2910 = vmatmul.mubr.bf16.gmra.mrb[0].mxu0 %v2826
        %v2911 = vpop.f32.mrb[0].mxu0
        %v2912 = vadd.f32 0.0, %v2911
        %v2913 = vpop.f32.mrb[0].mxu0
        %v2914 = vpop.f32.mrb[0].mxu0
        %v2915 = vadd.f32 0.0, %v2914
        %v2916 = vpop.f32.mrb[0].mxu0
        %2917 = vmatprep.mubr.bf16.mxu0 0
        %2918 = vmatmul.mubr.bf16.gmra.mrb[0].mxu0 %v2829
        %v2919 = vpop.f32.mrb[0].mxu0
        %v2920 = vadd.f32 0.0, %v2919
        %v2921 = vpop.f32.mrb[0].mxu0
        %v2922 = vpop.f32.mrb[0].mxu0
        %v2923 = vadd.f32 0.0, %v2922
        %v2924 = vpop.f32.mrb[0].mxu0
        %2925 = vmatprep.mubr.bf16.mxu0 0
        %2926 = vmatmul.mubr.bf16.gmra.mrb[0].mxu0 %v2832
        %v2927 = vpop.f32.mrb[0].mxu0
        %v2928 = vadd.f32 0.0, %v2927
        %v2929 = vpop.f32.mrb[0].mxu0
        %v2930 = vpop.f32.mrb[0].mxu0
        %v2931 = vadd.f32 0.0, %v2930
        %v2932 = vpop.f32.mrb[0].mxu0
        %2933 = vdwg.mxu0
        %v2934 = vadd.f32 %v2752, %v2872
        %v2935 = vadd.f32 %v2753, %v2875
        %v2936 = vadd.f32 %v2754, %v2880
        %v2937 = vadd.f32 %v2755, %v2883
        %v2938 = vadd.f32 %v2756, %v2888
        %v2939 = vadd.f32 %v2757, %v2891
        %v2940 = vadd.f32 %v2758, %v2896
        %v2941 = vadd.f32 %v2759, %v2899
        %v2942 = vadd.f32 %v2760, %v2904
        %v2943 = vadd.f32 %v2761, %v2907
        %v2944 = vadd.f32 %v2762, %v2912
        %v2945 = vadd.f32 %v2763, %v2915
        %v2946 = vadd.f32 %v2764, %v2920
        %v2947 = vadd.f32 %v2765, %v2923
        %v2948 = vadd.f32 %v2766, %v2928
        %v2949 = vadd.f32 %v2767, %v2931
        %s2950 = scalar_lea.vmem [#allocation14], 1
        %v2951 = vld [vmem:[%s2950] sm:$0x1]
        %v2953 = vlaneseq
        %v2954 = vshrl.u32 %v2953, 7
        %v2955 = vsub.s32 0, %v2954
        %v2956 = vrot.slane %v2951, %v2955
        %v2958 = vmul.f32 %v2934, %v2956
        %v2959 = vmul.f32 %v2935, %v2956
        %v2960 = vmul.f32 %v2936, %v2956
        %v2961 = vmul.f32 %v2937, %v2956
        %v2962 = vmul.f32 %v2938, %v2956
        %v2963 = vmul.f32 %v2939, %v2956
        %v2964 = vmul.f32 %v2940, %v2956
        %v2965 = vmul.f32 %v2941, %v2956
        %v2966 = vmul.f32 %v2942, %v2956
        %v2967 = vmul.f32 %v2943, %v2956
        %v2968 = vmul.f32 %v2944, %v2956
        %v2969 = vmul.f32 %v2945, %v2956
        %v2970 = vmul.f32 %v2946, %v2956
        %v2971 = vmul.f32 %v2947, %v2956
        %v2972 = vmul.f32 %v2948, %v2956
        %v2973 = vmul.f32 %v2949, %v2956
        %s2974 = scalar_lea.vmem [#allocation16], 1
        %v2975 = vld [vmem:[%s2974] sm:$0x1]
        %v2977 = vlaneseq
        %v2978 = vshrl.u32 %v2977, 7
        %v2979 = vsub.s32 0, %v2978
        %v2980 = vrot.slane %v2975, %v2979
        %v2982 = vadd.f32 %v2958, %v2980
        %v2983 = vadd.f32 %v2959, %v2980
        %v2984 = vadd.f32 %v2960, %v2980
        %v2985 = vadd.f32 %v2961, %v2980
        %v2986 = vadd.f32 %v2962, %v2980
        %v2987 = vadd.f32 %v2963, %v2980
        %v2988 = vadd.f32 %v2964, %v2980
        %v2989 = vadd.f32 %v2965, %v2980
        %v2990 = vadd.f32 %v2966, %v2980
        %v2991 = vadd.f32 %v2967, %v2980
        %v2992 = vadd.f32 %v2968, %v2980
        %v2993 = vadd.f32 %v2969, %v2980
        %v2994 = vadd.f32 %v2970, %v2980
        %v2995 = vadd.f32 %v2971, %v2980
        %v2996 = vadd.f32 %v2972, %v2980
        %v2997 = vadd.f32 %v2973, %v2980
        %v2998 = vmax.f32 %v2982, 0.0
        %v2999 = vmax.f32 %v2983, 0.0
        %v3000 = vmax.f32 %v2984, 0.0
        %v3001 = vmax.f32 %v2985, 0.0
        %v3002 = vmax.f32 %v2986, 0.0
        %v3003 = vmax.f32 %v2987, 0.0
        %v3004 = vmax.f32 %v2988, 0.0
        %v3005 = vmax.f32 %v2989, 0.0
        %v3006 = vmax.f32 %v2990, 0.0
        %v3007 = vmax.f32 %v2991, 0.0
        %v3008 = vmax.f32 %v2992, 0.0
        %v3009 = vmax.f32 %v2993, 0.0
        %v3010 = vmax.f32 %v2994, 0.0
        %v3011 = vmax.f32 %v2995, 0.0
        %v3012 = vmax.f32 %v2996, 0.0
        %v3013 = vmax.f32 %v2997, 0.0
        %v3014 = vpack.c.bf16 %v2999, %v2998
        %v3015 = vpack.c.bf16 %v3001, %v3000
        %v3016 = vpack.c.bf16 %v3003, %v3002
        %v3017 = vpack.c.bf16 %v3005, %v3004
        %v3018 = vpack.c.bf16 %v3007, %v3006
        %v3019 = vpack.c.bf16 %v3009, %v3008
        %v3020 = vpack.c.bf16 %v3011, %v3010
        %v3021 = vpack.c.bf16 %v3013, %v3012
        %s3022 = scalar_lea.vmem [#allocation11], 4
        %v3023 = vld [vmem:[%s3022] sm:$0xf]
        %v3025 = vsel %vm761, %v3014, 0
        %v3028 = vsel %vm761, %v3015, 0
        %v3031 = vsel %vm761, %v3016, 0
        %v3034 = vsel %vm761, %v3017, 0
        %v3037 = vsel %vm761, %v3018, 0
        %v3040 = vsel %vm761, %v3019, 0
        %v3043 = vsel %vm761, %v3020, 0
        %v3046 = vsel %vm761, %v3021, 0
        %v3049 = vsel %vm786, %v3023, 0
        %3051 = vmatprep.subr.bf16.mxu0 0
        %3052 = vmatpush1.bf16.msra.mxu0 %v3049
        %3053 = vmatprep.subr.bf16.mxu0 0
        %3054 = vmatpush1.bf16.msra.mxu0 0
        %3055 = vmatprep.subr.bf16.mxu0 0
        %3056 = vmatpush1.bf16.msra.mxu0 0
        %3057 = vmatprep.subr.bf16.mxu0 0
        %3058 = vmatpush1.bf16.msra.mxu0 0
        %3059 = vmatprep.subr.bf16.mxu0 0
        %3060 = vmatpush1.bf16.msra.mxu0 0
        %3061 = vmatprep.subr.bf16.mxu0 0
        %3062 = vmatpush1.bf16.msra.mxu0 0
        %3063 = vmatprep.subr.bf16.mxu0 0
        %3064 = vmatpush1.bf16.msra.mxu0 0
        %3065 = vmatprep.subr.bf16.mxu0 0
        %3066 = vmatpush1.bf16.msra.mxu0 0
        %3067 = vmatprep.subr.bf16.mxu0 0
        %3068 = vmatpush1.bf16.msra.mxu0 0
        %3069 = vmatprep.subr.bf16.mxu0 0
        %3070 = vmatpush1.bf16.msra.mxu0 0
        %3071 = vmatprep.subr.bf16.mxu0 0
        %3072 = vmatpush1.bf16.msra.mxu0 0
        %3073 = vmatprep.subr.bf16.mxu0 0
        %3074 = vmatpush1.bf16.msra.mxu0 0
        %3075 = vmatprep.subr.bf16.mxu0 0
        %3076 = vmatpush1.bf16.msra.mxu0 0
        %3077 = vmatprep.subr.bf16.mxu0 0
        %3078 = vmatpush1.bf16.msra.mxu0 0
        %3079 = vmatprep.subr.bf16.mxu0 0
        %3080 = vmatpush1.bf16.msra.mxu0 0
        %3081 = vmatprep.subr.bf16.mxu0 0
        %3082 = vmatpush1.bf16.msra.mxu0 0
        %3083 = vmatprep.mubr.bf16.mxu0 0
        %3084 = vmatmul.mubr.bf16.gmra.mrb[0].mxu0 %v3025
        %v3085 = vpop.f32.mrb[0].mxu0
        %v3086 = vadd.f32 0.0, %v3085
        %v3087 = vpop.f32.mrb[0].mxu0
        %v3088 = vpop.f32.mrb[0].mxu0
        %v3089 = vadd.f32 0.0, %v3088
        %v3090 = vpop.f32.mrb[0].mxu0
        %3091 = vmatprep.mubr.bf16.mxu0 0
        %3092 = vmatmul.mubr.bf16.gmra.mrb[0].mxu0 %v3028
        %v3093 = vpop.f32.mrb[0].mxu0
        %v3094 = vadd.f32 0.0, %v3093
        %v3095 = vpop.f32.mrb[0].mxu0
        %v3096 = vpop.f32.mrb[0].mxu0
        %v3097 = vadd.f32 0.0, %v3096
        %v3098 = vpop.f32.mrb[0].mxu0
        %3099 = vmatprep.mubr.bf16.mxu0 0
        %3100 = vmatmul.mubr.bf16.gmra.mrb[0].mxu0 %v3031
        %v3101 = vpop.f32.mrb[0].mxu0
        %v3102 = vadd.f32 0.0, %v3101
        %v3103 = vpop.f32.mrb[0].mxu0
        %v3104 = vpop.f32.mrb[0].mxu0
        %v3105 = vadd.f32 0.0, %v3104
        %v3106 = vpop.f32.mrb[0].mxu0
        %3107 = vmatprep.mubr.bf16.mxu0 0
        %3108 = vmatmul.mubr.bf16.gmra.mrb[0].mxu0 %v3034
        %v3109 = vpop.f32.mrb[0].mxu0
        %v3110 = vadd.f32 0.0, %v3109
        %v3111 = vpop.f32.mrb[0].mxu0
        %v3112 = vpop.f32.mrb[0].mxu0
        %v3113 = vadd.f32 0.0, %v3112
        %v3114 = vpop.f32.mrb[0].mxu0
        %3115 = vmatprep.mubr.bf16.mxu0 0
        %3116 = vmatmul.mubr.bf16.gmra.mrb[0].mxu0 %v3037
        %v3117 = vpop.f32.mrb[0].mxu0
        %v3118 = vadd.f32 0.0, %v3117
        %v3119 = vpop.f32.mrb[0].mxu0
        %v3120 = vpop.f32.mrb[0].mxu0
        %v3121 = vadd.f32 0.0, %v3120
        %v3122 = vpop.f32.mrb[0].mxu0
        %3123 = vmatprep.mubr.bf16.mxu0 0
        %3124 = vmatmul.mubr.bf16.gmra.mrb[0].mxu0 %v3040
        %v3125 = vpop.f32.mrb[0].mxu0
        %v3126 = vadd.f32 0.0, %v3125
        %v3127 = vpop.f32.mrb[0].mxu0
        %v3128 = vpop.f32.mrb[0].mxu0
        %v3129 = vadd.f32 0.0, %v3128
        %v3130 = vpop.f32.mrb[0].mxu0
        %3131 = vmatprep.mubr.bf16.mxu0 0
        %3132 = vmatmul.mubr.bf16.gmra.mrb[0].mxu0 %v3043
        %v3133 = vpop.f32.mrb[0].mxu0
        %v3134 = vadd.f32 0.0, %v3133
        %v3135 = vpop.f32.mrb[0].mxu0
        %v3136 = vpop.f32.mrb[0].mxu0
        %v3137 = vadd.f32 0.0, %v3136
        %v3138 = vpop.f32.mrb[0].mxu0
        %3139 = vmatprep.mubr.bf16.mxu0 0
        %3140 = vmatmul.mubr.bf16.gmra.mrb[0].mxu0 %v3046
        %v3141 = vpop.f32.mrb[0].mxu0
        %v3142 = vadd.f32 0.0, %v3141
        %v3143 = vpop.f32.mrb[0].mxu0
        %v3144 = vpop.f32.mrb[0].mxu0
        %v3145 = vadd.f32 0.0, %v3144
        %v3146 = vpop.f32.mrb[0].mxu0
        %3147 = vdwg.mxu0
        %v3149 = vsel %vm761, %v949, 0
        %v3152 = vsel %vm761, %v950, 0
        %v3155 = vsel %vm761, %v951, 0
        %v3158 = vsel %vm761, %v952, 0
        %v3161 = vsel %vm761, %v953, 0
        %v3164 = vsel %vm761, %v954, 0
        %v3167 = vsel %vm761, %v955, 0
        %v3170 = vsel %vm761, %v956, 0
        %v3173 = vsel %vm786, %v957, 0
        %3175 = vmatprep.subr.bf16.mxu0 0
        %3176 = vmatpush1.bf16.msra.mxu0 %v3173
        %3177 = vmatprep.subr.bf16.mxu0 0
        %3178 = vmatpush1.bf16.msra.mxu0 0
        %3179 = vmatprep.subr.bf16.mxu0 0
        %3180 = vmatpush1.bf16.msra.mxu0 0
        %3181 = vmatprep.subr.bf16.mxu0 0
        %3182 = vmatpush1.bf16.msra.mxu0 0
        %3183 = vmatprep.subr.bf16.mxu0 0
        %3184 = vmatpush1.bf16.msra.mxu0 0
        %3185 = vmatprep.subr.bf16.mxu0 0
        %3186 = vmatpush1.bf16.msra.mxu0 0
        %3187 = vmatprep.subr.bf16.mxu0 0
        %3188 = vmatpush1.bf16.msra.mxu0 0
        %3189 = vmatprep.subr.bf16.mxu0 0
        %3190 = vmatpush1.bf16.msra.mxu0 0
        %3191 = vmatprep.subr.bf16.mxu0 0
        %3192 = vmatpush1.bf16.msra.mxu0 0
        %3193 = vmatprep.subr.bf16.mxu0 0
        %3194 = vmatpush1.bf16.msra.mxu0 0
        %3195 = vmatprep.subr.bf16.mxu0 0
        %3196 = vmatpush1.bf16.msra.mxu0 0
        %3197 = vmatprep.subr.bf16.mxu0 0
        %3198 = vmatpush1.bf16.msra.mxu0 0
        %3199 = vmatprep.subr.bf16.mxu0 0
        %3200 = vmatpush1.bf16.msra.mxu0 0
        %3201 = vmatprep.subr.bf16.mxu0 0
        %3202 = vmatpush1.bf16.msra.mxu0 0
        %3203 = vmatprep.subr.bf16.mxu0 0
        %3204 = vmatpush1.bf16.msra.mxu0 0
        %3205 = vmatprep.subr.bf16.mxu0 0
        %3206 = vmatpush1.bf16.msra.mxu0 0
        %3207 = vmatprep.mubr.bf16.mxu0 0
        %3208 = vmatmul.mubr.bf16.gmra.mrb[0].mxu0 %v3149
        %v3209 = vpop.f32.mrb[0].mxu0
        %v3210 = vadd.f32 %v3086, %v3209
        %v3211 = vpop.f32.mrb[0].mxu0
        %v3212 = vpop.f32.mrb[0].mxu0
        %v3213 = vadd.f32 %v3089, %v3212
        %v3214 = vpop.f32.mrb[0].mxu0
        %3215 = vmatprep.mubr.bf16.mxu0 0
        %3216 = vmatmul.mubr.bf16.gmra.mrb[0].mxu0 %v3152
        %v3217 = vpop.f32.mrb[0].mxu0
        %v3218 = vadd.f32 %v3094, %v3217
        %v3219 = vpop.f32.mrb[0].mxu0
        %v3220 = vpop.f32.mrb[0].mxu0
        %v3221 = vadd.f32 %v3097, %v3220
        %v3222 = vpop.f32.mrb[0].mxu0
        %3223 = vmatprep.mubr.bf16.mxu0 0
        %3224 = vmatmul.mubr.bf16.gmra.mrb[0].mxu0 %v3155
        %v3225 = vpop.f32.mrb[0].mxu0
        %v3226 = vadd.f32 %v3102, %v3225
        %v3227 = vpop.f32.mrb[0].mxu0
        %v3228 = vpop.f32.mrb[0].mxu0
        %v3229 = vadd.f32 %v3105, %v3228
        %v3230 = vpop.f32.mrb[0].mxu0
        %3231 = vmatprep.mubr.bf16.mxu0 0
        %3232 = vmatmul.mubr.bf16.gmra.mrb[0].mxu0 %v3158
        %v3233 = vpop.f32.mrb[0].mxu0
        %v3234 = vadd.f32 %v3110, %v3233
        %v3235 = vpop.f32.mrb[0].mxu0
        %v3236 = vpop.f32.mrb[0].mxu0
        %v3237 = vadd.f32 %v3113, %v3236
        %v3238 = vpop.f32.mrb[0].mxu0
        %3239 = vmatprep.mubr.bf16.mxu0 0
        %3240 = vmatmul.mubr.bf16.gmra.mrb[0].mxu0 %v3161
        %v3241 = vpop.f32.mrb[0].mxu0
        %v3242 = vadd.f32 %v3118, %v3241
        %v3243 = vpop.f32.mrb[0].mxu0
        %v3244 = vpop.f32.mrb[0].mxu0
        %v3245 = vadd.f32 %v3121, %v3244
        %v3246 = vpop.f32.mrb[0].mxu0
        %3247 = vmatprep.mubr.bf16.mxu0 0
        %3248 = vmatmul.mubr.bf16.gmra.mrb[0].mxu0 %v3164
        %v3249 = vpop.f32.mrb[0].mxu0
        %v3250 = vadd.f32 %v3126, %v3249
        %v3251 = vpop.f32.mrb[0].mxu0
        %v3252 = vpop.f32.mrb[0].mxu0
        %v3253 = vadd.f32 %v3129, %v3252
        %v3254 = vpop.f32.mrb[0].mxu0
        %3255 = vmatprep.mubr.bf16.mxu0 0
        %3256 = vmatmul.mubr.bf16.gmra.mrb[0].mxu0 %v3167
        %v3257 = vpop.f32.mrb[0].mxu0
        %v3258 = vadd.f32 %v3134, %v3257
        %v3259 = vpop.f32.mrb[0].mxu0
        %v3260 = vpop.f32.mrb[0].mxu0
        %v3261 = vadd.f32 %v3137, %v3260
        %v3262 = vpop.f32.mrb[0].mxu0
        %3263 = vmatprep.mubr.bf16.mxu0 0
        %3264 = vmatmul.mubr.bf16.gmra.mrb[0].mxu0 %v3170
        %v3265 = vpop.f32.mrb[0].mxu0
        %v3266 = vadd.f32 %v3142, %v3265
        %v3267 = vpop.f32.mrb[0].mxu0
        %v3268 = vpop.f32.mrb[0].mxu0
        %v3269 = vadd.f32 %v3145, %v3268
        %v3270 = vpop.f32.mrb[0].mxu0
        %3271 = vdwg.mxu0
        %s3272 = sadd.s32 %s608, 6
        %s3273 = smul.u32 %s3272, 7
        %s3274 = smul.addr %s3273, 4
        %s3275 = scalar_lea.vmem %s510, %s3274 [#allocation2]
        %v3276 = vld [vmem:[%s3275] sm:$0x8]
        %v3277 = vld [vmem:[%s3275 + $0x4] sm:$0xf]
        %v3278 = vld [vmem:[%s3275 + $0x8] sm:$0x7]
        %v3279 = vld [vmem:[%s3275 + $0x1c] sm:$0x8]
        %v3280 = vld [vmem:[%s3275 + $0x20] sm:$0xf]
        %v3281 = vld [vmem:[%s3275 + $0x24] sm:$0x7]
        %v3282 = vld [vmem:[%s3275 + $0x38] sm:$0x8]
        %v3283 = vld [vmem:[%s3275 + $0x3c] sm:$0xf]
        %v3284 = vld [vmem:[%s3275 + $0x40] sm:$0x7]
        %v3285 = vld [vmem:[%s3275 + $0x54] sm:$0x8]
        %v3286 = vld [vmem:[%s3275 + $0x58] sm:$0xf]
        %v3287 = vld [vmem:[%s3275 + $0x5c] sm:$0x7]
        %v3288 = vld [vmem:[%s3275 + $0x70] sm:$0x8]
        %v3289 = vld [vmem:[%s3275 + $0x74] sm:$0xf]
        %v3290 = vld [vmem:[%s3275 + $0x78] sm:$0x7]
        %v3291 = vld [vmem:[%s3275 + $0x8c] sm:$0x8]
        %v3292 = vld [vmem:[%s3275 + $0x90] sm:$0xf]
        %v3293 = vld [vmem:[%s3275 + $0x94] sm:$0x7]
        %v3294 = vld [vmem:[%s3275 + $0xa8] sm:$0x8]
        %v3295 = vld [vmem:[%s3275 + $0xac] sm:$0xf]
        %v3296 = vld [vmem:[%s3275 + $0xb0] sm:$0x7]
        %v3297 = vld [vmem:[%s3275 + $0xc4] sm:$0x8]
        %v3298 = vld [vmem:[%s3275 + $0xc8] sm:$0xf]
        %v3299 = vld [vmem:[%s3275 + $0xcc] sm:$0x7]
        %vm3324 = vcmask 1040384
        %vm3325 = vcmask 1044484
        %vm3326 = vmor %vm3324, %vm3325
        %v3327 = vrot.slane %v3276, 7
        %v3328 = vrot.slane %v3327, 4
        %v3329 = vrot.slane %v3277, 7
        %v3330 = vsel %vm3326, %v3328, %v3329
        %v3331 = vrot.slane %v3329, 4
        %v3332 = vrot.slane %v3278, 7
        %v3333 = vsel %vm3326, %v3331, %v3332
        %v3334 = vrot.slane %v3279, 7
        %v3335 = vrot.slane %v3334, 4
        %v3336 = vrot.slane %v3280, 7
        %v3337 = vsel %vm3326, %v3335, %v3336
        %v3338 = vrot.slane %v3336, 4
        %v3339 = vrot.slane %v3281, 7
        %v3340 = vsel %vm3326, %v3338, %v3339
        %v3341 = vrot.slane %v3282, 7
        %v3342 = vrot.slane %v3341, 4
        %v3343 = vrot.slane %v3283, 7
        %v3344 = vsel %vm3326, %v3342, %v3343
        %v3345 = vrot.slane %v3343, 4
        %v3346 = vrot.slane %v3284, 7
        %v3347 = vsel %vm3326, %v3345, %v3346
        %v3348 = vrot.slane %v3285, 7
        %v3349 = vrot.slane %v3348, 4
        %v3350 = vrot.slane %v3286, 7
        %v3351 = vsel %vm3326, %v3349, %v3350
        %v3352 = vrot.slane %v3350, 4
        %v3353 = vrot.slane %v3287, 7
        %v3354 = vsel %vm3326, %v3352, %v3353
        %v3355 = vrot.slane %v3288, 7
        %v3356 = vrot.slane %v3355, 4
        %v3357 = vrot.slane %v3289, 7
        %v3358 = vsel %vm3326, %v3356, %v3357
        %v3359 = vrot.slane %v3357, 4
        %v3360 = vrot.slane %v3290, 7
        %v3361 = vsel %vm3326, %v3359, %v3360
        %v3362 = vrot.slane %v3291, 7
        %v3363 = vrot.slane %v3362, 4
        %v3364 = vrot.slane %v3292, 7
        %v3365 = vsel %vm3326, %v3363, %v3364
        %v3366 = vrot.slane %v3364, 4
        %v3367 = vrot.slane %v3293, 7
        %v3368 = vsel %vm3326, %v3366, %v3367
        %v3369 = vrot.slane %v3294, 7
        %v3370 = vrot.slane %v3369, 4
        %v3371 = vrot.slane %v3295, 7
        %v3372 = vsel %vm3326, %v3370, %v3371
        %v3373 = vrot.slane %v3371, 4
        %v3374 = vrot.slane %v3296, 7
        %v3375 = vsel %vm3326, %v3373, %v3374
        %v3376 = vrot.slane %v3297, 7
        %v3377 = vrot.slane %v3376, 4
        %v3378 = vrot.slane %v3298, 7
        %v3379 = vsel %vm3326, %v3377, %v3378
        %v3380 = vrot.slane %v3378, 4
        %v3381 = vrot.slane %v3299, 7
        %v3382 = vsel %vm3326, %v3380, %v3381
        %s3383 = scalar_lea.vmem [#allocation10], 36
        %v3384 = vld [vmem:[%s3383] sm:$0xf]
        %v3385 = vld [vmem:[%s3275 + $0x8] sm:$0xe]
        %v3386 = vld [vmem:[%s3275 + $0xc] sm:$0xf]
        %v3387 = vld [vmem:[%s3275 + $0x10] sm:$0x1]
        %v3388 = vld [vmem:[%s3275 + $0x24] sm:$0xe]
        %v3389 = vld [vmem:[%s3275 + $0x28] sm:$0xf]
        %v3390 = vld [vmem:[%s3275 + $0x2c] sm:$0x1]
        %v3391 = vld [vmem:[%s3275 + $0x40] sm:$0xe]
        %v3392 = vld [vmem:[%s3275 + $0x44] sm:$0xf]
        %v3393 = vld [vmem:[%s3275 + $0x48] sm:$0x1]
        %v3394 = vld [vmem:[%s3275 + $0x5c] sm:$0xe]
        %v3395 = vld [vmem:[%s3275 + $0x60] sm:$0xf]
        %v3396 = vld [vmem:[%s3275 + $0x64] sm:$0x1]
        %v3397 = vld [vmem:[%s3275 + $0x78] sm:$0xe]
        %v3398 = vld [vmem:[%s3275 + $0x7c] sm:$0xf]
        %v3399 = vld [vmem:[%s3275 + $0x80] sm:$0x1]
        %v3400 = vld [vmem:[%s3275 + $0x94] sm:$0xe]
        %v3401 = vld [vmem:[%s3275 + $0x98] sm:$0xf]
        %v3402 = vld [vmem:[%s3275 + $0x9c] sm:$0x1]
        %v3403 = vld [vmem:[%s3275 + $0xb0] sm:$0xe]
        %v3404 = vld [vmem:[%s3275 + $0xb4] sm:$0xf]
        %v3405 = vld [vmem:[%s3275 + $0xb8] sm:$0x1]
        %v3406 = vld [vmem:[%s3275 + $0xcc] sm:$0xe]
        %v3407 = vld [vmem:[%s3275 + $0xd0] sm:$0xf]
        %v3408 = vld [vmem:[%s3275 + $0xd4] sm:$0x1]
        %v3433 = vrot.slane %v3385, 5
        %v3434 = vrot.slane %v3433, 4
        %v3435 = vrot.slane %v3386, 5
        %v3436 = vsel %vm663, %v3434, %v3435
        %v3437 = vrot.slane %v3435, 4
        %v3438 = vrot.slane %v3387, 5
        %v3439 = vsel %vm663, %v3437, %v3438
        %v3440 = vrot.slane %v3388, 5
        %v3441 = vrot.slane %v3440, 4
        %v3442 = vrot.slane %v3389, 5
        %v3443 = vsel %vm663, %v3441, %v3442
        %v3444 = vrot.slane %v3442, 4
        %v3445 = vrot.slane %v3390, 5
        %v3446 = vsel %vm663, %v3444, %v3445
        %v3447 = vrot.slane %v3391, 5
        %v3448 = vrot.slane %v3447, 4
        %v3449 = vrot.slane %v3392, 5
        %v3450 = vsel %vm663, %v3448, %v3449
        %v3451 = vrot.slane %v3449, 4
        %v3452 = vrot.slane %v3393, 5
        %v3453 = vsel %vm663, %v3451, %v3452
        %v3454 = vrot.slane %v3394, 5
        %v3455 = vrot.slane %v3454, 4
        %v3456 = vrot.slane %v3395, 5
        %v3457 = vsel %vm663, %v3455, %v3456
        %v3458 = vrot.slane %v3456, 4
        %v3459 = vrot.slane %v3396, 5
        %v3460 = vsel %vm663, %v3458, %v3459
        %v3461 = vrot.slane %v3397, 5
        %v3462 = vrot.slane %v3461, 4
        %v3463 = vrot.slane %v3398, 5
        %v3464 = vsel %vm663, %v3462, %v3463
        %v3465 = vrot.slane %v3463, 4
        %v3466 = vrot.slane %v3399, 5
        %v3467 = vsel %vm663, %v3465, %v3466
        %v3468 = vrot.slane %v3400, 5
        %v3469 = vrot.slane %v3468, 4
        %v3470 = vrot.slane %v3401, 5
        %v3471 = vsel %vm663, %v3469, %v3470
        %v3472 = vrot.slane %v3470, 4
        %v3473 = vrot.slane %v3402, 5
        %v3474 = vsel %vm663, %v3472, %v3473
        %v3475 = vrot.slane %v3403, 5
        %v3476 = vrot.slane %v3475, 4
        %v3477 = vrot.slane %v3404, 5
        %v3478 = vsel %vm663, %v3476, %v3477
        %v3479 = vrot.slane %v3477, 4
        %v3480 = vrot.slane %v3405, 5
        %v3481 = vsel %vm663, %v3479, %v3480
        %v3482 = vrot.slane %v3406, 5
        %v3483 = vrot.slane %v3482, 4
        %v3484 = vrot.slane %v3407, 5
        %v3485 = vsel %vm663, %v3483, %v3484
        %v3486 = vrot.slane %v3484, 4
        %v3487 = vrot.slane %v3408, 5
        %v3488 = vsel %vm663, %v3486, %v3487
        %s3489 = scalar_lea.vmem [#allocation10], 40
        %v3490 = vld [vmem:[%s3489] sm:$0xf]
        %v3491 = vunpack.c.l.b16 %v3436
        %v3492 = vunpack.c.l.b16 %v3439
        %v3493 = vunpack.c.l.b16 %v3443
        %v3494 = vunpack.c.l.b16 %v3446
        %v3495 = vunpack.c.l.b16 %v3450
        %v3496 = vunpack.c.l.b16 %v3453
        %v3497 = vunpack.c.l.b16 %v3457
        %v3498 = vunpack.c.l.b16 %v3460
        %v3499 = vunpack.c.l.b16 %v3464
        %v3500 = vunpack.c.l.b16 %v3467
        %v3501 = vunpack.c.l.b16 %v3471
        %v3502 = vunpack.c.l.b16 %v3474
        %v3503 = vunpack.c.l.b16 %v3478
        %v3504 = vunpack.c.l.b16 %v3481
        %v3505 = vunpack.c.l.b16 %v3485
        %v3506 = vunpack.c.l.b16 %v3488
        %v3507 = vpack.c.b16 %v3492, %v3491
        %v3508 = vpack.c.b16 %v3494, %v3493
        %v3509 = vpack.c.b16 %v3496, %v3495
        %v3510 = vpack.c.b16 %v3498, %v3497
        %v3511 = vpack.c.b16 %v3500, %v3499
        %v3512 = vpack.c.b16 %v3502, %v3501
        %v3513 = vpack.c.b16 %v3504, %v3503
        %v3514 = vpack.c.b16 %v3506, %v3505
        %v3516 = vsel %vm761, %v3507, 0
        %v3519 = vsel %vm761, %v3508, 0
        %v3522 = vsel %vm761, %v3509, 0
        %v3525 = vsel %vm761, %v3510, 0
        %v3528 = vsel %vm761, %v3511, 0
        %v3531 = vsel %vm761, %v3512, 0
        %v3534 = vsel %vm761, %v3513, 0
        %v3537 = vsel %vm761, %v3514, 0
        %v3540 = vsel %vm786, %v3490, 0
        %3542 = vmatprep.subr.bf16.mxu0 0
        %3543 = vmatpush1.bf16.msra.mxu0 %v3540
        %3544 = vmatprep.subr.bf16.mxu0 0
        %3545 = vmatpush1.bf16.msra.mxu0 0
        %3546 = vmatprep.subr.bf16.mxu0 0
        %3547 = vmatpush1.bf16.msra.mxu0 0
        %3548 = vmatprep.subr.bf16.mxu0 0
        %3549 = vmatpush1.bf16.msra.mxu0 0
        %3550 = vmatprep.subr.bf16.mxu0 0
        %3551 = vmatpush1.bf16.msra.mxu0 0
        %3552 = vmatprep.subr.bf16.mxu0 0
        %3553 = vmatpush1.bf16.msra.mxu0 0
        %3554 = vmatprep.subr.bf16.mxu0 0
        %3555 = vmatpush1.bf16.msra.mxu0 0
        %3556 = vmatprep.subr.bf16.mxu0 0
        %3557 = vmatpush1.bf16.msra.mxu0 0
        %3558 = vmatprep.subr.bf16.mxu0 0
        %3559 = vmatpush1.bf16.msra.mxu0 0
        %3560 = vmatprep.subr.bf16.mxu0 0
        %3561 = vmatpush1.bf16.msra.mxu0 0
        %3562 = vmatprep.subr.bf16.mxu0 0
        %3563 = vmatpush1.bf16.msra.mxu0 0
        %3564 = vmatprep.subr.bf16.mxu0 0
        %3565 = vmatpush1.bf16.msra.mxu0 0
        %3566 = vmatprep.subr.bf16.mxu0 0
        %3567 = vmatpush1.bf16.msra.mxu0 0
        %3568 = vmatprep.subr.bf16.mxu0 0
        %3569 = vmatpush1.bf16.msra.mxu0 0
        %3570 = vmatprep.subr.bf16.mxu0 0
        %3571 = vmatpush1.bf16.msra.mxu0 0
        %3572 = vmatprep.subr.bf16.mxu0 0
        %3573 = vmatpush1.bf16.msra.mxu0 0
        %3574 = vmatprep.mubr.bf16.mxu0 0
        %3575 = vmatmul.mubr.bf16.gmra.mrb[0].mxu0 %v3516
        %v3576 = vpop.f32.mrb[0].mxu0
        %v3577 = vadd.f32 0.0, %v3576
        %v3578 = vpop.f32.mrb[0].mxu0
        %v3579 = vpop.f32.mrb[0].mxu0
        %v3580 = vadd.f32 0.0, %v3579
        %v3581 = vpop.f32.mrb[0].mxu0
        %3582 = vmatprep.mubr.bf16.mxu0 0
        %3583 = vmatmul.mubr.bf16.gmra.mrb[0].mxu0 %v3519
        %v3584 = vpop.f32.mrb[0].mxu0
        %v3585 = vadd.f32 0.0, %v3584
        %v3586 = vpop.f32.mrb[0].mxu0
        %v3587 = vpop.f32.mrb[0].mxu0
        %v3588 = vadd.f32 0.0, %v3587
        %v3589 = vpop.f32.mrb[0].mxu0
        %3590 = vmatprep.mubr.bf16.mxu0 0
        %3591 = vmatmul.mubr.bf16.gmra.mrb[0].mxu0 %v3522
        %v3592 = vpop.f32.mrb[0].mxu0
        %v3593 = vadd.f32 0.0, %v3592
        %v3594 = vpop.f32.mrb[0].mxu0
        %v3595 = vpop.f32.mrb[0].mxu0
        %v3596 = vadd.f32 0.0, %v3595
        %v3597 = vpop.f32.mrb[0].mxu0
        %3598 = vmatprep.mubr.bf16.mxu0 0
        %3599 = vmatmul.mubr.bf16.gmra.mrb[0].mxu0 %v3525
        %v3600 = vpop.f32.mrb[0].mxu0
        %v3601 = vadd.f32 0.0, %v3600
        %v3602 = vpop.f32.mrb[0].mxu0
        %v3603 = vpop.f32.mrb[0].mxu0
        %v3604 = vadd.f32 0.0, %v3603
        %v3605 = vpop.f32.mrb[0].mxu0
        %3606 = vmatprep.mubr.bf16.mxu0 0
        %3607 = vmatmul.mubr.bf16.gmra.mrb[0].mxu0 %v3528
        %v3608 = vpop.f32.mrb[0].mxu0
        %v3609 = vadd.f32 0.0, %v3608
        %v3610 = vpop.f32.mrb[0].mxu0
        %v3611 = vpop.f32.mrb[0].mxu0
        %v3612 = vadd.f32 0.0, %v3611
        %v3613 = vpop.f32.mrb[0].mxu0
        %3614 = vmatprep.mubr.bf16.mxu0 0
        %3615 = vmatmul.mubr.bf16.gmra.mrb[0].mxu0 %v3531
        %v3616 = vpop.f32.mrb[0].mxu0
        %v3617 = vadd.f32 0.0, %v3616
        %v3618 = vpop.f32.mrb[0].mxu0
        %v3619 = vpop.f32.mrb[0].mxu0
        %v3620 = vadd.f32 0.0, %v3619
        %v3621 = vpop.f32.mrb[0].mxu0
        %3622 = vmatprep.mubr.bf16.mxu0 0
        %3623 = vmatmul.mubr.bf16.gmra.mrb[0].mxu0 %v3534
        %v3624 = vpop.f32.mrb[0].mxu0
        %v3625 = vadd.f32 0.0, %v3624
        %v3626 = vpop.f32.mrb[0].mxu0
        %v3627 = vpop.f32.mrb[0].mxu0
        %v3628 = vadd.f32 0.0, %v3627
        %v3629 = vpop.f32.mrb[0].mxu0
        %3630 = vmatprep.mubr.bf16.mxu0 0
        %3631 = vmatmul.mubr.bf16.gmra.mrb[0].mxu0 %v3537
        %v3632 = vpop.f32.mrb[0].mxu0
        %v3633 = vadd.f32 0.0, %v3632
        %v3634 = vpop.f32.mrb[0].mxu0
        %v3635 = vpop.f32.mrb[0].mxu0
        %v3636 = vadd.f32 0.0, %v3635
        %v3637 = vpop.f32.mrb[0].mxu0
        %3638 = vdwg.mxu0
        %v3639 = vunpack.c.l.b16 %v3330
        %v3640 = vunpack.c.l.b16 %v3333
        %v3641 = vunpack.c.l.b16 %v3337
        %v3642 = vunpack.c.l.b16 %v3340
        %v3643 = vunpack.c.l.b16 %v3344
        %v3644 = vunpack.c.l.b16 %v3347
        %v3645 = vunpack.c.l.b16 %v3351
        %v3646 = vunpack.c.l.b16 %v3354
        %v3647 = vunpack.c.l.b16 %v3358
        %v3648 = vunpack.c.l.b16 %v3361
        %v3649 = vunpack.c.l.b16 %v3365
        %v3650 = vunpack.c.l.b16 %v3368
        %v3651 = vunpack.c.l.b16 %v3372
        %v3652 = vunpack.c.l.b16 %v3375
        %v3653 = vunpack.c.l.b16 %v3379
        %v3654 = vunpack.c.l.b16 %v3382
        %v3655 = vpack.c.b16 %v3640, %v3639
        %v3656 = vpack.c.b16 %v3642, %v3641
        %v3657 = vpack.c.b16 %v3644, %v3643
        %v3658 = vpack.c.b16 %v3646, %v3645
        %v3659 = vpack.c.b16 %v3648, %v3647
        %v3660 = vpack.c.b16 %v3650, %v3649
        %v3661 = vpack.c.b16 %v3652, %v3651
        %v3662 = vpack.c.b16 %v3654, %v3653
        %v3664 = vsel %vm761, %v3655, 0
        %v3667 = vsel %vm761, %v3656, 0
        %v3670 = vsel %vm761, %v3657, 0
        %v3673 = vsel %vm761, %v3658, 0
        %v3676 = vsel %vm761, %v3659, 0
        %v3679 = vsel %vm761, %v3660, 0
        %v3682 = vsel %vm761, %v3661, 0
        %v3685 = vsel %vm761, %v3662, 0
        %v3688 = vsel %vm786, %v3384, 0
        %3690 = vmatprep.subr.bf16.mxu0 0
        %3691 = vmatpush1.bf16.msra.mxu0 %v3688
        %3692 = vmatprep.subr.bf16.mxu0 0
        %3693 = vmatpush1.bf16.msra.mxu0 0
        %3694 = vmatprep.subr.bf16.mxu0 0
        %3695 = vmatpush1.bf16.msra.mxu0 0
        %3696 = vmatprep.subr.bf16.mxu0 0
        %3697 = vmatpush1.bf16.msra.mxu0 0
        %3698 = vmatprep.subr.bf16.mxu0 0
        %3699 = vmatpush1.bf16.msra.mxu0 0
        %3700 = vmatprep.subr.bf16.mxu0 0
        %3701 = vmatpush1.bf16.msra.mxu0 0
        %3702 = vmatprep.subr.bf16.mxu0 0
        %3703 = vmatpush1.bf16.msra.mxu0 0
        %3704 = vmatprep.subr.bf16.mxu0 0
        %3705 = vmatpush1.bf16.msra.mxu0 0
        %3706 = vmatprep.subr.bf16.mxu0 0
        %3707 = vmatpush1.bf16.msra.mxu0 0
        %3708 = vmatprep.subr.bf16.mxu0 0
        %3709 = vmatpush1.bf16.msra.mxu0 0
        %3710 = vmatprep.subr.bf16.mxu0 0
        %3711 = vmatpush1.bf16.msra.mxu0 0
        %3712 = vmatprep.subr.bf16.mxu0 0
        %3713 = vmatpush1.bf16.msra.mxu0 0
        %3714 = vmatprep.subr.bf16.mxu0 0
        %3715 = vmatpush1.bf16.msra.mxu0 0
        %3716 = vmatprep.subr.bf16.mxu0 0
        %3717 = vmatpush1.bf16.msra.mxu0 0
        %3718 = vmatprep.subr.bf16.mxu0 0
        %3719 = vmatpush1.bf16.msra.mxu0 0
        %3720 = vmatprep.subr.bf16.mxu0 0
        %3721 = vmatpush1.bf16.msra.mxu0 0
        %3722 = vmatprep.mubr.bf16.mxu0 0
        %3723 = vmatmul.mubr.bf16.gmra.mrb[0].mxu0 %v3664
        %v3724 = vpop.f32.mrb[0].mxu0
        %v3725 = vadd.f32 %v3577, %v3724
        %v3726 = vpop.f32.mrb[0].mxu0
        %v3727 = vpop.f32.mrb[0].mxu0
        %v3728 = vadd.f32 %v3580, %v3727
        %v3729 = vpop.f32.mrb[0].mxu0
        %3730 = vmatprep.mubr.bf16.mxu0 0
        %3731 = vmatmul.mubr.bf16.gmra.mrb[0].mxu0 %v3667
        %v3732 = vpop.f32.mrb[0].mxu0
        %v3733 = vadd.f32 %v3585, %v3732
        %v3734 = vpop.f32.mrb[0].mxu0
        %v3735 = vpop.f32.mrb[0].mxu0
        %v3736 = vadd.f32 %v3588, %v3735
        %v3737 = vpop.f32.mrb[0].mxu0
        %3738 = vmatprep.mubr.bf16.mxu0 0
        %3739 = vmatmul.mubr.bf16.gmra.mrb[0].mxu0 %v3670
        %v3740 = vpop.f32.mrb[0].mxu0
        %v3741 = vadd.f32 %v3593, %v3740
        %v3742 = vpop.f32.mrb[0].mxu0
        %v3743 = vpop.f32.mrb[0].mxu0
        %v3744 = vadd.f32 %v3596, %v3743
        %v3745 = vpop.f32.mrb[0].mxu0
        %3746 = vmatprep.mubr.bf16.mxu0 0
        %3747 = vmatmul.mubr.bf16.gmra.mrb[0].mxu0 %v3673
        %v3748 = vpop.f32.mrb[0].mxu0
        %v3749 = vadd.f32 %v3601, %v3748
        %v3750 = vpop.f32.mrb[0].mxu0
        %v3751 = vpop.f32.mrb[0].mxu0
        %v3752 = vadd.f32 %v3604, %v3751
        %v3753 = vpop.f32.mrb[0].mxu0
        %3754 = vmatprep.mubr.bf16.mxu0 0
        %3755 = vmatmul.mubr.bf16.gmra.mrb[0].mxu0 %v3676
        %v3756 = vpop.f32.mrb[0].mxu0
        %v3757 = vadd.f32 %v3609, %v3756
        %v3758 = vpop.f32.mrb[0].mxu0
        %v3759 = vpop.f32.mrb[0].mxu0
        %v3760 = vadd.f32 %v3612, %v3759
        %v3761 = vpop.f32.mrb[0].mxu0
        %3762 = vmatprep.mubr.bf16.mxu0 0
        %3763 = vmatmul.mubr.bf16.gmra.mrb[0].mxu0 %v3679
        %v3764 = vpop.f32.mrb[0].mxu0
        %v3765 = vadd.f32 %v3617, %v3764
        %v3766 = vpop.f32.mrb[0].mxu0
        %v3767 = vpop.f32.mrb[0].mxu0
        %v3768 = vadd.f32 %v3620, %v3767
        %v3769 = vpop.f32.mrb[0].mxu0
        %3770 = vmatprep.mubr.bf16.mxu0 0
        %3771 = vmatmul.mubr.bf16.gmra.mrb[0].mxu0 %v3682
        %v3772 = vpop.f32.mrb[0].mxu0
        %v3773 = vadd.f32 %v3625, %v3772
        %v3774 = vpop.f32.mrb[0].mxu0
        %v3775 = vpop.f32.mrb[0].mxu0
        %v3776 = vadd.f32 %v3628, %v3775
        %v3777 = vpop.f32.mrb[0].mxu0
        %3778 = vmatprep.mubr.bf16.mxu0 0
        %3779 = vmatmul.mubr.bf16.gmra.mrb[0].mxu0 %v3685
        %v3780 = vpop.f32.mrb[0].mxu0
        %v3781 = vadd.f32 %v3633, %v3780
        %v3782 = vpop.f32.mrb[0].mxu0
        %v3783 = vpop.f32.mrb[0].mxu0
        %v3784 = vadd.f32 %v3636, %v3783
        %v3785 = vpop.f32.mrb[0].mxu0
        %3786 = vdwg.mxu0
        %v3787 = vld [vmem:[%s3275 + $0xc] sm:$0x8]
        %v3788 = vld [vmem:[%s3275 + $0x10] sm:$0xf]
        %v3789 = vld [vmem:[%s3275 + $0x14] sm:$0x7]
        %v3790 = vld [vmem:[%s3275 + $0x28] sm:$0x8]
        %v3791 = vld [vmem:[%s3275 + $0x2c] sm:$0xf]
        %v3792 = vld [vmem:[%s3275 + $0x30] sm:$0x7]
        %v3793 = vld [vmem:[%s3275 + $0x44] sm:$0x8]
        %v3794 = vld [vmem:[%s3275 + $0x48] sm:$0xf]
        %v3795 = vld [vmem:[%s3275 + $0x4c] sm:$0x7]
        %v3796 = vld [vmem:[%s3275 + $0x60] sm:$0x8]
        %v3797 = vld [vmem:[%s3275 + $0x64] sm:$0xf]
        %v3798 = vld [vmem:[%s3275 + $0x68] sm:$0x7]
        %v3799 = vld [vmem:[%s3275 + $0x7c] sm:$0x8]
        %v3800 = vld [vmem:[%s3275 + $0x80] sm:$0xf]
        %v3801 = vld [vmem:[%s3275 + $0x84] sm:$0x7]
        %v3802 = vld [vmem:[%s3275 + $0x98] sm:$0x8]
        %v3803 = vld [vmem:[%s3275 + $0x9c] sm:$0xf]
        %v3804 = vld [vmem:[%s3275 + $0xa0] sm:$0x7]
        %v3805 = vld [vmem:[%s3275 + $0xb4] sm:$0x8]
        %v3806 = vld [vmem:[%s3275 + $0xb8] sm:$0xf]
        %v3807 = vld [vmem:[%s3275 + $0xbc] sm:$0x7]
        %v3808 = vld [vmem:[%s3275 + $0xd0] sm:$0x8]
        %v3809 = vld [vmem:[%s3275 + $0xd4] sm:$0xf]
        %v3810 = vld [vmem:[%s3275 + $0xd8] sm:$0x7]
        %v3835 = vrot.slane %v3787, 7
        %v3836 = vrot.slane %v3835, 4
        %v3837 = vrot.slane %v3788, 7
        %v3838 = vsel %vm3326, %v3836, %v3837
        %v3839 = vrot.slane %v3837, 4
        %v3840 = vrot.slane %v3789, 7
        %v3841 = vsel %vm3326, %v3839, %v3840
        %v3842 = vrot.slane %v3790, 7
        %v3843 = vrot.slane %v3842, 4
        %v3844 = vrot.slane %v3791, 7
        %v3845 = vsel %vm3326, %v3843, %v3844
        %v3846 = vrot.slane %v3844, 4
        %v3847 = vrot.slane %v3792, 7
        %v3848 = vsel %vm3326, %v3846, %v3847
        %v3849 = vrot.slane %v3793, 7
        %v3850 = vrot.slane %v3849, 4
        %v3851 = vrot.slane %v3794, 7
        %v3852 = vsel %vm3326, %v3850, %v3851
        %v3853 = vrot.slane %v3851, 4
        %v3854 = vrot.slane %v3795, 7
        %v3855 = vsel %vm3326, %v3853, %v3854
        %v3856 = vrot.slane %v3796, 7
        %v3857 = vrot.slane %v3856, 4
        %v3858 = vrot.slane %v3797, 7
        %v3859 = vsel %vm3326, %v3857, %v3858
        %v3860 = vrot.slane %v3858, 4
        %v3861 = vrot.slane %v3798, 7
        %v3862 = vsel %vm3326, %v3860, %v3861
        %v3863 = vrot.slane %v3799, 7
        %v3864 = vrot.slane %v3863, 4
        %v3865 = vrot.slane %v3800, 7
        %v3866 = vsel %vm3326, %v3864, %v3865
        %v3867 = vrot.slane %v3865, 4
        %v3868 = vrot.slane %v3801, 7
        %v3869 = vsel %vm3326, %v3867, %v3868
        %v3870 = vrot.slane %v3802, 7
        %v3871 = vrot.slane %v3870, 4
        %v3872 = vrot.slane %v3803, 7
        %v3873 = vsel %vm3326, %v3871, %v3872
        %v3874 = vrot.slane %v3872, 4
        %v3875 = vrot.slane %v3804, 7
        %v3876 = vsel %vm3326, %v3874, %v3875
        %v3877 = vrot.slane %v3805, 7
        %v3878 = vrot.slane %v3877, 4
        %v3879 = vrot.slane %v3806, 7
        %v3880 = vsel %vm3326, %v3878, %v3879
        %v3881 = vrot.slane %v3879, 4
        %v3882 = vrot.slane %v3807, 7
        %v3883 = vsel %vm3326, %v3881, %v3882
        %v3884 = vrot.slane %v3808, 7
        %v3885 = vrot.slane %v3884, 4
        %v3886 = vrot.slane %v3809, 7
        %v3887 = vsel %vm3326, %v3885, %v3886
        %v3888 = vrot.slane %v3886, 4
        %v3889 = vrot.slane %v3810, 7
        %v3890 = vsel %vm3326, %v3888, %v3889
        %s3891 = scalar_lea.vmem [#allocation10], 44
        %v3892 = vld [vmem:[%s3891] sm:$0xf]
        %v3893 = vunpack.c.l.b16 %v3838
        %v3894 = vunpack.c.l.b16 %v3841
        %v3895 = vunpack.c.l.b16 %v3845
        %v3896 = vunpack.c.l.b16 %v3848
        %v3897 = vunpack.c.l.b16 %v3852
        %v3898 = vunpack.c.l.b16 %v3855
        %v3899 = vunpack.c.l.b16 %v3859
        %v3900 = vunpack.c.l.b16 %v3862
        %v3901 = vunpack.c.l.b16 %v3866
        %v3902 = vunpack.c.l.b16 %v3869
        %v3903 = vunpack.c.l.b16 %v3873
        %v3904 = vunpack.c.l.b16 %v3876
        %v3905 = vunpack.c.l.b16 %v3880
        %v3906 = vunpack.c.l.b16 %v3883
        %v3907 = vunpack.c.l.b16 %v3887
        %v3908 = vunpack.c.l.b16 %v3890
        %v3909 = vpack.c.b16 %v3894, %v3893
        %v3910 = vpack.c.b16 %v3896, %v3895
        %v3911 = vpack.c.b16 %v3898, %v3897
        %v3912 = vpack.c.b16 %v3900, %v3899
        %v3913 = vpack.c.b16 %v3902, %v3901
        %v3914 = vpack.c.b16 %v3904, %v3903
        %v3915 = vpack.c.b16 %v3906, %v3905
        %v3916 = vpack.c.b16 %v3908, %v3907
        %v3918 = vsel %vm761, %v3909, 0
        %v3921 = vsel %vm761, %v3910, 0
        %v3924 = vsel %vm761, %v3911, 0
        %v3927 = vsel %vm761, %v3912, 0
        %v3930 = vsel %vm761, %v3913, 0
        %v3933 = vsel %vm761, %v3914, 0
        %v3936 = vsel %vm761, %v3915, 0
        %v3939 = vsel %vm761, %v3916, 0
        %v3942 = vsel %vm786, %v3892, 0
        %3944 = vmatprep.subr.bf16.mxu0 0
        %3945 = vmatpush1.bf16.msra.mxu0 %v3942
        %3946 = vmatprep.subr.bf16.mxu0 0
        %3947 = vmatpush1.bf16.msra.mxu0 0
        %3948 = vmatprep.subr.bf16.mxu0 0
        %3949 = vmatpush1.bf16.msra.mxu0 0
        %3950 = vmatprep.subr.bf16.mxu0 0
        %3951 = vmatpush1.bf16.msra.mxu0 0
        %3952 = vmatprep.subr.bf16.mxu0 0
        %3953 = vmatpush1.bf16.msra.mxu0 0
        %3954 = vmatprep.subr.bf16.mxu0 0
        %3955 = vmatpush1.bf16.msra.mxu0 0
        %3956 = vmatprep.subr.bf16.mxu0 0
        %3957 = vmatpush1.bf16.msra.mxu0 0
        %3958 = vmatprep.subr.bf16.mxu0 0
        %3959 = vmatpush1.bf16.msra.mxu0 0
        %3960 = vmatprep.subr.bf16.mxu0 0
        %3961 = vmatpush1.bf16.msra.mxu0 0
        %3962 = vmatprep.subr.bf16.mxu0 0
        %3963 = vmatpush1.bf16.msra.mxu0 0
        %3964 = vmatprep.subr.bf16.mxu0 0
        %3965 = vmatpush1.bf16.msra.mxu0 0
        %3966 = vmatprep.subr.bf16.mxu0 0
        %3967 = vmatpush1.bf16.msra.mxu0 0
        %3968 = vmatprep.subr.bf16.mxu0 0
        %3969 = vmatpush1.bf16.msra.mxu0 0
        %3970 = vmatprep.subr.bf16.mxu0 0
        %3971 = vmatpush1.bf16.msra.mxu0 0
        %3972 = vmatprep.subr.bf16.mxu0 0
        %3973 = vmatpush1.bf16.msra.mxu0 0
        %3974 = vmatprep.subr.bf16.mxu0 0
        %3975 = vmatpush1.bf16.msra.mxu0 0
        %3976 = vmatprep.mubr.bf16.mxu0 0
        %3977 = vmatmul.mubr.bf16.gmra.mrb[0].mxu0 %v3918
        %v3978 = vpop.f32.mrb[0].mxu0
        %v3979 = vadd.f32 0.0, %v3978
        %v3980 = vpop.f32.mrb[0].mxu0
        %v3981 = vpop.f32.mrb[0].mxu0
        %v3982 = vadd.f32 0.0, %v3981
        %v3983 = vpop.f32.mrb[0].mxu0
        %3984 = vmatprep.mubr.bf16.mxu0 0
        %3985 = vmatmul.mubr.bf16.gmra.mrb[0].mxu0 %v3921
        %v3986 = vpop.f32.mrb[0].mxu0
        %v3987 = vadd.f32 0.0, %v3986
        %v3988 = vpop.f32.mrb[0].mxu0
        %v3989 = vpop.f32.mrb[0].mxu0
        %v3990 = vadd.f32 0.0, %v3989
        %v3991 = vpop.f32.mrb[0].mxu0
        %3992 = vmatprep.mubr.bf16.mxu0 0
        %3993 = vmatmul.mubr.bf16.gmra.mrb[0].mxu0 %v3924
        %v3994 = vpop.f32.mrb[0].mxu0
        %v3995 = vadd.f32 0.0, %v3994
        %v3996 = vpop.f32.mrb[0].mxu0
        %v3997 = vpop.f32.mrb[0].mxu0
        %v3998 = vadd.f32 0.0, %v3997
        %v3999 = vpop.f32.mrb[0].mxu0
        %4000 = vmatprep.mubr.bf16.mxu0 0
        %4001 = vmatmul.mubr.bf16.gmra.mrb[0].mxu0 %v3927
        %v4002 = vpop.f32.mrb[0].mxu0
        %v4003 = vadd.f32 0.0, %v4002
        %v4004 = vpop.f32.mrb[0].mxu0
        %v4005 = vpop.f32.mrb[0].mxu0
        %v4006 = vadd.f32 0.0, %v4005
        %v4007 = vpop.f32.mrb[0].mxu0
        %4008 = vmatprep.mubr.bf16.mxu0 0
        %4009 = vmatmul.mubr.bf16.gmra.mrb[0].mxu0 %v3930
        %v4010 = vpop.f32.mrb[0].mxu0
        %v4011 = vadd.f32 0.0, %v4010
        %v4012 = vpop.f32.mrb[0].mxu0
        %v4013 = vpop.f32.mrb[0].mxu0
        %v4014 = vadd.f32 0.0, %v4013
        %v4015 = vpop.f32.mrb[0].mxu0
        %4016 = vmatprep.mubr.bf16.mxu0 0
        %4017 = vmatmul.mubr.bf16.gmra.mrb[0].mxu0 %v3933
        %v4018 = vpop.f32.mrb[0].mxu0
        %v4019 = vadd.f32 0.0, %v4018
        %v4020 = vpop.f32.mrb[0].mxu0
        %v4021 = vpop.f32.mrb[0].mxu0
        %v4022 = vadd.f32 0.0, %v4021
        %v4023 = vpop.f32.mrb[0].mxu0
        %4024 = vmatprep.mubr.bf16.mxu0 0
        %4025 = vmatmul.mubr.bf16.gmra.mrb[0].mxu0 %v3936
        %v4026 = vpop.f32.mrb[0].mxu0
        %v4027 = vadd.f32 0.0, %v4026
        %v4028 = vpop.f32.mrb[0].mxu0
        %v4029 = vpop.f32.mrb[0].mxu0
        %v4030 = vadd.f32 0.0, %v4029
        %v4031 = vpop.f32.mrb[0].mxu0
        %4032 = vmatprep.mubr.bf16.mxu0 0
        %4033 = vmatmul.mubr.bf16.gmra.mrb[0].mxu0 %v3939
        %v4034 = vpop.f32.mrb[0].mxu0
        %v4035 = vadd.f32 0.0, %v4034
        %v4036 = vpop.f32.mrb[0].mxu0
        %v4037 = vpop.f32.mrb[0].mxu0
        %v4038 = vadd.f32 0.0, %v4037
        %v4039 = vpop.f32.mrb[0].mxu0
        %4040 = vdwg.mxu0
        %v4041 = vadd.f32 %v3725, %v3979
        %v4042 = vadd.f32 %v3728, %v3982
        %v4043 = vadd.f32 %v3733, %v3987
        %v4044 = vadd.f32 %v3736, %v3990
        %v4045 = vadd.f32 %v3741, %v3995
        %v4046 = vadd.f32 %v3744, %v3998
        %v4047 = vadd.f32 %v3749, %v4003
        %v4048 = vadd.f32 %v3752, %v4006
        %v4049 = vadd.f32 %v3757, %v4011
        %v4050 = vadd.f32 %v3760, %v4014
        %v4051 = vadd.f32 %v3765, %v4019
        %v4052 = vadd.f32 %v3768, %v4022
        %v4053 = vadd.f32 %v3773, %v4027
        %v4054 = vadd.f32 %v3776, %v4030
        %v4055 = vadd.f32 %v3781, %v4035
        %v4056 = vadd.f32 %v3784, %v4038
        %v4057 = vld [vmem:[%s612] sm:$0x8]
        %v4058 = vld [vmem:[%s612 + $0x4] sm:$0xf]
        %v4059 = vld [vmem:[%s612 + $0x8] sm:$0x7]
        %v4060 = vld [vmem:[%s612 + $0x1c] sm:$0x8]
        %v4061 = vld [vmem:[%s612 + $0x20] sm:$0xf]
        %v4062 = vld [vmem:[%s612 + $0x24] sm:$0x7]
        %v4063 = vld [vmem:[%s612 + $0x38] sm:$0x8]
        %v4064 = vld [vmem:[%s612 + $0x3c] sm:$0xf]
        %v4065 = vld [vmem:[%s612 + $0x40] sm:$0x7]
        %v4066 = vld [vmem:[%s612 + $0x54] sm:$0x8]
        %v4067 = vld [vmem:[%s612 + $0x58] sm:$0xf]
        %v4068 = vld [vmem:[%s612 + $0x5c] sm:$0x7]
        %v4069 = vld [vmem:[%s612 + $0x70] sm:$0x8]
        %v4070 = vld [vmem:[%s612 + $0x74] sm:$0xf]
        %v4071 = vld [vmem:[%s612 + $0x78] sm:$0x7]
        %v4072 = vld [vmem:[%s612 + $0x8c] sm:$0x8]
        %v4073 = vld [vmem:[%s612 + $0x90] sm:$0xf]
        %v4074 = vld [vmem:[%s612 + $0x94] sm:$0x7]
        %v4075 = vld [vmem:[%s612 + $0xa8] sm:$0x8]
        %v4076 = vld [vmem:[%s612 + $0xac] sm:$0xf]
        %v4077 = vld [vmem:[%s612 + $0xb0] sm:$0x7]
        %v4078 = vld [vmem:[%s612 + $0xc4] sm:$0x8]
        %v4079 = vld [vmem:[%s612 + $0xc8] sm:$0xf]
        %v4080 = vld [vmem:[%s612 + $0xcc] sm:$0x7]
        %v4105 = vrot.slane %v4057, 7
        %v4106 = vrot.slane %v4105, 4
        %v4107 = vrot.slane %v4058, 7
        %v4108 = vsel %vm3326, %v4106, %v4107
        %v4109 = vrot.slane %v4107, 4
        %v4110 = vrot.slane %v4059, 7
        %v4111 = vsel %vm3326, %v4109, %v4110
        %v4112 = vrot.slane %v4060, 7
        %v4113 = vrot.slane %v4112, 4
        %v4114 = vrot.slane %v4061, 7
        %v4115 = vsel %vm3326, %v4113, %v4114
        %v4116 = vrot.slane %v4114, 4
        %v4117 = vrot.slane %v4062, 7
        %v4118 = vsel %vm3326, %v4116, %v4117
        %v4119 = vrot.slane %v4063, 7
        %v4120 = vrot.slane %v4119, 4
        %v4121 = vrot.slane %v4064, 7
        %v4122 = vsel %vm3326, %v4120, %v4121
        %v4123 = vrot.slane %v4121, 4
        %v4124 = vrot.slane %v4065, 7
        %v4125 = vsel %vm3326, %v4123, %v4124
        %v4126 = vrot.slane %v4066, 7
        %v4127 = vrot.slane %v4126, 4
        %v4128 = vrot.slane %v4067, 7
        %v4129 = vsel %vm3326, %v4127, %v4128
        %v4130 = vrot.slane %v4128, 4
        %v4131 = vrot.slane %v4068, 7
        %v4132 = vsel %vm3326, %v4130, %v4131
        %v4133 = vrot.slane %v4069, 7
        %v4134 = vrot.slane %v4133, 4
        %v4135 = vrot.slane %v4070, 7
        %v4136 = vsel %vm3326, %v4134, %v4135
        %v4137 = vrot.slane %v4135, 4
        %v4138 = vrot.slane %v4071, 7
        %v4139 = vsel %vm3326, %v4137, %v4138
        %v4140 = vrot.slane %v4072, 7
        %v4141 = vrot.slane %v4140, 4
        %v4142 = vrot.slane %v4073, 7
        %v4143 = vsel %vm3326, %v4141, %v4142
        %v4144 = vrot.slane %v4142, 4
        %v4145 = vrot.slane %v4074, 7
        %v4146 = vsel %vm3326, %v4144, %v4145
        %v4147 = vrot.slane %v4075, 7
        %v4148 = vrot.slane %v4147, 4
        %v4149 = vrot.slane %v4076, 7
        %v4150 = vsel %vm3326, %v4148, %v4149
        %v4151 = vrot.slane %v4149, 4
        %v4152 = vrot.slane %v4077, 7
        %v4153 = vsel %vm3326, %v4151, %v4152
        %v4154 = vrot.slane %v4078, 7
        %v4155 = vrot.slane %v4154, 4
        %v4156 = vrot.slane %v4079, 7
        %v4157 = vsel %vm3326, %v4155, %v4156
        %v4158 = vrot.slane %v4156, 4
        %v4159 = vrot.slane %v4080, 7
        %v4160 = vsel %vm3326, %v4158, %v4159
        %s4161 = scalar_lea.vmem [#allocation10], 48
        %v4162 = vld [vmem:[%s4161] sm:$0xf]
        %v4163 = vunpack.c.l.b16 %v4108
        %v4164 = vunpack.c.l.b16 %v4111
        %v4165 = vunpack.c.l.b16 %v4115
        %v4166 = vunpack.c.l.b16 %v4118
        %v4167 = vunpack.c.l.b16 %v4122
        %v4168 = vunpack.c.l.b16 %v4125
        %v4169 = vunpack.c.l.b16 %v4129
        %v4170 = vunpack.c.l.b16 %v4132
        %v4171 = vunpack.c.l.b16 %v4136
        %v4172 = vunpack.c.l.b16 %v4139
        %v4173 = vunpack.c.l.b16 %v4143
        %v4174 = vunpack.c.l.b16 %v4146
        %v4175 = vunpack.c.l.b16 %v4150
        %v4176 = vunpack.c.l.b16 %v4153
        %v4177 = vunpack.c.l.b16 %v4157
        %v4178 = vunpack.c.l.b16 %v4160
        %v4179 = vpack.c.b16 %v4164, %v4163
        %v4180 = vpack.c.b16 %v4166, %v4165
        %v4181 = vpack.c.b16 %v4168, %v4167
        %v4182 = vpack.c.b16 %v4170, %v4169
        %v4183 = vpack.c.b16 %v4172, %v4171
        %v4184 = vpack.c.b16 %v4174, %v4173
        %v4185 = vpack.c.b16 %v4176, %v4175
        %v4186 = vpack.c.b16 %v4178, %v4177
        %v4188 = vsel %vm761, %v4179, 0
        %v4191 = vsel %vm761, %v4180, 0
        %v4194 = vsel %vm761, %v4181, 0
        %v4197 = vsel %vm761, %v4182, 0
        %v4200 = vsel %vm761, %v4183, 0
        %v4203 = vsel %vm761, %v4184, 0
        %v4206 = vsel %vm761, %v4185, 0
        %v4209 = vsel %vm761, %v4186, 0
        %v4212 = vsel %vm786, %v4162, 0
        %4214 = vmatprep.subr.bf16.mxu0 0
        %4215 = vmatpush1.bf16.msra.mxu0 %v4212
        %4216 = vmatprep.subr.bf16.mxu0 0
        %4217 = vmatpush1.bf16.msra.mxu0 0
        %4218 = vmatprep.subr.bf16.mxu0 0
        %4219 = vmatpush1.bf16.msra.mxu0 0
        %4220 = vmatprep.subr.bf16.mxu0 0
        %4221 = vmatpush1.bf16.msra.mxu0 0
        %4222 = vmatprep.subr.bf16.mxu0 0
        %4223 = vmatpush1.bf16.msra.mxu0 0
        %4224 = vmatprep.subr.bf16.mxu0 0
        %4225 = vmatpush1.bf16.msra.mxu0 0
        %4226 = vmatprep.subr.bf16.mxu0 0
        %4227 = vmatpush1.bf16.msra.mxu0 0
        %4228 = vmatprep.subr.bf16.mxu0 0
        %4229 = vmatpush1.bf16.msra.mxu0 0
        %4230 = vmatprep.subr.bf16.mxu0 0
        %4231 = vmatpush1.bf16.msra.mxu0 0
        %4232 = vmatprep.subr.bf16.mxu0 0
        %4233 = vmatpush1.bf16.msra.mxu0 0
        %4234 = vmatprep.subr.bf16.mxu0 0
        %4235 = vmatpush1.bf16.msra.mxu0 0
        %4236 = vmatprep.subr.bf16.mxu0 0
        %4237 = vmatpush1.bf16.msra.mxu0 0
        %4238 = vmatprep.subr.bf16.mxu0 0
        %4239 = vmatpush1.bf16.msra.mxu0 0
        %4240 = vmatprep.subr.bf16.mxu0 0
        %4241 = vmatpush1.bf16.msra.mxu0 0
        %4242 = vmatprep.subr.bf16.mxu0 0
        %4243 = vmatpush1.bf16.msra.mxu0 0
        %4244 = vmatprep.subr.bf16.mxu0 0
        %4245 = vmatpush1.bf16.msra.mxu0 0
        %4246 = vmatprep.mubr.bf16.mxu0 0
        %4247 = vmatmul.mubr.bf16.gmra.mrb[0].mxu0 %v4188
        %v4248 = vpop.f32.mrb[0].mxu0
        %v4249 = vadd.f32 0.0, %v4248
        %v4250 = vpop.f32.mrb[0].mxu0
        %v4251 = vpop.f32.mrb[0].mxu0
        %v4252 = vadd.f32 0.0, %v4251
        %v4253 = vpop.f32.mrb[0].mxu0
        %4254 = vmatprep.mubr.bf16.mxu0 0
        %4255 = vmatmul.mubr.bf16.gmra.mrb[0].mxu0 %v4191
        %v4256 = vpop.f32.mrb[0].mxu0
        %v4257 = vadd.f32 0.0, %v4256
        %v4258 = vpop.f32.mrb[0].mxu0
        %v4259 = vpop.f32.mrb[0].mxu0
        %v4260 = vadd.f32 0.0, %v4259
        %v4261 = vpop.f32.mrb[0].mxu0
        %4262 = vmatprep.mubr.bf16.mxu0 0
        %4263 = vmatmul.mubr.bf16.gmra.mrb[0].mxu0 %v4194
        %v4264 = vpop.f32.mrb[0].mxu0
        %v4265 = vadd.f32 0.0, %v4264
        %v4266 = vpop.f32.mrb[0].mxu0
        %v4267 = vpop.f32.mrb[0].mxu0
        %v4268 = vadd.f32 0.0, %v4267
        %v4269 = vpop.f32.mrb[0].mxu0
        %4270 = vmatprep.mubr.bf16.mxu0 0
        %4271 = vmatmul.mubr.bf16.gmra.mrb[0].mxu0 %v4197
        %v4272 = vpop.f32.mrb[0].mxu0
        %v4273 = vadd.f32 0.0, %v4272
        %v4274 = vpop.f32.mrb[0].mxu0
        %v4275 = vpop.f32.mrb[0].mxu0
        %v4276 = vadd.f32 0.0, %v4275
        %v4277 = vpop.f32.mrb[0].mxu0
        %4278 = vmatprep.mubr.bf16.mxu0 0
        %4279 = vmatmul.mubr.bf16.gmra.mrb[0].mxu0 %v4200
        %v4280 = vpop.f32.mrb[0].mxu0
        %v4281 = vadd.f32 0.0, %v4280
        %v4282 = vpop.f32.mrb[0].mxu0
        %v4283 = vpop.f32.mrb[0].mxu0
        %v4284 = vadd.f32 0.0, %v4283
        %v4285 = vpop.f32.mrb[0].mxu0
        %4286 = vmatprep.mubr.bf16.mxu0 0
        %4287 = vmatmul.mubr.bf16.gmra.mrb[0].mxu0 %v4203
        %v4288 = vpop.f32.mrb[0].mxu0
        %v4289 = vadd.f32 0.0, %v4288
        %v4290 = vpop.f32.mrb[0].mxu0
        %v4291 = vpop.f32.mrb[0].mxu0
        %v4292 = vadd.f32 0.0, %v4291
        %v4293 = vpop.f32.mrb[0].mxu0
        %4294 = vmatprep.mubr.bf16.mxu0 0
        %4295 = vmatmul.mubr.bf16.gmra.mrb[0].mxu0 %v4206
        %v4296 = vpop.f32.mrb[0].mxu0
        %v4297 = vadd.f32 0.0, %v4296
        %v4298 = vpop.f32.mrb[0].mxu0
        %v4299 = vpop.f32.mrb[0].mxu0
        %v4300 = vadd.f32 0.0, %v4299
        %v4301 = vpop.f32.mrb[0].mxu0
        %4302 = vmatprep.mubr.bf16.mxu0 0
        %4303 = vmatmul.mubr.bf16.gmra.mrb[0].mxu0 %v4209
        %v4304 = vpop.f32.mrb[0].mxu0
        %v4305 = vadd.f32 0.0, %v4304
        %v4306 = vpop.f32.mrb[0].mxu0
        %v4307 = vpop.f32.mrb[0].mxu0
        %v4308 = vadd.f32 0.0, %v4307
        %v4309 = vpop.f32.mrb[0].mxu0
        %4310 = vdwg.mxu0
        %v4311 = vadd.f32 %v4041, %v4249
        %v4312 = vadd.f32 %v4042, %v4252
        %v4313 = vadd.f32 %v4043, %v4257
        %v4314 = vadd.f32 %v4044, %v4260
        %v4315 = vadd.f32 %v4045, %v4265
        %v4316 = vadd.f32 %v4046, %v4268
        %v4317 = vadd.f32 %v4047, %v4273
        %v4318 = vadd.f32 %v4048, %v4276
        %v4319 = vadd.f32 %v4049, %v4281
        %v4320 = vadd.f32 %v4050, %v4284
        %v4321 = vadd.f32 %v4051, %v4289
        %v4322 = vadd.f32 %v4052, %v4292
        %v4323 = vadd.f32 %v4053, %v4297
        %v4324 = vadd.f32 %v4054, %v4300
        %v4325 = vadd.f32 %v4055, %v4305
        %v4326 = vadd.f32 %v4056, %v4308
        %s4327 = scalar_lea.vmem [#allocation10], 52
        %v4328 = vld [vmem:[%s4327] sm:$0xf]
        %v4330 = vsel %vm786, %v4328, 0
        %4332 = vmatprep.subr.bf16.mxu0 0
        %4333 = vmatpush1.bf16.msra.mxu0 %v4330
        %4334 = vmatprep.subr.bf16.mxu0 0
        %4335 = vmatpush1.bf16.msra.mxu0 0
        %4336 = vmatprep.subr.bf16.mxu0 0
        %4337 = vmatpush1.bf16.msra.mxu0 0
        %4338 = vmatprep.subr.bf16.mxu0 0
        %4339 = vmatpush1.bf16.msra.mxu0 0
        %4340 = vmatprep.subr.bf16.mxu0 0
        %4341 = vmatpush1.bf16.msra.mxu0 0
        %4342 = vmatprep.subr.bf16.mxu0 0
        %4343 = vmatpush1.bf16.msra.mxu0 0
        %4344 = vmatprep.subr.bf16.mxu0 0
        %4345 = vmatpush1.bf16.msra.mxu0 0
        %4346 = vmatprep.subr.bf16.mxu0 0
        %4347 = vmatpush1.bf16.msra.mxu0 0
        %4348 = vmatprep.subr.bf16.mxu0 0
        %4349 = vmatpush1.bf16.msra.mxu0 0
        %4350 = vmatprep.subr.bf16.mxu0 0
        %4351 = vmatpush1.bf16.msra.mxu0 0
        %4352 = vmatprep.subr.bf16.mxu0 0
        %4353 = vmatpush1.bf16.msra.mxu0 0
        %4354 = vmatprep.subr.bf16.mxu0 0
        %4355 = vmatpush1.bf16.msra.mxu0 0
        %4356 = vmatprep.subr.bf16.mxu0 0
        %4357 = vmatpush1.bf16.msra.mxu0 0
        %4358 = vmatprep.subr.bf16.mxu0 0
        %4359 = vmatpush1.bf16.msra.mxu0 0
        %4360 = vmatprep.subr.bf16.mxu0 0
        %4361 = vmatpush1.bf16.msra.mxu0 0
        %4362 = vmatprep.subr.bf16.mxu0 0
        %4363 = vmatpush1.bf16.msra.mxu0 0
        %4364 = vmatprep.mubr.bf16.mxu0 0
        %4365 = vmatmul.mubr.bf16.gmra.mrb[0].mxu0 %v763
        %v4366 = vpop.f32.mrb[0].mxu0
        %v4367 = vadd.f32 0.0, %v4366
        %v4368 = vpop.f32.mrb[0].mxu0
        %v4369 = vpop.f32.mrb[0].mxu0
        %v4370 = vadd.f32 0.0, %v4369
        %v4371 = vpop.f32.mrb[0].mxu0
        %4372 = vmatprep.mubr.bf16.mxu0 0
        %4373 = vmatmul.mubr.bf16.gmra.mrb[0].mxu0 %v766
        %v4374 = vpop.f32.mrb[0].mxu0
        %v4375 = vadd.f32 0.0, %v4374
        %v4376 = vpop.f32.mrb[0].mxu0
        %v4377 = vpop.f32.mrb[0].mxu0
        %v4378 = vadd.f32 0.0, %v4377
        %v4379 = vpop.f32.mrb[0].mxu0
        %4380 = vmatprep.mubr.bf16.mxu0 0
        %4381 = vmatmul.mubr.bf16.gmra.mrb[0].mxu0 %v769
        %v4382 = vpop.f32.mrb[0].mxu0
        %v4383 = vadd.f32 0.0, %v4382
        %v4384 = vpop.f32.mrb[0].mxu0
        %v4385 = vpop.f32.mrb[0].mxu0
        %v4386 = vadd.f32 0.0, %v4385
        %v4387 = vpop.f32.mrb[0].mxu0
        %4388 = vmatprep.mubr.bf16.mxu0 0
        %4389 = vmatmul.mubr.bf16.gmra.mrb[0].mxu0 %v772
        %v4390 = vpop.f32.mrb[0].mxu0
        %v4391 = vadd.f32 0.0, %v4390
        %v4392 = vpop.f32.mrb[0].mxu0
        %v4393 = vpop.f32.mrb[0].mxu0
        %v4394 = vadd.f32 0.0, %v4393
        %v4395 = vpop.f32.mrb[0].mxu0
        %4396 = vmatprep.mubr.bf16.mxu0 0
        %4397 = vmatmul.mubr.bf16.gmra.mrb[0].mxu0 %v775
        %v4398 = vpop.f32.mrb[0].mxu0
        %v4399 = vadd.f32 0.0, %v4398
        %v4400 = vpop.f32.mrb[0].mxu0
        %v4401 = vpop.f32.mrb[0].mxu0
        %v4402 = vadd.f32 0.0, %v4401
        %v4403 = vpop.f32.mrb[0].mxu0
        %4404 = vmatprep.mubr.bf16.mxu0 0
        %4405 = vmatmul.mubr.bf16.gmra.mrb[0].mxu0 %v778
        %v4406 = vpop.f32.mrb[0].mxu0
        %v4407 = vadd.f32 0.0, %v4406
        %v4408 = vpop.f32.mrb[0].mxu0
        %v4409 = vpop.f32.mrb[0].mxu0
        %v4410 = vadd.f32 0.0, %v4409
        %v4411 = vpop.f32.mrb[0].mxu0
        %4412 = vmatprep.mubr.bf16.mxu0 0
        %4413 = vmatmul.mubr.bf16.gmra.mrb[0].mxu0 %v781
        %v4414 = vpop.f32.mrb[0].mxu0
        %v4415 = vadd.f32 0.0, %v4414
        %v4416 = vpop.f32.mrb[0].mxu0
        %v4417 = vpop.f32.mrb[0].mxu0
        %v4418 = vadd.f32 0.0, %v4417
        %v4419 = vpop.f32.mrb[0].mxu0
        %4420 = vmatprep.mubr.bf16.mxu0 0
        %4421 = vmatmul.mubr.bf16.gmra.mrb[0].mxu0 %v784
        %v4422 = vpop.f32.mrb[0].mxu0
        %v4423 = vadd.f32 0.0, %v4422
        %v4424 = vpop.f32.mrb[0].mxu0
        %v4425 = vpop.f32.mrb[0].mxu0
        %v4426 = vadd.f32 0.0, %v4425
        %v4427 = vpop.f32.mrb[0].mxu0
        %4428 = vdwg.mxu0
        %v4429 = vadd.f32 %v4311, %v4367
        %v4430 = vadd.f32 %v4312, %v4370
        %v4431 = vadd.f32 %v4313, %v4375
        %v4432 = vadd.f32 %v4314, %v4378
        %v4433 = vadd.f32 %v4315, %v4383
        %v4434 = vadd.f32 %v4316, %v4386
        %v4435 = vadd.f32 %v4317, %v4391
        %v4436 = vadd.f32 %v4318, %v4394
        %v4437 = vadd.f32 %v4319, %v4399
        %v4438 = vadd.f32 %v4320, %v4402
        %v4439 = vadd.f32 %v4321, %v4407
        %v4440 = vadd.f32 %v4322, %v4410
        %v4441 = vadd.f32 %v4323, %v4415
        %v4442 = vadd.f32 %v4324, %v4418
        %v4443 = vadd.f32 %v4325, %v4423
        %v4444 = vadd.f32 %v4326, %v4426
        %v4445 = vld [vmem:[%s612 + $0xc] sm:$0x8]
        %v4446 = vld [vmem:[%s612 + $0x10] sm:$0xf]
        %v4447 = vld [vmem:[%s612 + $0x14] sm:$0x7]
        %v4448 = vld [vmem:[%s612 + $0x28] sm:$0x8]
        %v4449 = vld [vmem:[%s612 + $0x2c] sm:$0xf]
        %v4450 = vld [vmem:[%s612 + $0x30] sm:$0x7]
        %v4451 = vld [vmem:[%s612 + $0x44] sm:$0x8]
        %v4452 = vld [vmem:[%s612 + $0x48] sm:$0xf]
        %v4453 = vld [vmem:[%s612 + $0x4c] sm:$0x7]
        %v4454 = vld [vmem:[%s612 + $0x60] sm:$0x8]
        %v4455 = vld [vmem:[%s612 + $0x64] sm:$0xf]
        %v4456 = vld [vmem:[%s612 + $0x68] sm:$0x7]
        %v4457 = vld [vmem:[%s612 + $0x7c] sm:$0x8]
        %v4458 = vld [vmem:[%s612 + $0x80] sm:$0xf]
        %v4459 = vld [vmem:[%s612 + $0x84] sm:$0x7]
        %v4460 = vld [vmem:[%s612 + $0x98] sm:$0x8]
        %v4461 = vld [vmem:[%s612 + $0x9c] sm:$0xf]
        %v4462 = vld [vmem:[%s612 + $0xa0] sm:$0x7]
        %v4463 = vld [vmem:[%s612 + $0xb4] sm:$0x8]
        %v4464 = vld [vmem:[%s612 + $0xb8] sm:$0xf]
        %v4465 = vld [vmem:[%s612 + $0xbc] sm:$0x7]
        %v4466 = vld [vmem:[%s612 + $0xd0] sm:$0x8]
        %v4467 = vld [vmem:[%s612 + $0xd4] sm:$0xf]
        %v4468 = vld [vmem:[%s612 + $0xd8] sm:$0x7]
        %v4493 = vrot.slane %v4445, 7
        %v4494 = vrot.slane %v4493, 4
        %v4495 = vrot.slane %v4446, 7
        %v4496 = vsel %vm3326, %v4494, %v4495
        %v4497 = vrot.slane %v4495, 4
        %v4498 = vrot.slane %v4447, 7
        %v4499 = vsel %vm3326, %v4497, %v4498
        %v4500 = vrot.slane %v4448, 7
        %v4501 = vrot.slane %v4500, 4
        %v4502 = vrot.slane %v4449, 7
        %v4503 = vsel %vm3326, %v4501, %v4502
        %v4504 = vrot.slane %v4502, 4
        %v4505 = vrot.slane %v4450, 7
        %v4506 = vsel %vm3326, %v4504, %v4505
        %v4507 = vrot.slane %v4451, 7
        %v4508 = vrot.slane %v4507, 4
        %v4509 = vrot.slane %v4452, 7
        %v4510 = vsel %vm3326, %v4508, %v4509
        %v4511 = vrot.slane %v4509, 4
        %v4512 = vrot.slane %v4453, 7
        %v4513 = vsel %vm3326, %v4511, %v4512
        %v4514 = vrot.slane %v4454, 7
        %v4515 = vrot.slane %v4514, 4
        %v4516 = vrot.slane %v4455, 7
        %v4517 = vsel %vm3326, %v4515, %v4516
        %v4518 = vrot.slane %v4516, 4
        %v4519 = vrot.slane %v4456, 7
        %v4520 = vsel %vm3326, %v4518, %v4519
        %v4521 = vrot.slane %v4457, 7
        %v4522 = vrot.slane %v4521, 4
        %v4523 = vrot.slane %v4458, 7
        %v4524 = vsel %vm3326, %v4522, %v4523
        %v4525 = vrot.slane %v4523, 4
        %v4526 = vrot.slane %v4459, 7
        %v4527 = vsel %vm3326, %v4525, %v4526
        %v4528 = vrot.slane %v4460, 7
        %v4529 = vrot.slane %v4528, 4
        %v4530 = vrot.slane %v4461, 7
        %v4531 = vsel %vm3326, %v4529, %v4530
        %v4532 = vrot.slane %v4530, 4
        %v4533 = vrot.slane %v4462, 7
        %v4534 = vsel %vm3326, %v4532, %v4533
        %v4535 = vrot.slane %v4463, 7
        %v4536 = vrot.slane %v4535, 4
        %v4537 = vrot.slane %v4464, 7
        %v4538 = vsel %vm3326, %v4536, %v4537
        %v4539 = vrot.slane %v4537, 4
        %v4540 = vrot.slane %v4465, 7
        %v4541 = vsel %vm3326, %v4539, %v4540
        %v4542 = vrot.slane %v4466, 7
        %v4543 = vrot.slane %v4542, 4
        %v4544 = vrot.slane %v4467, 7
        %v4545 = vsel %vm3326, %v4543, %v4544
        %v4546 = vrot.slane %v4544, 4
        %v4547 = vrot.slane %v4468, 7
        %v4548 = vsel %vm3326, %v4546, %v4547
        %s4549 = scalar_lea.vmem [#allocation10], 56
        %v4550 = vld [vmem:[%s4549] sm:$0xf]
        %v4551 = vunpack.c.l.b16 %v4496
        %v4552 = vunpack.c.l.b16 %v4499
        %v4553 = vunpack.c.l.b16 %v4503
        %v4554 = vunpack.c.l.b16 %v4506
        %v4555 = vunpack.c.l.b16 %v4510
        %v4556 = vunpack.c.l.b16 %v4513
        %v4557 = vunpack.c.l.b16 %v4517
        %v4558 = vunpack.c.l.b16 %v4520
        %v4559 = vunpack.c.l.b16 %v4524
        %v4560 = vunpack.c.l.b16 %v4527
        %v4561 = vunpack.c.l.b16 %v4531
        %v4562 = vunpack.c.l.b16 %v4534
        %v4563 = vunpack.c.l.b16 %v4538
        %v4564 = vunpack.c.l.b16 %v4541
        %v4565 = vunpack.c.l.b16 %v4545
        %v4566 = vunpack.c.l.b16 %v4548
        %v4567 = vpack.c.b16 %v4552, %v4551
        %v4568 = vpack.c.b16 %v4554, %v4553
        %v4569 = vpack.c.b16 %v4556, %v4555
        %v4570 = vpack.c.b16 %v4558, %v4557
        %v4571 = vpack.c.b16 %v4560, %v4559
        %v4572 = vpack.c.b16 %v4562, %v4561
        %v4573 = vpack.c.b16 %v4564, %v4563
        %v4574 = vpack.c.b16 %v4566, %v4565
        %v4576 = vsel %vm761, %v4567, 0
        %v4579 = vsel %vm761, %v4568, 0
        %v4582 = vsel %vm761, %v4569, 0
        %v4585 = vsel %vm761, %v4570, 0
        %v4588 = vsel %vm761, %v4571, 0
        %v4591 = vsel %vm761, %v4572, 0
        %v4594 = vsel %vm761, %v4573, 0
        %v4597 = vsel %vm761, %v4574, 0
        %v4600 = vsel %vm786, %v4550, 0
        %4602 = vmatprep.subr.bf16.mxu0 0
        %4603 = vmatpush1.bf16.msra.mxu0 %v4600
        %4604 = vmatprep.subr.bf16.mxu0 0
        %4605 = vmatpush1.bf16.msra.mxu0 0
        %4606 = vmatprep.subr.bf16.mxu0 0
        %4607 = vmatpush1.bf16.msra.mxu0 0
        %4608 = vmatprep.subr.bf16.mxu0 0
        %4609 = vmatpush1.bf16.msra.mxu0 0
        %4610 = vmatprep.subr.bf16.mxu0 0
        %4611 = vmatpush1.bf16.msra.mxu0 0
        %4612 = vmatprep.subr.bf16.mxu0 0
        %4613 = vmatpush1.bf16.msra.mxu0 0
        %4614 = vmatprep.subr.bf16.mxu0 0
        %4615 = vmatpush1.bf16.msra.mxu0 0
        %4616 = vmatprep.subr.bf16.mxu0 0
        %4617 = vmatpush1.bf16.msra.mxu0 0
        %4618 = vmatprep.subr.bf16.mxu0 0
        %4619 = vmatpush1.bf16.msra.mxu0 0
        %4620 = vmatprep.subr.bf16.mxu0 0
        %4621 = vmatpush1.bf16.msra.mxu0 0
        %4622 = vmatprep.subr.bf16.mxu0 0
        %4623 = vmatpush1.bf16.msra.mxu0 0
        %4624 = vmatprep.subr.bf16.mxu0 0
        %4625 = vmatpush1.bf16.msra.mxu0 0
        %4626 = vmatprep.subr.bf16.mxu0 0
        %4627 = vmatpush1.bf16.msra.mxu0 0
        %4628 = vmatprep.subr.bf16.mxu0 0
        %4629 = vmatpush1.bf16.msra.mxu0 0
        %4630 = vmatprep.subr.bf16.mxu0 0
        %4631 = vmatpush1.bf16.msra.mxu0 0
        %4632 = vmatprep.subr.bf16.mxu0 0
        %4633 = vmatpush1.bf16.msra.mxu0 0
        %4634 = vmatprep.mubr.bf16.mxu0 0
        %4635 = vmatmul.mubr.bf16.gmra.mrb[0].mxu0 %v4576
        %v4636 = vpop.f32.mrb[0].mxu0
        %v4637 = vadd.f32 0.0, %v4636
        %v4638 = vpop.f32.mrb[0].mxu0
        %v4639 = vpop.f32.mrb[0].mxu0
        %v4640 = vadd.f32 0.0, %v4639
        %v4641 = vpop.f32.mrb[0].mxu0
        %4642 = vmatprep.mubr.bf16.mxu0 0
        %4643 = vmatmul.mubr.bf16.gmra.mrb[0].mxu0 %v4579
        %v4644 = vpop.f32.mrb[0].mxu0
        %v4645 = vadd.f32 0.0, %v4644
        %v4646 = vpop.f32.mrb[0].mxu0
        %v4647 = vpop.f32.mrb[0].mxu0
        %v4648 = vadd.f32 0.0, %v4647
        %v4649 = vpop.f32.mrb[0].mxu0
        %4650 = vmatprep.mubr.bf16.mxu0 0
        %4651 = vmatmul.mubr.bf16.gmra.mrb[0].mxu0 %v4582
        %v4652 = vpop.f32.mrb[0].mxu0
        %v4653 = vadd.f32 0.0, %v4652
        %v4654 = vpop.f32.mrb[0].mxu0
        %v4655 = vpop.f32.mrb[0].mxu0
        %v4656 = vadd.f32 0.0, %v4655
        %v4657 = vpop.f32.mrb[0].mxu0
        %4658 = vmatprep.mubr.bf16.mxu0 0
        %4659 = vmatmul.mubr.bf16.gmra.mrb[0].mxu0 %v4585
        %v4660 = vpop.f32.mrb[0].mxu0
        %v4661 = vadd.f32 0.0, %v4660
        %v4662 = vpop.f32.mrb[0].mxu0
        %v4663 = vpop.f32.mrb[0].mxu0
        %v4664 = vadd.f32 0.0, %v4663
        %v4665 = vpop.f32.mrb[0].mxu0
        %4666 = vmatprep.mubr.bf16.mxu0 0
        %4667 = vmatmul.mubr.bf16.gmra.mrb[0].mxu0 %v4588
        %v4668 = vpop.f32.mrb[0].mxu0
        %v4669 = vadd.f32 0.0, %v4668
        %v4670 = vpop.f32.mrb[0].mxu0
        %v4671 = vpop.f32.mrb[0].mxu0
        %v4672 = vadd.f32 0.0, %v4671
        %v4673 = vpop.f32.mrb[0].mxu0
        %4674 = vmatprep.mubr.bf16.mxu0 0
        %4675 = vmatmul.mubr.bf16.gmra.mrb[0].mxu0 %v4591
        %v4676 = vpop.f32.mrb[0].mxu0
        %v4677 = vadd.f32 0.0, %v4676
        %v4678 = vpop.f32.mrb[0].mxu0
        %v4679 = vpop.f32.mrb[0].mxu0
        %v4680 = vadd.f32 0.0, %v4679
        %v4681 = vpop.f32.mrb[0].mxu0
        %4682 = vmatprep.mubr.bf16.mxu0 0
        %4683 = vmatmul.mubr.bf16.gmra.mrb[0].mxu0 %v4594
        %v4684 = vpop.f32.mrb[0].mxu0
        %v4685 = vadd.f32 0.0, %v4684
        %v4686 = vpop.f32.mrb[0].mxu0
        %v4687 = vpop.f32.mrb[0].mxu0
        %v4688 = vadd.f32 0.0, %v4687
        %v4689 = vpop.f32.mrb[0].mxu0
        %4690 = vmatprep.mubr.bf16.mxu0 0
        %4691 = vmatmul.mubr.bf16.gmra.mrb[0].mxu0 %v4597
        %v4692 = vpop.f32.mrb[0].mxu0
        %v4693 = vadd.f32 0.0, %v4692
        %v4694 = vpop.f32.mrb[0].mxu0
        %v4695 = vpop.f32.mrb[0].mxu0
        %v4696 = vadd.f32 0.0, %v4695
        %v4697 = vpop.f32.mrb[0].mxu0
        %4698 = vdwg.mxu0
        %v4699 = vadd.f32 %v4429, %v4637
        %v4700 = vadd.f32 %v4430, %v4640
        %v4701 = vadd.f32 %v4431, %v4645
        %v4702 = vadd.f32 %v4432, %v4648
        %v4703 = vadd.f32 %v4433, %v4653
        %v4704 = vadd.f32 %v4434, %v4656
        %v4705 = vadd.f32 %v4435, %v4661
        %v4706 = vadd.f32 %v4436, %v4664
        %v4707 = vadd.f32 %v4437, %v4669
        %v4708 = vadd.f32 %v4438, %v4672
        %v4709 = vadd.f32 %v4439, %v4677
        %v4710 = vadd.f32 %v4440, %v4680
        %v4711 = vadd.f32 %v4441, %v4685
        %v4712 = vadd.f32 %v4442, %v4688
        %v4713 = vadd.f32 %v4443, %v4693
        %v4714 = vadd.f32 %v4444, %v4696
        %s4715 = sadd.s32 %s608, 30
        %s4716 = smul.u32 %s4715, 7
        %s4717 = smul.addr %s4716, 4
        %s4718 = scalar_lea.vmem %s510, %s4717 [#allocation2]
        %v4719 = vld [vmem:[%s4718] sm:$0x8]
        %v4720 = vld [vmem:[%s4718 + $0x4] sm:$0xf]
        %v4721 = vld [vmem:[%s4718 + $0x8] sm:$0x7]
        %v4722 = vld [vmem:[%s4718 + $0x1c] sm:$0x8]
        %v4723 = vld [vmem:[%s4718 + $0x20] sm:$0xf]
        %v4724 = vld [vmem:[%s4718 + $0x24] sm:$0x7]
        %v4725 = vld [vmem:[%s4718 + $0x38] sm:$0x8]
        %v4726 = vld [vmem:[%s4718 + $0x3c] sm:$0xf]
        %v4727 = vld [vmem:[%s4718 + $0x40] sm:$0x7]
        %v4728 = vld [vmem:[%s4718 + $0x54] sm:$0x8]
        %v4729 = vld [vmem:[%s4718 + $0x58] sm:$0xf]
        %v4730 = vld [vmem:[%s4718 + $0x5c] sm:$0x7]
        %v4731 = vld [vmem:[%s4718 + $0x70] sm:$0x8]
        %v4732 = vld [vmem:[%s4718 + $0x74] sm:$0xf]
        %v4733 = vld [vmem:[%s4718 + $0x78] sm:$0x7]
        %v4734 = vld [vmem:[%s4718 + $0x8c] sm:$0x8]
        %v4735 = vld [vmem:[%s4718 + $0x90] sm:$0xf]
        %v4736 = vld [vmem:[%s4718 + $0x94] sm:$0x7]
        %v4737 = vld [vmem:[%s4718 + $0xa8] sm:$0x8]
        %v4738 = vld [vmem:[%s4718 + $0xac] sm:$0xf]
        %v4739 = vld [vmem:[%s4718 + $0xb0] sm:$0x7]
        %v4740 = vld [vmem:[%s4718 + $0xc4] sm:$0x8]
        %v4741 = vld [vmem:[%s4718 + $0xc8] sm:$0xf]
        %v4742 = vld [vmem:[%s4718 + $0xcc] sm:$0x7]
        %v4767 = vrot.slane %v4719, 7
        %v4768 = vrot.slane %v4767, 4
        %v4769 = vrot.slane %v4720, 7
        %v4770 = vsel %vm3326, %v4768, %v4769
        %v4771 = vrot.slane %v4769, 4
        %v4772 = vrot.slane %v4721, 7
        %v4773 = vsel %vm3326, %v4771, %v4772
        %v4774 = vrot.slane %v4722, 7
        %v4775 = vrot.slane %v4774, 4
        %v4776 = vrot.slane %v4723, 7
        %v4777 = vsel %vm3326, %v4775, %v4776
        %v4778 = vrot.slane %v4776, 4
        %v4779 = vrot.slane %v4724, 7
        %v4780 = vsel %vm3326, %v4778, %v4779
        %v4781 = vrot.slane %v4725, 7
        %v4782 = vrot.slane %v4781, 4
        %v4783 = vrot.slane %v4726, 7
        %v4784 = vsel %vm3326, %v4782, %v4783
        %v4785 = vrot.slane %v4783, 4
        %v4786 = vrot.slane %v4727, 7
        %v4787 = vsel %vm3326, %v4785, %v4786
        %v4788 = vrot.slane %v4728, 7
        %v4789 = vrot.slane %v4788, 4
        %v4790 = vrot.slane %v4729, 7
        %v4791 = vsel %vm3326, %v4789, %v4790
        %v4792 = vrot.slane %v4790, 4
        %v4793 = vrot.slane %v4730, 7
        %v4794 = vsel %vm3326, %v4792, %v4793
        %v4795 = vrot.slane %v4731, 7
        %v4796 = vrot.slane %v4795, 4
        %v4797 = vrot.slane %v4732, 7
        %v4798 = vsel %vm3326, %v4796, %v4797
        %v4799 = vrot.slane %v4797, 4
        %v4800 = vrot.slane %v4733, 7
        %v4801 = vsel %vm3326, %v4799, %v4800
        %v4802 = vrot.slane %v4734, 7
        %v4803 = vrot.slane %v4802, 4
        %v4804 = vrot.slane %v4735, 7
        %v4805 = vsel %vm3326, %v4803, %v4804
        %v4806 = vrot.slane %v4804, 4
        %v4807 = vrot.slane %v4736, 7
        %v4808 = vsel %vm3326, %v4806, %v4807
        %v4809 = vrot.slane %v4737, 7
        %v4810 = vrot.slane %v4809, 4
        %v4811 = vrot.slane %v4738, 7
        %v4812 = vsel %vm3326, %v4810, %v4811
        %v4813 = vrot.slane %v4811, 4
        %v4814 = vrot.slane %v4739, 7
        %v4815 = vsel %vm3326, %v4813, %v4814
        %v4816 = vrot.slane %v4740, 7
        %v4817 = vrot.slane %v4816, 4
        %v4818 = vrot.slane %v4741, 7
        %v4819 = vsel %vm3326, %v4817, %v4818
        %v4820 = vrot.slane %v4818, 4
        %v4821 = vrot.slane %v4742, 7
        %v4822 = vsel %vm3326, %v4820, %v4821
        %s4823 = scalar_lea.vmem [#allocation10], 60
        %v4824 = vld [vmem:[%s4823] sm:$0xf]
        %v4825 = vunpack.c.l.b16 %v4770
        %v4826 = vunpack.c.l.b16 %v4773
        %v4827 = vunpack.c.l.b16 %v4777
        %v4828 = vunpack.c.l.b16 %v4780
        %v4829 = vunpack.c.l.b16 %v4784
        %v4830 = vunpack.c.l.b16 %v4787
        %v4831 = vunpack.c.l.b16 %v4791
        %v4832 = vunpack.c.l.b16 %v4794
        %v4833 = vunpack.c.l.b16 %v4798
        %v4834 = vunpack.c.l.b16 %v4801
        %v4835 = vunpack.c.l.b16 %v4805
        %v4836 = vunpack.c.l.b16 %v4808
        %v4837 = vunpack.c.l.b16 %v4812
        %v4838 = vunpack.c.l.b16 %v4815
        %v4839 = vunpack.c.l.b16 %v4819
        %v4840 = vunpack.c.l.b16 %v4822
        %v4841 = vpack.c.b16 %v4826, %v4825
        %v4842 = vpack.c.b16 %v4828, %v4827
        %v4843 = vpack.c.b16 %v4830, %v4829
        %v4844 = vpack.c.b16 %v4832, %v4831
        %v4845 = vpack.c.b16 %v4834, %v4833
        %v4846 = vpack.c.b16 %v4836, %v4835
        %v4847 = vpack.c.b16 %v4838, %v4837
        %v4848 = vpack.c.b16 %v4840, %v4839
        %v4850 = vsel %vm761, %v4841, 0
        %v4853 = vsel %vm761, %v4842, 0
        %v4856 = vsel %vm761, %v4843, 0
        %v4859 = vsel %vm761, %v4844, 0
        %v4862 = vsel %vm761, %v4845, 0
        %v4865 = vsel %vm761, %v4846, 0
        %v4868 = vsel %vm761, %v4847, 0
        %v4871 = vsel %vm761, %v4848, 0
        %v4874 = vsel %vm786, %v4824, 0
        %4876 = vmatprep.subr.bf16.mxu0 0
        %4877 = vmatpush1.bf16.msra.mxu0 %v4874
        %4878 = vmatprep.subr.bf16.mxu0 0
        %4879 = vmatpush1.bf16.msra.mxu0 0
        %4880 = vmatprep.subr.bf16.mxu0 0
        %4881 = vmatpush1.bf16.msra.mxu0 0
        %4882 = vmatprep.subr.bf16.mxu0 0
        %4883 = vmatpush1.bf16.msra.mxu0 0
        %4884 = vmatprep.subr.bf16.mxu0 0
        %4885 = vmatpush1.bf16.msra.mxu0 0
        %4886 = vmatprep.subr.bf16.mxu0 0
        %4887 = vmatpush1.bf16.msra.mxu0 0
        %4888 = vmatprep.subr.bf16.mxu0 0
        %4889 = vmatpush1.bf16.msra.mxu0 0
        %4890 = vmatprep.subr.bf16.mxu0 0
        %4891 = vmatpush1.bf16.msra.mxu0 0
        %4892 = vmatprep.subr.bf16.mxu0 0
        %4893 = vmatpush1.bf16.msra.mxu0 0
        %4894 = vmatprep.subr.bf16.mxu0 0
        %4895 = vmatpush1.bf16.msra.mxu0 0
        %4896 = vmatprep.subr.bf16.mxu0 0
        %4897 = vmatpush1.bf16.msra.mxu0 0
        %4898 = vmatprep.subr.bf16.mxu0 0
        %4899 = vmatpush1.bf16.msra.mxu0 0
        %4900 = vmatprep.subr.bf16.mxu0 0
        %4901 = vmatpush1.bf16.msra.mxu0 0
        %4902 = vmatprep.subr.bf16.mxu0 0
        %4903 = vmatpush1.bf16.msra.mxu0 0
        %4904 = vmatprep.subr.bf16.mxu0 0
        %4905 = vmatpush1.bf16.msra.mxu0 0
        %4906 = vmatprep.subr.bf16.mxu0 0
        %4907 = vmatpush1.bf16.msra.mxu0 0
        %4908 = vmatprep.mubr.bf16.mxu0 0
        %4909 = vmatmul.mubr.bf16.gmra.mrb[0].mxu0 %v4850
        %v4910 = vpop.f32.mrb[0].mxu0
        %v4911 = vadd.f32 0.0, %v4910
        %v4912 = vpop.f32.mrb[0].mxu0
        %v4913 = vpop.f32.mrb[0].mxu0
        %v4914 = vadd.f32 0.0, %v4913
        %v4915 = vpop.f32.mrb[0].mxu0
        %4916 = vmatprep.mubr.bf16.mxu0 0
        %4917 = vmatmul.mubr.bf16.gmra.mrb[0].mxu0 %v4853
        %v4918 = vpop.f32.mrb[0].mxu0
        %v4919 = vadd.f32 0.0, %v4918
        %v4920 = vpop.f32.mrb[0].mxu0
        %v4921 = vpop.f32.mrb[0].mxu0
        %v4922 = vadd.f32 0.0, %v4921
        %v4923 = vpop.f32.mrb[0].mxu0
        %4924 = vmatprep.mubr.bf16.mxu0 0
        %4925 = vmatmul.mubr.bf16.gmra.mrb[0].mxu0 %v4856
        %v4926 = vpop.f32.mrb[0].mxu0
        %v4927 = vadd.f32 0.0, %v4926
        %v4928 = vpop.f32.mrb[0].mxu0
        %v4929 = vpop.f32.mrb[0].mxu0
        %v4930 = vadd.f32 0.0, %v4929
        %v4931 = vpop.f32.mrb[0].mxu0
        %4932 = vmatprep.mubr.bf16.mxu0 0
        %4933 = vmatmul.mubr.bf16.gmra.mrb[0].mxu0 %v4859
        %v4934 = vpop.f32.mrb[0].mxu0
        %v4935 = vadd.f32 0.0, %v4934
        %v4936 = vpop.f32.mrb[0].mxu0
        %v4937 = vpop.f32.mrb[0].mxu0
        %v4938 = vadd.f32 0.0, %v4937
        %v4939 = vpop.f32.mrb[0].mxu0
        %4940 = vmatprep.mubr.bf16.mxu0 0
        %4941 = vmatmul.mubr.bf16.gmra.mrb[0].mxu0 %v4862
        %v4942 = vpop.f32.mrb[0].mxu0
        %v4943 = vadd.f32 0.0, %v4942
        %v4944 = vpop.f32.mrb[0].mxu0
        %v4945 = vpop.f32.mrb[0].mxu0
        %v4946 = vadd.f32 0.0, %v4945
        %v4947 = vpop.f32.mrb[0].mxu0
        %4948 = vmatprep.mubr.bf16.mxu0 0
        %4949 = vmatmul.mubr.bf16.gmra.mrb[0].mxu0 %v4865
        %v4950 = vpop.f32.mrb[0].mxu0
        %v4951 = vadd.f32 0.0, %v4950
        %v4952 = vpop.f32.mrb[0].mxu0
        %v4953 = vpop.f32.mrb[0].mxu0
        %v4954 = vadd.f32 0.0, %v4953
        %v4955 = vpop.f32.mrb[0].mxu0
        %4956 = vmatprep.mubr.bf16.mxu0 0
        %4957 = vmatmul.mubr.bf16.gmra.mrb[0].mxu0 %v4868
        %v4958 = vpop.f32.mrb[0].mxu0
        %v4959 = vadd.f32 0.0, %v4958
        %v4960 = vpop.f32.mrb[0].mxu0
        %v4961 = vpop.f32.mrb[0].mxu0
        %v4962 = vadd.f32 0.0, %v4961
        %v4963 = vpop.f32.mrb[0].mxu0
        %4964 = vmatprep.mubr.bf16.mxu0 0
        %4965 = vmatmul.mubr.bf16.gmra.mrb[0].mxu0 %v4871
        %v4966 = vpop.f32.mrb[0].mxu0
        %v4967 = vadd.f32 0.0, %v4966
        %v4968 = vpop.f32.mrb[0].mxu0
        %v4969 = vpop.f32.mrb[0].mxu0
        %v4970 = vadd.f32 0.0, %v4969
        %v4971 = vpop.f32.mrb[0].mxu0
        %4972 = vdwg.mxu0
        %v4973 = vadd.f32 %v4699, %v4911
        %v4974 = vadd.f32 %v4700, %v4914
        %v4975 = vadd.f32 %v4701, %v4919
        %v4976 = vadd.f32 %v4702, %v4922
        %v4977 = vadd.f32 %v4703, %v4927
        %v4978 = vadd.f32 %v4704, %v4930
        %v4979 = vadd.f32 %v4705, %v4935
        %v4980 = vadd.f32 %v4706, %v4938
        %v4981 = vadd.f32 %v4707, %v4943
        %v4982 = vadd.f32 %v4708, %v4946
        %v4983 = vadd.f32 %v4709, %v4951
        %v4984 = vadd.f32 %v4710, %v4954
        %v4985 = vadd.f32 %v4711, %v4959
        %v4986 = vadd.f32 %v4712, %v4962
        %v4987 = vadd.f32 %v4713, %v4967
        %v4988 = vadd.f32 %v4714, %v4970
        %v4989 = vld [vmem:[%s4718 + $0x8] sm:$0xe]
        %v4990 = vld [vmem:[%s4718 + $0xc] sm:$0xf]
        %v4991 = vld [vmem:[%s4718 + $0x10] sm:$0x1]
        %v4992 = vld [vmem:[%s4718 + $0x24] sm:$0xe]
        %v4993 = vld [vmem:[%s4718 + $0x28] sm:$0xf]
        %v4994 = vld [vmem:[%s4718 + $0x2c] sm:$0x1]
        %v4995 = vld [vmem:[%s4718 + $0x40] sm:$0xe]
        %v4996 = vld [vmem:[%s4718 + $0x44] sm:$0xf]
        %v4997 = vld [vmem:[%s4718 + $0x48] sm:$0x1]
        %v4998 = vld [vmem:[%s4718 + $0x5c] sm:$0xe]
        %v4999 = vld [vmem:[%s4718 + $0x60] sm:$0xf]
        %v5000 = vld [vmem:[%s4718 + $0x64] sm:$0x1]
        %v5001 = vld [vmem:[%s4718 + $0x78] sm:$0xe]
        %v5002 = vld [vmem:[%s4718 + $0x7c] sm:$0xf]
        %v5003 = vld [vmem:[%s4718 + $0x80] sm:$0x1]
        %v5004 = vld [vmem:[%s4718 + $0x94] sm:$0xe]
        %v5005 = vld [vmem:[%s4718 + $0x98] sm:$0xf]
        %v5006 = vld [vmem:[%s4718 + $0x9c] sm:$0x1]
        %v5007 = vld [vmem:[%s4718 + $0xb0] sm:$0xe]
        %v5008 = vld [vmem:[%s4718 + $0xb4] sm:$0xf]
        %v5009 = vld [vmem:[%s4718 + $0xb8] sm:$0x1]
        %v5010 = vld [vmem:[%s4718 + $0xcc] sm:$0xe]
        %v5011 = vld [vmem:[%s4718 + $0xd0] sm:$0xf]
        %v5012 = vld [vmem:[%s4718 + $0xd4] sm:$0x1]
        %v5037 = vrot.slane %v4989, 5
        %v5038 = vrot.slane %v5037, 4
        %v5039 = vrot.slane %v4990, 5
        %v5040 = vsel %vm663, %v5038, %v5039
        %v5041 = vrot.slane %v5039, 4
        %v5042 = vrot.slane %v4991, 5
        %v5043 = vsel %vm663, %v5041, %v5042
        %v5044 = vrot.slane %v4992, 5
        %v5045 = vrot.slane %v5044, 4
        %v5046 = vrot.slane %v4993, 5
        %v5047 = vsel %vm663, %v5045, %v5046
        %v5048 = vrot.slane %v5046, 4
        %v5049 = vrot.slane %v4994, 5
        %v5050 = vsel %vm663, %v5048, %v5049
        %v5051 = vrot.slane %v4995, 5
        %v5052 = vrot.slane %v5051, 4
        %v5053 = vrot.slane %v4996, 5
        %v5054 = vsel %vm663, %v5052, %v5053
        %v5055 = vrot.slane %v5053, 4
        %v5056 = vrot.slane %v4997, 5
        %v5057 = vsel %vm663, %v5055, %v5056
        %v5058 = vrot.slane %v4998, 5
        %v5059 = vrot.slane %v5058, 4
        %v5060 = vrot.slane %v4999, 5
        %v5061 = vsel %vm663, %v5059, %v5060
        %v5062 = vrot.slane %v5060, 4
        %v5063 = vrot.slane %v5000, 5
        %v5064 = vsel %vm663, %v5062, %v5063
        %v5065 = vrot.slane %v5001, 5
        %v5066 = vrot.slane %v5065, 4
        %v5067 = vrot.slane %v5002, 5
        %v5068 = vsel %vm663, %v5066, %v5067
        %v5069 = vrot.slane %v5067, 4
        %v5070 = vrot.slane %v5003, 5
        %v5071 = vsel %vm663, %v5069, %v5070
        %v5072 = vrot.slane %v5004, 5
        %v5073 = vrot.slane %v5072, 4
        %v5074 = vrot.slane %v5005, 5
        %v5075 = vsel %vm663, %v5073, %v5074
        %v5076 = vrot.slane %v5074, 4
        %v5077 = vrot.slane %v5006, 5
        %v5078 = vsel %vm663, %v5076, %v5077
        %v5079 = vrot.slane %v5007, 5
        %v5080 = vrot.slane %v5079, 4
        %v5081 = vrot.slane %v5008, 5
        %v5082 = vsel %vm663, %v5080, %v5081
        %v5083 = vrot.slane %v5081, 4
        %v5084 = vrot.slane %v5009, 5
        %v5085 = vsel %vm663, %v5083, %v5084
        %v5086 = vrot.slane %v5010, 5
        %v5087 = vrot.slane %v5086, 4
        %v5088 = vrot.slane %v5011, 5
        %v5089 = vsel %vm663, %v5087, %v5088
        %v5090 = vrot.slane %v5088, 4
        %v5091 = vrot.slane %v5012, 5
        %v5092 = vsel %vm663, %v5090, %v5091
        %s5093 = scalar_lea.vmem [#allocation10], 64
        %v5094 = vld [vmem:[%s5093] sm:$0xf]
        %v5095 = vunpack.c.l.b16 %v5040
        %v5096 = vunpack.c.l.b16 %v5043
        %v5097 = vunpack.c.l.b16 %v5047
        %v5098 = vunpack.c.l.b16 %v5050
        %v5099 = vunpack.c.l.b16 %v5054
        %v5100 = vunpack.c.l.b16 %v5057
        %v5101 = vunpack.c.l.b16 %v5061
        %v5102 = vunpack.c.l.b16 %v5064
        %v5103 = vunpack.c.l.b16 %v5068
        %v5104 = vunpack.c.l.b16 %v5071
        %v5105 = vunpack.c.l.b16 %v5075
        %v5106 = vunpack.c.l.b16 %v5078
        %v5107 = vunpack.c.l.b16 %v5082
        %v5108 = vunpack.c.l.b16 %v5085
        %v5109 = vunpack.c.l.b16 %v5089
        %v5110 = vunpack.c.l.b16 %v5092
        %v5111 = vpack.c.b16 %v5096, %v5095
        %v5112 = vpack.c.b16 %v5098, %v5097
        %v5113 = vpack.c.b16 %v5100, %v5099
        %v5114 = vpack.c.b16 %v5102, %v5101
        %v5115 = vpack.c.b16 %v5104, %v5103
        %v5116 = vpack.c.b16 %v5106, %v5105
        %v5117 = vpack.c.b16 %v5108, %v5107
        %v5118 = vpack.c.b16 %v5110, %v5109
        %v5120 = vsel %vm761, %v5111, 0
        %v5123 = vsel %vm761, %v5112, 0
        %v5126 = vsel %vm761, %v5113, 0
        %v5129 = vsel %vm761, %v5114, 0
        %v5132 = vsel %vm761, %v5115, 0
        %v5135 = vsel %vm761, %v5116, 0
        %v5138 = vsel %vm761, %v5117, 0
        %v5141 = vsel %vm761, %v5118, 0
        %v5144 = vsel %vm786, %v5094, 0
        %5146 = vmatprep.subr.bf16.mxu0 0
        %5147 = vmatpush1.bf16.msra.mxu0 %v5144
        %5148 = vmatprep.subr.bf16.mxu0 0
        %5149 = vmatpush1.bf16.msra.mxu0 0
        %5150 = vmatprep.subr.bf16.mxu0 0
        %5151 = vmatpush1.bf16.msra.mxu0 0
        %5152 = vmatprep.subr.bf16.mxu0 0
        %5153 = vmatpush1.bf16.msra.mxu0 0
        %5154 = vmatprep.subr.bf16.mxu0 0
        %5155 = vmatpush1.bf16.msra.mxu0 0
        %5156 = vmatprep.subr.bf16.mxu0 0
        %5157 = vmatpush1.bf16.msra.mxu0 0
        %5158 = vmatprep.subr.bf16.mxu0 0
        %5159 = vmatpush1.bf16.msra.mxu0 0
        %5160 = vmatprep.subr.bf16.mxu0 0
        %5161 = vmatpush1.bf16.msra.mxu0 0
        %5162 = vmatprep.subr.bf16.mxu0 0
        %5163 = vmatpush1.bf16.msra.mxu0 0
        %5164 = vmatprep.subr.bf16.mxu0 0
        %5165 = vmatpush1.bf16.msra.mxu0 0
        %5166 = vmatprep.subr.bf16.mxu0 0
        %5167 = vmatpush1.bf16.msra.mxu0 0
        %5168 = vmatprep.subr.bf16.mxu0 0
        %5169 = vmatpush1.bf16.msra.mxu0 0
        %5170 = vmatprep.subr.bf16.mxu0 0
        %5171 = vmatpush1.bf16.msra.mxu0 0
        %5172 = vmatprep.subr.bf16.mxu0 0
        %5173 = vmatpush1.bf16.msra.mxu0 0
        %5174 = vmatprep.subr.bf16.mxu0 0
        %5175 = vmatpush1.bf16.msra.mxu0 0
        %5176 = vmatprep.subr.bf16.mxu0 0
        %5177 = vmatpush1.bf16.msra.mxu0 0
        %5178 = vmatprep.mubr.bf16.mxu0 0
        %5179 = vmatmul.mubr.bf16.gmra.mrb[0].mxu0 %v5120
        %v5180 = vpop.f32.mrb[0].mxu0
        %v5181 = vadd.f32 0.0, %v5180
        %v5182 = vpop.f32.mrb[0].mxu0
        %v5183 = vpop.f32.mrb[0].mxu0
        %v5184 = vadd.f32 0.0, %v5183
        %v5185 = vpop.f32.mrb[0].mxu0
        %5186 = vmatprep.mubr.bf16.mxu0 0
        %5187 = vmatmul.mubr.bf16.gmra.mrb[0].mxu0 %v5123
        %v5188 = vpop.f32.mrb[0].mxu0
        %v5189 = vadd.f32 0.0, %v5188
        %v5190 = vpop.f32.mrb[0].mxu0
        %v5191 = vpop.f32.mrb[0].mxu0
        %v5192 = vadd.f32 0.0, %v5191
        %v5193 = vpop.f32.mrb[0].mxu0
        %5194 = vmatprep.mubr.bf16.mxu0 0
        %5195 = vmatmul.mubr.bf16.gmra.mrb[0].mxu0 %v5126
        %v5196 = vpop.f32.mrb[0].mxu0
        %v5197 = vadd.f32 0.0, %v5196
        %v5198 = vpop.f32.mrb[0].mxu0
        %v5199 = vpop.f32.mrb[0].mxu0
        %v5200 = vadd.f32 0.0, %v5199
        %v5201 = vpop.f32.mrb[0].mxu0
        %5202 = vmatprep.mubr.bf16.mxu0 0
        %5203 = vmatmul.mubr.bf16.gmra.mrb[0].mxu0 %v5129
        %v5204 = vpop.f32.mrb[0].mxu0
        %v5205 = vadd.f32 0.0, %v5204
        %v5206 = vpop.f32.mrb[0].mxu0
        %v5207 = vpop.f32.mrb[0].mxu0
        %v5208 = vadd.f32 0.0, %v5207
        %v5209 = vpop.f32.mrb[0].mxu0
        %5210 = vmatprep.mubr.bf16.mxu0 0
        %5211 = vmatmul.mubr.bf16.gmra.mrb[0].mxu0 %v5132
        %v5212 = vpop.f32.mrb[0].mxu0
        %v5213 = vadd.f32 0.0, %v5212
        %v5214 = vpop.f32.mrb[0].mxu0
        %v5215 = vpop.f32.mrb[0].mxu0
        %v5216 = vadd.f32 0.0, %v5215
        %v5217 = vpop.f32.mrb[0].mxu0
        %5218 = vmatprep.mubr.bf16.mxu0 0
        %5219 = vmatmul.mubr.bf16.gmra.mrb[0].mxu0 %v5135
        %v5220 = vpop.f32.mrb[0].mxu0
        %v5221 = vadd.f32 0.0, %v5220
        %v5222 = vpop.f32.mrb[0].mxu0
        %v5223 = vpop.f32.mrb[0].mxu0
        %v5224 = vadd.f32 0.0, %v5223
        %v5225 = vpop.f32.mrb[0].mxu0
        %5226 = vmatprep.mubr.bf16.mxu0 0
        %5227 = vmatmul.mubr.bf16.gmra.mrb[0].mxu0 %v5138
        %v5228 = vpop.f32.mrb[0].mxu0
        %v5229 = vadd.f32 0.0, %v5228
        %v5230 = vpop.f32.mrb[0].mxu0
        %v5231 = vpop.f32.mrb[0].mxu0
        %v5232 = vadd.f32 0.0, %v5231
        %v5233 = vpop.f32.mrb[0].mxu0
        %5234 = vmatprep.mubr.bf16.mxu0 0
        %5235 = vmatmul.mubr.bf16.gmra.mrb[0].mxu0 %v5141
        %v5236 = vpop.f32.mrb[0].mxu0
        %v5237 = vadd.f32 0.0, %v5236
        %v5238 = vpop.f32.mrb[0].mxu0
        %v5239 = vpop.f32.mrb[0].mxu0
        %v5240 = vadd.f32 0.0, %v5239
        %v5241 = vpop.f32.mrb[0].mxu0
        %5242 = vdwg.mxu0
        %v5243 = vadd.f32 %v4973, %v5181
        %v5244 = vadd.f32 %v4974, %v5184
        %v5245 = vadd.f32 %v4975, %v5189
        %v5246 = vadd.f32 %v4976, %v5192
        %v5247 = vadd.f32 %v4977, %v5197
        %v5248 = vadd.f32 %v4978, %v5200
        %v5249 = vadd.f32 %v4979, %v5205
        %v5250 = vadd.f32 %v4980, %v5208
        %v5251 = vadd.f32 %v4981, %v5213
        %v5252 = vadd.f32 %v4982, %v5216
        %v5253 = vadd.f32 %v4983, %v5221
        %v5254 = vadd.f32 %v4984, %v5224
        %v5255 = vadd.f32 %v4985, %v5229
        %v5256 = vadd.f32 %v4986, %v5232
        %v5257 = vadd.f32 %v4987, %v5237
        %v5258 = vadd.f32 %v4988, %v5240
        %v5259 = vld [vmem:[%s4718 + $0xc] sm:$0x8]
        %v5260 = vld [vmem:[%s4718 + $0x10] sm:$0xf]
        %v5261 = vld [vmem:[%s4718 + $0x14] sm:$0x7]
        %v5262 = vld [vmem:[%s4718 + $0x28] sm:$0x8]
        %v5263 = vld [vmem:[%s4718 + $0x2c] sm:$0xf]
        %v5264 = vld [vmem:[%s4718 + $0x30] sm:$0x7]
        %v5265 = vld [vmem:[%s4718 + $0x44] sm:$0x8]
        %v5266 = vld [vmem:[%s4718 + $0x48] sm:$0xf]
        %v5267 = vld [vmem:[%s4718 + $0x4c] sm:$0x7]
        %v5268 = vld [vmem:[%s4718 + $0x60] sm:$0x8]
        %v5269 = vld [vmem:[%s4718 + $0x64] sm:$0xf]
        %v5270 = vld [vmem:[%s4718 + $0x68] sm:$0x7]
        %v5271 = vld [vmem:[%s4718 + $0x7c] sm:$0x8]
        %v5272 = vld [vmem:[%s4718 + $0x80] sm:$0xf]
        %v5273 = vld [vmem:[%s4718 + $0x84] sm:$0x7]
        %v5274 = vld [vmem:[%s4718 + $0x98] sm:$0x8]
        %v5275 = vld [vmem:[%s4718 + $0x9c] sm:$0xf]
        %v5276 = vld [vmem:[%s4718 + $0xa0] sm:$0x7]
        %v5277 = vld [vmem:[%s4718 + $0xb4] sm:$0x8]
        %v5278 = vld [vmem:[%s4718 + $0xb8] sm:$0xf]
        %v5279 = vld [vmem:[%s4718 + $0xbc] sm:$0x7]
        %v5280 = vld [vmem:[%s4718 + $0xd0] sm:$0x8]
        %v5281 = vld [vmem:[%s4718 + $0xd4] sm:$0xf]
        %v5282 = vld [vmem:[%s4718 + $0xd8] sm:$0x7]
        %v5307 = vrot.slane %v5259, 7
        %v5308 = vrot.slane %v5307, 4
        %v5309 = vrot.slane %v5260, 7
        %v5310 = vsel %vm3326, %v5308, %v5309
        %v5311 = vrot.slane %v5309, 4
        %v5312 = vrot.slane %v5261, 7
        %v5313 = vsel %vm3326, %v5311, %v5312
        %v5314 = vrot.slane %v5262, 7
        %v5315 = vrot.slane %v5314, 4
        %v5316 = vrot.slane %v5263, 7
        %v5317 = vsel %vm3326, %v5315, %v5316
        %v5318 = vrot.slane %v5316, 4
        %v5319 = vrot.slane %v5264, 7
        %v5320 = vsel %vm3326, %v5318, %v5319
        %v5321 = vrot.slane %v5265, 7
        %v5322 = vrot.slane %v5321, 4
        %v5323 = vrot.slane %v5266, 7
        %v5324 = vsel %vm3326, %v5322, %v5323
        %v5325 = vrot.slane %v5323, 4
        %v5326 = vrot.slane %v5267, 7
        %v5327 = vsel %vm3326, %v5325, %v5326
        %v5328 = vrot.slane %v5268, 7
        %v5329 = vrot.slane %v5328, 4
        %v5330 = vrot.slane %v5269, 7
        %v5331 = vsel %vm3326, %v5329, %v5330
        %v5332 = vrot.slane %v5330, 4
        %v5333 = vrot.slane %v5270, 7
        %v5334 = vsel %vm3326, %v5332, %v5333
        %v5335 = vrot.slane %v5271, 7
        %v5336 = vrot.slane %v5335, 4
        %v5337 = vrot.slane %v5272, 7
        %v5338 = vsel %vm3326, %v5336, %v5337
        %v5339 = vrot.slane %v5337, 4
        %v5340 = vrot.slane %v5273, 7
        %v5341 = vsel %vm3326, %v5339, %v5340
        %v5342 = vrot.slane %v5274, 7
        %v5343 = vrot.slane %v5342, 4
        %v5344 = vrot.slane %v5275, 7
        %v5345 = vsel %vm3326, %v5343, %v5344
        %v5346 = vrot.slane %v5344, 4
        %v5347 = vrot.slane %v5276, 7
        %v5348 = vsel %vm3326, %v5346, %v5347
        %v5349 = vrot.slane %v5277, 7
        %v5350 = vrot.slane %v5349, 4
        %v5351 = vrot.slane %v5278, 7
        %v5352 = vsel %vm3326, %v5350, %v5351
        %v5353 = vrot.slane %v5351, 4
        %v5354 = vrot.slane %v5279, 7
        %v5355 = vsel %vm3326, %v5353, %v5354
        %v5356 = vrot.slane %v5280, 7
        %v5357 = vrot.slane %v5356, 4
        %v5358 = vrot.slane %v5281, 7
        %v5359 = vsel %vm3326, %v5357, %v5358
        %v5360 = vrot.slane %v5358, 4
        %v5361 = vrot.slane %v5282, 7
        %v5362 = vsel %vm3326, %v5360, %v5361
        %s5363 = scalar_lea.vmem [#allocation10], 68
        %v5364 = vld [vmem:[%s5363] sm:$0xf]
        %v5365 = vunpack.c.l.b16 %v5310
        %v5366 = vunpack.c.l.b16 %v5313
        %v5367 = vunpack.c.l.b16 %v5317
        %v5368 = vunpack.c.l.b16 %v5320
        %v5369 = vunpack.c.l.b16 %v5324
        %v5370 = vunpack.c.l.b16 %v5327
        %v5371 = vunpack.c.l.b16 %v5331
        %v5372 = vunpack.c.l.b16 %v5334
        %v5373 = vunpack.c.l.b16 %v5338
        %v5374 = vunpack.c.l.b16 %v5341
        %v5375 = vunpack.c.l.b16 %v5345
        %v5376 = vunpack.c.l.b16 %v5348
        %v5377 = vunpack.c.l.b16 %v5352
        %v5378 = vunpack.c.l.b16 %v5355
        %v5379 = vunpack.c.l.b16 %v5359
        %v5380 = vunpack.c.l.b16 %v5362
        %v5381 = vpack.c.b16 %v5366, %v5365
        %v5382 = vpack.c.b16 %v5368, %v5367
        %v5383 = vpack.c.b16 %v5370, %v5369
        %v5384 = vpack.c.b16 %v5372, %v5371
        %v5385 = vpack.c.b16 %v5374, %v5373
        %v5386 = vpack.c.b16 %v5376, %v5375
        %v5387 = vpack.c.b16 %v5378, %v5377
        %v5388 = vpack.c.b16 %v5380, %v5379
        %v5390 = vsel %vm761, %v5381, 0
        %v5393 = vsel %vm761, %v5382, 0
        %v5396 = vsel %vm761, %v5383, 0
        %v5399 = vsel %vm761, %v5384, 0
        %v5402 = vsel %vm761, %v5385, 0
        %v5405 = vsel %vm761, %v5386, 0
        %v5408 = vsel %vm761, %v5387, 0
        %v5411 = vsel %vm761, %v5388, 0
        %v5414 = vsel %vm786, %v5364, 0
        %5416 = vmatprep.subr.bf16.mxu0 0
        %5417 = vmatpush1.bf16.msra.mxu0 %v5414
        %5418 = vmatprep.subr.bf16.mxu0 0
        %5419 = vmatpush1.bf16.msra.mxu0 0
        %5420 = vmatprep.subr.bf16.mxu0 0
        %5421 = vmatpush1.bf16.msra.mxu0 0
        %5422 = vmatprep.subr.bf16.mxu0 0
        %5423 = vmatpush1.bf16.msra.mxu0 0
        %5424 = vmatprep.subr.bf16.mxu0 0
        %5425 = vmatpush1.bf16.msra.mxu0 0
        %5426 = vmatprep.subr.bf16.mxu0 0
        %5427 = vmatpush1.bf16.msra.mxu0 0
        %5428 = vmatprep.subr.bf16.mxu0 0
        %5429 = vmatpush1.bf16.msra.mxu0 0
        %5430 = vmatprep.subr.bf16.mxu0 0
        %5431 = vmatpush1.bf16.msra.mxu0 0
        %5432 = vmatprep.subr.bf16.mxu0 0
        %5433 = vmatpush1.bf16.msra.mxu0 0
        %5434 = vmatprep.subr.bf16.mxu0 0
        %5435 = vmatpush1.bf16.msra.mxu0 0
        %5436 = vmatprep.subr.bf16.mxu0 0
        %5437 = vmatpush1.bf16.msra.mxu0 0
        %5438 = vmatprep.subr.bf16.mxu0 0
        %5439 = vmatpush1.bf16.msra.mxu0 0
        %5440 = vmatprep.subr.bf16.mxu0 0
        %5441 = vmatpush1.bf16.msra.mxu0 0
        %5442 = vmatprep.subr.bf16.mxu0 0
        %5443 = vmatpush1.bf16.msra.mxu0 0
        %5444 = vmatprep.subr.bf16.mxu0 0
        %5445 = vmatpush1.bf16.msra.mxu0 0
        %5446 = vmatprep.subr.bf16.mxu0 0
        %5447 = vmatpush1.bf16.msra.mxu0 0
        %5448 = vmatprep.mubr.bf16.mxu0 0
        %5449 = vmatmul.mubr.bf16.gmra.mrb[0].mxu0 %v5390
        %v5450 = vpop.f32.mrb[0].mxu0
        %v5451 = vadd.f32 0.0, %v5450
        %v5452 = vpop.f32.mrb[0].mxu0
        %v5453 = vpop.f32.mrb[0].mxu0
        %v5454 = vadd.f32 0.0, %v5453
        %v5455 = vpop.f32.mrb[0].mxu0
        %5456 = vmatprep.mubr.bf16.mxu0 0
        %5457 = vmatmul.mubr.bf16.gmra.mrb[0].mxu0 %v5393
        %v5458 = vpop.f32.mrb[0].mxu0
        %v5459 = vadd.f32 0.0, %v5458
        %v5460 = vpop.f32.mrb[0].mxu0
        %v5461 = vpop.f32.mrb[0].mxu0
        %v5462 = vadd.f32 0.0, %v5461
        %v5463 = vpop.f32.mrb[0].mxu0
        %5464 = vmatprep.mubr.bf16.mxu0 0
        %5465 = vmatmul.mubr.bf16.gmra.mrb[0].mxu0 %v5396
        %v5466 = vpop.f32.mrb[0].mxu0
        %v5467 = vadd.f32 0.0, %v5466
        %v5468 = vpop.f32.mrb[0].mxu0
        %v5469 = vpop.f32.mrb[0].mxu0
        %v5470 = vadd.f32 0.0, %v5469
        %v5471 = vpop.f32.mrb[0].mxu0
        %5472 = vmatprep.mubr.bf16.mxu0 0
        %5473 = vmatmul.mubr.bf16.gmra.mrb[0].mxu0 %v5399
        %v5474 = vpop.f32.mrb[0].mxu0
        %v5475 = vadd.f32 0.0, %v5474
        %v5476 = vpop.f32.mrb[0].mxu0
        %v5477 = vpop.f32.mrb[0].mxu0
        %v5478 = vadd.f32 0.0, %v5477
        %v5479 = vpop.f32.mrb[0].mxu0
        %5480 = vmatprep.mubr.bf16.mxu0 0
        %5481 = vmatmul.mubr.bf16.gmra.mrb[0].mxu0 %v5402
        %v5482 = vpop.f32.mrb[0].mxu0
        %v5483 = vadd.f32 0.0, %v5482
        %v5484 = vpop.f32.mrb[0].mxu0
        %v5485 = vpop.f32.mrb[0].mxu0
        %v5486 = vadd.f32 0.0, %v5485
        %v5487 = vpop.f32.mrb[0].mxu0
        %5488 = vmatprep.mubr.bf16.mxu0 0
        %5489 = vmatmul.mubr.bf16.gmra.mrb[0].mxu0 %v5405
        %v5490 = vpop.f32.mrb[0].mxu0
        %v5491 = vadd.f32 0.0, %v5490
        %v5492 = vpop.f32.mrb[0].mxu0
        %v5493 = vpop.f32.mrb[0].mxu0
        %v5494 = vadd.f32 0.0, %v5493
        %v5495 = vpop.f32.mrb[0].mxu0
        %5496 = vmatprep.mubr.bf16.mxu0 0
        %5497 = vmatmul.mubr.bf16.gmra.mrb[0].mxu0 %v5408
        %v5498 = vpop.f32.mrb[0].mxu0
        %v5499 = vadd.f32 0.0, %v5498
        %v5500 = vpop.f32.mrb[0].mxu0
        %v5501 = vpop.f32.mrb[0].mxu0
        %v5502 = vadd.f32 0.0, %v5501
        %v5503 = vpop.f32.mrb[0].mxu0
        %5504 = vmatprep.mubr.bf16.mxu0 0
        %5505 = vmatmul.mubr.bf16.gmra.mrb[0].mxu0 %v5411
        %v5506 = vpop.f32.mrb[0].mxu0
        %v5507 = vadd.f32 0.0, %v5506
        %v5508 = vpop.f32.mrb[0].mxu0
        %v5509 = vpop.f32.mrb[0].mxu0
        %v5510 = vadd.f32 0.0, %v5509
        %v5511 = vpop.f32.mrb[0].mxu0
        %5512 = vdwg.mxu0
        %v5513 = vadd.f32 %v5243, %v5451
        %v5514 = vadd.f32 %v5244, %v5454
        %v5515 = vadd.f32 %v5245, %v5459
        %v5516 = vadd.f32 %v5246, %v5462
        %v5517 = vadd.f32 %v5247, %v5467
        %v5518 = vadd.f32 %v5248, %v5470
        %v5519 = vadd.f32 %v5249, %v5475
        %v5520 = vadd.f32 %v5250, %v5478
        %v5521 = vadd.f32 %v5251, %v5483
        %v5522 = vadd.f32 %v5252, %v5486
        %v5523 = vadd.f32 %v5253, %v5491
        %v5524 = vadd.f32 %v5254, %v5494
        %v5525 = vadd.f32 %v5255, %v5499
        %v5526 = vadd.f32 %v5256, %v5502
        %v5527 = vadd.f32 %v5257, %v5507
        %v5528 = vadd.f32 %v5258, %v5510
        %s5529 = scalar_lea.vmem [#allocation14], 2
        %v5530 = vld [vmem:[%s5529] sm:$0x1]
        %v5532 = vlaneseq
        %v5533 = vshrl.u32 %v5532, 7
        %v5534 = vsub.s32 0, %v5533
        %v5535 = vrot.slane %v5530, %v5534
        %v5537 = vmul.f32 %v5513, %v5535
        %v5538 = vmul.f32 %v5514, %v5535
        %v5539 = vmul.f32 %v5515, %v5535
        %v5540 = vmul.f32 %v5516, %v5535
        %v5541 = vmul.f32 %v5517, %v5535
        %v5542 = vmul.f32 %v5518, %v5535
        %v5543 = vmul.f32 %v5519, %v5535
        %v5544 = vmul.f32 %v5520, %v5535
        %v5545 = vmul.f32 %v5521, %v5535
        %v5546 = vmul.f32 %v5522, %v5535
        %v5547 = vmul.f32 %v5523, %v5535
        %v5548 = vmul.f32 %v5524, %v5535
        %v5549 = vmul.f32 %v5525, %v5535
        %v5550 = vmul.f32 %v5526, %v5535
        %v5551 = vmul.f32 %v5527, %v5535
        %v5552 = vmul.f32 %v5528, %v5535
        %s5553 = scalar_lea.vmem [#allocation16], 2
        %v5554 = vld [vmem:[%s5553] sm:$0x1]
        %v5556 = vlaneseq
        %v5557 = vshrl.u32 %v5556, 7
        %v5558 = vsub.s32 0, %v5557
        %v5559 = vrot.slane %v5554, %v5558
        %v5561 = vadd.f32 %v5537, %v5559
        %v5562 = vadd.f32 %v5538, %v5559
        %v5563 = vadd.f32 %v5539, %v5559
        %v5564 = vadd.f32 %v5540, %v5559
        %v5565 = vadd.f32 %v5541, %v5559
        %v5566 = vadd.f32 %v5542, %v5559
        %v5567 = vadd.f32 %v5543, %v5559
        %v5568 = vadd.f32 %v5544, %v5559
        %v5569 = vadd.f32 %v5545, %v5559
        %v5570 = vadd.f32 %v5546, %v5559
        %v5571 = vadd.f32 %v5547, %v5559
        %v5572 = vadd.f32 %v5548, %v5559
        %v5573 = vadd.f32 %v5549, %v5559
        %v5574 = vadd.f32 %v5550, %v5559
        %v5575 = vadd.f32 %v5551, %v5559
        %v5576 = vadd.f32 %v5552, %v5559
        %v5577 = vmax.f32 %v5561, 0.0
        %v5578 = vmax.f32 %v5562, 0.0
        %v5579 = vmax.f32 %v5563, 0.0
        %v5580 = vmax.f32 %v5564, 0.0
        %v5581 = vmax.f32 %v5565, 0.0
        %v5582 = vmax.f32 %v5566, 0.0
        %v5583 = vmax.f32 %v5567, 0.0
        %v5584 = vmax.f32 %v5568, 0.0
        %v5585 = vmax.f32 %v5569, 0.0
        %v5586 = vmax.f32 %v5570, 0.0
        %v5587 = vmax.f32 %v5571, 0.0
        %v5588 = vmax.f32 %v5572, 0.0
        %v5589 = vmax.f32 %v5573, 0.0
        %v5590 = vmax.f32 %v5574, 0.0
        %v5591 = vmax.f32 %v5575, 0.0
        %v5592 = vmax.f32 %v5576, 0.0
        %v5593 = vpack.c.bf16 %v5578, %v5577
        %v5594 = vpack.c.bf16 %v5580, %v5579
        %v5595 = vpack.c.bf16 %v5582, %v5581
        %v5596 = vpack.c.bf16 %v5584, %v5583
        %v5597 = vpack.c.bf16 %v5586, %v5585
        %v5598 = vpack.c.bf16 %v5588, %v5587
        %v5599 = vpack.c.bf16 %v5590, %v5589
        %v5600 = vpack.c.bf16 %v5592, %v5591
        %s5601 = scalar_lea.vmem [#allocation11], 8
        %v5602 = vld [vmem:[%s5601] sm:$0xf]
        %v5604 = vsel %vm761, %v5593, 0
        %v5607 = vsel %vm761, %v5594, 0
        %v5610 = vsel %vm761, %v5595, 0
        %v5613 = vsel %vm761, %v5596, 0
        %v5616 = vsel %vm761, %v5597, 0
        %v5619 = vsel %vm761, %v5598, 0
        %v5622 = vsel %vm761, %v5599, 0
        %v5625 = vsel %vm761, %v5600, 0
        %v5628 = vsel %vm786, %v5602, 0
        %5630 = vmatprep.subr.bf16.mxu0 0
        %5631 = vmatpush1.bf16.msra.mxu0 %v5628
        %5632 = vmatprep.subr.bf16.mxu0 0
        %5633 = vmatpush1.bf16.msra.mxu0 0
        %5634 = vmatprep.subr.bf16.mxu0 0
        %5635 = vmatpush1.bf16.msra.mxu0 0
        %5636 = vmatprep.subr.bf16.mxu0 0
        %5637 = vmatpush1.bf16.msra.mxu0 0
        %5638 = vmatprep.subr.bf16.mxu0 0
        %5639 = vmatpush1.bf16.msra.mxu0 0
        %5640 = vmatprep.subr.bf16.mxu0 0
        %5641 = vmatpush1.bf16.msra.mxu0 0
        %5642 = vmatprep.subr.bf16.mxu0 0
        %5643 = vmatpush1.bf16.msra.mxu0 0
        %5644 = vmatprep.subr.bf16.mxu0 0
        %5645 = vmatpush1.bf16.msra.mxu0 0
        %5646 = vmatprep.subr.bf16.mxu0 0
        %5647 = vmatpush1.bf16.msra.mxu0 0
        %5648 = vmatprep.subr.bf16.mxu0 0
        %5649 = vmatpush1.bf16.msra.mxu0 0
        %5650 = vmatprep.subr.bf16.mxu0 0
        %5651 = vmatpush1.bf16.msra.mxu0 0
        %5652 = vmatprep.subr.bf16.mxu0 0
        %5653 = vmatpush1.bf16.msra.mxu0 0
        %5654 = vmatprep.subr.bf16.mxu0 0
        %5655 = vmatpush1.bf16.msra.mxu0 0
        %5656 = vmatprep.subr.bf16.mxu0 0
        %5657 = vmatpush1.bf16.msra.mxu0 0
        %5658 = vmatprep.subr.bf16.mxu0 0
        %5659 = vmatpush1.bf16.msra.mxu0 0
        %5660 = vmatprep.subr.bf16.mxu0 0
        %5661 = vmatpush1.bf16.msra.mxu0 0
        %5662 = vmatprep.mubr.bf16.mxu0 0
        %5663 = vmatmul.mubr.bf16.gmra.mrb[0].mxu0 %v5604
        %v5664 = vpop.f32.mrb[0].mxu0
        %v5665 = vadd.f32 0.0, %v5664
        %v5666 = vpop.f32.mrb[0].mxu0
        %v5667 = vpop.f32.mrb[0].mxu0
        %v5668 = vadd.f32 0.0, %v5667
        %v5669 = vpop.f32.mrb[0].mxu0
        %5670 = vmatprep.mubr.bf16.mxu0 0
        %5671 = vmatmul.mubr.bf16.gmra.mrb[0].mxu0 %v5607
        %v5672 = vpop.f32.mrb[0].mxu0
        %v5673 = vadd.f32 0.0, %v5672
        %v5674 = vpop.f32.mrb[0].mxu0
        %v5675 = vpop.f32.mrb[0].mxu0
        %v5676 = vadd.f32 0.0, %v5675
        %v5677 = vpop.f32.mrb[0].mxu0
        %5678 = vmatprep.mubr.bf16.mxu0 0
        %5679 = vmatmul.mubr.bf16.gmra.mrb[0].mxu0 %v5610
        %v5680 = vpop.f32.mrb[0].mxu0
        %v5681 = vadd.f32 0.0, %v5680
        %v5682 = vpop.f32.mrb[0].mxu0
        %v5683 = vpop.f32.mrb[0].mxu0
        %v5684 = vadd.f32 0.0, %v5683
        %v5685 = vpop.f32.mrb[0].mxu0
        %5686 = vmatprep.mubr.bf16.mxu0 0
        %5687 = vmatmul.mubr.bf16.gmra.mrb[0].mxu0 %v5613
        %v5688 = vpop.f32.mrb[0].mxu0
        %v5689 = vadd.f32 0.0, %v5688
        %v5690 = vpop.f32.mrb[0].mxu0
        %v5691 = vpop.f32.mrb[0].mxu0
        %v5692 = vadd.f32 0.0, %v5691
        %v5693 = vpop.f32.mrb[0].mxu0
        %5694 = vmatprep.mubr.bf16.mxu0 0
        %5695 = vmatmul.mubr.bf16.gmra.mrb[0].mxu0 %v5616
        %v5696 = vpop.f32.mrb[0].mxu0
        %v5697 = vadd.f32 0.0, %v5696
        %v5698 = vpop.f32.mrb[0].mxu0
        %v5699 = vpop.f32.mrb[0].mxu0
        %v5700 = vadd.f32 0.0, %v5699
        %v5701 = vpop.f32.mrb[0].mxu0
        %5702 = vmatprep.mubr.bf16.mxu0 0
        %5703 = vmatmul.mubr.bf16.gmra.mrb[0].mxu0 %v5619
        %v5704 = vpop.f32.mrb[0].mxu0
        %v5705 = vadd.f32 0.0, %v5704
        %v5706 = vpop.f32.mrb[0].mxu0
        %v5707 = vpop.f32.mrb[0].mxu0
        %v5708 = vadd.f32 0.0, %v5707
        %v5709 = vpop.f32.mrb[0].mxu0
        %5710 = vmatprep.mubr.bf16.mxu0 0
        %5711 = vmatmul.mubr.bf16.gmra.mrb[0].mxu0 %v5622
        %v5712 = vpop.f32.mrb[0].mxu0
        %v5713 = vadd.f32 0.0, %v5712
        %v5714 = vpop.f32.mrb[0].mxu0
        %v5715 = vpop.f32.mrb[0].mxu0
        %v5716 = vadd.f32 0.0, %v5715
        %v5717 = vpop.f32.mrb[0].mxu0
        %5718 = vmatprep.mubr.bf16.mxu0 0
        %5719 = vmatmul.mubr.bf16.gmra.mrb[0].mxu0 %v5625
        %v5720 = vpop.f32.mrb[0].mxu0
        %v5721 = vadd.f32 0.0, %v5720
        %v5722 = vpop.f32.mrb[0].mxu0
        %v5723 = vpop.f32.mrb[0].mxu0
        %v5724 = vadd.f32 0.0, %v5723
        %v5725 = vpop.f32.mrb[0].mxu0
        %5726 = vdwg.mxu0
        %v5727 = vadd.f32 %v3210, %v5665
        %v5728 = vadd.f32 %v3213, %v5668
        %v5729 = vadd.f32 %v3218, %v5673
        %v5730 = vadd.f32 %v3221, %v5676
        %v5731 = vadd.f32 %v3226, %v5681
        %v5732 = vadd.f32 %v3229, %v5684
        %v5733 = vadd.f32 %v3234, %v5689
        %v5734 = vadd.f32 %v3237, %v5692
        %v5735 = vadd.f32 %v3242, %v5697
        %v5736 = vadd.f32 %v3245, %v5700
        %v5737 = vadd.f32 %v3250, %v5705
        %v5738 = vadd.f32 %v3253, %v5708
        %v5739 = vadd.f32 %v3258, %v5713
        %v5740 = vadd.f32 %v3261, %v5716
        %v5741 = vadd.f32 %v3266, %v5721
        %v5742 = vadd.f32 %v3269, %v5724
        %s5743 = smul.u32 %s608, 7
        %s5744 = smul.addr %s5743, 4
        %s5745 = scalar_lea.vmem %s510, %s5744 [#allocation2]
        %v5746 = vld [vmem:[%s5745] sm:$0xf]
        %v5747 = vld [vmem:[%s5745 + $0x4] sm:$0xf]
        %v5748 = vld [vmem:[%s5745 + $0x1c] sm:$0xf]
        %v5749 = vld [vmem:[%s5745 + $0x20] sm:$0xf]
        %v5750 = vld [vmem:[%s5745 + $0x38] sm:$0xf]
        %v5751 = vld [vmem:[%s5745 + $0x3c] sm:$0xf]
        %v5752 = vld [vmem:[%s5745 + $0x54] sm:$0xf]
        %v5753 = vld [vmem:[%s5745 + $0x58] sm:$0xf]
        %v5754 = vld [vmem:[%s5745 + $0x70] sm:$0xf]
        %v5755 = vld [vmem:[%s5745 + $0x74] sm:$0xf]
        %v5756 = vld [vmem:[%s5745 + $0x8c] sm:$0xf]
        %v5757 = vld [vmem:[%s5745 + $0x90] sm:$0xf]
        %v5758 = vld [vmem:[%s5745 + $0xa8] sm:$0xf]
        %v5759 = vld [vmem:[%s5745 + $0xac] sm:$0xf]
        %v5760 = vld [vmem:[%s5745 + $0xc4] sm:$0xf]
        %v5761 = vld [vmem:[%s5745 + $0xc8] sm:$0xf]
        %s5762 = scalar_lea.vmem [#allocation10], 72
        %v5763 = vld [vmem:[%s5762] sm:$0xf]
        %v5764 = vld [vmem:[%s5745 + $0x8] sm:$0xe]
        %v5765 = vld [vmem:[%s5745 + $0xc] sm:$0xf]
        %v5766 = vld [vmem:[%s5745 + $0x10] sm:$0x1]
        %v5767 = vld [vmem:[%s5745 + $0x24] sm:$0xe]
        %v5768 = vld [vmem:[%s5745 + $0x28] sm:$0xf]
        %v5769 = vld [vmem:[%s5745 + $0x2c] sm:$0x1]
        %v5770 = vld [vmem:[%s5745 + $0x40] sm:$0xe]
        %v5771 = vld [vmem:[%s5745 + $0x44] sm:$0xf]
        %v5772 = vld [vmem:[%s5745 + $0x48] sm:$0x1]
        %v5773 = vld [vmem:[%s5745 + $0x5c] sm:$0xe]
        %v5774 = vld [vmem:[%s5745 + $0x60] sm:$0xf]
        %v5775 = vld [vmem:[%s5745 + $0x64] sm:$0x1]
        %v5776 = vld [vmem:[%s5745 + $0x78] sm:$0xe]
        %v5777 = vld [vmem:[%s5745 + $0x7c] sm:$0xf]
        %v5778 = vld [vmem:[%s5745 + $0x80] sm:$0x1]
        %v5779 = vld [vmem:[%s5745 + $0x94] sm:$0xe]
        %v5780 = vld [vmem:[%s5745 + $0x98] sm:$0xf]
        %v5781 = vld [vmem:[%s5745 + $0x9c] sm:$0x1]
        %v5782 = vld [vmem:[%s5745 + $0xb0] sm:$0xe]
        %v5783 = vld [vmem:[%s5745 + $0xb4] sm:$0xf]
        %v5784 = vld [vmem:[%s5745 + $0xb8] sm:$0x1]
        %v5785 = vld [vmem:[%s5745 + $0xcc] sm:$0xe]
        %v5786 = vld [vmem:[%s5745 + $0xd0] sm:$0xf]
        %v5787 = vld [vmem:[%s5745 + $0xd4] sm:$0x1]
        %v5812 = vrot.slane %v5764, 5
        %v5813 = vrot.slane %v5812, 4
        %v5814 = vrot.slane %v5765, 5
        %v5815 = vsel %vm663, %v5813, %v5814
        %v5816 = vrot.slane %v5814, 4
        %v5817 = vrot.slane %v5766, 5
        %v5818 = vsel %vm663, %v5816, %v5817
        %v5819 = vrot.slane %v5767, 5
        %v5820 = vrot.slane %v5819, 4
        %v5821 = vrot.slane %v5768, 5
        %v5822 = vsel %vm663, %v5820, %v5821
        %v5823 = vrot.slane %v5821, 4
        %v5824 = vrot.slane %v5769, 5
        %v5825 = vsel %vm663, %v5823, %v5824
        %v5826 = vrot.slane %v5770, 5
        %v5827 = vrot.slane %v5826, 4
        %v5828 = vrot.slane %v5771, 5
        %v5829 = vsel %vm663, %v5827, %v5828
        %v5830 = vrot.slane %v5828, 4
        %v5831 = vrot.slane %v5772, 5
        %v5832 = vsel %vm663, %v5830, %v5831
        %v5833 = vrot.slane %v5773, 5
        %v5834 = vrot.slane %v5833, 4
        %v5835 = vrot.slane %v5774, 5
        %v5836 = vsel %vm663, %v5834, %v5835
        %v5837 = vrot.slane %v5835, 4
        %v5838 = vrot.slane %v5775, 5
        %v5839 = vsel %vm663, %v5837, %v5838
        %v5840 = vrot.slane %v5776, 5
        %v5841 = vrot.slane %v5840, 4
        %v5842 = vrot.slane %v5777, 5
        %v5843 = vsel %vm663, %v5841, %v5842
        %v5844 = vrot.slane %v5842, 4
        %v5845 = vrot.slane %v5778, 5
        %v5846 = vsel %vm663, %v5844, %v5845
        %v5847 = vrot.slane %v5779, 5
        %v5848 = vrot.slane %v5847, 4
        %v5849 = vrot.slane %v5780, 5
        %v5850 = vsel %vm663, %v5848, %v5849
        %v5851 = vrot.slane %v5849, 4
        %v5852 = vrot.slane %v5781, 5
        %v5853 = vsel %vm663, %v5851, %v5852
        %v5854 = vrot.slane %v5782, 5
        %v5855 = vrot.slane %v5854, 4
        %v5856 = vrot.slane %v5783, 5
        %v5857 = vsel %vm663, %v5855, %v5856
        %v5858 = vrot.slane %v5856, 4
        %v5859 = vrot.slane %v5784, 5
        %v5860 = vsel %vm663, %v5858, %v5859
        %v5861 = vrot.slane %v5785, 5
        %v5862 = vrot.slane %v5861, 4
        %v5863 = vrot.slane %v5786, 5
        %v5864 = vsel %vm663, %v5862, %v5863
        %v5865 = vrot.slane %v5863, 4
        %v5866 = vrot.slane %v5787, 5
        %v5867 = vsel %vm663, %v5865, %v5866
        %s5868 = scalar_lea.vmem [#allocation10], 76
        %v5869 = vld [vmem:[%s5868] sm:$0xf]
        %v5870 = vunpack.c.l.b16 %v5815
        %v5871 = vunpack.c.l.b16 %v5818
        %v5872 = vunpack.c.l.b16 %v5822
        %v5873 = vunpack.c.l.b16 %v5825
        %v5874 = vunpack.c.l.b16 %v5829
        %v5875 = vunpack.c.l.b16 %v5832
        %v5876 = vunpack.c.l.b16 %v5836
        %v5877 = vunpack.c.l.b16 %v5839
        %v5878 = vunpack.c.l.b16 %v5843
        %v5879 = vunpack.c.l.b16 %v5846
        %v5880 = vunpack.c.l.b16 %v5850
        %v5881 = vunpack.c.l.b16 %v5853
        %v5882 = vunpack.c.l.b16 %v5857
        %v5883 = vunpack.c.l.b16 %v5860
        %v5884 = vunpack.c.l.b16 %v5864
        %v5885 = vunpack.c.l.b16 %v5867
        %v5886 = vpack.c.b16 %v5871, %v5870
        %v5887 = vpack.c.b16 %v5873, %v5872
        %v5888 = vpack.c.b16 %v5875, %v5874
        %v5889 = vpack.c.b16 %v5877, %v5876
        %v5890 = vpack.c.b16 %v5879, %v5878
        %v5891 = vpack.c.b16 %v5881, %v5880
        %v5892 = vpack.c.b16 %v5883, %v5882
        %v5893 = vpack.c.b16 %v5885, %v5884
        %v5895 = vsel %vm761, %v5886, 0
        %v5898 = vsel %vm761, %v5887, 0
        %v5901 = vsel %vm761, %v5888, 0
        %v5904 = vsel %vm761, %v5889, 0
        %v5907 = vsel %vm761, %v5890, 0
        %v5910 = vsel %vm761, %v5891, 0
        %v5913 = vsel %vm761, %v5892, 0
        %v5916 = vsel %vm761, %v5893, 0
        %v5919 = vsel %vm786, %v5869, 0
        %5921 = vmatprep.subr.bf16.mxu0 0
        %5922 = vmatpush1.bf16.msra.mxu0 %v5919
        %5923 = vmatprep.subr.bf16.mxu0 0
        %5924 = vmatpush1.bf16.msra.mxu0 0
        %5925 = vmatprep.subr.bf16.mxu0 0
        %5926 = vmatpush1.bf16.msra.mxu0 0
        %5927 = vmatprep.subr.bf16.mxu0 0
        %5928 = vmatpush1.bf16.msra.mxu0 0
        %5929 = vmatprep.subr.bf16.mxu0 0
        %5930 = vmatpush1.bf16.msra.mxu0 0
        %5931 = vmatprep.subr.bf16.mxu0 0
        %5932 = vmatpush1.bf16.msra.mxu0 0
        %5933 = vmatprep.subr.bf16.mxu0 0
        %5934 = vmatpush1.bf16.msra.mxu0 0
        %5935 = vmatprep.subr.bf16.mxu0 0
        %5936 = vmatpush1.bf16.msra.mxu0 0
        %5937 = vmatprep.subr.bf16.mxu0 0
        %5938 = vmatpush1.bf16.msra.mxu0 0
        %5939 = vmatprep.subr.bf16.mxu0 0
        %5940 = vmatpush1.bf16.msra.mxu0 0
        %5941 = vmatprep.subr.bf16.mxu0 0
        %5942 = vmatpush1.bf16.msra.mxu0 0
        %5943 = vmatprep.subr.bf16.mxu0 0
        %5944 = vmatpush1.bf16.msra.mxu0 0
        %5945 = vmatprep.subr.bf16.mxu0 0
        %5946 = vmatpush1.bf16.msra.mxu0 0
        %5947 = vmatprep.subr.bf16.mxu0 0
        %5948 = vmatpush1.bf16.msra.mxu0 0
        %5949 = vmatprep.subr.bf16.mxu0 0
        %5950 = vmatpush1.bf16.msra.mxu0 0
        %5951 = vmatprep.subr.bf16.mxu0 0
        %5952 = vmatpush1.bf16.msra.mxu0 0
        %5953 = vmatprep.mubr.bf16.mxu0 0
        %5954 = vmatmul.mubr.bf16.gmra.mrb[0].mxu0 %v5895
        %v5955 = vpop.f32.mrb[0].mxu0
        %v5956 = vadd.f32 0.0, %v5955
        %v5957 = vpop.f32.mrb[0].mxu0
        %v5958 = vpop.f32.mrb[0].mxu0
        %v5959 = vadd.f32 0.0, %v5958
        %v5960 = vpop.f32.mrb[0].mxu0
        %5961 = vmatprep.mubr.bf16.mxu0 0
        %5962 = vmatmul.mubr.bf16.gmra.mrb[0].mxu0 %v5898
        %v5963 = vpop.f32.mrb[0].mxu0
        %v5964 = vadd.f32 0.0, %v5963
        %v5965 = vpop.f32.mrb[0].mxu0
        %v5966 = vpop.f32.mrb[0].mxu0
        %v5967 = vadd.f32 0.0, %v5966
        %v5968 = vpop.f32.mrb[0].mxu0
        %5969 = vmatprep.mubr.bf16.mxu0 0
        %5970 = vmatmul.mubr.bf16.gmra.mrb[0].mxu0 %v5901
        %v5971 = vpop.f32.mrb[0].mxu0
        %v5972 = vadd.f32 0.0, %v5971
        %v5973 = vpop.f32.mrb[0].mxu0
        %v5974 = vpop.f32.mrb[0].mxu0
        %v5975 = vadd.f32 0.0, %v5974
        %v5976 = vpop.f32.mrb[0].mxu0
        %5977 = vmatprep.mubr.bf16.mxu0 0
        %5978 = vmatmul.mubr.bf16.gmra.mrb[0].mxu0 %v5904
        %v5979 = vpop.f32.mrb[0].mxu0
        %v5980 = vadd.f32 0.0, %v5979
        %v5981 = vpop.f32.mrb[0].mxu0
        %v5982 = vpop.f32.mrb[0].mxu0
        %v5983 = vadd.f32 0.0, %v5982
        %v5984 = vpop.f32.mrb[0].mxu0
        %5985 = vmatprep.mubr.bf16.mxu0 0
        %5986 = vmatmul.mubr.bf16.gmra.mrb[0].mxu0 %v5907
        %v5987 = vpop.f32.mrb[0].mxu0
        %v5988 = vadd.f32 0.0, %v5987
        %v5989 = vpop.f32.mrb[0].mxu0
        %v5990 = vpop.f32.mrb[0].mxu0
        %v5991 = vadd.f32 0.0, %v5990
        %v5992 = vpop.f32.mrb[0].mxu0
        %5993 = vmatprep.mubr.bf16.mxu0 0
        %5994 = vmatmul.mubr.bf16.gmra.mrb[0].mxu0 %v5910
        %v5995 = vpop.f32.mrb[0].mxu0
        %v5996 = vadd.f32 0.0, %v5995
        %v5997 = vpop.f32.mrb[0].mxu0
        %v5998 = vpop.f32.mrb[0].mxu0
        %v5999 = vadd.f32 0.0, %v5998
        %v6000 = vpop.f32.mrb[0].mxu0
        %6001 = vmatprep.mubr.bf16.mxu0 0
        %6002 = vmatmul.mubr.bf16.gmra.mrb[0].mxu0 %v5913
        %v6003 = vpop.f32.mrb[0].mxu0
        %v6004 = vadd.f32 0.0, %v6003
        %v6005 = vpop.f32.mrb[0].mxu0
        %v6006 = vpop.f32.mrb[0].mxu0
        %v6007 = vadd.f32 0.0, %v6006
        %v6008 = vpop.f32.mrb[0].mxu0
        %6009 = vmatprep.mubr.bf16.mxu0 0
        %6010 = vmatmul.mubr.bf16.gmra.mrb[0].mxu0 %v5916
        %v6011 = vpop.f32.mrb[0].mxu0
        %v6012 = vadd.f32 0.0, %v6011
        %v6013 = vpop.f32.mrb[0].mxu0
        %v6014 = vpop.f32.mrb[0].mxu0
        %v6015 = vadd.f32 0.0, %v6014
        %v6016 = vpop.f32.mrb[0].mxu0
        %6017 = vdwg.mxu0
        %v6034 = vunpack.c.l.b16 %v5746
        %v6035 = vunpack.c.l.b16 %v5747
        %v6036 = vunpack.c.l.b16 %v5748
        %v6037 = vunpack.c.l.b16 %v5749
        %v6038 = vunpack.c.l.b16 %v5750
        %v6039 = vunpack.c.l.b16 %v5751
        %v6040 = vunpack.c.l.b16 %v5752
        %v6041 = vunpack.c.l.b16 %v5753
        %v6042 = vunpack.c.l.b16 %v5754
        %v6043 = vunpack.c.l.b16 %v5755
        %v6044 = vunpack.c.l.b16 %v5756
        %v6045 = vunpack.c.l.b16 %v5757
        %v6046 = vunpack.c.l.b16 %v5758
        %v6047 = vunpack.c.l.b16 %v5759
        %v6048 = vunpack.c.l.b16 %v5760
        %v6049 = vunpack.c.l.b16 %v5761
        %v6050 = vpack.c.b16 %v6035, %v6034
        %v6051 = vpack.c.b16 %v6037, %v6036
        %v6052 = vpack.c.b16 %v6039, %v6038
        %v6053 = vpack.c.b16 %v6041, %v6040
        %v6054 = vpack.c.b16 %v6043, %v6042
        %v6055 = vpack.c.b16 %v6045, %v6044
        %v6056 = vpack.c.b16 %v6047, %v6046
        %v6057 = vpack.c.b16 %v6049, %v6048
        %v6059 = vsel %vm761, %v6050, 0
        %v6062 = vsel %vm761, %v6051, 0
        %v6065 = vsel %vm761, %v6052, 0
        %v6068 = vsel %vm761, %v6053, 0
        %v6071 = vsel %vm761, %v6054, 0
        %v6074 = vsel %vm761, %v6055, 0
        %v6077 = vsel %vm761, %v6056, 0
        %v6080 = vsel %vm761, %v6057, 0
        %v6083 = vsel %vm786, %v5763, 0
        %6085 = vmatprep.subr.bf16.mxu0 0
        %6086 = vmatpush1.bf16.msra.mxu0 %v6083
        %6087 = vmatprep.subr.bf16.mxu0 0
        %6088 = vmatpush1.bf16.msra.mxu0 0
        %6089 = vmatprep.subr.bf16.mxu0 0
        %6090 = vmatpush1.bf16.msra.mxu0 0
        %6091 = vmatprep.subr.bf16.mxu0 0
        %6092 = vmatpush1.bf16.msra.mxu0 0
        %6093 = vmatprep.subr.bf16.mxu0 0
        %6094 = vmatpush1.bf16.msra.mxu0 0
        %6095 = vmatprep.subr.bf16.mxu0 0
        %6096 = vmatpush1.bf16.msra.mxu0 0
        %6097 = vmatprep.subr.bf16.mxu0 0
        %6098 = vmatpush1.bf16.msra.mxu0 0
        %6099 = vmatprep.subr.bf16.mxu0 0
        %6100 = vmatpush1.bf16.msra.mxu0 0
        %6101 = vmatprep.subr.bf16.mxu0 0
        %6102 = vmatpush1.bf16.msra.mxu0 0
        %6103 = vmatprep.subr.bf16.mxu0 0
        %6104 = vmatpush1.bf16.msra.mxu0 0
        %6105 = vmatprep.subr.bf16.mxu0 0
        %6106 = vmatpush1.bf16.msra.mxu0 0
        %6107 = vmatprep.subr.bf16.mxu0 0
        %6108 = vmatpush1.bf16.msra.mxu0 0
        %6109 = vmatprep.subr.bf16.mxu0 0
        %6110 = vmatpush1.bf16.msra.mxu0 0
        %6111 = vmatprep.subr.bf16.mxu0 0
        %6112 = vmatpush1.bf16.msra.mxu0 0
        %6113 = vmatprep.subr.bf16.mxu0 0
        %6114 = vmatpush1.bf16.msra.mxu0 0
        %6115 = vmatprep.subr.bf16.mxu0 0
        %6116 = vmatpush1.bf16.msra.mxu0 0
        %6117 = vmatprep.mubr.bf16.mxu0 0
        %6118 = vmatmul.mubr.bf16.gmra.mrb[0].mxu0 %v6059
        %v6119 = vpop.f32.mrb[0].mxu0
        %v6120 = vadd.f32 %v5956, %v6119
        %v6121 = vpop.f32.mrb[0].mxu0
        %v6122 = vpop.f32.mrb[0].mxu0
        %v6123 = vadd.f32 %v5959, %v6122
        %v6124 = vpop.f32.mrb[0].mxu0
        %6125 = vmatprep.mubr.bf16.mxu0 0
        %6126 = vmatmul.mubr.bf16.gmra.mrb[0].mxu0 %v6062
        %v6127 = vpop.f32.mrb[0].mxu0
        %v6128 = vadd.f32 %v5964, %v6127
        %v6129 = vpop.f32.mrb[0].mxu0
        %v6130 = vpop.f32.mrb[0].mxu0
        %v6131 = vadd.f32 %v5967, %v6130
        %v6132 = vpop.f32.mrb[0].mxu0
        %6133 = vmatprep.mubr.bf16.mxu0 0
        %6134 = vmatmul.mubr.bf16.gmra.mrb[0].mxu0 %v6065
        %v6135 = vpop.f32.mrb[0].mxu0
        %v6136 = vadd.f32 %v5972, %v6135
        %v6137 = vpop.f32.mrb[0].mxu0
        %v6138 = vpop.f32.mrb[0].mxu0
        %v6139 = vadd.f32 %v5975, %v6138
        %v6140 = vpop.f32.mrb[0].mxu0
        %6141 = vmatprep.mubr.bf16.mxu0 0
        %6142 = vmatmul.mubr.bf16.gmra.mrb[0].mxu0 %v6068
        %v6143 = vpop.f32.mrb[0].mxu0
        %v6144 = vadd.f32 %v5980, %v6143
        %v6145 = vpop.f32.mrb[0].mxu0
        %v6146 = vpop.f32.mrb[0].mxu0
        %v6147 = vadd.f32 %v5983, %v6146
        %v6148 = vpop.f32.mrb[0].mxu0
        %6149 = vmatprep.mubr.bf16.mxu0 0
        %6150 = vmatmul.mubr.bf16.gmra.mrb[0].mxu0 %v6071
        %v6151 = vpop.f32.mrb[0].mxu0
        %v6152 = vadd.f32 %v5988, %v6151
        %v6153 = vpop.f32.mrb[0].mxu0
        %v6154 = vpop.f32.mrb[0].mxu0
        %v6155 = vadd.f32 %v5991, %v6154
        %v6156 = vpop.f32.mrb[0].mxu0
        %6157 = vmatprep.mubr.bf16.mxu0 0
        %6158 = vmatmul.mubr.bf16.gmra.mrb[0].mxu0 %v6074
        %v6159 = vpop.f32.mrb[0].mxu0
        %v6160 = vadd.f32 %v5996, %v6159
        %v6161 = vpop.f32.mrb[0].mxu0
        %v6162 = vpop.f32.mrb[0].mxu0
        %v6163 = vadd.f32 %v5999, %v6162
        %v6164 = vpop.f32.mrb[0].mxu0
        %6165 = vmatprep.mubr.bf16.mxu0 0
        %6166 = vmatmul.mubr.bf16.gmra.mrb[0].mxu0 %v6077
        %v6167 = vpop.f32.mrb[0].mxu0
        %v6168 = vadd.f32 %v6004, %v6167
        %v6169 = vpop.f32.mrb[0].mxu0
        %v6170 = vpop.f32.mrb[0].mxu0
        %v6171 = vadd.f32 %v6007, %v6170
        %v6172 = vpop.f32.mrb[0].mxu0
        %6173 = vmatprep.mubr.bf16.mxu0 0
        %6174 = vmatmul.mubr.bf16.gmra.mrb[0].mxu0 %v6080
        %v6175 = vpop.f32.mrb[0].mxu0
        %v6176 = vadd.f32 %v6012, %v6175
        %v6177 = vpop.f32.mrb[0].mxu0
        %v6178 = vpop.f32.mrb[0].mxu0
        %v6179 = vadd.f32 %v6015, %v6178
        %v6180 = vpop.f32.mrb[0].mxu0
        %6181 = vdwg.mxu0
        %v6182 = vld [vmem:[%s5745 + $0x10] sm:$0xc]
        %v6183 = vld [vmem:[%s5745 + $0x14] sm:$0xf]
        %v6184 = vld [vmem:[%s5745 + $0x18] sm:$0x3]
        %v6185 = vld [vmem:[%s5745 + $0x2c] sm:$0xc]
        %v6186 = vld [vmem:[%s5745 + $0x30] sm:$0xf]
        %v6187 = vld [vmem:[%s5745 + $0x34] sm:$0x3]
        %v6188 = vld [vmem:[%s5745 + $0x48] sm:$0xc]
        %v6189 = vld [vmem:[%s5745 + $0x4c] sm:$0xf]
        %v6190 = vld [vmem:[%s5745 + $0x50] sm:$0x3]
        %v6191 = vld [vmem:[%s5745 + $0x64] sm:$0xc]
        %v6192 = vld [vmem:[%s5745 + $0x68] sm:$0xf]
        %v6193 = vld [vmem:[%s5745 + $0x6c] sm:$0x3]
        %v6194 = vld [vmem:[%s5745 + $0x80] sm:$0xc]
        %v6195 = vld [vmem:[%s5745 + $0x84] sm:$0xf]
        %v6196 = vld [vmem:[%s5745 + $0x88] sm:$0x3]
        %v6197 = vld [vmem:[%s5745 + $0x9c] sm:$0xc]
        %v6198 = vld [vmem:[%s5745 + $0xa0] sm:$0xf]
        %v6199 = vld [vmem:[%s5745 + $0xa4] sm:$0x3]
        %v6200 = vld [vmem:[%s5745 + $0xb8] sm:$0xc]
        %v6201 = vld [vmem:[%s5745 + $0xbc] sm:$0xf]
        %v6202 = vld [vmem:[%s5745 + $0xc0] sm:$0x3]
        %v6203 = vld [vmem:[%s5745 + $0xd4] sm:$0xc]
        %v6204 = vld [vmem:[%s5745 + $0xd8] sm:$0xf]
        %v6205 = vld [vmem:[%s5745 + $0xdc] sm:$0x3]
        %v6230 = vrot.slane %v6182, 6
        %v6231 = vrot.slane %v6230, 4
        %v6232 = vrot.slane %v6183, 6
        %v6233 = vsel %vm1012, %v6231, %v6232
        %v6234 = vrot.slane %v6232, 4
        %v6235 = vrot.slane %v6184, 6
        %v6236 = vsel %vm1012, %v6234, %v6235
        %v6237 = vrot.slane %v6185, 6
        %v6238 = vrot.slane %v6237, 4
        %v6239 = vrot.slane %v6186, 6
        %v6240 = vsel %vm1012, %v6238, %v6239
        %v6241 = vrot.slane %v6239, 4
        %v6242 = vrot.slane %v6187, 6
        %v6243 = vsel %vm1012, %v6241, %v6242
        %v6244 = vrot.slane %v6188, 6
        %v6245 = vrot.slane %v6244, 4
        %v6246 = vrot.slane %v6189, 6
        %v6247 = vsel %vm1012, %v6245, %v6246
        %v6248 = vrot.slane %v6246, 4
        %v6249 = vrot.slane %v6190, 6
        %v6250 = vsel %vm1012, %v6248, %v6249
        %v6251 = vrot.slane %v6191, 6
        %v6252 = vrot.slane %v6251, 4
        %v6253 = vrot.slane %v6192, 6
        %v6254 = vsel %vm1012, %v6252, %v6253
        %v6255 = vrot.slane %v6253, 4
        %v6256 = vrot.slane %v6193, 6
        %v6257 = vsel %vm1012, %v6255, %v6256
        %v6258 = vrot.slane %v6194, 6
        %v6259 = vrot.slane %v6258, 4
        %v6260 = vrot.slane %v6195, 6
        %v6261 = vsel %vm1012, %v6259, %v6260
        %v6262 = vrot.slane %v6260, 4
        %v6263 = vrot.slane %v6196, 6
        %v6264 = vsel %vm1012, %v6262, %v6263
        %v6265 = vrot.slane %v6197, 6
        %v6266 = vrot.slane %v6265, 4
        %v6267 = vrot.slane %v6198, 6
        %v6268 = vsel %vm1012, %v6266, %v6267
        %v6269 = vrot.slane %v6267, 4
        %v6270 = vrot.slane %v6199, 6
        %v6271 = vsel %vm1012, %v6269, %v6270
        %v6272 = vrot.slane %v6200, 6
        %v6273 = vrot.slane %v6272, 4
        %v6274 = vrot.slane %v6201, 6
        %v6275 = vsel %vm1012, %v6273, %v6274
        %v6276 = vrot.slane %v6274, 4
        %v6277 = vrot.slane %v6202, 6
        %v6278 = vsel %vm1012, %v6276, %v6277
        %v6279 = vrot.slane %v6203, 6
        %v6280 = vrot.slane %v6279, 4
        %v6281 = vrot.slane %v6204, 6
        %v6282 = vsel %vm1012, %v6280, %v6281
        %v6283 = vrot.slane %v6281, 4
        %v6284 = vrot.slane %v6205, 6
        %v6285 = vsel %vm1012, %v6283, %v6284
        %s6286 = scalar_lea.vmem [#allocation10], 80
        %v6287 = vld [vmem:[%s6286] sm:$0xf]
        %v6288 = vunpack.c.l.b16 %v6233
        %v6289 = vunpack.c.l.b16 %v6236
        %v6290 = vunpack.c.l.b16 %v6240
        %v6291 = vunpack.c.l.b16 %v6243
        %v6292 = vunpack.c.l.b16 %v6247
        %v6293 = vunpack.c.l.b16 %v6250
        %v6294 = vunpack.c.l.b16 %v6254
        %v6295 = vunpack.c.l.b16 %v6257
        %v6296 = vunpack.c.l.b16 %v6261
        %v6297 = vunpack.c.l.b16 %v6264
        %v6298 = vunpack.c.l.b16 %v6268
        %v6299 = vunpack.c.l.b16 %v6271
        %v6300 = vunpack.c.l.b16 %v6275
        %v6301 = vunpack.c.l.b16 %v6278
        %v6302 = vunpack.c.l.b16 %v6282
        %v6303 = vunpack.c.l.b16 %v6285
        %v6304 = vpack.c.b16 %v6289, %v6288
        %v6305 = vpack.c.b16 %v6291, %v6290
        %v6306 = vpack.c.b16 %v6293, %v6292
        %v6307 = vpack.c.b16 %v6295, %v6294
        %v6308 = vpack.c.b16 %v6297, %v6296
        %v6309 = vpack.c.b16 %v6299, %v6298
        %v6310 = vpack.c.b16 %v6301, %v6300
        %v6311 = vpack.c.b16 %v6303, %v6302
        %v6313 = vsel %vm761, %v6304, 0
        %v6316 = vsel %vm761, %v6305, 0
        %v6319 = vsel %vm761, %v6306, 0
        %v6322 = vsel %vm761, %v6307, 0
        %v6325 = vsel %vm761, %v6308, 0
        %v6328 = vsel %vm761, %v6309, 0
        %v6331 = vsel %vm761, %v6310, 0
        %v6334 = vsel %vm761, %v6311, 0
        %v6337 = vsel %vm786, %v6287, 0
        %6339 = vmatprep.subr.bf16.mxu0 0
        %6340 = vmatpush1.bf16.msra.mxu0 %v6337
        %6341 = vmatprep.subr.bf16.mxu0 0
        %6342 = vmatpush1.bf16.msra.mxu0 0
        %6343 = vmatprep.subr.bf16.mxu0 0
        %6344 = vmatpush1.bf16.msra.mxu0 0
        %6345 = vmatprep.subr.bf16.mxu0 0
        %6346 = vmatpush1.bf16.msra.mxu0 0
        %6347 = vmatprep.subr.bf16.mxu0 0
        %6348 = vmatpush1.bf16.msra.mxu0 0
        %6349 = vmatprep.subr.bf16.mxu0 0
        %6350 = vmatpush1.bf16.msra.mxu0 0
        %6351 = vmatprep.subr.bf16.mxu0 0
        %6352 = vmatpush1.bf16.msra.mxu0 0
        %6353 = vmatprep.subr.bf16.mxu0 0
        %6354 = vmatpush1.bf16.msra.mxu0 0
        %6355 = vmatprep.subr.bf16.mxu0 0
        %6356 = vmatpush1.bf16.msra.mxu0 0
        %6357 = vmatprep.subr.bf16.mxu0 0
        %6358 = vmatpush1.bf16.msra.mxu0 0
        %6359 = vmatprep.subr.bf16.mxu0 0
        %6360 = vmatpush1.bf16.msra.mxu0 0
        %6361 = vmatprep.subr.bf16.mxu0 0
        %6362 = vmatpush1.bf16.msra.mxu0 0
        %6363 = vmatprep.subr.bf16.mxu0 0
        %6364 = vmatpush1.bf16.msra.mxu0 0
        %6365 = vmatprep.subr.bf16.mxu0 0
        %6366 = vmatpush1.bf16.msra.mxu0 0
        %6367 = vmatprep.subr.bf16.mxu0 0
        %6368 = vmatpush1.bf16.msra.mxu0 0
        %6369 = vmatprep.subr.bf16.mxu0 0
        %6370 = vmatpush1.bf16.msra.mxu0 0
        %6371 = vmatprep.mubr.bf16.mxu0 0
        %6372 = vmatmul.mubr.bf16.gmra.mrb[0].mxu0 %v6313
        %v6373 = vpop.f32.mrb[0].mxu0
        %v6374 = vadd.f32 0.0, %v6373
        %v6375 = vpop.f32.mrb[0].mxu0
        %v6376 = vpop.f32.mrb[0].mxu0
        %v6377 = vadd.f32 0.0, %v6376
        %v6378 = vpop.f32.mrb[0].mxu0
        %6379 = vmatprep.mubr.bf16.mxu0 0
        %6380 = vmatmul.mubr.bf16.gmra.mrb[0].mxu0 %v6316
        %v6381 = vpop.f32.mrb[0].mxu0
        %v6382 = vadd.f32 0.0, %v6381
        %v6383 = vpop.f32.mrb[0].mxu0
        %v6384 = vpop.f32.mrb[0].mxu0
        %v6385 = vadd.f32 0.0, %v6384
        %v6386 = vpop.f32.mrb[0].mxu0
        %6387 = vmatprep.mubr.bf16.mxu0 0
        %6388 = vmatmul.mubr.bf16.gmra.mrb[0].mxu0 %v6319
        %v6389 = vpop.f32.mrb[0].mxu0
        %v6390 = vadd.f32 0.0, %v6389
        %v6391 = vpop.f32.mrb[0].mxu0
        %v6392 = vpop.f32.mrb[0].mxu0
        %v6393 = vadd.f32 0.0, %v6392
        %v6394 = vpop.f32.mrb[0].mxu0
        %6395 = vmatprep.mubr.bf16.mxu0 0
        %6396 = vmatmul.mubr.bf16.gmra.mrb[0].mxu0 %v6322
        %v6397 = vpop.f32.mrb[0].mxu0
        %v6398 = vadd.f32 0.0, %v6397
        %v6399 = vpop.f32.mrb[0].mxu0
        %v6400 = vpop.f32.mrb[0].mxu0
        %v6401 = vadd.f32 0.0, %v6400
        %v6402 = vpop.f32.mrb[0].mxu0
        %6403 = vmatprep.mubr.bf16.mxu0 0
        %6404 = vmatmul.mubr.bf16.gmra.mrb[0].mxu0 %v6325
        %v6405 = vpop.f32.mrb[0].mxu0
        %v6406 = vadd.f32 0.0, %v6405
        %v6407 = vpop.f32.mrb[0].mxu0
        %v6408 = vpop.f32.mrb[0].mxu0
        %v6409 = vadd.f32 0.0, %v6408
        %v6410 = vpop.f32.mrb[0].mxu0
        %6411 = vmatprep.mubr.bf16.mxu0 0
        %6412 = vmatmul.mubr.bf16.gmra.mrb[0].mxu0 %v6328
        %v6413 = vpop.f32.mrb[0].mxu0
        %v6414 = vadd.f32 0.0, %v6413
        %v6415 = vpop.f32.mrb[0].mxu0
        %v6416 = vpop.f32.mrb[0].mxu0
        %v6417 = vadd.f32 0.0, %v6416
        %v6418 = vpop.f32.mrb[0].mxu0
        %6419 = vmatprep.mubr.bf16.mxu0 0
        %6420 = vmatmul.mubr.bf16.gmra.mrb[0].mxu0 %v6331
        %v6421 = vpop.f32.mrb[0].mxu0
        %v6422 = vadd.f32 0.0, %v6421
        %v6423 = vpop.f32.mrb[0].mxu0
        %v6424 = vpop.f32.mrb[0].mxu0
        %v6425 = vadd.f32 0.0, %v6424
        %v6426 = vpop.f32.mrb[0].mxu0
        %6427 = vmatprep.mubr.bf16.mxu0 0
        %6428 = vmatmul.mubr.bf16.gmra.mrb[0].mxu0 %v6334
        %v6429 = vpop.f32.mrb[0].mxu0
        %v6430 = vadd.f32 0.0, %v6429
        %v6431 = vpop.f32.mrb[0].mxu0
        %v6432 = vpop.f32.mrb[0].mxu0
        %v6433 = vadd.f32 0.0, %v6432
        %v6434 = vpop.f32.mrb[0].mxu0
        %6435 = vdwg.mxu0
        %v6436 = vadd.f32 %v6120, %v6374
        %v6437 = vadd.f32 %v6123, %v6377
        %v6438 = vadd.f32 %v6128, %v6382
        %v6439 = vadd.f32 %v6131, %v6385
        %v6440 = vadd.f32 %v6136, %v6390
        %v6441 = vadd.f32 %v6139, %v6393
        %v6442 = vadd.f32 %v6144, %v6398
        %v6443 = vadd.f32 %v6147, %v6401
        %v6444 = vadd.f32 %v6152, %v6406
        %v6445 = vadd.f32 %v6155, %v6409
        %v6446 = vadd.f32 %v6160, %v6414
        %v6447 = vadd.f32 %v6163, %v6417
        %v6448 = vadd.f32 %v6168, %v6422
        %v6449 = vadd.f32 %v6171, %v6425
        %v6450 = vadd.f32 %v6176, %v6430
        %v6451 = vadd.f32 %v6179, %v6433
        %v6452 = vld [vmem:[%s612] sm:$0xf]
        %v6453 = vld [vmem:[%s612 + $0x4] sm:$0xf]
        %v6454 = vld [vmem:[%s612 + $0x1c] sm:$0xf]
        %v6455 = vld [vmem:[%s612 + $0x20] sm:$0xf]
        %v6456 = vld [vmem:[%s612 + $0x38] sm:$0xf]
        %v6457 = vld [vmem:[%s612 + $0x3c] sm:$0xf]
        %v6458 = vld [vmem:[%s612 + $0x54] sm:$0xf]
        %v6459 = vld [vmem:[%s612 + $0x58] sm:$0xf]
        %v6460 = vld [vmem:[%s612 + $0x70] sm:$0xf]
        %v6461 = vld [vmem:[%s612 + $0x74] sm:$0xf]
        %v6462 = vld [vmem:[%s612 + $0x8c] sm:$0xf]
        %v6463 = vld [vmem:[%s612 + $0x90] sm:$0xf]
        %v6464 = vld [vmem:[%s612 + $0xa8] sm:$0xf]
        %v6465 = vld [vmem:[%s612 + $0xac] sm:$0xf]
        %v6466 = vld [vmem:[%s612 + $0xc4] sm:$0xf]
        %v6467 = vld [vmem:[%s612 + $0xc8] sm:$0xf]
        %s6468 = scalar_lea.vmem [#allocation10], 84
        %v6469 = vld [vmem:[%s6468] sm:$0xf]
        %v6486 = vunpack.c.l.b16 %v6452
        %v6487 = vunpack.c.l.b16 %v6453
        %v6488 = vunpack.c.l.b16 %v6454
        %v6489 = vunpack.c.l.b16 %v6455
        %v6490 = vunpack.c.l.b16 %v6456
        %v6491 = vunpack.c.l.b16 %v6457
        %v6492 = vunpack.c.l.b16 %v6458
        %v6493 = vunpack.c.l.b16 %v6459
        %v6494 = vunpack.c.l.b16 %v6460
        %v6495 = vunpack.c.l.b16 %v6461
        %v6496 = vunpack.c.l.b16 %v6462
        %v6497 = vunpack.c.l.b16 %v6463
        %v6498 = vunpack.c.l.b16 %v6464
        %v6499 = vunpack.c.l.b16 %v6465
        %v6500 = vunpack.c.l.b16 %v6466
        %v6501 = vunpack.c.l.b16 %v6467
        %v6502 = vpack.c.b16 %v6487, %v6486
        %v6503 = vpack.c.b16 %v6489, %v6488
        %v6504 = vpack.c.b16 %v6491, %v6490
        %v6505 = vpack.c.b16 %v6493, %v6492
        %v6506 = vpack.c.b16 %v6495, %v6494
        %v6507 = vpack.c.b16 %v6497, %v6496
        %v6508 = vpack.c.b16 %v6499, %v6498
        %v6509 = vpack.c.b16 %v6501, %v6500
        %v6511 = vsel %vm761, %v6502, 0
        %v6514 = vsel %vm761, %v6503, 0
        %v6517 = vsel %vm761, %v6504, 0
        %v6520 = vsel %vm761, %v6505, 0
        %v6523 = vsel %vm761, %v6506, 0
        %v6526 = vsel %vm761, %v6507, 0
        %v6529 = vsel %vm761, %v6508, 0
        %v6532 = vsel %vm761, %v6509, 0
        %v6535 = vsel %vm786, %v6469, 0
        %6537 = vmatprep.subr.bf16.mxu0 0
        %6538 = vmatpush1.bf16.msra.mxu0 %v6535
        %6539 = vmatprep.subr.bf16.mxu0 0
        %6540 = vmatpush1.bf16.msra.mxu0 0
        %6541 = vmatprep.subr.bf16.mxu0 0
        %6542 = vmatpush1.bf16.msra.mxu0 0
        %6543 = vmatprep.subr.bf16.mxu0 0
        %6544 = vmatpush1.bf16.msra.mxu0 0
        %6545 = vmatprep.subr.bf16.mxu0 0
        %6546 = vmatpush1.bf16.msra.mxu0 0
        %6547 = vmatprep.subr.bf16.mxu0 0
        %6548 = vmatpush1.bf16.msra.mxu0 0
        %6549 = vmatprep.subr.bf16.mxu0 0
        %6550 = vmatpush1.bf16.msra.mxu0 0
        %6551 = vmatprep.subr.bf16.mxu0 0
        %6552 = vmatpush1.bf16.msra.mxu0 0
        %6553 = vmatprep.subr.bf16.mxu0 0
        %6554 = vmatpush1.bf16.msra.mxu0 0
        %6555 = vmatprep.subr.bf16.mxu0 0
        %6556 = vmatpush1.bf16.msra.mxu0 0
        %6557 = vmatprep.subr.bf16.mxu0 0
        %6558 = vmatpush1.bf16.msra.mxu0 0
        %6559 = vmatprep.subr.bf16.mxu0 0
        %6560 = vmatpush1.bf16.msra.mxu0 0
        %6561 = vmatprep.subr.bf16.mxu0 0
        %6562 = vmatpush1.bf16.msra.mxu0 0
        %6563 = vmatprep.subr.bf16.mxu0 0
        %6564 = vmatpush1.bf16.msra.mxu0 0
        %6565 = vmatprep.subr.bf16.mxu0 0
        %6566 = vmatpush1.bf16.msra.mxu0 0
        %6567 = vmatprep.subr.bf16.mxu0 0
        %6568 = vmatpush1.bf16.msra.mxu0 0
        %6569 = vmatprep.mubr.bf16.mxu0 0
        %6570 = vmatmul.mubr.bf16.gmra.mrb[0].mxu0 %v6511
        %v6571 = vpop.f32.mrb[0].mxu0
        %v6572 = vadd.f32 0.0, %v6571
        %v6573 = vpop.f32.mrb[0].mxu0
        %v6574 = vpop.f32.mrb[0].mxu0
        %v6575 = vadd.f32 0.0, %v6574
        %v6576 = vpop.f32.mrb[0].mxu0
        %6577 = vmatprep.mubr.bf16.mxu0 0
        %6578 = vmatmul.mubr.bf16.gmra.mrb[0].mxu0 %v6514
        %v6579 = vpop.f32.mrb[0].mxu0
        %v6580 = vadd.f32 0.0, %v6579
        %v6581 = vpop.f32.mrb[0].mxu0
        %v6582 = vpop.f32.mrb[0].mxu0
        %v6583 = vadd.f32 0.0, %v6582
        %v6584 = vpop.f32.mrb[0].mxu0
        %6585 = vmatprep.mubr.bf16.mxu0 0
        %6586 = vmatmul.mubr.bf16.gmra.mrb[0].mxu0 %v6517
        %v6587 = vpop.f32.mrb[0].mxu0
        %v6588 = vadd.f32 0.0, %v6587
        %v6589 = vpop.f32.mrb[0].mxu0
        %v6590 = vpop.f32.mrb[0].mxu0
        %v6591 = vadd.f32 0.0, %v6590
        %v6592 = vpop.f32.mrb[0].mxu0
        %6593 = vmatprep.mubr.bf16.mxu0 0
        %6594 = vmatmul.mubr.bf16.gmra.mrb[0].mxu0 %v6520
        %v6595 = vpop.f32.mrb[0].mxu0
        %v6596 = vadd.f32 0.0, %v6595
        %v6597 = vpop.f32.mrb[0].mxu0
        %v6598 = vpop.f32.mrb[0].mxu0
        %v6599 = vadd.f32 0.0, %v6598
        %v6600 = vpop.f32.mrb[0].mxu0
        %6601 = vmatprep.mubr.bf16.mxu0 0
        %6602 = vmatmul.mubr.bf16.gmra.mrb[0].mxu0 %v6523
        %v6603 = vpop.f32.mrb[0].mxu0
        %v6604 = vadd.f32 0.0, %v6603
        %v6605 = vpop.f32.mrb[0].mxu0
        %v6606 = vpop.f32.mrb[0].mxu0
        %v6607 = vadd.f32 0.0, %v6606
        %v6608 = vpop.f32.mrb[0].mxu0
        %6609 = vmatprep.mubr.bf16.mxu0 0
        %6610 = vmatmul.mubr.bf16.gmra.mrb[0].mxu0 %v6526
        %v6611 = vpop.f32.mrb[0].mxu0
        %v6612 = vadd.f32 0.0, %v6611
        %v6613 = vpop.f32.mrb[0].mxu0
        %v6614 = vpop.f32.mrb[0].mxu0
        %v6615 = vadd.f32 0.0, %v6614
        %v6616 = vpop.f32.mrb[0].mxu0
        %6617 = vmatprep.mubr.bf16.mxu0 0
        %6618 = vmatmul.mubr.bf16.gmra.mrb[0].mxu0 %v6529
        %v6619 = vpop.f32.mrb[0].mxu0
        %v6620 = vadd.f32 0.0, %v6619
        %v6621 = vpop.f32.mrb[0].mxu0
        %v6622 = vpop.f32.mrb[0].mxu0
        %v6623 = vadd.f32 0.0, %v6622
        %v6624 = vpop.f32.mrb[0].mxu0
        %6625 = vmatprep.mubr.bf16.mxu0 0
        %6626 = vmatmul.mubr.bf16.gmra.mrb[0].mxu0 %v6532
        %v6627 = vpop.f32.mrb[0].mxu0
        %v6628 = vadd.f32 0.0, %v6627
        %v6629 = vpop.f32.mrb[0].mxu0
        %v6630 = vpop.f32.mrb[0].mxu0
        %v6631 = vadd.f32 0.0, %v6630
        %v6632 = vpop.f32.mrb[0].mxu0
        %6633 = vdwg.mxu0
        %v6634 = vadd.f32 %v6436, %v6572
        %v6635 = vadd.f32 %v6437, %v6575
        %v6636 = vadd.f32 %v6438, %v6580
        %v6637 = vadd.f32 %v6439, %v6583
        %v6638 = vadd.f32 %v6440, %v6588
        %v6639 = vadd.f32 %v6441, %v6591
        %v6640 = vadd.f32 %v6442, %v6596
        %v6641 = vadd.f32 %v6443, %v6599
        %v6642 = vadd.f32 %v6444, %v6604
        %v6643 = vadd.f32 %v6445, %v6607
        %v6644 = vadd.f32 %v6446, %v6612
        %v6645 = vadd.f32 %v6447, %v6615
        %v6646 = vadd.f32 %v6448, %v6620
        %v6647 = vadd.f32 %v6449, %v6623
        %v6648 = vadd.f32 %v6450, %v6628
        %v6649 = vadd.f32 %v6451, %v6631
        %s6650 = scalar_lea.vmem [#allocation10], 88
        %v6651 = vld [vmem:[%s6650] sm:$0xf]
        %v6653 = vsel %vm786, %v6651, 0
        %6655 = vmatprep.subr.bf16.mxu0 0
        %6656 = vmatpush1.bf16.msra.mxu0 %v6653
        %6657 = vmatprep.subr.bf16.mxu0 0
        %6658 = vmatpush1.bf16.msra.mxu0 0
        %6659 = vmatprep.subr.bf16.mxu0 0
        %6660 = vmatpush1.bf16.msra.mxu0 0
        %6661 = vmatprep.subr.bf16.mxu0 0
        %6662 = vmatpush1.bf16.msra.mxu0 0
        %6663 = vmatprep.subr.bf16.mxu0 0
        %6664 = vmatpush1.bf16.msra.mxu0 0
        %6665 = vmatprep.subr.bf16.mxu0 0
        %6666 = vmatpush1.bf16.msra.mxu0 0
        %6667 = vmatprep.subr.bf16.mxu0 0
        %6668 = vmatpush1.bf16.msra.mxu0 0
        %6669 = vmatprep.subr.bf16.mxu0 0
        %6670 = vmatpush1.bf16.msra.mxu0 0
        %6671 = vmatprep.subr.bf16.mxu0 0
        %6672 = vmatpush1.bf16.msra.mxu0 0
        %6673 = vmatprep.subr.bf16.mxu0 0
        %6674 = vmatpush1.bf16.msra.mxu0 0
        %6675 = vmatprep.subr.bf16.mxu0 0
        %6676 = vmatpush1.bf16.msra.mxu0 0
        %6677 = vmatprep.subr.bf16.mxu0 0
        %6678 = vmatpush1.bf16.msra.mxu0 0
        %6679 = vmatprep.subr.bf16.mxu0 0
        %6680 = vmatpush1.bf16.msra.mxu0 0
        %6681 = vmatprep.subr.bf16.mxu0 0
        %6682 = vmatpush1.bf16.msra.mxu0 0
        %6683 = vmatprep.subr.bf16.mxu0 0
        %6684 = vmatpush1.bf16.msra.mxu0 0
        %6685 = vmatprep.subr.bf16.mxu0 0
        %6686 = vmatpush1.bf16.msra.mxu0 0
        %6687 = vmatprep.mubr.bf16.mxu0 0
        %6688 = vmatmul.mubr.bf16.gmra.mrb[0].mxu0 %v763
        %v6689 = vpop.f32.mrb[0].mxu0
        %v6690 = vadd.f32 0.0, %v6689
        %v6691 = vpop.f32.mrb[0].mxu0
        %v6692 = vpop.f32.mrb[0].mxu0
        %v6693 = vadd.f32 0.0, %v6692
        %v6694 = vpop.f32.mrb[0].mxu0
        %6695 = vmatprep.mubr.bf16.mxu0 0
        %6696 = vmatmul.mubr.bf16.gmra.mrb[0].mxu0 %v766
        %v6697 = vpop.f32.mrb[0].mxu0
        %v6698 = vadd.f32 0.0, %v6697
        %v6699 = vpop.f32.mrb[0].mxu0
        %v6700 = vpop.f32.mrb[0].mxu0
        %v6701 = vadd.f32 0.0, %v6700
        %v6702 = vpop.f32.mrb[0].mxu0
        %6703 = vmatprep.mubr.bf16.mxu0 0
        %6704 = vmatmul.mubr.bf16.gmra.mrb[0].mxu0 %v769
        %v6705 = vpop.f32.mrb[0].mxu0
        %v6706 = vadd.f32 0.0, %v6705
        %v6707 = vpop.f32.mrb[0].mxu0
        %v6708 = vpop.f32.mrb[0].mxu0
        %v6709 = vadd.f32 0.0, %v6708
        %v6710 = vpop.f32.mrb[0].mxu0
        %6711 = vmatprep.mubr.bf16.mxu0 0
        %6712 = vmatmul.mubr.bf16.gmra.mrb[0].mxu0 %v772
        %v6713 = vpop.f32.mrb[0].mxu0
        %v6714 = vadd.f32 0.0, %v6713
        %v6715 = vpop.f32.mrb[0].mxu0
        %v6716 = vpop.f32.mrb[0].mxu0
        %v6717 = vadd.f32 0.0, %v6716
        %v6718 = vpop.f32.mrb[0].mxu0
        %6719 = vmatprep.mubr.bf16.mxu0 0
        %6720 = vmatmul.mubr.bf16.gmra.mrb[0].mxu0 %v775
        %v6721 = vpop.f32.mrb[0].mxu0
        %v6722 = vadd.f32 0.0, %v6721
        %v6723 = vpop.f32.mrb[0].mxu0
        %v6724 = vpop.f32.mrb[0].mxu0
        %v6725 = vadd.f32 0.0, %v6724
        %v6726 = vpop.f32.mrb[0].mxu0
        %6727 = vmatprep.mubr.bf16.mxu0 0
        %6728 = vmatmul.mubr.bf16.gmra.mrb[0].mxu0 %v778
        %v6729 = vpop.f32.mrb[0].mxu0
        %v6730 = vadd.f32 0.0, %v6729
        %v6731 = vpop.f32.mrb[0].mxu0
        %v6732 = vpop.f32.mrb[0].mxu0
        %v6733 = vadd.f32 0.0, %v6732
        %v6734 = vpop.f32.mrb[0].mxu0
        %6735 = vmatprep.mubr.bf16.mxu0 0
        %6736 = vmatmul.mubr.bf16.gmra.mrb[0].mxu0 %v781
        %v6737 = vpop.f32.mrb[0].mxu0
        %v6738 = vadd.f32 0.0, %v6737
        %v6739 = vpop.f32.mrb[0].mxu0
        %v6740 = vpop.f32.mrb[0].mxu0
        %v6741 = vadd.f32 0.0, %v6740
        %v6742 = vpop.f32.mrb[0].mxu0
        %6743 = vmatprep.mubr.bf16.mxu0 0
        %6744 = vmatmul.mubr.bf16.gmra.mrb[0].mxu0 %v784
        %v6745 = vpop.f32.mrb[0].mxu0
        %v6746 = vadd.f32 0.0, %v6745
        %v6747 = vpop.f32.mrb[0].mxu0
        %v6748 = vpop.f32.mrb[0].mxu0
        %v6749 = vadd.f32 0.0, %v6748
        %v6750 = vpop.f32.mrb[0].mxu0
        %6751 = vdwg.mxu0
        %v6752 = vadd.f32 %v6634, %v6690
        %v6753 = vadd.f32 %v6635, %v6693
        %v6754 = vadd.f32 %v6636, %v6698
        %v6755 = vadd.f32 %v6637, %v6701
        %v6756 = vadd.f32 %v6638, %v6706
        %v6757 = vadd.f32 %v6639, %v6709
        %v6758 = vadd.f32 %v6640, %v6714
        %v6759 = vadd.f32 %v6641, %v6717
        %v6760 = vadd.f32 %v6642, %v6722
        %v6761 = vadd.f32 %v6643, %v6725
        %v6762 = vadd.f32 %v6644, %v6730
        %v6763 = vadd.f32 %v6645, %v6733
        %v6764 = vadd.f32 %v6646, %v6738
        %v6765 = vadd.f32 %v6647, %v6741
        %v6766 = vadd.f32 %v6648, %v6746
        %v6767 = vadd.f32 %v6649, %v6749
        %v6768 = vld [vmem:[%s612 + $0x10] sm:$0xc]
        %v6769 = vld [vmem:[%s612 + $0x14] sm:$0xf]
        %v6770 = vld [vmem:[%s612 + $0x18] sm:$0x3]
        %v6771 = vld [vmem:[%s612 + $0x2c] sm:$0xc]
        %v6772 = vld [vmem:[%s612 + $0x30] sm:$0xf]
        %v6773 = vld [vmem:[%s612 + $0x34] sm:$0x3]
        %v6774 = vld [vmem:[%s612 + $0x48] sm:$0xc]
        %v6775 = vld [vmem:[%s612 + $0x4c] sm:$0xf]
        %v6776 = vld [vmem:[%s612 + $0x50] sm:$0x3]
        %v6777 = vld [vmem:[%s612 + $0x64] sm:$0xc]
        %v6778 = vld [vmem:[%s612 + $0x68] sm:$0xf]
        %v6779 = vld [vmem:[%s612 + $0x6c] sm:$0x3]
        %v6780 = vld [vmem:[%s612 + $0x80] sm:$0xc]
        %v6781 = vld [vmem:[%s612 + $0x84] sm:$0xf]
        %v6782 = vld [vmem:[%s612 + $0x88] sm:$0x3]
        %v6783 = vld [vmem:[%s612 + $0x9c] sm:$0xc]
        %v6784 = vld [vmem:[%s612 + $0xa0] sm:$0xf]
        %v6785 = vld [vmem:[%s612 + $0xa4] sm:$0x3]
        %v6786 = vld [vmem:[%s612 + $0xb8] sm:$0xc]
        %v6787 = vld [vmem:[%s612 + $0xbc] sm:$0xf]
        %v6788 = vld [vmem:[%s612 + $0xc0] sm:$0x3]
        %v6789 = vld [vmem:[%s612 + $0xd4] sm:$0xc]
        %v6790 = vld [vmem:[%s612 + $0xd8] sm:$0xf]
        %v6791 = vld [vmem:[%s612 + $0xdc] sm:$0x3]
        %v6816 = vrot.slane %v6768, 6
        %v6817 = vrot.slane %v6816, 4
        %v6818 = vrot.slane %v6769, 6
        %v6819 = vsel %vm1012, %v6817, %v6818
        %v6820 = vrot.slane %v6818, 4
        %v6821 = vrot.slane %v6770, 6
        %v6822 = vsel %vm1012, %v6820, %v6821
        %v6823 = vrot.slane %v6771, 6
        %v6824 = vrot.slane %v6823, 4
        %v6825 = vrot.slane %v6772, 6
        %v6826 = vsel %vm1012, %v6824, %v6825
        %v6827 = vrot.slane %v6825, 4
        %v6828 = vrot.slane %v6773, 6
        %v6829 = vsel %vm1012, %v6827, %v6828
        %v6830 = vrot.slane %v6774, 6
        %v6831 = vrot.slane %v6830, 4
        %v6832 = vrot.slane %v6775, 6
        %v6833 = vsel %vm1012, %v6831, %v6832
        %v6834 = vrot.slane %v6832, 4
        %v6835 = vrot.slane %v6776, 6
        %v6836 = vsel %vm1012, %v6834, %v6835
        %v6837 = vrot.slane %v6777, 6
        %v6838 = vrot.slane %v6837, 4
        %v6839 = vrot.slane %v6778, 6
        %v6840 = vsel %vm1012, %v6838, %v6839
        %v6841 = vrot.slane %v6839, 4
        %v6842 = vrot.slane %v6779, 6
        %v6843 = vsel %vm1012, %v6841, %v6842
        %v6844 = vrot.slane %v6780, 6
        %v6845 = vrot.slane %v6844, 4
        %v6846 = vrot.slane %v6781, 6
        %v6847 = vsel %vm1012, %v6845, %v6846
        %v6848 = vrot.slane %v6846, 4
        %v6849 = vrot.slane %v6782, 6
        %v6850 = vsel %vm1012, %v6848, %v6849
        %v6851 = vrot.slane %v6783, 6
        %v6852 = vrot.slane %v6851, 4
        %v6853 = vrot.slane %v6784, 6
        %v6854 = vsel %vm1012, %v6852, %v6853
        %v6855 = vrot.slane %v6853, 4
        %v6856 = vrot.slane %v6785, 6
        %v6857 = vsel %vm1012, %v6855, %v6856
        %v6858 = vrot.slane %v6786, 6
        %v6859 = vrot.slane %v6858, 4
        %v6860 = vrot.slane %v6787, 6
        %v6861 = vsel %vm1012, %v6859, %v6860
        %v6862 = vrot.slane %v6860, 4
        %v6863 = vrot.slane %v6788, 6
        %v6864 = vsel %vm1012, %v6862, %v6863
        %v6865 = vrot.slane %v6789, 6
        %v6866 = vrot.slane %v6865, 4
        %v6867 = vrot.slane %v6790, 6
        %v6868 = vsel %vm1012, %v6866, %v6867
        %v6869 = vrot.slane %v6867, 4
        %v6870 = vrot.slane %v6791, 6
        %v6871 = vsel %vm1012, %v6869, %v6870
        %s6872 = scalar_lea.vmem [#allocation10], 92
        %v6873 = vld [vmem:[%s6872] sm:$0xf]
        %v6874 = vunpack.c.l.b16 %v6819
        %v6875 = vunpack.c.l.b16 %v6822
        %v6876 = vunpack.c.l.b16 %v6826
        %v6877 = vunpack.c.l.b16 %v6829
        %v6878 = vunpack.c.l.b16 %v6833
        %v6879 = vunpack.c.l.b16 %v6836
        %v6880 = vunpack.c.l.b16 %v6840
        %v6881 = vunpack.c.l.b16 %v6843
        %v6882 = vunpack.c.l.b16 %v6847
        %v6883 = vunpack.c.l.b16 %v6850
        %v6884 = vunpack.c.l.b16 %v6854
        %v6885 = vunpack.c.l.b16 %v6857
        %v6886 = vunpack.c.l.b16 %v6861
        %v6887 = vunpack.c.l.b16 %v6864
        %v6888 = vunpack.c.l.b16 %v6868
        %v6889 = vunpack.c.l.b16 %v6871
        %v6890 = vpack.c.b16 %v6875, %v6874
        %v6891 = vpack.c.b16 %v6877, %v6876
        %v6892 = vpack.c.b16 %v6879, %v6878
        %v6893 = vpack.c.b16 %v6881, %v6880
        %v6894 = vpack.c.b16 %v6883, %v6882
        %v6895 = vpack.c.b16 %v6885, %v6884
        %v6896 = vpack.c.b16 %v6887, %v6886
        %v6897 = vpack.c.b16 %v6889, %v6888
        %v6899 = vsel %vm761, %v6890, 0
        %v6902 = vsel %vm761, %v6891, 0
        %v6905 = vsel %vm761, %v6892, 0
        %v6908 = vsel %vm761, %v6893, 0
        %v6911 = vsel %vm761, %v6894, 0
        %v6914 = vsel %vm761, %v6895, 0
        %v6917 = vsel %vm761, %v6896, 0
        %v6920 = vsel %vm761, %v6897, 0
        %v6923 = vsel %vm786, %v6873, 0
        %6925 = vmatprep.subr.bf16.mxu0 0
        %6926 = vmatpush1.bf16.msra.mxu0 %v6923
        %6927 = vmatprep.subr.bf16.mxu0 0
        %6928 = vmatpush1.bf16.msra.mxu0 0
        %6929 = vmatprep.subr.bf16.mxu0 0
        %6930 = vmatpush1.bf16.msra.mxu0 0
        %6931 = vmatprep.subr.bf16.mxu0 0
        %6932 = vmatpush1.bf16.msra.mxu0 0
        %6933 = vmatprep.subr.bf16.mxu0 0
        %6934 = vmatpush1.bf16.msra.mxu0 0
        %6935 = vmatprep.subr.bf16.mxu0 0
        %6936 = vmatpush1.bf16.msra.mxu0 0
        %6937 = vmatprep.subr.bf16.mxu0 0
        %6938 = vmatpush1.bf16.msra.mxu0 0
        %6939 = vmatprep.subr.bf16.mxu0 0
        %6940 = vmatpush1.bf16.msra.mxu0 0
        %6941 = vmatprep.subr.bf16.mxu0 0
        %6942 = vmatpush1.bf16.msra.mxu0 0
        %6943 = vmatprep.subr.bf16.mxu0 0
        %6944 = vmatpush1.bf16.msra.mxu0 0
        %6945 = vmatprep.subr.bf16.mxu0 0
        %6946 = vmatpush1.bf16.msra.mxu0 0
        %6947 = vmatprep.subr.bf16.mxu0 0
        %6948 = vmatpush1.bf16.msra.mxu0 0
        %6949 = vmatprep.subr.bf16.mxu0 0
        %6950 = vmatpush1.bf16.msra.mxu0 0
        %6951 = vmatprep.subr.bf16.mxu0 0
        %6952 = vmatpush1.bf16.msra.mxu0 0
        %6953 = vmatprep.subr.bf16.mxu0 0
        %6954 = vmatpush1.bf16.msra.mxu0 0
        %6955 = vmatprep.subr.bf16.mxu0 0
        %6956 = vmatpush1.bf16.msra.mxu0 0
        %6957 = vmatprep.mubr.bf16.mxu0 0
        %6958 = vmatmul.mubr.bf16.gmra.mrb[0].mxu0 %v6899
        %v6959 = vpop.f32.mrb[0].mxu0
        %v6960 = vadd.f32 0.0, %v6959
        %v6961 = vpop.f32.mrb[0].mxu0
        %v6962 = vpop.f32.mrb[0].mxu0
        %v6963 = vadd.f32 0.0, %v6962
        %v6964 = vpop.f32.mrb[0].mxu0
        %6965 = vmatprep.mubr.bf16.mxu0 0
        %6966 = vmatmul.mubr.bf16.gmra.mrb[0].mxu0 %v6902
        %v6967 = vpop.f32.mrb[0].mxu0
        %v6968 = vadd.f32 0.0, %v6967
        %v6969 = vpop.f32.mrb[0].mxu0
        %v6970 = vpop.f32.mrb[0].mxu0
        %v6971 = vadd.f32 0.0, %v6970
        %v6972 = vpop.f32.mrb[0].mxu0
        %6973 = vmatprep.mubr.bf16.mxu0 0
        %6974 = vmatmul.mubr.bf16.gmra.mrb[0].mxu0 %v6905
        %v6975 = vpop.f32.mrb[0].mxu0
        %v6976 = vadd.f32 0.0, %v6975
        %v6977 = vpop.f32.mrb[0].mxu0
        %v6978 = vpop.f32.mrb[0].mxu0
        %v6979 = vadd.f32 0.0, %v6978
        %v6980 = vpop.f32.mrb[0].mxu0
        %6981 = vmatprep.mubr.bf16.mxu0 0
        %6982 = vmatmul.mubr.bf16.gmra.mrb[0].mxu0 %v6908
        %v6983 = vpop.f32.mrb[0].mxu0
        %v6984 = vadd.f32 0.0, %v6983
        %v6985 = vpop.f32.mrb[0].mxu0
        %v6986 = vpop.f32.mrb[0].mxu0
        %v6987 = vadd.f32 0.0, %v6986
        %v6988 = vpop.f32.mrb[0].mxu0
        %6989 = vmatprep.mubr.bf16.mxu0 0
        %6990 = vmatmul.mubr.bf16.gmra.mrb[0].mxu0 %v6911
        %v6991 = vpop.f32.mrb[0].mxu0
        %v6992 = vadd.f32 0.0, %v6991
        %v6993 = vpop.f32.mrb[0].mxu0
        %v6994 = vpop.f32.mrb[0].mxu0
        %v6995 = vadd.f32 0.0, %v6994
        %v6996 = vpop.f32.mrb[0].mxu0
        %6997 = vmatprep.mubr.bf16.mxu0 0
        %6998 = vmatmul.mubr.bf16.gmra.mrb[0].mxu0 %v6914
        %v6999 = vpop.f32.mrb[0].mxu0
        %v7000 = vadd.f32 0.0, %v6999
        %v7001 = vpop.f32.mrb[0].mxu0
        %v7002 = vpop.f32.mrb[0].mxu0
        %v7003 = vadd.f32 0.0, %v7002
        %v7004 = vpop.f32.mrb[0].mxu0
        %7005 = vmatprep.mubr.bf16.mxu0 0
        %7006 = vmatmul.mubr.bf16.gmra.mrb[0].mxu0 %v6917
        %v7007 = vpop.f32.mrb[0].mxu0
        %v7008 = vadd.f32 0.0, %v7007
        %v7009 = vpop.f32.mrb[0].mxu0
        %v7010 = vpop.f32.mrb[0].mxu0
        %v7011 = vadd.f32 0.0, %v7010
        %v7012 = vpop.f32.mrb[0].mxu0
        %7013 = vmatprep.mubr.bf16.mxu0 0
        %7014 = vmatmul.mubr.bf16.gmra.mrb[0].mxu0 %v6920
        %v7015 = vpop.f32.mrb[0].mxu0
        %v7016 = vadd.f32 0.0, %v7015
        %v7017 = vpop.f32.mrb[0].mxu0
        %v7018 = vpop.f32.mrb[0].mxu0
        %v7019 = vadd.f32 0.0, %v7018
        %v7020 = vpop.f32.mrb[0].mxu0
        %7021 = vdwg.mxu0
        %v7022 = vadd.f32 %v6752, %v6960
        %v7023 = vadd.f32 %v6753, %v6963
        %v7024 = vadd.f32 %v6754, %v6968
        %v7025 = vadd.f32 %v6755, %v6971
        %v7026 = vadd.f32 %v6756, %v6976
        %v7027 = vadd.f32 %v6757, %v6979
        %v7028 = vadd.f32 %v6758, %v6984
        %v7029 = vadd.f32 %v6759, %v6987
        %v7030 = vadd.f32 %v6760, %v6992
        %v7031 = vadd.f32 %v6761, %v6995
        %v7032 = vadd.f32 %v6762, %v7000
        %v7033 = vadd.f32 %v6763, %v7003
        %v7034 = vadd.f32 %v6764, %v7008
        %v7035 = vadd.f32 %v6765, %v7011
        %v7036 = vadd.f32 %v6766, %v7016
        %v7037 = vadd.f32 %v6767, %v7019
        %s7038 = sadd.s32 %s608, 36
        %s7039 = smul.u32 %s7038, 7
        %s7040 = smul.addr %s7039, 4
        %s7041 = scalar_lea.vmem %s510, %s7040 [#allocation2]
        %v7042 = vld [vmem:[%s7041] sm:$0xf]
        %v7043 = vld [vmem:[%s7041 + $0x4] sm:$0xf]
        %v7044 = vld [vmem:[%s7041 + $0x1c] sm:$0xf]
        %v7045 = vld [vmem:[%s7041 + $0x20] sm:$0xf]
        %v7046 = vld [vmem:[%s7041 + $0x38] sm:$0xf]
        %v7047 = vld [vmem:[%s7041 + $0x3c] sm:$0xf]
        %v7048 = vld [vmem:[%s7041 + $0x54] sm:$0xf]
        %v7049 = vld [vmem:[%s7041 + $0x58] sm:$0xf]
        %v7050 = vld [vmem:[%s7041 + $0x70] sm:$0xf]
        %v7051 = vld [vmem:[%s7041 + $0x74] sm:$0xf]
        %v7052 = vld [vmem:[%s7041 + $0x8c] sm:$0xf]
        %v7053 = vld [vmem:[%s7041 + $0x90] sm:$0xf]
        %v7054 = vld [vmem:[%s7041 + $0xa8] sm:$0xf]
        %v7055 = vld [vmem:[%s7041 + $0xac] sm:$0xf]
        %v7056 = vld [vmem:[%s7041 + $0xc4] sm:$0xf]
        %v7057 = vld [vmem:[%s7041 + $0xc8] sm:$0xf]
        %s7058 = scalar_lea.vmem [#allocation10], 96
        %v7059 = vld [vmem:[%s7058] sm:$0xf]
        %v7076 = vunpack.c.l.b16 %v7042
        %v7077 = vunpack.c.l.b16 %v7043
        %v7078 = vunpack.c.l.b16 %v7044
        %v7079 = vunpack.c.l.b16 %v7045
        %v7080 = vunpack.c.l.b16 %v7046
        %v7081 = vunpack.c.l.b16 %v7047
        %v7082 = vunpack.c.l.b16 %v7048
        %v7083 = vunpack.c.l.b16 %v7049
        %v7084 = vunpack.c.l.b16 %v7050
        %v7085 = vunpack.c.l.b16 %v7051
        %v7086 = vunpack.c.l.b16 %v7052
        %v7087 = vunpack.c.l.b16 %v7053
        %v7088 = vunpack.c.l.b16 %v7054
        %v7089 = vunpack.c.l.b16 %v7055
        %v7090 = vunpack.c.l.b16 %v7056
        %v7091 = vunpack.c.l.b16 %v7057
        %v7092 = vpack.c.b16 %v7077, %v7076
        %v7093 = vpack.c.b16 %v7079, %v7078
        %v7094 = vpack.c.b16 %v7081, %v7080
        %v7095 = vpack.c.b16 %v7083, %v7082
        %v7096 = vpack.c.b16 %v7085, %v7084
        %v7097 = vpack.c.b16 %v7087, %v7086
        %v7098 = vpack.c.b16 %v7089, %v7088
        %v7099 = vpack.c.b16 %v7091, %v7090
        %v7101 = vsel %vm761, %v7092, 0
        %v7104 = vsel %vm761, %v7093, 0
        %v7107 = vsel %vm761, %v7094, 0
        %v7110 = vsel %vm761, %v7095, 0
        %v7113 = vsel %vm761, %v7096, 0
        %v7116 = vsel %vm761, %v7097, 0
        %v7119 = vsel %vm761, %v7098, 0
        %v7122 = vsel %vm761, %v7099, 0
        %v7125 = vsel %vm786, %v7059, 0
        %7127 = vmatprep.subr.bf16.mxu0 0
        %7128 = vmatpush1.bf16.msra.mxu0 %v7125
        %7129 = vmatprep.subr.bf16.mxu0 0
        %7130 = vmatpush1.bf16.msra.mxu0 0
        %7131 = vmatprep.subr.bf16.mxu0 0
        %7132 = vmatpush1.bf16.msra.mxu0 0
        %7133 = vmatprep.subr.bf16.mxu0 0
        %7134 = vmatpush1.bf16.msra.mxu0 0
        %7135 = vmatprep.subr.bf16.mxu0 0
        %7136 = vmatpush1.bf16.msra.mxu0 0
        %7137 = vmatprep.subr.bf16.mxu0 0
        %7138 = vmatpush1.bf16.msra.mxu0 0
        %7139 = vmatprep.subr.bf16.mxu0 0
        %7140 = vmatpush1.bf16.msra.mxu0 0
        %7141 = vmatprep.subr.bf16.mxu0 0
        %7142 = vmatpush1.bf16.msra.mxu0 0
        %7143 = vmatprep.subr.bf16.mxu0 0
        %7144 = vmatpush1.bf16.msra.mxu0 0
        %7145 = vmatprep.subr.bf16.mxu0 0
        %7146 = vmatpush1.bf16.msra.mxu0 0
        %7147 = vmatprep.subr.bf16.mxu0 0
        %7148 = vmatpush1.bf16.msra.mxu0 0
        %7149 = vmatprep.subr.bf16.mxu0 0
        %7150 = vmatpush1.bf16.msra.mxu0 0
        %7151 = vmatprep.subr.bf16.mxu0 0
        %7152 = vmatpush1.bf16.msra.mxu0 0
        %7153 = vmatprep.subr.bf16.mxu0 0
        %7154 = vmatpush1.bf16.msra.mxu0 0
        %7155 = vmatprep.subr.bf16.mxu0 0
        %7156 = vmatpush1.bf16.msra.mxu0 0
        %7157 = vmatprep.subr.bf16.mxu0 0
        %7158 = vmatpush1.bf16.msra.mxu0 0
        %7159 = vmatprep.mubr.bf16.mxu0 0
        %7160 = vmatmul.mubr.bf16.gmra.mrb[0].mxu0 %v7101
        %v7161 = vpop.f32.mrb[0].mxu0
        %v7162 = vadd.f32 0.0, %v7161
        %v7163 = vpop.f32.mrb[0].mxu0
        %v7164 = vpop.f32.mrb[0].mxu0
        %v7165 = vadd.f32 0.0, %v7164
        %v7166 = vpop.f32.mrb[0].mxu0
        %7167 = vmatprep.mubr.bf16.mxu0 0
        %7168 = vmatmul.mubr.bf16.gmra.mrb[0].mxu0 %v7104
        %v7169 = vpop.f32.mrb[0].mxu0
        %v7170 = vadd.f32 0.0, %v7169
        %v7171 = vpop.f32.mrb[0].mxu0
        %v7172 = vpop.f32.mrb[0].mxu0
        %v7173 = vadd.f32 0.0, %v7172
        %v7174 = vpop.f32.mrb[0].mxu0
        %7175 = vmatprep.mubr.bf16.mxu0 0
        %7176 = vmatmul.mubr.bf16.gmra.mrb[0].mxu0 %v7107
        %v7177 = vpop.f32.mrb[0].mxu0
        %v7178 = vadd.f32 0.0, %v7177
        %v7179 = vpop.f32.mrb[0].mxu0
        %v7180 = vpop.f32.mrb[0].mxu0
        %v7181 = vadd.f32 0.0, %v7180
        %v7182 = vpop.f32.mrb[0].mxu0
        %7183 = vmatprep.mubr.bf16.mxu0 0
        %7184 = vmatmul.mubr.bf16.gmra.mrb[0].mxu0 %v7110
        %v7185 = vpop.f32.mrb[0].mxu0
        %v7186 = vadd.f32 0.0, %v7185
        %v7187 = vpop.f32.mrb[0].mxu0
        %v7188 = vpop.f32.mrb[0].mxu0
        %v7189 = vadd.f32 0.0, %v7188
        %v7190 = vpop.f32.mrb[0].mxu0
        %7191 = vmatprep.mubr.bf16.mxu0 0
        %7192 = vmatmul.mubr.bf16.gmra.mrb[0].mxu0 %v7113
        %v7193 = vpop.f32.mrb[0].mxu0
        %v7194 = vadd.f32 0.0, %v7193
        %v7195 = vpop.f32.mrb[0].mxu0
        %v7196 = vpop.f32.mrb[0].mxu0
        %v7197 = vadd.f32 0.0, %v7196
        %v7198 = vpop.f32.mrb[0].mxu0
        %7199 = vmatprep.mubr.bf16.mxu0 0
        %7200 = vmatmul.mubr.bf16.gmra.mrb[0].mxu0 %v7116
        %v7201 = vpop.f32.mrb[0].mxu0
        %v7202 = vadd.f32 0.0, %v7201
        %v7203 = vpop.f32.mrb[0].mxu0
        %v7204 = vpop.f32.mrb[0].mxu0
        %v7205 = vadd.f32 0.0, %v7204
        %v7206 = vpop.f32.mrb[0].mxu0
        %7207 = vmatprep.mubr.bf16.mxu0 0
        %7208 = vmatmul.mubr.bf16.gmra.mrb[0].mxu0 %v7119
        %v7209 = vpop.f32.mrb[0].mxu0
        %v7210 = vadd.f32 0.0, %v7209
        %v7211 = vpop.f32.mrb[0].mxu0
        %v7212 = vpop.f32.mrb[0].mxu0
        %v7213 = vadd.f32 0.0, %v7212
        %v7214 = vpop.f32.mrb[0].mxu0
        %7215 = vmatprep.mubr.bf16.mxu0 0
        %7216 = vmatmul.mubr.bf16.gmra.mrb[0].mxu0 %v7122
        %v7217 = vpop.f32.mrb[0].mxu0
        %v7218 = vadd.f32 0.0, %v7217
        %v7219 = vpop.f32.mrb[0].mxu0
        %v7220 = vpop.f32.mrb[0].mxu0
        %v7221 = vadd.f32 0.0, %v7220
        %v7222 = vpop.f32.mrb[0].mxu0
        %7223 = vdwg.mxu0
        %v7224 = vadd.f32 %v7022, %v7162
        %v7225 = vadd.f32 %v7023, %v7165
        %v7226 = vadd.f32 %v7024, %v7170
        %v7227 = vadd.f32 %v7025, %v7173
        %v7228 = vadd.f32 %v7026, %v7178
        %v7229 = vadd.f32 %v7027, %v7181
        %v7230 = vadd.f32 %v7028, %v7186
        %v7231 = vadd.f32 %v7029, %v7189
        %v7232 = vadd.f32 %v7030, %v7194
        %v7233 = vadd.f32 %v7031, %v7197
        %v7234 = vadd.f32 %v7032, %v7202
        %v7235 = vadd.f32 %v7033, %v7205
        %v7236 = vadd.f32 %v7034, %v7210
        %v7237 = vadd.f32 %v7035, %v7213
        %v7238 = vadd.f32 %v7036, %v7218
        %v7239 = vadd.f32 %v7037, %v7221
        %v7240 = vld [vmem:[%s7041 + $0x8] sm:$0xe]
        %v7241 = vld [vmem:[%s7041 + $0xc] sm:$0xf]
        %v7242 = vld [vmem:[%s7041 + $0x10] sm:$0x1]
        %v7243 = vld [vmem:[%s7041 + $0x24] sm:$0xe]
        %v7244 = vld [vmem:[%s7041 + $0x28] sm:$0xf]
        %v7245 = vld [vmem:[%s7041 + $0x2c] sm:$0x1]
        %v7246 = vld [vmem:[%s7041 + $0x40] sm:$0xe]
        %v7247 = vld [vmem:[%s7041 + $0x44] sm:$0xf]
        %v7248 = vld [vmem:[%s7041 + $0x48] sm:$0x1]
        %v7249 = vld [vmem:[%s7041 + $0x5c] sm:$0xe]
        %v7250 = vld [vmem:[%s7041 + $0x60] sm:$0xf]
        %v7251 = vld [vmem:[%s7041 + $0x64] sm:$0x1]
        %v7252 = vld [vmem:[%s7041 + $0x78] sm:$0xe]
        %v7253 = vld [vmem:[%s7041 + $0x7c] sm:$0xf]
        %v7254 = vld [vmem:[%s7041 + $0x80] sm:$0x1]
        %v7255 = vld [vmem:[%s7041 + $0x94] sm:$0xe]
        %v7256 = vld [vmem:[%s7041 + $0x98] sm:$0xf]
        %v7257 = vld [vmem:[%s7041 + $0x9c] sm:$0x1]
        %v7258 = vld [vmem:[%s7041 + $0xb0] sm:$0xe]
        %v7259 = vld [vmem:[%s7041 + $0xb4] sm:$0xf]
        %v7260 = vld [vmem:[%s7041 + $0xb8] sm:$0x1]
        %v7261 = vld [vmem:[%s7041 + $0xcc] sm:$0xe]
        %v7262 = vld [vmem:[%s7041 + $0xd0] sm:$0xf]
        %v7263 = vld [vmem:[%s7041 + $0xd4] sm:$0x1]
        %v7288 = vrot.slane %v7240, 5
        %v7289 = vrot.slane %v7288, 4
        %v7290 = vrot.slane %v7241, 5
        %v7291 = vsel %vm663, %v7289, %v7290
        %v7292 = vrot.slane %v7290, 4
        %v7293 = vrot.slane %v7242, 5
        %v7294 = vsel %vm663, %v7292, %v7293
        %v7295 = vrot.slane %v7243, 5
        %v7296 = vrot.slane %v7295, 4
        %v7297 = vrot.slane %v7244, 5
        %v7298 = vsel %vm663, %v7296, %v7297
        %v7299 = vrot.slane %v7297, 4
        %v7300 = vrot.slane %v7245, 5
        %v7301 = vsel %vm663, %v7299, %v7300
        %v7302 = vrot.slane %v7246, 5
        %v7303 = vrot.slane %v7302, 4
        %v7304 = vrot.slane %v7247, 5
        %v7305 = vsel %vm663, %v7303, %v7304
        %v7306 = vrot.slane %v7304, 4
        %v7307 = vrot.slane %v7248, 5
        %v7308 = vsel %vm663, %v7306, %v7307
        %v7309 = vrot.slane %v7249, 5
        %v7310 = vrot.slane %v7309, 4
        %v7311 = vrot.slane %v7250, 5
        %v7312 = vsel %vm663, %v7310, %v7311
        %v7313 = vrot.slane %v7311, 4
        %v7314 = vrot.slane %v7251, 5
        %v7315 = vsel %vm663, %v7313, %v7314
        %v7316 = vrot.slane %v7252, 5
        %v7317 = vrot.slane %v7316, 4
        %v7318 = vrot.slane %v7253, 5
        %v7319 = vsel %vm663, %v7317, %v7318
        %v7320 = vrot.slane %v7318, 4
        %v7321 = vrot.slane %v7254, 5
        %v7322 = vsel %vm663, %v7320, %v7321
        %v7323 = vrot.slane %v7255, 5
        %v7324 = vrot.slane %v7323, 4
        %v7325 = vrot.slane %v7256, 5
        %v7326 = vsel %vm663, %v7324, %v7325
        %v7327 = vrot.slane %v7325, 4
        %v7328 = vrot.slane %v7257, 5
        %v7329 = vsel %vm663, %v7327, %v7328
        %v7330 = vrot.slane %v7258, 5
        %v7331 = vrot.slane %v7330, 4
        %v7332 = vrot.slane %v7259, 5
        %v7333 = vsel %vm663, %v7331, %v7332
        %v7334 = vrot.slane %v7332, 4
        %v7335 = vrot.slane %v7260, 5
        %v7336 = vsel %vm663, %v7334, %v7335
        %v7337 = vrot.slane %v7261, 5
        %v7338 = vrot.slane %v7337, 4
        %v7339 = vrot.slane %v7262, 5
        %v7340 = vsel %vm663, %v7338, %v7339
        %v7341 = vrot.slane %v7339, 4
        %v7342 = vrot.slane %v7263, 5
        %v7343 = vsel %vm663, %v7341, %v7342
        %s7344 = scalar_lea.vmem [#allocation10], 100
        %v7345 = vld [vmem:[%s7344] sm:$0xf]
        %v7346 = vunpack.c.l.b16 %v7291
        %v7347 = vunpack.c.l.b16 %v7294
        %v7348 = vunpack.c.l.b16 %v7298
        %v7349 = vunpack.c.l.b16 %v7301
        %v7350 = vunpack.c.l.b16 %v7305
        %v7351 = vunpack.c.l.b16 %v7308
        %v7352 = vunpack.c.l.b16 %v7312
        %v7353 = vunpack.c.l.b16 %v7315
        %v7354 = vunpack.c.l.b16 %v7319
        %v7355 = vunpack.c.l.b16 %v7322
        %v7356 = vunpack.c.l.b16 %v7326
        %v7357 = vunpack.c.l.b16 %v7329
        %v7358 = vunpack.c.l.b16 %v7333
        %v7359 = vunpack.c.l.b16 %v7336
        %v7360 = vunpack.c.l.b16 %v7340
        %v7361 = vunpack.c.l.b16 %v7343
        %v7362 = vpack.c.b16 %v7347, %v7346
        %v7363 = vpack.c.b16 %v7349, %v7348
        %v7364 = vpack.c.b16 %v7351, %v7350
        %v7365 = vpack.c.b16 %v7353, %v7352
        %v7366 = vpack.c.b16 %v7355, %v7354
        %v7367 = vpack.c.b16 %v7357, %v7356
        %v7368 = vpack.c.b16 %v7359, %v7358
        %v7369 = vpack.c.b16 %v7361, %v7360
        %v7371 = vsel %vm761, %v7362, 0
        %v7374 = vsel %vm761, %v7363, 0
        %v7377 = vsel %vm761, %v7364, 0
        %v7380 = vsel %vm761, %v7365, 0
        %v7383 = vsel %vm761, %v7366, 0
        %v7386 = vsel %vm761, %v7367, 0
        %v7389 = vsel %vm761, %v7368, 0
        %v7392 = vsel %vm761, %v7369, 0
        %v7395 = vsel %vm786, %v7345, 0
        %7397 = vmatprep.subr.bf16.mxu0 0
        %7398 = vmatpush1.bf16.msra.mxu0 %v7395
        %7399 = vmatprep.subr.bf16.mxu0 0
        %7400 = vmatpush1.bf16.msra.mxu0 0
        %7401 = vmatprep.subr.bf16.mxu0 0
        %7402 = vmatpush1.bf16.msra.mxu0 0
        %7403 = vmatprep.subr.bf16.mxu0 0
        %7404 = vmatpush1.bf16.msra.mxu0 0
        %7405 = vmatprep.subr.bf16.mxu0 0
        %7406 = vmatpush1.bf16.msra.mxu0 0
        %7407 = vmatprep.subr.bf16.mxu0 0
        %7408 = vmatpush1.bf16.msra.mxu0 0
        %7409 = vmatprep.subr.bf16.mxu0 0
        %7410 = vmatpush1.bf16.msra.mxu0 0
        %7411 = vmatprep.subr.bf16.mxu0 0
        %7412 = vmatpush1.bf16.msra.mxu0 0
        %7413 = vmatprep.subr.bf16.mxu0 0
        %7414 = vmatpush1.bf16.msra.mxu0 0
        %7415 = vmatprep.subr.bf16.mxu0 0
        %7416 = vmatpush1.bf16.msra.mxu0 0
        %7417 = vmatprep.subr.bf16.mxu0 0
        %7418 = vmatpush1.bf16.msra.mxu0 0
        %7419 = vmatprep.subr.bf16.mxu0 0
        %7420 = vmatpush1.bf16.msra.mxu0 0
        %7421 = vmatprep.subr.bf16.mxu0 0
        %7422 = vmatpush1.bf16.msra.mxu0 0
        %7423 = vmatprep.subr.bf16.mxu0 0
        %7424 = vmatpush1.bf16.msra.mxu0 0
        %7425 = vmatprep.subr.bf16.mxu0 0
        %7426 = vmatpush1.bf16.msra.mxu0 0
        %7427 = vmatprep.subr.bf16.mxu0 0
        %7428 = vmatpush1.bf16.msra.mxu0 0
        %7429 = vmatprep.mubr.bf16.mxu0 0
        %7430 = vmatmul.mubr.bf16.gmra.mrb[0].mxu0 %v7371
        %v7431 = vpop.f32.mrb[0].mxu0
        %v7432 = vadd.f32 0.0, %v7431
        %v7433 = vpop.f32.mrb[0].mxu0
        %v7434 = vpop.f32.mrb[0].mxu0
        %v7435 = vadd.f32 0.0, %v7434
        %v7436 = vpop.f32.mrb[0].mxu0
        %7437 = vmatprep.mubr.bf16.mxu0 0
        %7438 = vmatmul.mubr.bf16.gmra.mrb[0].mxu0 %v7374
        %v7439 = vpop.f32.mrb[0].mxu0
        %v7440 = vadd.f32 0.0, %v7439
        %v7441 = vpop.f32.mrb[0].mxu0
        %v7442 = vpop.f32.mrb[0].mxu0
        %v7443 = vadd.f32 0.0, %v7442
        %v7444 = vpop.f32.mrb[0].mxu0
        %7445 = vmatprep.mubr.bf16.mxu0 0
        %7446 = vmatmul.mubr.bf16.gmra.mrb[0].mxu0 %v7377
        %v7447 = vpop.f32.mrb[0].mxu0
        %v7448 = vadd.f32 0.0, %v7447
        %v7449 = vpop.f32.mrb[0].mxu0
        %v7450 = vpop.f32.mrb[0].mxu0
        %v7451 = vadd.f32 0.0, %v7450
        %v7452 = vpop.f32.mrb[0].mxu0
        %7453 = vmatprep.mubr.bf16.mxu0 0
        %7454 = vmatmul.mubr.bf16.gmra.mrb[0].mxu0 %v7380
        %v7455 = vpop.f32.mrb[0].mxu0
        %v7456 = vadd.f32 0.0, %v7455
        %v7457 = vpop.f32.mrb[0].mxu0
        %v7458 = vpop.f32.mrb[0].mxu0
        %v7459 = vadd.f32 0.0, %v7458
        %v7460 = vpop.f32.mrb[0].mxu0
        %7461 = vmatprep.mubr.bf16.mxu0 0
        %7462 = vmatmul.mubr.bf16.gmra.mrb[0].mxu0 %v7383
        %v7463 = vpop.f32.mrb[0].mxu0
        %v7464 = vadd.f32 0.0, %v7463
        %v7465 = vpop.f32.mrb[0].mxu0
        %v7466 = vpop.f32.mrb[0].mxu0
        %v7467 = vadd.f32 0.0, %v7466
        %v7468 = vpop.f32.mrb[0].mxu0
        %7469 = vmatprep.mubr.bf16.mxu0 0
        %7470 = vmatmul.mubr.bf16.gmra.mrb[0].mxu0 %v7386
        %v7471 = vpop.f32.mrb[0].mxu0
        %v7472 = vadd.f32 0.0, %v7471
        %v7473 = vpop.f32.mrb[0].mxu0
        %v7474 = vpop.f32.mrb[0].mxu0
        %v7475 = vadd.f32 0.0, %v7474
        %v7476 = vpop.f32.mrb[0].mxu0
        %7477 = vmatprep.mubr.bf16.mxu0 0
        %7478 = vmatmul.mubr.bf16.gmra.mrb[0].mxu0 %v7389
        %v7479 = vpop.f32.mrb[0].mxu0
        %v7480 = vadd.f32 0.0, %v7479
        %v7481 = vpop.f32.mrb[0].mxu0
        %v7482 = vpop.f32.mrb[0].mxu0
        %v7483 = vadd.f32 0.0, %v7482
        %v7484 = vpop.f32.mrb[0].mxu0
        %7485 = vmatprep.mubr.bf16.mxu0 0
        %7486 = vmatmul.mubr.bf16.gmra.mrb[0].mxu0 %v7392
        %v7487 = vpop.f32.mrb[0].mxu0
        %v7488 = vadd.f32 0.0, %v7487
        %v7489 = vpop.f32.mrb[0].mxu0
        %v7490 = vpop.f32.mrb[0].mxu0
        %v7491 = vadd.f32 0.0, %v7490
        %v7492 = vpop.f32.mrb[0].mxu0
        %7493 = vdwg.mxu0
        %v7494 = vadd.f32 %v7224, %v7432
        %v7495 = vadd.f32 %v7225, %v7435
        %v7496 = vadd.f32 %v7226, %v7440
        %v7497 = vadd.f32 %v7227, %v7443
        %v7498 = vadd.f32 %v7228, %v7448
        %v7499 = vadd.f32 %v7229, %v7451
        %v7500 = vadd.f32 %v7230, %v7456
        %v7501 = vadd.f32 %v7231, %v7459
        %v7502 = vadd.f32 %v7232, %v7464
        %v7503 = vadd.f32 %v7233, %v7467
        %v7504 = vadd.f32 %v7234, %v7472
        %v7505 = vadd.f32 %v7235, %v7475
        %v7506 = vadd.f32 %v7236, %v7480
        %v7507 = vadd.f32 %v7237, %v7483
        %v7508 = vadd.f32 %v7238, %v7488
        %v7509 = vadd.f32 %v7239, %v7491
        %v7510 = vld [vmem:[%s7041 + $0x10] sm:$0xc]
        %v7511 = vld [vmem:[%s7041 + $0x14] sm:$0xf]
        %v7512 = vld [vmem:[%s7041 + $0x18] sm:$0x3]
        %v7513 = vld [vmem:[%s7041 + $0x2c] sm:$0xc]
        %v7514 = vld [vmem:[%s7041 + $0x30] sm:$0xf]
        %v7515 = vld [vmem:[%s7041 + $0x34] sm:$0x3]
        %v7516 = vld [vmem:[%s7041 + $0x48] sm:$0xc]
        %v7517 = vld [vmem:[%s7041 + $0x4c] sm:$0xf]
        %v7518 = vld [vmem:[%s7041 + $0x50] sm:$0x3]
        %v7519 = vld [vmem:[%s7041 + $0x64] sm:$0xc]
        %v7520 = vld [vmem:[%s7041 + $0x68] sm:$0xf]
        %v7521 = vld [vmem:[%s7041 + $0x6c] sm:$0x3]
        %v7522 = vld [vmem:[%s7041 + $0x80] sm:$0xc]
        %v7523 = vld [vmem:[%s7041 + $0x84] sm:$0xf]
        %v7524 = vld [vmem:[%s7041 + $0x88] sm:$0x3]
        %v7525 = vld [vmem:[%s7041 + $0x9c] sm:$0xc]
        %v7526 = vld [vmem:[%s7041 + $0xa0] sm:$0xf]
        %v7527 = vld [vmem:[%s7041 + $0xa4] sm:$0x3]
        %v7528 = vld [vmem:[%s7041 + $0xb8] sm:$0xc]
        %v7529 = vld [vmem:[%s7041 + $0xbc] sm:$0xf]
        %v7530 = vld [vmem:[%s7041 + $0xc0] sm:$0x3]
        %v7531 = vld [vmem:[%s7041 + $0xd4] sm:$0xc]
        %v7532 = vld [vmem:[%s7041 + $0xd8] sm:$0xf]
        %v7533 = vld [vmem:[%s7041 + $0xdc] sm:$0x3]
        %v7558 = vrot.slane %v7510, 6
        %v7559 = vrot.slane %v7558, 4
        %v7560 = vrot.slane %v7511, 6
        %v7561 = vsel %vm1012, %v7559, %v7560
        %v7562 = vrot.slane %v7560, 4
        %v7563 = vrot.slane %v7512, 6
        %v7564 = vsel %vm1012, %v7562, %v7563
        %v7565 = vrot.slane %v7513, 6
        %v7566 = vrot.slane %v7565, 4
        %v7567 = vrot.slane %v7514, 6
        %v7568 = vsel %vm1012, %v7566, %v7567
        %v7569 = vrot.slane %v7567, 4
        %v7570 = vrot.slane %v7515, 6
        %v7571 = vsel %vm1012, %v7569, %v7570
        %v7572 = vrot.slane %v7516, 6
        %v7573 = vrot.slane %v7572, 4
        %v7574 = vrot.slane %v7517, 6
        %v7575 = vsel %vm1012, %v7573, %v7574
        %v7576 = vrot.slane %v7574, 4
        %v7577 = vrot.slane %v7518, 6
        %v7578 = vsel %vm1012, %v7576, %v7577
        %v7579 = vrot.slane %v7519, 6
        %v7580 = vrot.slane %v7579, 4
        %v7581 = vrot.slane %v7520, 6
        %v7582 = vsel %vm1012, %v7580, %v7581
        %v7583 = vrot.slane %v7581, 4
        %v7584 = vrot.slane %v7521, 6
        %v7585 = vsel %vm1012, %v7583, %v7584
        %v7586 = vrot.slane %v7522, 6
        %v7587 = vrot.slane %v7586, 4
        %v7588 = vrot.slane %v7523, 6
        %v7589 = vsel %vm1012, %v7587, %v7588
        %v7590 = vrot.slane %v7588, 4
        %v7591 = vrot.slane %v7524, 6
        %v7592 = vsel %vm1012, %v7590, %v7591
        %v7593 = vrot.slane %v7525, 6
        %v7594 = vrot.slane %v7593, 4
        %v7595 = vrot.slane %v7526, 6
        %v7596 = vsel %vm1012, %v7594, %v7595
        %v7597 = vrot.slane %v7595, 4
        %v7598 = vrot.slane %v7527, 6
        %v7599 = vsel %vm1012, %v7597, %v7598
        %v7600 = vrot.slane %v7528, 6
        %v7601 = vrot.slane %v7600, 4
        %v7602 = vrot.slane %v7529, 6
        %v7603 = vsel %vm1012, %v7601, %v7602
        %v7604 = vrot.slane %v7602, 4
        %v7605 = vrot.slane %v7530, 6
        %v7606 = vsel %vm1012, %v7604, %v7605
        %v7607 = vrot.slane %v7531, 6
        %v7608 = vrot.slane %v7607, 4
        %v7609 = vrot.slane %v7532, 6
        %v7610 = vsel %vm1012, %v7608, %v7609
        %v7611 = vrot.slane %v7609, 4
        %v7612 = vrot.slane %v7533, 6
        %v7613 = vsel %vm1012, %v7611, %v7612
        %s7614 = scalar_lea.vmem [#allocation10], 104
        %v7615 = vld [vmem:[%s7614] sm:$0xf]
        %v7616 = vunpack.c.l.b16 %v7561
        %v7617 = vunpack.c.l.b16 %v7564
        %v7618 = vunpack.c.l.b16 %v7568
        %v7619 = vunpack.c.l.b16 %v7571
        %v7620 = vunpack.c.l.b16 %v7575
        %v7621 = vunpack.c.l.b16 %v7578
        %v7622 = vunpack.c.l.b16 %v7582
        %v7623 = vunpack.c.l.b16 %v7585
        %v7624 = vunpack.c.l.b16 %v7589
        %v7625 = vunpack.c.l.b16 %v7592
        %v7626 = vunpack.c.l.b16 %v7596
        %v7627 = vunpack.c.l.b16 %v7599
        %v7628 = vunpack.c.l.b16 %v7603
        %v7629 = vunpack.c.l.b16 %v7606
        %v7630 = vunpack.c.l.b16 %v7610
        %v7631 = vunpack.c.l.b16 %v7613
        %v7632 = vpack.c.b16 %v7617, %v7616
        %v7633 = vpack.c.b16 %v7619, %v7618
        %v7634 = vpack.c.b16 %v7621, %v7620
        %v7635 = vpack.c.b16 %v7623, %v7622
        %v7636 = vpack.c.b16 %v7625, %v7624
        %v7637 = vpack.c.b16 %v7627, %v7626
        %v7638 = vpack.c.b16 %v7629, %v7628
        %v7639 = vpack.c.b16 %v7631, %v7630
        %v7641 = vsel %vm761, %v7632, 0
        %v7644 = vsel %vm761, %v7633, 0
        %v7647 = vsel %vm761, %v7634, 0
        %v7650 = vsel %vm761, %v7635, 0
        %v7653 = vsel %vm761, %v7636, 0
        %v7656 = vsel %vm761, %v7637, 0
        %v7659 = vsel %vm761, %v7638, 0
        %v7662 = vsel %vm761, %v7639, 0
        %v7665 = vsel %vm786, %v7615, 0
        %7667 = vmatprep.subr.bf16.mxu0 0
        %7668 = vmatpush1.bf16.msra.mxu0 %v7665
        %7669 = vmatprep.subr.bf16.mxu0 0
        %7670 = vmatpush1.bf16.msra.mxu0 0
        %7671 = vmatprep.subr.bf16.mxu0 0
        %7672 = vmatpush1.bf16.msra.mxu0 0
        %7673 = vmatprep.subr.bf16.mxu0 0
        %7674 = vmatpush1.bf16.msra.mxu0 0
        %7675 = vmatprep.subr.bf16.mxu0 0
        %7676 = vmatpush1.bf16.msra.mxu0 0
        %7677 = vmatprep.subr.bf16.mxu0 0
        %7678 = vmatpush1.bf16.msra.mxu0 0
        %7679 = vmatprep.subr.bf16.mxu0 0
        %7680 = vmatpush1.bf16.msra.mxu0 0
        %7681 = vmatprep.subr.bf16.mxu0 0
        %7682 = vmatpush1.bf16.msra.mxu0 0
        %7683 = vmatprep.subr.bf16.mxu0 0
        %7684 = vmatpush1.bf16.msra.mxu0 0
        %7685 = vmatprep.subr.bf16.mxu0 0
        %7686 = vmatpush1.bf16.msra.mxu0 0
        %7687 = vmatprep.subr.bf16.mxu0 0
        %7688 = vmatpush1.bf16.msra.mxu0 0
        %7689 = vmatprep.subr.bf16.mxu0 0
        %7690 = vmatpush1.bf16.msra.mxu0 0
        %7691 = vmatprep.subr.bf16.mxu0 0
        %7692 = vmatpush1.bf16.msra.mxu0 0
        %7693 = vmatprep.subr.bf16.mxu0 0
        %7694 = vmatpush1.bf16.msra.mxu0 0
        %7695 = vmatprep.subr.bf16.mxu0 0
        %7696 = vmatpush1.bf16.msra.mxu0 0
        %7697 = vmatprep.subr.bf16.mxu0 0
        %7698 = vmatpush1.bf16.msra.mxu0 0
        %7699 = vmatprep.mubr.bf16.mxu0 0
        %7700 = vmatmul.mubr.bf16.gmra.mrb[0].mxu0 %v7641
        %v7701 = vpop.f32.mrb[0].mxu0
        %v7702 = vadd.f32 0.0, %v7701
        %v7703 = vpop.f32.mrb[0].mxu0
        %v7704 = vpop.f32.mrb[0].mxu0
        %v7705 = vadd.f32 0.0, %v7704
        %v7706 = vpop.f32.mrb[0].mxu0
        %7707 = vmatprep.mubr.bf16.mxu0 0
        %7708 = vmatmul.mubr.bf16.gmra.mrb[0].mxu0 %v7644
        %v7709 = vpop.f32.mrb[0].mxu0
        %v7710 = vadd.f32 0.0, %v7709
        %v7711 = vpop.f32.mrb[0].mxu0
        %v7712 = vpop.f32.mrb[0].mxu0
        %v7713 = vadd.f32 0.0, %v7712
        %v7714 = vpop.f32.mrb[0].mxu0
        %7715 = vmatprep.mubr.bf16.mxu0 0
        %7716 = vmatmul.mubr.bf16.gmra.mrb[0].mxu0 %v7647
        %v7717 = vpop.f32.mrb[0].mxu0
        %v7718 = vadd.f32 0.0, %v7717
        %v7719 = vpop.f32.mrb[0].mxu0
        %v7720 = vpop.f32.mrb[0].mxu0
        %v7721 = vadd.f32 0.0, %v7720
        %v7722 = vpop.f32.mrb[0].mxu0
        %7723 = vmatprep.mubr.bf16.mxu0 0
        %7724 = vmatmul.mubr.bf16.gmra.mrb[0].mxu0 %v7650
        %v7725 = vpop.f32.mrb[0].mxu0
        %v7726 = vadd.f32 0.0, %v7725
        %v7727 = vpop.f32.mrb[0].mxu0
        %v7728 = vpop.f32.mrb[0].mxu0
        %v7729 = vadd.f32 0.0, %v7728
        %v7730 = vpop.f32.mrb[0].mxu0
        %7731 = vmatprep.mubr.bf16.mxu0 0
        %7732 = vmatmul.mubr.bf16.gmra.mrb[0].mxu0 %v7653
        %v7733 = vpop.f32.mrb[0].mxu0
        %v7734 = vadd.f32 0.0, %v7733
        %v7735 = vpop.f32.mrb[0].mxu0
        %v7736 = vpop.f32.mrb[0].mxu0
        %v7737 = vadd.f32 0.0, %v7736
        %v7738 = vpop.f32.mrb[0].mxu0
        %7739 = vmatprep.mubr.bf16.mxu0 0
        %7740 = vmatmul.mubr.bf16.gmra.mrb[0].mxu0 %v7656
        %v7741 = vpop.f32.mrb[0].mxu0
        %v7742 = vadd.f32 0.0, %v7741
        %v7743 = vpop.f32.mrb[0].mxu0
        %v7744 = vpop.f32.mrb[0].mxu0
        %v7745 = vadd.f32 0.0, %v7744
        %v7746 = vpop.f32.mrb[0].mxu0
        %7747 = vmatprep.mubr.bf16.mxu0 0
        %7748 = vmatmul.mubr.bf16.gmra.mrb[0].mxu0 %v7659
        %v7749 = vpop.f32.mrb[0].mxu0
        %v7750 = vadd.f32 0.0, %v7749
        %v7751 = vpop.f32.mrb[0].mxu0
        %v7752 = vpop.f32.mrb[0].mxu0
        %v7753 = vadd.f32 0.0, %v7752
        %v7754 = vpop.f32.mrb[0].mxu0
        %7755 = vmatprep.mubr.bf16.mxu0 0
        %7756 = vmatmul.mubr.bf16.gmra.mrb[0].mxu0 %v7662
        %v7757 = vpop.f32.mrb[0].mxu0
        %v7758 = vadd.f32 0.0, %v7757
        %v7759 = vpop.f32.mrb[0].mxu0
        %v7760 = vpop.f32.mrb[0].mxu0
        %v7761 = vadd.f32 0.0, %v7760
        %v7762 = vpop.f32.mrb[0].mxu0
        %7763 = vdwg.mxu0
        %v7764 = vadd.f32 %v7494, %v7702
        %v7765 = vadd.f32 %v7495, %v7705
        %v7766 = vadd.f32 %v7496, %v7710
        %v7767 = vadd.f32 %v7497, %v7713
        %v7768 = vadd.f32 %v7498, %v7718
        %v7769 = vadd.f32 %v7499, %v7721
        %v7770 = vadd.f32 %v7500, %v7726
        %v7771 = vadd.f32 %v7501, %v7729
        %v7772 = vadd.f32 %v7502, %v7734
        %v7773 = vadd.f32 %v7503, %v7737
        %v7774 = vadd.f32 %v7504, %v7742
        %v7775 = vadd.f32 %v7505, %v7745
        %v7776 = vadd.f32 %v7506, %v7750
        %v7777 = vadd.f32 %v7507, %v7753
        %v7778 = vadd.f32 %v7508, %v7758
        %v7779 = vadd.f32 %v7509, %v7761
        %s7780 = scalar_lea.vmem [#allocation14], 3
        %v7781 = vld [vmem:[%s7780] sm:$0x1]
        %v7783 = vlaneseq
        %v7784 = vshrl.u32 %v7783, 7
        %v7785 = vsub.s32 0, %v7784
        %v7786 = vrot.slane %v7781, %v7785
        %v7788 = vmul.f32 %v7764, %v7786
        %v7789 = vmul.f32 %v7765, %v7786
        %v7790 = vmul.f32 %v7766, %v7786
        %v7791 = vmul.f32 %v7767, %v7786
        %v7792 = vmul.f32 %v7768, %v7786
        %v7793 = vmul.f32 %v7769, %v7786
        %v7794 = vmul.f32 %v7770, %v7786
        %v7795 = vmul.f32 %v7771, %v7786
        %v7796 = vmul.f32 %v7772, %v7786
        %v7797 = vmul.f32 %v7773, %v7786
        %v7798 = vmul.f32 %v7774, %v7786
        %v7799 = vmul.f32 %v7775, %v7786
        %v7800 = vmul.f32 %v7776, %v7786
        %v7801 = vmul.f32 %v7777, %v7786
        %v7802 = vmul.f32 %v7778, %v7786
        %v7803 = vmul.f32 %v7779, %v7786
        %s7804 = scalar_lea.vmem [#allocation16], 3
        %v7805 = vld [vmem:[%s7804] sm:$0x1]
        %v7807 = vlaneseq
        %v7808 = vshrl.u32 %v7807, 7
        %v7809 = vsub.s32 0, %v7808
        %v7810 = vrot.slane %v7805, %v7809
        %v7812 = vadd.f32 %v7788, %v7810
        %v7813 = vadd.f32 %v7789, %v7810
        %v7814 = vadd.f32 %v7790, %v7810
        %v7815 = vadd.f32 %v7791, %v7810
        %v7816 = vadd.f32 %v7792, %v7810
        %v7817 = vadd.f32 %v7793, %v7810
        %v7818 = vadd.f32 %v7794, %v7810
        %v7819 = vadd.f32 %v7795, %v7810
        %v7820 = vadd.f32 %v7796, %v7810
        %v7821 = vadd.f32 %v7797, %v7810
        %v7822 = vadd.f32 %v7798, %v7810
        %v7823 = vadd.f32 %v7799, %v7810
        %v7824 = vadd.f32 %v7800, %v7810
        %v7825 = vadd.f32 %v7801, %v7810
        %v7826 = vadd.f32 %v7802, %v7810
        %v7827 = vadd.f32 %v7803, %v7810
        %v7828 = vmax.f32 %v7812, 0.0
        %v7829 = vmax.f32 %v7813, 0.0
        %v7830 = vmax.f32 %v7814, 0.0
        %v7831 = vmax.f32 %v7815, 0.0
        %v7832 = vmax.f32 %v7816, 0.0
        %v7833 = vmax.f32 %v7817, 0.0
        %v7834 = vmax.f32 %v7818, 0.0
        %v7835 = vmax.f32 %v7819, 0.0
        %v7836 = vmax.f32 %v7820, 0.0
        %v7837 = vmax.f32 %v7821, 0.0
        %v7838 = vmax.f32 %v7822, 0.0
        %v7839 = vmax.f32 %v7823, 0.0
        %v7840 = vmax.f32 %v7824, 0.0
        %v7841 = vmax.f32 %v7825, 0.0
        %v7842 = vmax.f32 %v7826, 0.0
        %v7843 = vmax.f32 %v7827, 0.0
        %v7844 = vpack.c.bf16 %v7829, %v7828
        %v7845 = vpack.c.bf16 %v7831, %v7830
        %v7846 = vpack.c.bf16 %v7833, %v7832
        %v7847 = vpack.c.bf16 %v7835, %v7834
        %v7848 = vpack.c.bf16 %v7837, %v7836
        %v7849 = vpack.c.bf16 %v7839, %v7838
        %v7850 = vpack.c.bf16 %v7841, %v7840
        %v7851 = vpack.c.bf16 %v7843, %v7842
        %s7852 = scalar_lea.vmem [#allocation11], 12
        %v7853 = vld [vmem:[%s7852] sm:$0xf]
        %v7855 = vsel %vm761, %v7844, 0
        %v7858 = vsel %vm761, %v7845, 0
        %v7861 = vsel %vm761, %v7846, 0
        %v7864 = vsel %vm761, %v7847, 0
        %v7867 = vsel %vm761, %v7848, 0
        %v7870 = vsel %vm761, %v7849, 0
        %v7873 = vsel %vm761, %v7850, 0
        %v7876 = vsel %vm761, %v7851, 0
        %v7879 = vsel %vm786, %v7853, 0
        %7881 = vmatprep.subr.bf16.mxu0 0
        %7882 = vmatpush1.bf16.msra.mxu0 %v7879
        %7883 = vmatprep.subr.bf16.mxu0 0
        %7884 = vmatpush1.bf16.msra.mxu0 0
        %7885 = vmatprep.subr.bf16.mxu0 0
        %7886 = vmatpush1.bf16.msra.mxu0 0
        %7887 = vmatprep.subr.bf16.mxu0 0
        %7888 = vmatpush1.bf16.msra.mxu0 0
        %7889 = vmatprep.subr.bf16.mxu0 0
        %7890 = vmatpush1.bf16.msra.mxu0 0
        %7891 = vmatprep.subr.bf16.mxu0 0
        %7892 = vmatpush1.bf16.msra.mxu0 0
        %7893 = vmatprep.subr.bf16.mxu0 0
        %7894 = vmatpush1.bf16.msra.mxu0 0
        %7895 = vmatprep.subr.bf16.mxu0 0
        %7896 = vmatpush1.bf16.msra.mxu0 0
        %7897 = vmatprep.subr.bf16.mxu0 0
        %7898 = vmatpush1.bf16.msra.mxu0 0
        %7899 = vmatprep.subr.bf16.mxu0 0
        %7900 = vmatpush1.bf16.msra.mxu0 0
        %7901 = vmatprep.subr.bf16.mxu0 0
        %7902 = vmatpush1.bf16.msra.mxu0 0
        %7903 = vmatprep.subr.bf16.mxu0 0
        %7904 = vmatpush1.bf16.msra.mxu0 0
        %7905 = vmatprep.subr.bf16.mxu0 0
        %7906 = vmatpush1.bf16.msra.mxu0 0
        %7907 = vmatprep.subr.bf16.mxu0 0
        %7908 = vmatpush1.bf16.msra.mxu0 0
        %7909 = vmatprep.subr.bf16.mxu0 0
        %7910 = vmatpush1.bf16.msra.mxu0 0
        %7911 = vmatprep.subr.bf16.mxu0 0
        %7912 = vmatpush1.bf16.msra.mxu0 0
        %7913 = vmatprep.mubr.bf16.mxu0 0
        %7914 = vmatmul.mubr.bf16.gmra.mrb[0].mxu0 %v7855
        %v7915 = vpop.f32.mrb[0].mxu0
        %v7916 = vadd.f32 0.0, %v7915
        %v7917 = vpop.f32.mrb[0].mxu0
        %v7918 = vpop.f32.mrb[0].mxu0
        %v7919 = vadd.f32 0.0, %v7918
        %v7920 = vpop.f32.mrb[0].mxu0
        %7921 = vmatprep.mubr.bf16.mxu0 0
        %7922 = vmatmul.mubr.bf16.gmra.mrb[0].mxu0 %v7858
        %v7923 = vpop.f32.mrb[0].mxu0
        %v7924 = vadd.f32 0.0, %v7923
        %v7925 = vpop.f32.mrb[0].mxu0
        %v7926 = vpop.f32.mrb[0].mxu0
        %v7927 = vadd.f32 0.0, %v7926
        %v7928 = vpop.f32.mrb[0].mxu0
        %7929 = vmatprep.mubr.bf16.mxu0 0
        %7930 = vmatmul.mubr.bf16.gmra.mrb[0].mxu0 %v7861
        %v7931 = vpop.f32.mrb[0].mxu0
        %v7932 = vadd.f32 0.0, %v7931
        %v7933 = vpop.f32.mrb[0].mxu0
        %v7934 = vpop.f32.mrb[0].mxu0
        %v7935 = vadd.f32 0.0, %v7934
        %v7936 = vpop.f32.mrb[0].mxu0
        %7937 = vmatprep.mubr.bf16.mxu0 0
        %7938 = vmatmul.mubr.bf16.gmra.mrb[0].mxu0 %v7864
        %v7939 = vpop.f32.mrb[0].mxu0
        %v7940 = vadd.f32 0.0, %v7939
        %v7941 = vpop.f32.mrb[0].mxu0
        %v7942 = vpop.f32.mrb[0].mxu0
        %v7943 = vadd.f32 0.0, %v7942
        %v7944 = vpop.f32.mrb[0].mxu0
        %7945 = vmatprep.mubr.bf16.mxu0 0
        %7946 = vmatmul.mubr.bf16.gmra.mrb[0].mxu0 %v7867
        %v7947 = vpop.f32.mrb[0].mxu0
        %v7948 = vadd.f32 0.0, %v7947
        %v7949 = vpop.f32.mrb[0].mxu0
        %v7950 = vpop.f32.mrb[0].mxu0
        %v7951 = vadd.f32 0.0, %v7950
        %v7952 = vpop.f32.mrb[0].mxu0
        %7953 = vmatprep.mubr.bf16.mxu0 0
        %7954 = vmatmul.mubr.bf16.gmra.mrb[0].mxu0 %v7870
        %v7955 = vpop.f32.mrb[0].mxu0
        %v7956 = vadd.f32 0.0, %v7955
        %v7957 = vpop.f32.mrb[0].mxu0
        %v7958 = vpop.f32.mrb[0].mxu0
        %v7959 = vadd.f32 0.0, %v7958
        %v7960 = vpop.f32.mrb[0].mxu0
        %7961 = vmatprep.mubr.bf16.mxu0 0
        %7962 = vmatmul.mubr.bf16.gmra.mrb[0].mxu0 %v7873
        %v7963 = vpop.f32.mrb[0].mxu0
        %v7964 = vadd.f32 0.0, %v7963
        %v7965 = vpop.f32.mrb[0].mxu0
        %v7966 = vpop.f32.mrb[0].mxu0
        %v7967 = vadd.f32 0.0, %v7966
        %v7968 = vpop.f32.mrb[0].mxu0
        %7969 = vmatprep.mubr.bf16.mxu0 0
        %7970 = vmatmul.mubr.bf16.gmra.mrb[0].mxu0 %v7876
        %v7971 = vpop.f32.mrb[0].mxu0
        %v7972 = vadd.f32 0.0, %v7971
        %v7973 = vpop.f32.mrb[0].mxu0
        %v7974 = vpop.f32.mrb[0].mxu0
        %v7975 = vadd.f32 0.0, %v7974
        %v7976 = vpop.f32.mrb[0].mxu0
        %7977 = vdwg.mxu0
        %v7978 = vadd.f32 %v5727, %v7916
        %v7979 = vadd.f32 %v5728, %v7919
        %v7980 = vadd.f32 %v5729, %v7924
        %v7981 = vadd.f32 %v5730, %v7927
        %v7982 = vadd.f32 %v5731, %v7932
        %v7983 = vadd.f32 %v5732, %v7935
        %v7984 = vadd.f32 %v5733, %v7940
        %v7985 = vadd.f32 %v5734, %v7943
        %v7986 = vadd.f32 %v5735, %v7948
        %v7987 = vadd.f32 %v5736, %v7951
        %v7988 = vadd.f32 %v5737, %v7956
        %v7989 = vadd.f32 %v5738, %v7959
        %v7990 = vadd.f32 %v5739, %v7964
        %v7991 = vadd.f32 %v5740, %v7967
        %v7992 = vadd.f32 %v5741, %v7972
        %v7993 = vadd.f32 %v5742, %v7975
        %v7994 = vld [vmem:[%s527] sm:$0x1]
        %v7996 = vlaneseq
        %v7997 = vshrl.u32 %v7996, 7
        %v7998 = vsub.s32 0, %v7997
        %v7999 = vrot.slane %v7994, %v7998
        %v8001 = vadd.f32 %v7978, %v7999
        %v8002 = vadd.f32 %v7979, %v7999
        %v8003 = vadd.f32 %v7980, %v7999
        %v8004 = vadd.f32 %v7981, %v7999
        %v8005 = vadd.f32 %v7982, %v7999
        %v8006 = vadd.f32 %v7983, %v7999
        %v8007 = vadd.f32 %v7984, %v7999
        %v8008 = vadd.f32 %v7985, %v7999
        %v8009 = vadd.f32 %v7986, %v7999
        %v8010 = vadd.f32 %v7987, %v7999
        %v8011 = vadd.f32 %v7988, %v7999
        %v8012 = vadd.f32 %v7989, %v7999
        %v8013 = vadd.f32 %v7990, %v7999
        %v8014 = vadd.f32 %v7991, %v7999
        %v8015 = vadd.f32 %v7992, %v7999
        %v8016 = vadd.f32 %v7993, %v7999
        %s8017 = scalar_lea.vmem [#allocation14], 4
        %v8018 = vld [vmem:[%s8017] sm:$0x1]
        %v8020 = vlaneseq
        %v8021 = vshrl.u32 %v8020, 7
        %v8022 = vsub.s32 0, %v8021
        %v8023 = vrot.slane %v8018, %v8022
        %v8025 = vmul.f32 %v8001, %v8023
        %v8026 = vmul.f32 %v8002, %v8023
        %v8027 = vmul.f32 %v8003, %v8023
        %v8028 = vmul.f32 %v8004, %v8023
        %v8029 = vmul.f32 %v8005, %v8023
        %v8030 = vmul.f32 %v8006, %v8023
        %v8031 = vmul.f32 %v8007, %v8023
        %v8032 = vmul.f32 %v8008, %v8023
        %v8033 = vmul.f32 %v8009, %v8023
        %v8034 = vmul.f32 %v8010, %v8023
        %v8035 = vmul.f32 %v8011, %v8023
        %v8036 = vmul.f32 %v8012, %v8023
        %v8037 = vmul.f32 %v8013, %v8023
        %v8038 = vmul.f32 %v8014, %v8023
        %v8039 = vmul.f32 %v8015, %v8023
        %v8040 = vmul.f32 %v8016, %v8023
        %s8041 = scalar_lea.vmem [#allocation16], 4
        %v8042 = vld [vmem:[%s8041] sm:$0x1]
        %v8044 = vlaneseq
        %v8045 = vshrl.u32 %v8044, 7
        %v8046 = vsub.s32 0, %v8045
        %v8047 = vrot.slane %v8042, %v8046
        %v8049 = vadd.f32 %v8025, %v8047
        %v8050 = vadd.f32 %v8026, %v8047
        %v8051 = vadd.f32 %v8027, %v8047
        %v8052 = vadd.f32 %v8028, %v8047
        %v8053 = vadd.f32 %v8029, %v8047
        %v8054 = vadd.f32 %v8030, %v8047
        %v8055 = vadd.f32 %v8031, %v8047
        %v8056 = vadd.f32 %v8032, %v8047
        %v8057 = vadd.f32 %v8033, %v8047
        %v8058 = vadd.f32 %v8034, %v8047
        %v8059 = vadd.f32 %v8035, %v8047
        %v8060 = vadd.f32 %v8036, %v8047
        %v8061 = vadd.f32 %v8037, %v8047
        %v8062 = vadd.f32 %v8038, %v8047
        %v8063 = vadd.f32 %v8039, %v8047
        %v8064 = vadd.f32 %v8040, %v8047
        %v8065 = vmax.f32 %v8049, 0.0
        %v8066 = vmax.f32 %v8050, 0.0
        %v8067 = vmax.f32 %v8051, 0.0
        %v8068 = vmax.f32 %v8052, 0.0
        %v8069 = vmax.f32 %v8053, 0.0
        %v8070 = vmax.f32 %v8054, 0.0
        %v8071 = vmax.f32 %v8055, 0.0
        %v8072 = vmax.f32 %v8056, 0.0
        %v8073 = vmax.f32 %v8057, 0.0
        %v8074 = vmax.f32 %v8058, 0.0
        %v8075 = vmax.f32 %v8059, 0.0
        %v8076 = vmax.f32 %v8060, 0.0
        %v8077 = vmax.f32 %v8061, 0.0
        %v8078 = vmax.f32 %v8062, 0.0
        %v8079 = vmax.f32 %v8063, 0.0
        %v8080 = vmax.f32 %v8064, 0.0
        %v8081 = vunpack.c.l.bf16 %v667
        %v8082 = vunpack.c.l.bf16 %v670
        %v8083 = vunpack.c.l.bf16 %v674
        %v8084 = vunpack.c.l.bf16 %v677
        %v8085 = vunpack.c.l.bf16 %v681
        %v8086 = vunpack.c.l.bf16 %v684
        %v8087 = vunpack.c.l.bf16 %v688
        %v8088 = vunpack.c.l.bf16 %v691
        %v8089 = vunpack.c.l.bf16 %v695
        %v8090 = vunpack.c.l.bf16 %v698
        %v8091 = vunpack.c.l.bf16 %v702
        %v8092 = vunpack.c.l.bf16 %v705
        %v8093 = vunpack.c.l.bf16 %v709
        %v8094 = vunpack.c.l.bf16 %v712
        %v8095 = vunpack.c.l.bf16 %v716
        %v8096 = vunpack.c.l.bf16 %v719
        %v8097 = vadd.f32 %v8081, %v8065
        %v8098 = vadd.f32 %v8082, %v8066
        %v8099 = vadd.f32 %v8083, %v8067
        %v8100 = vadd.f32 %v8084, %v8068
        %v8101 = vadd.f32 %v8085, %v8069
        %v8102 = vadd.f32 %v8086, %v8070
        %v8103 = vadd.f32 %v8087, %v8071
        %v8104 = vadd.f32 %v8088, %v8072
        %v8105 = vadd.f32 %v8089, %v8073
        %v8106 = vadd.f32 %v8090, %v8074
        %v8107 = vadd.f32 %v8091, %v8075
        %v8108 = vadd.f32 %v8092, %v8076
        %v8109 = vadd.f32 %v8093, %v8077
        %v8110 = vadd.f32 %v8094, %v8078
        %v8111 = vadd.f32 %v8095, %v8079
        %v8112 = vadd.f32 %v8096, %v8080
        %v8113 = vld [vmem:[#allocation13] sm:$0xf]
        %v8114 = vld [vmem:[#allocation13 + $0x4] sm:$0xf]
        %v8115 = vld [vmem:[#allocation13 + $0x8] sm:$0xf]
        %v8116 = vld [vmem:[#allocation13 + $0xc] sm:$0xf]
        %v8117 = vpack.c.bf16 %v8098, %v8097
        %v8118 = vpack.c.bf16 %v8100, %v8099
        %v8119 = vpack.c.bf16 %v8102, %v8101
        %v8120 = vpack.c.bf16 %v8104, %v8103
        %v8121 = vpack.c.bf16 %v8106, %v8105
        %v8122 = vpack.c.bf16 %v8108, %v8107
        %v8123 = vpack.c.bf16 %v8110, %v8109
        %v8124 = vpack.c.bf16 %v8112, %v8111
        %v8129 = vunpack.c.l.b16 %v8113
        %v8130 = vunpack.c.l.b16 %v8114
        %v8131 = vunpack.c.l.b16 %v8115
        %v8132 = vunpack.c.l.b16 %v8116
        %v8133 = vpack.c.b16 %v8130, %v8129
        %v8134 = vpack.c.b16 %v8132, %v8131
        %v8136 = vsel %vm761, %v8133, 0
        %v8139 = vsel %vm761, %v8134, 0
        %v8142 = vsel %vm761, %v8117, 0
        %v8145 = vsel %vm761, %v8118, 0
        %v8148 = vsel %vm761, %v8119, 0
        %v8151 = vsel %vm761, %v8120, 0
        %v8154 = vsel %vm761, %v8121, 0
        %v8157 = vsel %vm761, %v8122, 0
        %v8160 = vsel %vm761, %v8123, 0
        %v8163 = vsel %vm761, %v8124, 0
        %8165 = vmatprep.subr.bf16.mxu0 0
        %8166 = vmatpush1.bf16.xpose.msra.mxu0 %v8142
        %8167 = vmatprep.subr.bf16.mxu0 0
        %8168 = vmatpush1.bf16.xpose.msra.mxu0 %v8145
        %8169 = vmatprep.subr.bf16.mxu0 0
        %8170 = vmatpush1.bf16.xpose.msra.mxu0 %v8148
        %8171 = vmatprep.subr.bf16.mxu0 0
        %8172 = vmatpush1.bf16.xpose.msra.mxu0 %v8151
        %8173 = vmatprep.subr.bf16.mxu0 0
        %8174 = vmatpush1.bf16.xpose.msra.mxu0 %v8154
        %8175 = vmatprep.subr.bf16.mxu0 0
        %8176 = vmatpush1.bf16.xpose.msra.mxu0 %v8157
        %8177 = vmatprep.subr.bf16.mxu0 0
        %8178 = vmatpush1.bf16.xpose.msra.mxu0 %v8160
        %8179 = vmatprep.subr.bf16.mxu0 0
        %8180 = vmatpush1.bf16.xpose.msra.mxu0 %v8163
        %8181 = vmatprep.subr.bf16.mxu0 0
        %8182 = vmatpush1.bf16.xpose.msra.mxu0 0
        %8183 = vmatprep.subr.bf16.mxu0 0
        %8184 = vmatpush1.bf16.xpose.msra.mxu0 0
        %8185 = vmatprep.subr.bf16.mxu0 0
        %8186 = vmatpush1.bf16.xpose.msra.mxu0 0
        %8187 = vmatprep.subr.bf16.mxu0 0
        %8188 = vmatpush1.bf16.xpose.msra.mxu0 0
        %8189 = vmatprep.subr.bf16.mxu0 0
        %8190 = vmatpush1.bf16.xpose.msra.mxu0 0
        %8191 = vmatprep.subr.bf16.mxu0 0
        %8192 = vmatpush1.bf16.xpose.msra.mxu0 0
        %8193 = vmatprep.subr.bf16.mxu0 0
        %8194 = vmatpush1.bf16.xpose.msra.mxu0 0
        %8195 = vmatprep.subr.bf16.mxu0 0
        %8196 = vmatpush1.bf16.xpose.msra.mxu0 0
        %8197 = vmatprep.mubr.bf16.mxu0 0
        %8198 = vmatmul.mubr.bf16.gmra.mrb[0].mxu0 %v8136
        %v8199 = vpop.f32.mrb[0].mxu0
        %v8200 = vadd.f32 0.0, %v8199
        %v8201 = vpop.f32.mrb[0].mxu0
        %v8202 = vpop.f32.mrb[0].mxu0
        %v8203 = vadd.f32 0.0, %v8202
        %v8204 = vpop.f32.mrb[0].mxu0
        %8205 = vmatprep.mubr.bf16.mxu0 0
        %8206 = vmatmul.mubr.bf16.gmra.mrb[0].mxu0 %v8139
        %v8207 = vpop.f32.mrb[0].mxu0
        %v8208 = vadd.f32 0.0, %v8207
        %v8209 = vpop.f32.mrb[0].mxu0
        %v8210 = vpop.f32.mrb[0].mxu0
        %v8211 = vadd.f32 0.0, %v8210
        %v8212 = vpop.f32.mrb[0].mxu0
        %8213 = vdwg.mxu0
        %v8214 = vld [vmem:[%s519] sm:$0xff]
        %v8215 = vld [vmem:[%s519 + $0x8] sm:$0xff]
        %v8216 = vld [vmem:[%s519 + $0x10] sm:$0xff]
        %v8217 = vld [vmem:[%s519 + $0x18] sm:$0xff]
        %v8218 = vld [vmem:[#allocation17] sm:$0xff]
        %v8219 = vld [vmem:[#allocation17 + $0x8] sm:$0xff]
        %v8220 = vld [vmem:[#allocation17 + $0x10] sm:$0xff]
        %v8221 = vld [vmem:[#allocation17 + $0x18] sm:$0xff]
        %8223 = vset.pattern.permute.xlu0 0
        %8224 = vperm.xlu0 %8223, %v8218
        %v8225 = vpop.permute.xlu0 %8224
        %8228 = vset.pattern.permute.xlu0 0
        %8229 = vperm.xlu0 %8228, %v8219
        %v8230 = vpop.permute.xlu0 %8229
        %8233 = vset.pattern.permute.xlu0 0
        %8234 = vperm.xlu0 %8233, %v8220
        %v8235 = vpop.permute.xlu0 %8234
        %8238 = vset.pattern.permute.xlu0 0
        %8239 = vperm.xlu0 %8238, %v8221
        %v8240 = vpop.permute.xlu0 %8239
        %v8242 = vmul.f32 %v8200, %v8225
        %v8243 = vmul.f32 %v8203, %v8230
        %v8244 = vmul.f32 %v8208, %v8235
        %v8245 = vmul.f32 %v8211, %v8240
        %v8246 = vld [vmem:[#allocation19] sm:$0xff]
        %v8247 = vld [vmem:[#allocation19 + $0x8] sm:$0xff]
        %v8248 = vld [vmem:[#allocation19 + $0x10] sm:$0xff]
        %v8249 = vld [vmem:[#allocation19 + $0x18] sm:$0xff]
        %8251 = vset.pattern.permute.xlu0 0
        %8252 = vperm.xlu0 %8251, %v8246
        %v8253 = vpop.permute.xlu0 %8252
        %8256 = vset.pattern.permute.xlu0 0
        %8257 = vperm.xlu0 %8256, %v8247
        %v8258 = vpop.permute.xlu0 %8257
        %8261 = vset.pattern.permute.xlu0 0
        %8262 = vperm.xlu0 %8261, %v8248
        %v8263 = vpop.permute.xlu0 %8262
        %8266 = vset.pattern.permute.xlu0 0
        %8267 = vperm.xlu0 %8266, %v8249
        %v8268 = vpop.permute.xlu0 %8267
        %v8270 = vadd.f32 %v8242, %v8253
        %v8271 = vadd.f32 %v8243, %v8258
        %v8272 = vadd.f32 %v8244, %v8263
        %v8273 = vadd.f32 %v8245, %v8268
        %v8274 = vmax.f32 %v8270, 0.0
        %v8275 = vmax.f32 %v8271, 0.0
        %v8276 = vmax.f32 %v8272, 0.0
        %v8277 = vmax.f32 %v8273, 0.0
        %v8278 = vadd.f32 %v8214, %v8274
        %v8279 = vadd.f32 %v8215, %v8275
        %v8280 = vadd.f32 %v8216, %v8276
        %v8281 = vadd.f32 %v8217, %v8277
        %8282 = vst [vmem:[%s606] sm:$0xff] %v8278
        %8283 = vst [vmem:[%s606 + $0x8] sm:$0xff] %v8279
        %8284 = vst [vmem:[%s606 + $0x10] sm:$0xff] %v8280
        %8285 = vst [vmem:[%s606 + $0x18] sm:$0xff] %v8281
        %s8286 = sand.u32 %s305, 1
        %s8287 = scalar_lea.sflag [#allocation4], %s8286
        %s8288 = sand.u32 %s305, 1
        %s8289 = smul.addr %s8288, 32
        %s8290 = scalar_lea.vmem [#allocation20], %s8289
        // Predicated region
        $region109: #{bottleneck_aspp_forward.3} parent=63 // pred_check
          %p8291 = pneg %p315
        $region110: #{bottleneck_aspp_forward.3} parent=63 // pred_check_branch
          %8293 = sbr.rel (%p8291) target = $region112
        $region111: #{bottleneck_aspp_forward.3} parent=63 // pred_region
          %s8295 = ssub.s32 512, 512
          %8296 = vsyncadd %s8287, %s8295
          %s8297 = smul.addr %s39, 8
          %s8298 = sadd.s32 %s40, %s8297
          %s8299 = smul.addr %s8298, 128
          %s8300 = scalar_lea.hbm %s11, %s8299
          %s8301 = sshll.u32 %s8290, 4
          %s8302 = int_to_ptr.vmem [resolvable:$true] %s8301
          %8307 = dma.vmem_to_hbm [thread:$0]  %s8302, 512, %s8300, %s8287, 128, 256, 8
        $region112: #{bottleneck_aspp_forward.3} parent=63 // pred_fallthru
          _
      $region64: #{bottleneck_aspp_forward.3} parent=5 // pred_fallthru
        _
      %p8308 = scmp.le.s32.totalorder 2, %s30
      // Predicated region
      $region113: #{bottleneck_aspp_forward.3} parent=5 // pred_check
        %p8309 = pneg %p8308
      $region114: #{bottleneck_aspp_forward.3} parent=5 // pred_check_branch
        %8311 = sbr.rel (%p8309) target = $region116
      $region115: #{bottleneck_aspp_forward.3} parent=5 // pred_region
        %s8312 = ssub.s32 %s30, 2
        // Predicated region
        $region117: #{bottleneck_aspp_forward.3} parent=115 // pred_check
          %p8313 = pneg %p321
        $region118: #{bottleneck_aspp_forward.3} parent=115 // pred_check_branch
          %8315 = sbr.rel (%p8313) target = $region120
        $region119: #{bottleneck_aspp_forward.3} parent=115 // pred_region
          %s8316 = sand.u32 %s306, 1
          %s8317 = scalar_lea.sflag [#allocation4], %s8316
          %s8318 = sand.u32 %s306, 1
          %s8319 = smul.addr %s8318, 32
          %s8320 = scalar_lea.vmem [#allocation20], %s8319
          %8321 = dma.done %s8317, 512
        $region120: #{bottleneck_aspp_forward.3} parent=115 // pred_fallthru
          _
      $region116: #{bottleneck_aspp_forward.3} parent=5 // pred_fallthru
        _
    $region6: #{bottleneck_aspp_forward.3} parent=1 // loop_footer
      %s34 = sadd.s32 1, %s30
    $region7: #{bottleneck_aspp_forward.3} parent=1 // loop_footer_branch
      %29 = sbr.rel target = $region3
    $region8: #{bottleneck_aspp_forward.3} parent=1 // loop_exit
      _
    %8322 = vsyncpa [#allocation3], 1
    %s8323 = scalar_lea.sflag [#allocation3], 1
    %8324 = vsyncpa %s8323, 1
    %8325 = vsyncpa [#allocation6], 1
    %s8326 = scalar_lea.sflag [#allocation6], 1
    %8327 = vsyncpa %s8326, 1
    %8328 = vsyncpa [#allocation9], 1
    %8329 = vsyncpa [#allocation12], 1
    %8330 = vsyncpa [#allocation15], 1
    %8331 = vsyncpa [#allocation18], 1
    %8332 = vsyncpa [#allocation4], 1
    %s8333 = scalar_lea.sflag [#allocation4], 1
    %8334 = vsyncpa %s8333, 1

</llo_original>
